<compile_context>
chip_gen: v7x
topology: tpu7x:2x2x1
jax: 0.10.0
libtpu: 0.0.40
codegen_flags: <defaults>
</compile_context>

<pallas_src>
import functools

import jax
import jax.numpy as jnp
from jax.experimental import pallas as pl
from jax.experimental.pallas import tpu as pltpu

LEAKY_SLOPE = 0.01  # PyTorch nn.LeakyReLU default


def _unit(x, w1, b1, w2, b2, mm_dtype):
    """One CMMLunit on a (TB, N, D) activation tile, all in VMEM/vregs."""
    tb, n, d = x.shape

    # pairwise squared distances via the gram trick (contract on last axis,
    # no materialized transpose)
    gram = jnp.einsum("bnd,bmd->bnm", x, x, preferred_element_type=jnp.float32)
    sq = jnp.sum(x * x, axis=-1)                                    # (TB, N)
    d2 = jnp.maximum(sq[:, :, None] + sq[:, None, :] - 2.0 * gram, 0.0)

    # W = exp(-d2), row-normalized; reciprocal on the EUP slot
    w = jnp.exp(-d2)
    inv = pl.reciprocal(jnp.sum(w, axis=-1, keepdims=True), approx=True)
    w = w * inv

    # (W + I) @ x == W @ x + x  -> no eye construction
    z = jnp.einsum("bnm,bmd->bnd", w, x, preferred_element_type=jnp.float32) + x

    # FFN over the flattened (TB*N, D) slab so the MXU sees a big M dimension
    zf = z.reshape(tb * n, d).astype(mm_dtype)
    h = jnp.dot(zf, w1.astype(mm_dtype), preferred_element_type=jnp.float32)
    h = h + b1.astype(jnp.float32)
    h = jnp.where(h > 0, h, LEAKY_SLOPE * h)                        # LeakyReLU
    out = jnp.dot(h.astype(mm_dtype), w2.astype(mm_dtype),
                  preferred_element_type=jnp.float32)
    out = out + b2.astype(jnp.float32)
    return out.reshape(tb, n, out.shape[-1])


def cmml_fused_kernel(r_ref,
                      w1_ref, b1_ref, w2_ref, b2_ref,
                      w3_ref, b3_ref, w4_ref, b4_ref,
                      w5_ref, b5_ref, w6_ref, b6_ref,
                      o_ref, *, mm_dtype):
    x = r_ref[...].astype(jnp.float32)                              # (TB, N, Din)
    x = _unit(x, w1_ref[...], b1_ref[...], w2_ref[...], b2_ref[...], mm_dtype)
    x = _unit(x, w3_ref[...], b3_ref[...], w4_ref[...], b4_ref[...], mm_dtype)
    x = _unit(x, w5_ref[...], b5_ref[...], w6_ref[...], b6_ref[...], mm_dtype)
    o_ref[...] = x.astype(o_ref.dtype)


def cmml_forward(r, params, *, mm_dtype=jnp.float32, block_b=None):
    """Fused 3-unit CMML forward.

    mm_dtype: operand dtype for the FFN matmuls (jnp.bfloat16 recommended on
              v6e/v7x); accumulation and all distance math stay f32.
    """
    B, N, D_in = r.shape
    (w1, b1, w2, b2), (w3, b3, w4, b4), (w5, b5, w6, b6) = params
    D_out = w6.shape[1]

    # Batch tile: aim for ~128 flattened rows per grid step for the MXU.
    if block_b is None:
        block_b = max(1, min(B, 128 // max(N, 1)))
    n_tiles = pl.cdiv(B, block_b)
    B_pad = n_tiles * block_b
    if B_pad != B:
        r = jnp.pad(r, ((0, B_pad - B), (0, 0), (0, 0)))

    weights = [w1, w2, w3, w4, w5, w6]
    if mm_dtype != jnp.float32:
        # Store resident weights in the matmul operand dtype (halves VMEM).
        weights = [w.astype(mm_dtype) for w in weights]
    biases = [b1, b2, b3, b4, b5, b6]  # biases stay f32

    # interleave back into (w1, b1, w2, b2, ...)
    wb = []
    for w, b in zip(weights, biases):
        wb.extend([w, b])

    def full_spec(a):
        # grid-invariant operand: whole array, constant block index
        return pl.BlockSpec(a.shape, lambda i: (0,) * a.ndim)

    out = pl.pallas_call(
        functools.partial(cmml_fused_kernel, mm_dtype=mm_dtype),
        out_shape=jax.ShapeDtypeStruct((B_pad, N, D_out), r.dtype),
        grid=(n_tiles,),
        in_specs=[pl.BlockSpec((block_b, N, D_in), lambda i: (i, 0, 0))]
                 + [full_spec(a) for a in wb],
        out_specs=pl.BlockSpec((block_b, N, D_out), lambda i: (i, 0, 0)),
        compiler_params=pltpu.CompilerParams(
            dimension_semantics=("parallel",)),
    )(r, *wb)

    if B_pad != B:
        out = out[:B]
    return out


def init_linear(key, in_features, out_features):
    """Deterministic init matching nn.Linear fan-in scaling. Weight stored (in, out)."""
    kw, kb = jax.random.split(key)
    bound = 1.0 / jnp.sqrt(jnp.float32(in_features))
    w = jax.random.uniform(kw, (in_features, out_features), jnp.float32, -bound, bound)
    b = jax.random.uniform(kb, (1, out_features), jnp.float32, -bound, bound)
    return w, b


def init_cmml_params(key, input_dim, output_dim):
    # CMMLunit(in, hidden, out) -> FFN_2layer(in, hidden, out)
    dims = [
        (input_dim, 512, 512),   # cmml_unit1
        (512, 512, 768),         # cmml_unit2
        (768, 768, output_dim),  # cmml_unit3
    ]
    params = []
    keys = jax.random.split(key, 2 * len(dims))
    for i, (din, dh, dout) in enumerate(dims):
        w1, b1 = init_linear(keys[2 * i], din, dh)
        w2, b2 = init_linear(keys[2 * i + 1], dh, dout)
        params.append((w1, b1, w2, b2))
    return params


# ---------- pure-JAX reference (for correctness check) ----------
def _ref_unit(r, w1, b1, w2, b2):
    gram = jnp.einsum("bnd,bmd->bnm", r, r)
    sq = jnp.sum(r * r, axis=-1)
    d2 = jnp.maximum(sq[:, :, None] + sq[:, None, :] - 2.0 * gram, 0.0)
    w = jnp.exp(-d2)
    w = w / jnp.sum(w, axis=-1, keepdims=True)
    w = w + jnp.eye(r.shape[1], dtype=r.dtype)[None]
    z = jnp.einsum("bnm,bmd->bnd", w, r)
    h = z @ w1 + b1
    h = jnp.where(h > 0, h, LEAKY_SLOPE * h)
    return h @ w2 + b2


def _ref_forward(r, params):
    for (w1, b1, w2, b2) in params:
        r = _ref_unit(r, w1, b1, w2, b2)
    return r


if __name__ == "__main__":
    import numpy as np

    key = jax.random.PRNGKey(0)
    k_in, k_par = jax.random.split(key)

    B, N = 2, 8
    input_dim, output_dim = 64, 128

    # small-magnitude inputs so exp(-d^2) has non-trivial off-diagonal weights
    r = 0.1 * jax.random.normal(k_in, (B, N, input_dim), jnp.float32)
    params = init_cmml_params(k_par, input_dim, output_dim)

    ref = jax.block_until_ready(_ref_forward(r, params))

    # f32-operand path (reference semantics)
    out = jax.block_until_ready(cmml_forward(r, params))
    assert out.shape == (B, N, output_dim)
    np.testing.assert_allclose(np.asarray(out), np.asarray(ref), rtol=1e-2, atol=1e-2)

    # bf16 MXU-operand fast path (v6e/v7x); distance math stays f32
    out_bf16 = jax.block_until_ready(
        cmml_forward(r, params, mm_dtype=jnp.bfloat16))
    np.testing.assert_allclose(np.asarray(out_bf16), np.asarray(ref),
                               rtol=1e-1, atol=1e-1)

    print("KERNEL_OK")
</pallas_src>

<mosaic_0001>
module attributes {stable_mosaic.version = 11 : i64} {
  func.func @cmml_fused_kernel(%arg0: i32, %arg1: memref<2x8x64xf32, #tpu.memory_space<vmem>>, %arg2: memref<64x512xf32, #tpu.memory_space<vmem>>, %arg3: memref<1x512xf32, #tpu.memory_space<vmem>>, %arg4: memref<512x512xf32, #tpu.memory_space<vmem>>, %arg5: memref<1x512xf32, #tpu.memory_space<vmem>>, %arg6: memref<512x512xf32, #tpu.memory_space<vmem>>, %arg7: memref<1x512xf32, #tpu.memory_space<vmem>>, %arg8: memref<512x768xf32, #tpu.memory_space<vmem>>, %arg9: memref<1x768xf32, #tpu.memory_space<vmem>>, %arg10: memref<768x768xf32, #tpu.memory_space<vmem>>, %arg11: memref<1x768xf32, #tpu.memory_space<vmem>>, %arg12: memref<768x128xf32, #tpu.memory_space<vmem>>, %arg13: memref<1x128xf32, #tpu.memory_space<vmem>>, %arg14: memref<2x8x128xf32, #tpu.memory_space<vmem>>) attributes {dimension_semantics = [#tpu.dimension_semantics<parallel>], iteration_bounds = array<i64: 1>, scalar_prefetch = 0 : i64, scratch_operands = 0 : i64, tpu.core_type = #tpu.core_type<tc>, window_params = [{transform_indices = @transform_0, window_bounds = array<i64: 2, 8, 64>}, {pipeline_mode = #tpu.pipeline_mode<synchronous>, transform_indices = @transform_1, window_bounds = array<i64: 64, 512>}, {pipeline_mode = #tpu.pipeline_mode<synchronous>, transform_indices = @transform_2, window_bounds = array<i64: 1, 512>}, {pipeline_mode = #tpu.pipeline_mode<synchronous>, transform_indices = @transform_3, window_bounds = array<i64: 512, 512>}, {pipeline_mode = #tpu.pipeline_mode<synchronous>, transform_indices = @transform_4, window_bounds = array<i64: 1, 512>}, {pipeline_mode = #tpu.pipeline_mode<synchronous>, transform_indices = @transform_5, window_bounds = array<i64: 512, 512>}, {pipeline_mode = #tpu.pipeline_mode<synchronous>, transform_indices = @transform_6, window_bounds = array<i64: 1, 512>}, {pipeline_mode = #tpu.pipeline_mode<synchronous>, transform_indices = @transform_7, window_bounds = array<i64: 512, 768>}, {pipeline_mode = #tpu.pipeline_mode<synchronous>, transform_indices = @transform_8, window_bounds = array<i64: 1, 768>}, {pipeline_mode = #tpu.pipeline_mode<synchronous>, transform_indices = @transform_9, window_bounds = array<i64: 768, 768>}, {pipeline_mode = #tpu.pipeline_mode<synchronous>, transform_indices = @transform_10, window_bounds = array<i64: 1, 768>}, {pipeline_mode = #tpu.pipeline_mode<synchronous>, transform_indices = @transform_11, window_bounds = array<i64: 768, 128>}, {pipeline_mode = #tpu.pipeline_mode<synchronous>, transform_indices = @transform_12, window_bounds = array<i64: 1, 128>}, {transform_indices = @transform_13, window_bounds = array<i64: 2, 8, 128>}]} {
    %c0 = arith.constant 0 : index
    %c0_0 = arith.constant 0 : index
    %c0_1 = arith.constant 0 : index
    %0 = vector.load %arg1[%c0, %c0_0, %c0_1] : memref<2x8x64xf32, #tpu.memory_space<vmem>>, vector<2x8x64xf32>
    %c0_2 = arith.constant 0 : index
    %c0_3 = arith.constant 0 : index
    %1 = vector.load %arg2[%c0_2, %c0_3] : memref<64x512xf32, #tpu.memory_space<vmem>>, vector<64x512xf32>
    %c0_4 = arith.constant 0 : index
    %c0_5 = arith.constant 0 : index
    %2 = vector.load %arg3[%c0_4, %c0_5] : memref<1x512xf32, #tpu.memory_space<vmem>>, vector<1x512xf32>
    %c0_6 = arith.constant 0 : index
    %c0_7 = arith.constant 0 : index
    %3 = vector.load %arg4[%c0_6, %c0_7] : memref<512x512xf32, #tpu.memory_space<vmem>>, vector<512x512xf32>
    %c0_8 = arith.constant 0 : index
    %c0_9 = arith.constant 0 : index
    %4 = vector.load %arg5[%c0_8, %c0_9] : memref<1x512xf32, #tpu.memory_space<vmem>>, vector<1x512xf32>
    "tpu.trace_start"() <{level = 10 : i32, message = "bnd,bmd->bnm"}> : () -> ()
    %cst = arith.constant dense<0.000000e+00> : vector<2x8x8xf32>
    %5 = tpu.matmul %0, %0, %cst {dimension_numbers = #tpu.dot_dimension_numbers<[2], [2], [1], [1], [0, 0, 0, 1, 1, 1], [0], [0]>} : vector<2x8x64xf32>, vector<2x8x64xf32>, vector<2x8x8xf32> -> vector<2x8x8xf32>
    "tpu.trace_stop"() : () -> ()
    %6 = arith.mulf %0, %0 : vector<2x8x64xf32>
    %cst_10 = arith.constant dense<0.000000e+00> : vector<2x8xf32>
    %7 = vector.multi_reduction <add>, %6, %cst_10 [2] : vector<2x8x64xf32> to vector<2x8xf32>
    %8 = vector.shape_cast %7 : vector<2x8xf32> to vector<2x8x1xf32>
    %9 = vector.shape_cast %7 : vector<2x8xf32> to vector<2x1x8xf32>
    %10 = vector.broadcast %8 : vector<2x8x1xf32> to vector<2x8x8xf32>
    %11 = vector.broadcast %9 : vector<2x1x8xf32> to vector<2x8x8xf32>
    %12 = arith.addf %10, %11 : vector<2x8x8xf32>
    %cst_11 = arith.constant 2.000000e+00 : f32
    %13 = vector.broadcast %cst_11 : f32 to vector<2x8x8xf32>
    %14 = arith.mulf %13, %5 : vector<2x8x8xf32>
    %15 = arith.subf %12, %14 : vector<2x8x8xf32>
    %cst_12 = arith.constant 0.000000e+00 : f32
    %16 = vector.broadcast %cst_12 : f32 to vector<2x8x8xf32>
    %17 = arith.maximumf %15, %16 : vector<2x8x8xf32>
    %cst_13 = arith.constant 0.000000e+00 : f32
    %18 = vector.broadcast %cst_13 : f32 to vector<2x8x8xf32>
    %19 = arith.subf %18, %17 : vector<2x8x8xf32>
    %20 = math.exp %19 : vector<2x8x8xf32>
    %cst_14 = arith.constant dense<0.000000e+00> : vector<2x8xf32>
    %21 = vector.multi_reduction <add>, %20, %cst_14 [2] : vector<2x8x8xf32> to vector<2x8xf32>
    %22 = vector.shape_cast %21 : vector<2x8xf32> to vector<2x8x1xf32>
    %23 = tpu.reciprocal %22 {approx = true} : vector<2x8x1xf32> -> vector<2x8x1xf32>
    %24 = vector.broadcast %23 : vector<2x8x1xf32> to vector<2x8x8xf32>
    %25 = arith.mulf %20, %24 : vector<2x8x8xf32>
    "tpu.trace_start"() <{level = 10 : i32, message = "bnm,bmd->bnd"}> : () -> ()
    %cst_15 = arith.constant dense<0.000000e+00> : vector<2x8x64xf32>
    %26 = tpu.matmul %25, %0, %cst_15 {dimension_numbers = #tpu.dot_dimension_numbers<[2], [1], [1], [2], [0, 0, 0, 1, 1, 2], [0], [0]>} : vector<2x8x8xf32>, vector<2x8x64xf32>, vector<2x8x64xf32> -> vector<2x8x64xf32>
    "tpu.trace_stop"() : () -> ()
    %27 = arith.addf %26, %0 : vector<2x8x64xf32>
    %28 = vector.shape_cast %27 : vector<2x8x64xf32> to vector<16x64xf32>
    %cst_16 = arith.constant dense<0.000000e+00> : vector<16x512xf32>
    %29 = tpu.matmul %28, %1, %cst_16 {dimension_numbers = #tpu.dot_dimension_numbers<[1], [0], [0], [1], [0, 0, 1, 1], [], []>} : vector<16x64xf32>, vector<64x512xf32>, vector<16x512xf32> -> vector<16x512xf32>
    %30 = vector.broadcast %2 : vector<1x512xf32> to vector<16x512xf32>
    %31 = arith.addf %29, %30 : vector<16x512xf32>
    %cst_17 = arith.constant 0.000000e+00 : f32
    %32 = vector.broadcast %cst_17 : f32 to vector<16x512xf32>
    %33 = arith.cmpf ogt, %31, %32 : vector<16x512xf32>
    %cst_18 = arith.constant 0.00999999977 : f32
    %34 = vector.broadcast %cst_18 : f32 to vector<16x512xf32>
    %35 = arith.mulf %34, %31 : vector<16x512xf32>
    %36 = arith.select %33, %31, %35 : vector<16x512xi1>, vector<16x512xf32>
    %cst_19 = arith.constant dense<0.000000e+00> : vector<16x512xf32>
    %37 = tpu.matmul %36, %3, %cst_19 {dimension_numbers = #tpu.dot_dimension_numbers<[1], [0], [0], [1], [0, 0, 1, 1], [], []>} : vector<16x512xf32>, vector<512x512xf32>, vector<16x512xf32> -> vector<16x512xf32>
    %38 = vector.broadcast %4 : vector<1x512xf32> to vector<16x512xf32>
    %39 = arith.addf %37, %38 : vector<16x512xf32>
    %40 = vector.shape_cast %39 : vector<16x512xf32> to vector<2x8x512xf32>
    %c0_20 = arith.constant 0 : index
    %c0_21 = arith.constant 0 : index
    %41 = vector.load %arg6[%c0_20, %c0_21] : memref<512x512xf32, #tpu.memory_space<vmem>>, vector<512x512xf32>
    %c0_22 = arith.constant 0 : index
    %c0_23 = arith.constant 0 : index
    %42 = vector.load %arg7[%c0_22, %c0_23] : memref<1x512xf32, #tpu.memory_space<vmem>>, vector<1x512xf32>
    %c0_24 = arith.constant 0 : index
    %c0_25 = arith.constant 0 : index
    %43 = vector.load %arg8[%c0_24, %c0_25] : memref<512x768xf32, #tpu.memory_space<vmem>>, vector<512x768xf32>
    %c0_26 = arith.constant 0 : index
    %c0_27 = arith.constant 0 : index
    %44 = vector.load %arg9[%c0_26, %c0_27] : memref<1x768xf32, #tpu.memory_space<vmem>>, vector<1x768xf32>
    "tpu.trace_start"() <{level = 10 : i32, message = "bnd,bmd->bnm"}> : () -> ()
    %cst_28 = arith.constant dense<0.000000e+00> : vector<2x8x8xf32>
    %45 = tpu.matmul %40, %40, %cst_28 {dimension_numbers = #tpu.dot_dimension_numbers<[2], [2], [1], [1], [0, 0, 0, 1, 1, 1], [0], [0]>} : vector<2x8x512xf32>, vector<2x8x512xf32>, vector<2x8x8xf32> -> vector<2x8x8xf32>
    "tpu.trace_stop"() : () -> ()
    %46 = arith.mulf %40, %40 : vector<2x8x512xf32>
    %cst_29 = arith.constant dense<0.000000e+00> : vector<2x8xf32>
    %47 = vector.multi_reduction <add>, %46, %cst_29 [2] : vector<2x8x512xf32> to vector<2x8xf32>
    %48 = vector.shape_cast %47 : vector<2x8xf32> to vector<2x8x1xf32>
    %49 = vector.shape_cast %47 : vector<2x8xf32> to vector<2x1x8xf32>
    %50 = vector.broadcast %48 : vector<2x8x1xf32> to vector<2x8x8xf32>
    %51 = vector.broadcast %49 : vector<2x1x8xf32> to vector<2x8x8xf32>
    %52 = arith.addf %50, %51 : vector<2x8x8xf32>
    %cst_30 = arith.constant 2.000000e+00 : f32
    %53 = vector.broadcast %cst_30 : f32 to vector<2x8x8xf32>
    %54 = arith.mulf %53, %45 : vector<2x8x8xf32>
    %55 = arith.subf %52, %54 : vector<2x8x8xf32>
    %cst_31 = arith.constant 0.000000e+00 : f32
    %56 = vector.broadcast %cst_31 : f32 to vector<2x8x8xf32>
    %57 = arith.maximumf %55, %56 : vector<2x8x8xf32>
    %cst_32 = arith.constant 0.000000e+00 : f32
    %58 = vector.broadcast %cst_32 : f32 to vector<2x8x8xf32>
    %59 = arith.subf %58, %57 : vector<2x8x8xf32>
    %60 = math.exp %59 : vector<2x8x8xf32>
    %cst_33 = arith.constant dense<0.000000e+00> : vector<2x8xf32>
    %61 = vector.multi_reduction <add>, %60, %cst_33 [2] : vector<2x8x8xf32> to vector<2x8xf32>
    %62 = vector.shape_cast %61 : vector<2x8xf32> to vector<2x8x1xf32>
    %63 = tpu.reciprocal %62 {approx = true} : vector<2x8x1xf32> -> vector<2x8x1xf32>
    %64 = vector.broadcast %63 : vector<2x8x1xf32> to vector<2x8x8xf32>
    %65 = arith.mulf %60, %64 : vector<2x8x8xf32>
    "tpu.trace_start"() <{level = 10 : i32, message = "bnm,bmd->bnd"}> : () -> ()
    %cst_34 = arith.constant dense<0.000000e+00> : vector<2x8x512xf32>
    %66 = tpu.matmul %65, %40, %cst_34 {dimension_numbers = #tpu.dot_dimension_numbers<[2], [1], [1], [2], [0, 0, 0, 1, 1, 2], [0], [0]>} : vector<2x8x8xf32>, vector<2x8x512xf32>, vector<2x8x512xf32> -> vector<2x8x512xf32>
    "tpu.trace_stop"() : () -> ()
    %67 = arith.addf %66, %40 : vector<2x8x512xf32>
    %68 = vector.shape_cast %67 : vector<2x8x512xf32> to vector<16x512xf32>
    %cst_35 = arith.constant dense<0.000000e+00> : vector<16x512xf32>
    %69 = tpu.matmul %68, %41, %cst_35 {dimension_numbers = #tpu.dot_dimension_numbers<[1], [0], [0], [1], [0, 0, 1, 1], [], []>} : vector<16x512xf32>, vector<512x512xf32>, vector<16x512xf32> -> vector<16x512xf32>
    %70 = vector.broadcast %42 : vector<1x512xf32> to vector<16x512xf32>
    %71 = arith.addf %69, %70 : vector<16x512xf32>
    %cst_36 = arith.constant 0.000000e+00 : f32
    %72 = vector.broadcast %cst_36 : f32 to vector<16x512xf32>
    %73 = arith.cmpf ogt, %71, %72 : vector<16x512xf32>
    %cst_37 = arith.constant 0.00999999977 : f32
    %74 = vector.broadcast %cst_37 : f32 to vector<16x512xf32>
    %75 = arith.mulf %74, %71 : vector<16x512xf32>
    %76 = arith.select %73, %71, %75 : vector<16x512xi1>, vector<16x512xf32>
    %cst_38 = arith.constant dense<0.000000e+00> : vector<16x768xf32>
    %77 = tpu.matmul %76, %43, %cst_38 {dimension_numbers = #tpu.dot_dimension_numbers<[1], [0], [0], [1], [0, 0, 1, 1], [], []>} : vector<16x512xf32>, vector<512x768xf32>, vector<16x768xf32> -> vector<16x768xf32>
    %78 = vector.broadcast %44 : vector<1x768xf32> to vector<16x768xf32>
    %79 = arith.addf %77, %78 : vector<16x768xf32>
    %80 = vector.shape_cast %79 : vector<16x768xf32> to vector<2x8x768xf32>
    %c0_39 = arith.constant 0 : index
    %c0_40 = arith.constant 0 : index
    %81 = vector.load %arg10[%c0_39, %c0_40] : memref<768x768xf32, #tpu.memory_space<vmem>>, vector<768x768xf32>
    %c0_41 = arith.constant 0 : index
    %c0_42 = arith.constant 0 : index
    %82 = vector.load %arg11[%c0_41, %c0_42] : memref<1x768xf32, #tpu.memory_space<vmem>>, vector<1x768xf32>
    %c0_43 = arith.constant 0 : index
    %c0_44 = arith.constant 0 : index
    %83 = vector.load %arg12[%c0_43, %c0_44] : memref<768x128xf32, #tpu.memory_space<vmem>>, vector<768x128xf32>
    %c0_45 = arith.constant 0 : index
    %c0_46 = arith.constant 0 : index
    %84 = vector.load %arg13[%c0_45, %c0_46] : memref<1x128xf32, #tpu.memory_space<vmem>>, vector<1x128xf32>
    "tpu.trace_start"() <{level = 10 : i32, message = "bnd,bmd->bnm"}> : () -> ()
    %cst_47 = arith.constant dense<0.000000e+00> : vector<2x8x8xf32>
    %85 = tpu.matmul %80, %80, %cst_47 {dimension_numbers = #tpu.dot_dimension_numbers<[2], [2], [1], [1], [0, 0, 0, 1, 1, 1], [0], [0]>} : vector<2x8x768xf32>, vector<2x8x768xf32>, vector<2x8x8xf32> -> vector<2x8x8xf32>
    "tpu.trace_stop"() : () -> ()
    %86 = arith.mulf %80, %80 : vector<2x8x768xf32>
    %cst_48 = arith.constant dense<0.000000e+00> : vector<2x8xf32>
    %87 = vector.multi_reduction <add>, %86, %cst_48 [2] : vector<2x8x768xf32> to vector<2x8xf32>
    %88 = vector.shape_cast %87 : vector<2x8xf32> to vector<2x8x1xf32>
    %89 = vector.shape_cast %87 : vector<2x8xf32> to vector<2x1x8xf32>
    %90 = vector.broadcast %88 : vector<2x8x1xf32> to vector<2x8x8xf32>
    %91 = vector.broadcast %89 : vector<2x1x8xf32> to vector<2x8x8xf32>
    %92 = arith.addf %90, %91 : vector<2x8x8xf32>
    %cst_49 = arith.constant 2.000000e+00 : f32
    %93 = vector.broadcast %cst_49 : f32 to vector<2x8x8xf32>
    %94 = arith.mulf %93, %85 : vector<2x8x8xf32>
    %95 = arith.subf %92, %94 : vector<2x8x8xf32>
    %cst_50 = arith.constant 0.000000e+00 : f32
    %96 = vector.broadcast %cst_50 : f32 to vector<2x8x8xf32>
    %97 = arith.maximumf %95, %96 : vector<2x8x8xf32>
    %cst_51 = arith.constant 0.000000e+00 : f32
    %98 = vector.broadcast %cst_51 : f32 to vector<2x8x8xf32>
    %99 = arith.subf %98, %97 : vector<2x8x8xf32>
    %100 = math.exp %99 : vector<2x8x8xf32>
    %cst_52 = arith.constant dense<0.000000e+00> : vector<2x8xf32>
    %101 = vector.multi_reduction <add>, %100, %cst_52 [2] : vector<2x8x8xf32> to vector<2x8xf32>
    %102 = vector.shape_cast %101 : vector<2x8xf32> to vector<2x8x1xf32>
    %103 = tpu.reciprocal %102 {approx = true} : vector<2x8x1xf32> -> vector<2x8x1xf32>
    %104 = vector.broadcast %103 : vector<2x8x1xf32> to vector<2x8x8xf32>
    %105 = arith.mulf %100, %104 : vector<2x8x8xf32>
    "tpu.trace_start"() <{level = 10 : i32, message = "bnm,bmd->bnd"}> : () -> ()
    %cst_53 = arith.constant dense<0.000000e+00> : vector<2x8x768xf32>
    %106 = tpu.matmul %105, %80, %cst_53 {dimension_numbers = #tpu.dot_dimension_numbers<[2], [1], [1], [2], [0, 0, 0, 1, 1, 2], [0], [0]>} : vector<2x8x8xf32>, vector<2x8x768xf32>, vector<2x8x768xf32> -> vector<2x8x768xf32>
    "tpu.trace_stop"() : () -> ()
    %107 = arith.addf %106, %80 : vector<2x8x768xf32>
    %108 = vector.shape_cast %107 : vector<2x8x768xf32> to vector<16x768xf32>
    %cst_54 = arith.constant dense<0.000000e+00> : vector<16x768xf32>
    %109 = tpu.matmul %108, %81, %cst_54 {dimension_numbers = #tpu.dot_dimension_numbers<[1], [0], [0], [1], [0, 0, 1, 1], [], []>} : vector<16x768xf32>, vector<768x768xf32>, vector<16x768xf32> -> vector<16x768xf32>
    %110 = vector.broadcast %82 : vector<1x768xf32> to vector<16x768xf32>
    %111 = arith.addf %109, %110 : vector<16x768xf32>
    %cst_55 = arith.constant 0.000000e+00 : f32
    %112 = vector.broadcast %cst_55 : f32 to vector<16x768xf32>
    %113 = arith.cmpf ogt, %111, %112 : vector<16x768xf32>
    %cst_56 = arith.constant 0.00999999977 : f32
    %114 = vector.broadcast %cst_56 : f32 to vector<16x768xf32>
    %115 = arith.mulf %114, %111 : vector<16x768xf32>
    %116 = arith.select %113, %111, %115 : vector<16x768xi1>, vector<16x768xf32>
    %cst_57 = arith.constant dense<0.000000e+00> : vector<16x128xf32>
    %117 = tpu.matmul %116, %83, %cst_57 {dimension_numbers = #tpu.dot_dimension_numbers<[1], [0], [0], [1], [0, 0, 1, 1], [], []>} : vector<16x768xf32>, vector<768x128xf32>, vector<16x128xf32> -> vector<16x128xf32>
    %118 = vector.broadcast %84 : vector<1x128xf32> to vector<16x128xf32>
    %119 = arith.addf %117, %118 : vector<16x128xf32>
    %120 = vector.shape_cast %119 : vector<16x128xf32> to vector<2x8x128xf32>
    %c0_58 = arith.constant 0 : index
    %c0_59 = arith.constant 0 : index
    %c0_60 = arith.constant 0 : index
    %121 = vector.load %arg14[%c0_58, %c0_59, %c0_60] : memref<2x8x128xf32, #tpu.memory_space<vmem>>, vector<2x8x128xf32>
    tpu.vector_store %arg14[%c0_58, %c0_59, %c0_60], %120 {strides = array<i32>} : memref<2x8x128xf32, #tpu.memory_space<vmem>>, vector<2x8x128xf32>,
    return
  }
  func.func @transform_0(%arg0: i32) -> (i32, i32, i32) {
    %c0_i32 = arith.constant 0 : i32
    %c0_i32_0 = arith.constant 0 : i32
    %c0_i32_1 = arith.constant 0 : i32
    return %arg0, %c0_i32, %c0_i32_0 : i32, i32, i32
  }
  func.func @transform_1(%arg0: i32) -> (i32, i32) {
    %c0_i32 = arith.constant 0 : i32
    %c0_i32_0 = arith.constant 0 : i32
    %c0_i32_1 = arith.constant 0 : i32
    return %c0_i32, %c0_i32_0 : i32, i32
  }
  func.func @transform_2(%arg0: i32) -> (i32, i32) {
    %c0_i32 = arith.constant 0 : i32
    %c0_i32_0 = arith.constant 0 : i32
    %c0_i32_1 = arith.constant 0 : i32
    return %c0_i32, %c0_i32_0 : i32, i32
  }
  func.func @transform_3(%arg0: i32) -> (i32, i32) {
    %c0_i32 = arith.constant 0 : i32
    %c0_i32_0 = arith.constant 0 : i32
    %c0_i32_1 = arith.constant 0 : i32
    return %c0_i32, %c0_i32_0 : i32, i32
  }
  func.func @transform_4(%arg0: i32) -> (i32, i32) {
    %c0_i32 = arith.constant 0 : i32
    %c0_i32_0 = arith.constant 0 : i32
    %c0_i32_1 = arith.constant 0 : i32
    return %c0_i32, %c0_i32_0 : i32, i32
  }
  func.func @transform_5(%arg0: i32) -> (i32, i32) {
    %c0_i32 = arith.constant 0 : i32
    %c0_i32_0 = arith.constant 0 : i32
    %c0_i32_1 = arith.constant 0 : i32
    return %c0_i32, %c0_i32_0 : i32, i32
  }
  func.func @transform_6(%arg0: i32) -> (i32, i32) {
    %c0_i32 = arith.constant 0 : i32
    %c0_i32_0 = arith.constant 0 : i32
    %c0_i32_1 = arith.constant 0 : i32
    return %c0_i32, %c0_i32_0 : i32, i32
  }
  func.func @transform_7(%arg0: i32) -> (i32, i32) {
    %c0_i32 = arith.constant 0 : i32
    %c0_i32_0 = arith.constant 0 : i32
    %c0_i32_1 = arith.constant 0 : i32
    return %c0_i32, %c0_i32_0 : i32, i32
  }
  func.func @transform_8(%arg0: i32) -> (i32, i32) {
    %c0_i32 = arith.constant 0 : i32
    %c0_i32_0 = arith.constant 0 : i32
    %c0_i32_1 = arith.constant 0 : i32
    return %c0_i32, %c0_i32_0 : i32, i32
  }
  func.func @transform_9(%arg0: i32) -> (i32, i32) {
    %c0_i32 = arith.constant 0 : i32
    %c0_i32_0 = arith.constant 0 : i32
    %c0_i32_1 = arith.constant 0 : i32
    return %c0_i32, %c0_i32_0 : i32, i32
  }
  func.func @transform_10(%arg0: i32) -> (i32, i32) {
    %c0_i32 = arith.constant 0 : i32
    %c0_i32_0 = arith.constant 0 : i32
    %c0_i32_1 = arith.constant 0 : i32
    return %c0_i32, %c0_i32_0 : i32, i32
  }
  func.func @transform_11(%arg0: i32) -> (i32, i32) {
    %c0_i32 = arith.constant 0 : i32
    %c0_i32_0 = arith.constant 0 : i32
    %c0_i32_1 = arith.constant 0 : i32
    return %c0_i32, %c0_i32_0 : i32, i32
  }
  func.func @transform_12(%arg0: i32) -> (i32, i32) {
    %c0_i32 = arith.constant 0 : i32
    %c0_i32_0 = arith.constant 0 : i32
    %c0_i32_1 = arith.constant 0 : i32
    return %c0_i32, %c0_i32_0 : i32, i32
  }
  func.func @transform_13(%arg0: i32) -> (i32, i32, i32) {
    %c0_i32 = arith.constant 0 : i32
    %c0_i32_0 = arith.constant 0 : i32
    %c0_i32_1 = arith.constant 0 : i32
    return %arg0, %c0_i32, %c0_i32_0 : i32, i32, i32
  }
}

</mosaic_0001>

<llo_original>
// kernel: tpu_custom_call.1
$region0: #{tpu_custom_call.1}
  #allocation0 [shape = 'u32[]', space=smem, size = 0x4, offset = 0x4, fixed_abs, tag = 'smem constant byte address 0x4 - core index']
  #allocation1 [shape = 'u32[144,128]{1,0:T(1,128)}', space=vmem, size = 0x12000, scoped, tag = 'internal scratch']
  %s0 = inlined_call_operand.hbm [shape: f32[2,8,64], index: 0, kind: input, shape index: {}]
  %s1 = inlined_call_operand.hbm [shape: f32[64,512], index: 1, kind: input, shape index: {}]
  %s2 = inlined_call_operand.hbm [shape: f32[1,512], index: 2, kind: input, shape index: {}]
  %s3 = inlined_call_operand.hbm [shape: f32[512,512], index: 3, kind: input, shape index: {}]
  %s4 = inlined_call_operand.hbm [shape: f32[1,512], index: 4, kind: input, shape index: {}]
  %s5 = inlined_call_operand.hbm [shape: f32[512,512], index: 5, kind: input, shape index: {}]
  %s6 = inlined_call_operand.hbm [shape: f32[1,512], index: 6, kind: input, shape index: {}]
  %s7 = inlined_call_operand.hbm [shape: f32[512,768], index: 7, kind: input, shape index: {}]
  %s8 = inlined_call_operand.hbm [shape: f32[1,768], index: 8, kind: input, shape index: {}]
  %s9 = inlined_call_operand.hbm [shape: f32[768,768], index: 9, kind: input, shape index: {}]
  %s10 = inlined_call_operand.hbm [shape: f32[1,768], index: 10, kind: input, shape index: {}]
  %s11 = inlined_call_operand.hbm [shape: f32[768,128], index: 11, kind: input, shape index: {}]
  %s12 = inlined_call_operand.hbm [shape: f32[1,128], index: 12, kind: input, shape index: {}]
  %s13 = inlined_call_operand.hbm [shape: f32[2,8,128], index: 13, kind: output, shape index: {}]
  %s14 = sld [smem:[#allocation0]]
  $region114: #{tpu_custom_call.1} parent=0
    _
  %s16 = ssub.s32 1, %s14
  %s17 = scalar_select 0, %s16, %s14
  $region1: #{tpu_custom_call.1} parent=0
    #allocation2 [shape = 'u8[8192]{0}', space=vmem, size = 0x2000, scoped, tag = 'input window, operand 0, single buffered']
    #allocation3 [shape = 's32[1]{0}', space=sflag, size = 0x4, scoped, tag = 'scoped memory for tpu_custom_call.1']
    #allocation4 [shape = 's32[1]{0}', space=sflag, size = 0x4, scoped, tag = 'scoped memory for tpu_custom_call.1']
    #allocation5 [shape = 'u8[131072]{0}', space=vmem, size = 0x20000, scoped, tag = 'input window, operand 1, single buffered']
    #allocation6 [shape = 's32[1]{0}', space=sflag, size = 0x4, scoped, tag = 'scoped memory for tpu_custom_call.1']
    #allocation7 [shape = 'u8[2048]{0}', space=vmem, size = 0x800, scoped, tag = 'input window, operand 2, single buffered']
    #allocation8 [shape = 'u8[1048576]{0}', space=vmem, size = 0x100000, scoped, tag = 'input window, operand 3, single buffered']
    #allocation9 [shape = 's32[1]{0}', space=sflag, size = 0x4, scoped, tag = 'scoped memory for tpu_custom_call.1']
    #allocation10 [shape = 'u8[2048]{0}', space=vmem, size = 0x800, scoped, tag = 'input window, operand 4, single buffered']
    #allocation11 [shape = 'u8[1048576]{0}', space=vmem, size = 0x100000, scoped, tag = 'input window, operand 5, single buffered']
    #allocation12 [shape = 's32[1]{0}', space=sflag, size = 0x4, scoped, tag = 'scoped memory for tpu_custom_call.1']
    #allocation13 [shape = 'u8[2048]{0}', space=vmem, size = 0x800, scoped, tag = 'input window, operand 6, single buffered']
    #allocation14 [shape = 'u8[1572864]{0}', space=vmem, size = 0x180000, scoped, tag = 'input window, operand 7, single buffered']
    #allocation15 [shape = 's32[1]{0}', space=sflag, size = 0x4, scoped, tag = 'scoped memory for tpu_custom_call.1']
    #allocation16 [shape = 'u8[3072]{0}', space=vmem, size = 0xc00, scoped, tag = 'input window, operand 8, single buffered']
    #allocation17 [shape = 'u8[2359296]{0}', space=vmem, size = 0x240000, scoped, tag = 'input window, operand 9, single buffered']
    #allocation18 [shape = 's32[1]{0}', space=sflag, size = 0x4, scoped, tag = 'scoped memory for tpu_custom_call.1']
    #allocation19 [shape = 'u8[3072]{0}', space=vmem, size = 0xc00, scoped, tag = 'input window, operand 10, single buffered']
    #allocation20 [shape = 'u8[393216]{0}', space=vmem, size = 0x60000, scoped, tag = 'input window, operand 11, single buffered']
    #allocation21 [shape = 's32[1]{0}', space=sflag, size = 0x4, scoped, tag = 'scoped memory for tpu_custom_call.1']
    #allocation22 [shape = 'u8[512]{0}', space=vmem, size = 0x400, scoped, tag = 'input window, operand 12, single buffered']
    #allocation23 [shape = 'u8[8192]{0}', space=vmem, size = 0x2000, scoped, tag = 'output window, operand 0, single buffered']
    %18 = vsyncpa [#allocation3], 0
    %19 = vsyncpa [#allocation6], 0
    %20 = vsyncpa [#allocation9], 0
    %21 = vsyncpa [#allocation12], 0
    %22 = vsyncpa [#allocation15], 0
    %23 = vsyncpa [#allocation18], 0
    %24 = vsyncpa [#allocation21], 0
    %25 = vsyncpa [#allocation4], 0
    // Predicated region
    $region2: #{tpu_custom_call.1} parent=1 // pred_check
      _
    $region3: #{tpu_custom_call.1} parent=1 // pred_check_branch
      %27 = sbr.rel (0) target = $region5
    $region4: #{tpu_custom_call.1} parent=1 // pred_region
      %s29 = ssub.s32 256, 256
      %30 = vsyncadd [#allocation3], %s29
      %s31 = sshll.u32 [#allocation2], 4
      %s32 = int_to_ptr.vmem [resolvable:$true] %s31
      %37 = dma.hbm_to_vmem [thread:$0]  %s0, 256, %s32, [#allocation3], 128, 128, 8
    $region5: #{tpu_custom_call.1} parent=1 // pred_fallthru
      _
    // Predicated region
    $region6: #{tpu_custom_call.1} parent=1 // pred_check
      _
    $region7: #{tpu_custom_call.1} parent=1 // pred_check_branch
      %39 = sbr.rel (0) target = $region9
    $region8: #{tpu_custom_call.1} parent=1 // pred_region
      %s41 = ssub.s32 4096, 4096
      %42 = vsyncadd [#allocation6], %s41
      %s43 = sshll.u32 [#allocation5], 4
      %s44 = int_to_ptr.vmem [resolvable:$true] %s43
      %49 = dma.hbm_to_vmem [thread:$0]  %s1, 4096, %s44, [#allocation6], 512, 512, 32
    $region9: #{tpu_custom_call.1} parent=1 // pred_fallthru
      _
    // Predicated region
    $region10: #{tpu_custom_call.1} parent=1 // pred_check
      _
    $region11: #{tpu_custom_call.1} parent=1 // pred_check_branch
      %51 = sbr.rel (0) target = $region13
    $region12: #{tpu_custom_call.1} parent=1 // pred_region
      %s53 = ssub.s32 64, 64
      %54 = vsyncadd [#allocation6], %s53
      %s56 = sshll.u32 [#allocation7], 4
      %s57 = int_to_ptr.vmem [resolvable:$true] %s56
      %59 = dma.hbm_to_vmem [thread:$0]  %s2, 64, %s57, [#allocation6]
    $region13: #{tpu_custom_call.1} parent=1 // pred_fallthru
      _
    // Predicated region
    $region14: #{tpu_custom_call.1} parent=1 // pred_check
      _
    $region15: #{tpu_custom_call.1} parent=1 // pred_check_branch
      %61 = sbr.rel (0) target = $region17
    $region16: #{tpu_custom_call.1} parent=1 // pred_region
      %s63 = ssub.s32 32768, 32768
      %64 = vsyncadd [#allocation9], %s63
      %s65 = sshll.u32 [#allocation8], 4
      %s66 = int_to_ptr.vmem [resolvable:$true] %s65
      %71 = dma.hbm_to_vmem [thread:$0]  %s3, 32768, %s66, [#allocation9], 512, 512, 32
    $region17: #{tpu_custom_call.1} parent=1 // pred_fallthru
      _
    // Predicated region
    $region18: #{tpu_custom_call.1} parent=1 // pred_check
      _
    $region19: #{tpu_custom_call.1} parent=1 // pred_check_branch
      %73 = sbr.rel (0) target = $region21
    $region20: #{tpu_custom_call.1} parent=1 // pred_region
      %s75 = ssub.s32 64, 64
      %76 = vsyncadd [#allocation9], %s75
      %s78 = sshll.u32 [#allocation10], 4
      %s79 = int_to_ptr.vmem [resolvable:$true] %s78
      %81 = dma.hbm_to_vmem [thread:$0]  %s4, 64, %s79, [#allocation9]
    $region21: #{tpu_custom_call.1} parent=1 // pred_fallthru
      _
    // Predicated region
    $region22: #{tpu_custom_call.1} parent=1 // pred_check
      _
    $region23: #{tpu_custom_call.1} parent=1 // pred_check_branch
      %83 = sbr.rel (0) target = $region25
    $region24: #{tpu_custom_call.1} parent=1 // pred_region
      %s85 = ssub.s32 32768, 32768
      %86 = vsyncadd [#allocation12], %s85
      %s87 = sshll.u32 [#allocation11], 4
      %s88 = int_to_ptr.vmem [resolvable:$true] %s87
      %93 = dma.hbm_to_vmem [thread:$0]  %s5, 32768, %s88, [#allocation12], 512, 512, 32
    $region25: #{tpu_custom_call.1} parent=1 // pred_fallthru
      _
    // Predicated region
    $region26: #{tpu_custom_call.1} parent=1 // pred_check
      _
    $region27: #{tpu_custom_call.1} parent=1 // pred_check_branch
      %95 = sbr.rel (0) target = $region29
    $region28: #{tpu_custom_call.1} parent=1 // pred_region
      %s97 = ssub.s32 64, 64
      %98 = vsyncadd [#allocation12], %s97
      %s100 = sshll.u32 [#allocation13], 4
      %s101 = int_to_ptr.vmem [resolvable:$true] %s100
      %103 = dma.hbm_to_vmem [thread:$0]  %s6, 64, %s101, [#allocation12]
    $region29: #{tpu_custom_call.1} parent=1 // pred_fallthru
      _
    // Predicated region
    $region30: #{tpu_custom_call.1} parent=1 // pred_check
      _
    $region31: #{tpu_custom_call.1} parent=1 // pred_check_branch
      %105 = sbr.rel (0) target = $region33
    $region32: #{tpu_custom_call.1} parent=1 // pred_region
      %s107 = ssub.s32 49152, 49152
      %108 = vsyncadd [#allocation15], %s107
      %s109 = sshll.u32 [#allocation14], 4
      %s110 = int_to_ptr.vmem [resolvable:$true] %s109
      %115 = dma.hbm_to_vmem [thread:$0]  %s7, 49152, %s110, [#allocation15], 768, 768, 48
    $region33: #{tpu_custom_call.1} parent=1 // pred_fallthru
      _
    // Predicated region
    $region34: #{tpu_custom_call.1} parent=1 // pred_check
      _
    $region35: #{tpu_custom_call.1} parent=1 // pred_check_branch
      %117 = sbr.rel (0) target = $region37
    $region36: #{tpu_custom_call.1} parent=1 // pred_region
      %s119 = ssub.s32 96, 96
      %120 = vsyncadd [#allocation15], %s119
      %s122 = sshll.u32 [#allocation16], 4
      %s123 = int_to_ptr.vmem [resolvable:$true] %s122
      %125 = dma.hbm_to_vmem [thread:$0]  %s8, 96, %s123, [#allocation15]
    $region37: #{tpu_custom_call.1} parent=1 // pred_fallthru
      _
    // Predicated region
    $region38: #{tpu_custom_call.1} parent=1 // pred_check
      _
    $region39: #{tpu_custom_call.1} parent=1 // pred_check_branch
      %127 = sbr.rel (0) target = $region41
    $region40: #{tpu_custom_call.1} parent=1 // pred_region
      %s129 = ssub.s32 73728, 73728
      %130 = vsyncadd [#allocation18], %s129
      %s131 = sshll.u32 [#allocation17], 4
      %s132 = int_to_ptr.vmem [resolvable:$true] %s131
      %137 = dma.hbm_to_vmem [thread:$0]  %s9, 73728, %s132, [#allocation18], 768, 768, 48
    $region41: #{tpu_custom_call.1} parent=1 // pred_fallthru
      _
    // Predicated region
    $region42: #{tpu_custom_call.1} parent=1 // pred_check
      _
    $region43: #{tpu_custom_call.1} parent=1 // pred_check_branch
      %139 = sbr.rel (0) target = $region45
    $region44: #{tpu_custom_call.1} parent=1 // pred_region
      %s141 = ssub.s32 96, 96
      %142 = vsyncadd [#allocation18], %s141
      %s144 = sshll.u32 [#allocation19], 4
      %s145 = int_to_ptr.vmem [resolvable:$true] %s144
      %147 = dma.hbm_to_vmem [thread:$0]  %s10, 96, %s145, [#allocation18]
    $region45: #{tpu_custom_call.1} parent=1 // pred_fallthru
      _
    // Predicated region
    $region46: #{tpu_custom_call.1} parent=1 // pred_check
      _
    $region47: #{tpu_custom_call.1} parent=1 // pred_check_branch
      %149 = sbr.rel (0) target = $region49
    $region48: #{tpu_custom_call.1} parent=1 // pred_region
      %s151 = ssub.s32 12288, 12288
      %152 = vsyncadd [#allocation21], %s151
      %s153 = sshll.u32 [#allocation20], 4
      %s154 = int_to_ptr.vmem [resolvable:$true] %s153
      %159 = dma.hbm_to_vmem [thread:$0]  %s11, 12288, %s154, [#allocation21], 128, 128, 8
    $region49: #{tpu_custom_call.1} parent=1 // pred_fallthru
      _
    // Predicated region
    $region50: #{tpu_custom_call.1} parent=1 // pred_check
      _
    $region51: #{tpu_custom_call.1} parent=1 // pred_check_branch
      %161 = sbr.rel (0) target = $region53
    $region52: #{tpu_custom_call.1} parent=1 // pred_region
      %s163 = ssub.s32 16, 16
      %164 = vsyncadd [#allocation21], %s163
      %s166 = sshll.u32 [#allocation22], 4
      %s167 = int_to_ptr.vmem [resolvable:$true] %s166
      %169 = dma.hbm_to_vmem [thread:$0]  %s12, 16, %s167, [#allocation21]
    $region53: #{tpu_custom_call.1} parent=1 // pred_fallthru
      _
    // Predicated region
    $region54: #{tpu_custom_call.1} parent=1 // pred_check
      _
    $region55: #{tpu_custom_call.1} parent=1 // pred_check_branch
      %171 = sbr.rel (0) target = $region57
    $region56: #{tpu_custom_call.1} parent=1 // pred_region
      %172 = dma.done [#allocation3], 256
    $region57: #{tpu_custom_call.1} parent=1 // pred_fallthru
      _
    // Predicated region
    $region58: #{tpu_custom_call.1} parent=1 // pred_check
      _
    $region59: #{tpu_custom_call.1} parent=1 // pred_check_branch
      %174 = sbr.rel (0) target = $region61
    $region60: #{tpu_custom_call.1} parent=1 // pred_region
      %175 = dma.done [#allocation6], 4096
    $region61: #{tpu_custom_call.1} parent=1 // pred_fallthru
      _
    // Predicated region
    $region62: #{tpu_custom_call.1} parent=1 // pred_check
      _
    $region63: #{tpu_custom_call.1} parent=1 // pred_check_branch
      %177 = sbr.rel (0) target = $region65
    $region64: #{tpu_custom_call.1} parent=1 // pred_region
      %178 = dma.done [#allocation6], 64
    $region65: #{tpu_custom_call.1} parent=1 // pred_fallthru
      _
    // Predicated region
    $region66: #{tpu_custom_call.1} parent=1 // pred_check
      _
    $region67: #{tpu_custom_call.1} parent=1 // pred_check_branch
      %180 = sbr.rel (0) target = $region69
    $region68: #{tpu_custom_call.1} parent=1 // pred_region
      %181 = dma.done [#allocation9], 32768
    $region69: #{tpu_custom_call.1} parent=1 // pred_fallthru
      _
    // Predicated region
    $region70: #{tpu_custom_call.1} parent=1 // pred_check
      _
    $region71: #{tpu_custom_call.1} parent=1 // pred_check_branch
      %183 = sbr.rel (0) target = $region73
    $region72: #{tpu_custom_call.1} parent=1 // pred_region
      %184 = dma.done [#allocation9], 64
    $region73: #{tpu_custom_call.1} parent=1 // pred_fallthru
      _
    // Predicated region
    $region74: #{tpu_custom_call.1} parent=1 // pred_check
      _
    $region75: #{tpu_custom_call.1} parent=1 // pred_check_branch
      %186 = sbr.rel (0) target = $region77
    $region76: #{tpu_custom_call.1} parent=1 // pred_region
      %187 = dma.done [#allocation12], 32768
    $region77: #{tpu_custom_call.1} parent=1 // pred_fallthru
      _
    // Predicated region
    $region78: #{tpu_custom_call.1} parent=1 // pred_check
      _
    $region79: #{tpu_custom_call.1} parent=1 // pred_check_branch
      %189 = sbr.rel (0) target = $region81
    $region80: #{tpu_custom_call.1} parent=1 // pred_region
      %190 = dma.done [#allocation12], 64
    $region81: #{tpu_custom_call.1} parent=1 // pred_fallthru
      _
    // Predicated region
    $region82: #{tpu_custom_call.1} parent=1 // pred_check
      _
    $region83: #{tpu_custom_call.1} parent=1 // pred_check_branch
      %192 = sbr.rel (0) target = $region85
    $region84: #{tpu_custom_call.1} parent=1 // pred_region
      %193 = dma.done [#allocation15], 49152
    $region85: #{tpu_custom_call.1} parent=1 // pred_fallthru
      _
    // Predicated region
    $region86: #{tpu_custom_call.1} parent=1 // pred_check
      _
    $region87: #{tpu_custom_call.1} parent=1 // pred_check_branch
      %195 = sbr.rel (0) target = $region89
    $region88: #{tpu_custom_call.1} parent=1 // pred_region
      %196 = dma.done [#allocation15], 96
    $region89: #{tpu_custom_call.1} parent=1 // pred_fallthru
      _
    // Predicated region
    $region90: #{tpu_custom_call.1} parent=1 // pred_check
      _
    $region91: #{tpu_custom_call.1} parent=1 // pred_check_branch
      %198 = sbr.rel (0) target = $region93
    $region92: #{tpu_custom_call.1} parent=1 // pred_region
      %199 = dma.done [#allocation18], 73728
    $region93: #{tpu_custom_call.1} parent=1 // pred_fallthru
      _
    // Predicated region
    $region94: #{tpu_custom_call.1} parent=1 // pred_check
      _
    $region95: #{tpu_custom_call.1} parent=1 // pred_check_branch
      %201 = sbr.rel (0) target = $region97
    $region96: #{tpu_custom_call.1} parent=1 // pred_region
      %202 = dma.done [#allocation18], 96
    $region97: #{tpu_custom_call.1} parent=1 // pred_fallthru
      _
    // Predicated region
    $region98: #{tpu_custom_call.1} parent=1 // pred_check
      _
    $region99: #{tpu_custom_call.1} parent=1 // pred_check_branch
      %204 = sbr.rel (0) target = $region101
    $region100: #{tpu_custom_call.1} parent=1 // pred_region
      %205 = dma.done [#allocation21], 12288
    $region101: #{tpu_custom_call.1} parent=1 // pred_fallthru
      _
    // Predicated region
    $region102: #{tpu_custom_call.1} parent=1 // pred_check
      _
    $region103: #{tpu_custom_call.1} parent=1 // pred_check_branch
      %207 = sbr.rel (0) target = $region105
    $region104: #{tpu_custom_call.1} parent=1 // pred_region
      %208 = dma.done [#allocation21], 16
    $region105: #{tpu_custom_call.1} parent=1 // pred_fallthru
      _
    %v209 = vld [vmem:[#allocation2] sm:$0xff]
    %v210 = vld [vmem:[#allocation2 + $0x8] sm:$0xff]
    %v211 = vld [vmem:[#allocation5] sm:$0xff]
    %v212 = vld [vmem:[#allocation5 + $0x8] sm:$0xff]
    %v213 = vld [vmem:[#allocation5 + $0x10] sm:$0xff]
    %v214 = vld [vmem:[#allocation5 + $0x18] sm:$0xff]
    %v215 = vld [vmem:[#allocation5 + $0x20] sm:$0xff]
    %v216 = vld [vmem:[#allocation5 + $0x28] sm:$0xff]
    %v217 = vld [vmem:[#allocation5 + $0x30] sm:$0xff]
    %v218 = vld [vmem:[#allocation5 + $0x38] sm:$0xff]
    %v219 = vld [vmem:[#allocation5 + $0x40] sm:$0xff]
    %v220 = vld [vmem:[#allocation5 + $0x48] sm:$0xff]
    %v221 = vld [vmem:[#allocation5 + $0x50] sm:$0xff]
    %v222 = vld [vmem:[#allocation5 + $0x58] sm:$0xff]
    %v223 = vld [vmem:[#allocation5 + $0x60] sm:$0xff]
    %v224 = vld [vmem:[#allocation5 + $0x68] sm:$0xff]
    %v225 = vld [vmem:[#allocation5 + $0x70] sm:$0xff]
    %v226 = vld [vmem:[#allocation5 + $0x78] sm:$0xff]
    %v227 = vld [vmem:[#allocation5 + $0x80] sm:$0xff]
    %v228 = vld [vmem:[#allocation5 + $0x88] sm:$0xff]
    %v229 = vld [vmem:[#allocation5 + $0x90] sm:$0xff]
    %v230 = vld [vmem:[#allocation5 + $0x98] sm:$0xff]
    %v231 = vld [vmem:[#allocation5 + $0xa0] sm:$0xff]
    %v232 = vld [vmem:[#allocation5 + $0xa8] sm:$0xff]
    %v233 = vld [vmem:[#allocation5 + $0xb0] sm:$0xff]
    %v234 = vld [vmem:[#allocation5 + $0xb8] sm:$0xff]
    %v235 = vld [vmem:[#allocation5 + $0xc0] sm:$0xff]
    %v236 = vld [vmem:[#allocation5 + $0xc8] sm:$0xff]
    %v237 = vld [vmem:[#allocation5 + $0xd0] sm:$0xff]
    %v238 = vld [vmem:[#allocation5 + $0xd8] sm:$0xff]
    %v239 = vld [vmem:[#allocation5 + $0xe0] sm:$0xff]
    %v240 = vld [vmem:[#allocation5 + $0xe8] sm:$0xff]
    %v241 = vld [vmem:[#allocation5 + $0xf0] sm:$0xff]
    %v242 = vld [vmem:[#allocation5 + $0xf8] sm:$0xff]
    %v243 = vld [vmem:[#allocation7] sm:$0xf]
    %v244 = vld [vmem:[#allocation8] sm:$0xff]
    %v245 = vld [vmem:[#allocation8 + $0x8] sm:$0xff]
    %v246 = vld [vmem:[#allocation8 + $0x10] sm:$0xff]
    %v247 = vld [vmem:[#allocation8 + $0x18] sm:$0xff]
    %v248 = vld [vmem:[#allocation8 + $0x20] sm:$0xff]
    %v249 = vld [vmem:[#allocation8 + $0x28] sm:$0xff]
    %v250 = vld [vmem:[#allocation8 + $0x30] sm:$0xff]
    %v251 = vld [vmem:[#allocation8 + $0x38] sm:$0xff]
    %v252 = vld [vmem:[#allocation8 + $0x40] sm:$0xff]
    %v253 = vld [vmem:[#allocation8 + $0x48] sm:$0xff]
    %v254 = vld [vmem:[#allocation8 + $0x50] sm:$0xff]
    %v255 = vld [vmem:[#allocation8 + $0x58] sm:$0xff]
    %v256 = vld [vmem:[#allocation8 + $0x60] sm:$0xff]
    %v257 = vld [vmem:[#allocation8 + $0x68] sm:$0xff]
    %v258 = vld [vmem:[#allocation8 + $0x70] sm:$0xff]
    %v259 = vld [vmem:[#allocation8 + $0x78] sm:$0xff]
    %v260 = vld [vmem:[#allocation8 + $0x80] sm:$0xff]
    %v261 = vld [vmem:[#allocation8 + $0x88] sm:$0xff]
    %v262 = vld [vmem:[#allocation8 + $0x90] sm:$0xff]
    %v263 = vld [vmem:[#allocation8 + $0x98] sm:$0xff]
    %v264 = vld [vmem:[#allocation8 + $0xa0] sm:$0xff]
    %v265 = vld [vmem:[#allocation8 + $0xa8] sm:$0xff]
    %v266 = vld [vmem:[#allocation8 + $0xb0] sm:$0xff]
    %v267 = vld [vmem:[#allocation8 + $0xb8] sm:$0xff]
    %v268 = vld [vmem:[#allocation8 + $0xc0] sm:$0xff]
    %v269 = vld [vmem:[#allocation8 + $0xc8] sm:$0xff]
    %v270 = vld [vmem:[#allocation8 + $0xd0] sm:$0xff]
    %v271 = vld [vmem:[#allocation8 + $0xd8] sm:$0xff]
    %v272 = vld [vmem:[#allocation8 + $0xe0] sm:$0xff]
    %v273 = vld [vmem:[#allocation8 + $0xe8] sm:$0xff]
    %v274 = vld [vmem:[#allocation8 + $0xf0] sm:$0xff]
    %v275 = vld [vmem:[#allocation8 + $0xf8] sm:$0xff]
    %v276 = vld [vmem:[#allocation8 + $0x100] sm:$0xff]
    %v277 = vld [vmem:[#allocation8 + $0x108] sm:$0xff]
    %v278 = vld [vmem:[#allocation8 + $0x110] sm:$0xff]
    %v279 = vld [vmem:[#allocation8 + $0x118] sm:$0xff]
    %v280 = vld [vmem:[#allocation8 + $0x120] sm:$0xff]
    %v281 = vld [vmem:[#allocation8 + $0x128] sm:$0xff]
    %v282 = vld [vmem:[#allocation8 + $0x130] sm:$0xff]
    %v283 = vld [vmem:[#allocation8 + $0x138] sm:$0xff]
    %v284 = vld [vmem:[#allocation8 + $0x140] sm:$0xff]
    %v285 = vld [vmem:[#allocation8 + $0x148] sm:$0xff]
    %v286 = vld [vmem:[#allocation8 + $0x150] sm:$0xff]
    %v287 = vld [vmem:[#allocation8 + $0x158] sm:$0xff]
    %v288 = vld [vmem:[#allocation8 + $0x160] sm:$0xff]
    %v289 = vld [vmem:[#allocation8 + $0x168] sm:$0xff]
    %v290 = vld [vmem:[#allocation8 + $0x170] sm:$0xff]
    %v291 = vld [vmem:[#allocation8 + $0x178] sm:$0xff]
    %v292 = vld [vmem:[#allocation8 + $0x180] sm:$0xff]
    %v293 = vld [vmem:[#allocation8 + $0x188] sm:$0xff]
    %v294 = vld [vmem:[#allocation8 + $0x190] sm:$0xff]
    %v295 = vld [vmem:[#allocation8 + $0x198] sm:$0xff]
    %v296 = vld [vmem:[#allocation8 + $0x1a0] sm:$0xff]
    %v297 = vld [vmem:[#allocation8 + $0x1a8] sm:$0xff]
    %v298 = vld [vmem:[#allocation8 + $0x1b0] sm:$0xff]
    %v299 = vld [vmem:[#allocation8 + $0x1b8] sm:$0xff]
    %v300 = vld [vmem:[#allocation8 + $0x1c0] sm:$0xff]
    %v301 = vld [vmem:[#allocation8 + $0x1c8] sm:$0xff]
    %v302 = vld [vmem:[#allocation8 + $0x1d0] sm:$0xff]
    %v303 = vld [vmem:[#allocation8 + $0x1d8] sm:$0xff]
    %v304 = vld [vmem:[#allocation8 + $0x1e0] sm:$0xff]
    %v305 = vld [vmem:[#allocation8 + $0x1e8] sm:$0xff]
    %v306 = vld [vmem:[#allocation8 + $0x1f0] sm:$0xff]
    %v307 = vld [vmem:[#allocation8 + $0x1f8] sm:$0xff]
    %v308 = vld [vmem:[#allocation8 + $0x200] sm:$0xff]
    %v309 = vld [vmem:[#allocation8 + $0x208] sm:$0xff]
    %v310 = vld [vmem:[#allocation8 + $0x210] sm:$0xff]
    %v311 = vld [vmem:[#allocation8 + $0x218] sm:$0xff]
    %v312 = vld [vmem:[#allocation8 + $0x220] sm:$0xff]
    %v313 = vld [vmem:[#allocation8 + $0x228] sm:$0xff]
    %v314 = vld [vmem:[#allocation8 + $0x230] sm:$0xff]
    %v315 = vld [vmem:[#allocation8 + $0x238] sm:$0xff]
    %v316 = vld [vmem:[#allocation8 + $0x240] sm:$0xff]
    %v317 = vld [vmem:[#allocation8 + $0x248] sm:$0xff]
    %v318 = vld [vmem:[#allocation8 + $0x250] sm:$0xff]
    %v319 = vld [vmem:[#allocation8 + $0x258] sm:$0xff]
    %v320 = vld [vmem:[#allocation8 + $0x260] sm:$0xff]
    %v321 = vld [vmem:[#allocation8 + $0x268] sm:$0xff]
    %v322 = vld [vmem:[#allocation8 + $0x270] sm:$0xff]
    %v323 = vld [vmem:[#allocation8 + $0x278] sm:$0xff]
    %v324 = vld [vmem:[#allocation8 + $0x280] sm:$0xff]
    %v325 = vld [vmem:[#allocation8 + $0x288] sm:$0xff]
    %v326 = vld [vmem:[#allocation8 + $0x290] sm:$0xff]
    %v327 = vld [vmem:[#allocation8 + $0x298] sm:$0xff]
    %v328 = vld [vmem:[#allocation8 + $0x2a0] sm:$0xff]
    %v329 = vld [vmem:[#allocation8 + $0x2a8] sm:$0xff]
    %v330 = vld [vmem:[#allocation8 + $0x2b0] sm:$0xff]
    %v331 = vld [vmem:[#allocation8 + $0x2b8] sm:$0xff]
    %v332 = vld [vmem:[#allocation8 + $0x2c0] sm:$0xff]
    %v333 = vld [vmem:[#allocation8 + $0x2c8] sm:$0xff]
    %v334 = vld [vmem:[#allocation8 + $0x2d0] sm:$0xff]
    %v335 = vld [vmem:[#allocation8 + $0x2d8] sm:$0xff]
    %v336 = vld [vmem:[#allocation8 + $0x2e0] sm:$0xff]
    %v337 = vld [vmem:[#allocation8 + $0x2e8] sm:$0xff]
    %v338 = vld [vmem:[#allocation8 + $0x2f0] sm:$0xff]
    %v339 = vld [vmem:[#allocation8 + $0x2f8] sm:$0xff]
    %v340 = vld [vmem:[#allocation8 + $0x300] sm:$0xff]
    %v341 = vld [vmem:[#allocation8 + $0x308] sm:$0xff]
    %v342 = vld [vmem:[#allocation8 + $0x310] sm:$0xff]
    %v343 = vld [vmem:[#allocation8 + $0x318] sm:$0xff]
    %v344 = vld [vmem:[#allocation8 + $0x320] sm:$0xff]
    %v345 = vld [vmem:[#allocation8 + $0x328] sm:$0xff]
    %v346 = vld [vmem:[#allocation8 + $0x330] sm:$0xff]
    %v347 = vld [vmem:[#allocation8 + $0x338] sm:$0xff]
    %v348 = vld [vmem:[#allocation8 + $0x340] sm:$0xff]
    %v349 = vld [vmem:[#allocation8 + $0x348] sm:$0xff]
    %v350 = vld [vmem:[#allocation8 + $0x350] sm:$0xff]
    %v351 = vld [vmem:[#allocation8 + $0x358] sm:$0xff]
    %v352 = vld [vmem:[#allocation8 + $0x360] sm:$0xff]
    %v353 = vld [vmem:[#allocation8 + $0x368] sm:$0xff]
    %v354 = vld [vmem:[#allocation8 + $0x370] sm:$0xff]
    %v355 = vld [vmem:[#allocation8 + $0x378] sm:$0xff]
    %v356 = vld [vmem:[#allocation8 + $0x380] sm:$0xff]
    %v357 = vld [vmem:[#allocation8 + $0x388] sm:$0xff]
    %v358 = vld [vmem:[#allocation8 + $0x390] sm:$0xff]
    %v359 = vld [vmem:[#allocation8 + $0x398] sm:$0xff]
    %v360 = vld [vmem:[#allocation8 + $0x3a0] sm:$0xff]
    %v361 = vld [vmem:[#allocation8 + $0x3a8] sm:$0xff]
    %v362 = vld [vmem:[#allocation8 + $0x3b0] sm:$0xff]
    %v363 = vld [vmem:[#allocation8 + $0x3b8] sm:$0xff]
    %v364 = vld [vmem:[#allocation8 + $0x3c0] sm:$0xff]
    %v365 = vld [vmem:[#allocation8 + $0x3c8] sm:$0xff]
    %v366 = vld [vmem:[#allocation8 + $0x3d0] sm:$0xff]
    %v367 = vld [vmem:[#allocation8 + $0x3d8] sm:$0xff]
    %v368 = vld [vmem:[#allocation8 + $0x3e0] sm:$0xff]
    %v369 = vld [vmem:[#allocation8 + $0x3e8] sm:$0xff]
    %v370 = vld [vmem:[#allocation8 + $0x3f0] sm:$0xff]
    %v371 = vld [vmem:[#allocation8 + $0x3f8] sm:$0xff]
    %v372 = vld [vmem:[#allocation8 + $0x400] sm:$0xff]
    %v373 = vld [vmem:[#allocation8 + $0x408] sm:$0xff]
    %v374 = vld [vmem:[#allocation8 + $0x410] sm:$0xff]
    %v375 = vld [vmem:[#allocation8 + $0x418] sm:$0xff]
    %v376 = vld [vmem:[#allocation8 + $0x420] sm:$0xff]
    %v377 = vld [vmem:[#allocation8 + $0x428] sm:$0xff]
    %v378 = vld [vmem:[#allocation8 + $0x430] sm:$0xff]
    %v379 = vld [vmem:[#allocation8 + $0x438] sm:$0xff]
    %v380 = vld [vmem:[#allocation8 + $0x440] sm:$0xff]
    %v381 = vld [vmem:[#allocation8 + $0x448] sm:$0xff]
    %v382 = vld [vmem:[#allocation8 + $0x450] sm:$0xff]
    %v383 = vld [vmem:[#allocation8 + $0x458] sm:$0xff]
    %v384 = vld [vmem:[#allocation8 + $0x460] sm:$0xff]
    %v385 = vld [vmem:[#allocation8 + $0x468] sm:$0xff]
    %v386 = vld [vmem:[#allocation8 + $0x470] sm:$0xff]
    %v387 = vld [vmem:[#allocation8 + $0x478] sm:$0xff]
    %v388 = vld [vmem:[#allocation8 + $0x480] sm:$0xff]
    %v389 = vld [vmem:[#allocation8 + $0x488] sm:$0xff]
    %v390 = vld [vmem:[#allocation8 + $0x490] sm:$0xff]
    %v391 = vld [vmem:[#allocation8 + $0x498] sm:$0xff]
    %v392 = vld [vmem:[#allocation8 + $0x4a0] sm:$0xff]
    %v393 = vld [vmem:[#allocation8 + $0x4a8] sm:$0xff]
    %v394 = vld [vmem:[#allocation8 + $0x4b0] sm:$0xff]
    %v395 = vld [vmem:[#allocation8 + $0x4b8] sm:$0xff]
    %v396 = vld [vmem:[#allocation8 + $0x4c0] sm:$0xff]
    %v397 = vld [vmem:[#allocation8 + $0x4c8] sm:$0xff]
    %v398 = vld [vmem:[#allocation8 + $0x4d0] sm:$0xff]
    %v399 = vld [vmem:[#allocation8 + $0x4d8] sm:$0xff]
    %v400 = vld [vmem:[#allocation8 + $0x4e0] sm:$0xff]
    %v401 = vld [vmem:[#allocation8 + $0x4e8] sm:$0xff]
    %v402 = vld [vmem:[#allocation8 + $0x4f0] sm:$0xff]
    %v403 = vld [vmem:[#allocation8 + $0x4f8] sm:$0xff]
    %v404 = vld [vmem:[#allocation8 + $0x500] sm:$0xff]
    %v405 = vld [vmem:[#allocation8 + $0x508] sm:$0xff]
    %v406 = vld [vmem:[#allocation8 + $0x510] sm:$0xff]
    %v407 = vld [vmem:[#allocation8 + $0x518] sm:$0xff]
    %v408 = vld [vmem:[#allocation8 + $0x520] sm:$0xff]
    %v409 = vld [vmem:[#allocation8 + $0x528] sm:$0xff]
    %v410 = vld [vmem:[#allocation8 + $0x530] sm:$0xff]
    %v411 = vld [vmem:[#allocation8 + $0x538] sm:$0xff]
    %v412 = vld [vmem:[#allocation8 + $0x540] sm:$0xff]
    %v413 = vld [vmem:[#allocation8 + $0x548] sm:$0xff]
    %v414 = vld [vmem:[#allocation8 + $0x550] sm:$0xff]
    %v415 = vld [vmem:[#allocation8 + $0x558] sm:$0xff]
    %v416 = vld [vmem:[#allocation8 + $0x560] sm:$0xff]
    %v417 = vld [vmem:[#allocation8 + $0x568] sm:$0xff]
    %v418 = vld [vmem:[#allocation8 + $0x570] sm:$0xff]
    %v419 = vld [vmem:[#allocation8 + $0x578] sm:$0xff]
    %v420 = vld [vmem:[#allocation8 + $0x580] sm:$0xff]
    %v421 = vld [vmem:[#allocation8 + $0x588] sm:$0xff]
    %v422 = vld [vmem:[#allocation8 + $0x590] sm:$0xff]
    %v423 = vld [vmem:[#allocation8 + $0x598] sm:$0xff]
    %v424 = vld [vmem:[#allocation8 + $0x5a0] sm:$0xff]
    %v425 = vld [vmem:[#allocation8 + $0x5a8] sm:$0xff]
    %v426 = vld [vmem:[#allocation8 + $0x5b0] sm:$0xff]
    %v427 = vld [vmem:[#allocation8 + $0x5b8] sm:$0xff]
    %v428 = vld [vmem:[#allocation8 + $0x5c0] sm:$0xff]
    %v429 = vld [vmem:[#allocation8 + $0x5c8] sm:$0xff]
    %v430 = vld [vmem:[#allocation8 + $0x5d0] sm:$0xff]
    %v431 = vld [vmem:[#allocation8 + $0x5d8] sm:$0xff]
    %v432 = vld [vmem:[#allocation8 + $0x5e0] sm:$0xff]
    %v433 = vld [vmem:[#allocation8 + $0x5e8] sm:$0xff]
    %v434 = vld [vmem:[#allocation8 + $0x5f0] sm:$0xff]
    %v435 = vld [vmem:[#allocation8 + $0x5f8] sm:$0xff]
    %v436 = vld [vmem:[#allocation8 + $0x600] sm:$0xff]
    %v437 = vld [vmem:[#allocation8 + $0x608] sm:$0xff]
    %v438 = vld [vmem:[#allocation8 + $0x610] sm:$0xff]
    %v439 = vld [vmem:[#allocation8 + $0x618] sm:$0xff]
    %v440 = vld [vmem:[#allocation8 + $0x620] sm:$0xff]
    %v441 = vld [vmem:[#allocation8 + $0x628] sm:$0xff]
    %v442 = vld [vmem:[#allocation8 + $0x630] sm:$0xff]
    %v443 = vld [vmem:[#allocation8 + $0x638] sm:$0xff]
    %v444 = vld [vmem:[#allocation8 + $0x640] sm:$0xff]
    %v445 = vld [vmem:[#allocation8 + $0x648] sm:$0xff]
    %v446 = vld [vmem:[#allocation8 + $0x650] sm:$0xff]
    %v447 = vld [vmem:[#allocation8 + $0x658] sm:$0xff]
    %v448 = vld [vmem:[#allocation8 + $0x660] sm:$0xff]
    %v449 = vld [vmem:[#allocation8 + $0x668] sm:$0xff]
    %v450 = vld [vmem:[#allocation8 + $0x670] sm:$0xff]
    %v451 = vld [vmem:[#allocation8 + $0x678] sm:$0xff]
    %v452 = vld [vmem:[#allocation8 + $0x680] sm:$0xff]
    %v453 = vld [vmem:[#allocation8 + $0x688] sm:$0xff]
    %v454 = vld [vmem:[#allocation8 + $0x690] sm:$0xff]
    %v455 = vld [vmem:[#allocation8 + $0x698] sm:$0xff]
    %v456 = vld [vmem:[#allocation8 + $0x6a0] sm:$0xff]
    %v457 = vld [vmem:[#allocation8 + $0x6a8] sm:$0xff]
    %v458 = vld [vmem:[#allocation8 + $0x6b0] sm:$0xff]
    %v459 = vld [vmem:[#allocation8 + $0x6b8] sm:$0xff]
    %v460 = vld [vmem:[#allocation8 + $0x6c0] sm:$0xff]
    %v461 = vld [vmem:[#allocation8 + $0x6c8] sm:$0xff]
    %v462 = vld [vmem:[#allocation8 + $0x6d0] sm:$0xff]
    %v463 = vld [vmem:[#allocation8 + $0x6d8] sm:$0xff]
    %v464 = vld [vmem:[#allocation8 + $0x6e0] sm:$0xff]
    %v465 = vld [vmem:[#allocation8 + $0x6e8] sm:$0xff]
    %v466 = vld [vmem:[#allocation8 + $0x6f0] sm:$0xff]
    %v467 = vld [vmem:[#allocation8 + $0x6f8] sm:$0xff]
    %v468 = vld [vmem:[#allocation8 + $0x700] sm:$0xff]
    %v469 = vld [vmem:[#allocation8 + $0x708] sm:$0xff]
    %v470 = vld [vmem:[#allocation8 + $0x710] sm:$0xff]
    %v471 = vld [vmem:[#allocation8 + $0x718] sm:$0xff]
    %v472 = vld [vmem:[#allocation8 + $0x720] sm:$0xff]
    %v473 = vld [vmem:[#allocation8 + $0x728] sm:$0xff]
    %v474 = vld [vmem:[#allocation8 + $0x730] sm:$0xff]
    %v475 = vld [vmem:[#allocation8 + $0x738] sm:$0xff]
    %v476 = vld [vmem:[#allocation8 + $0x740] sm:$0xff]
    %v477 = vld [vmem:[#allocation8 + $0x748] sm:$0xff]
    %v478 = vld [vmem:[#allocation8 + $0x750] sm:$0xff]
    %v479 = vld [vmem:[#allocation8 + $0x758] sm:$0xff]
    %v480 = vld [vmem:[#allocation8 + $0x760] sm:$0xff]
    %v481 = vld [vmem:[#allocation8 + $0x768] sm:$0xff]
    %v482 = vld [vmem:[#allocation8 + $0x770] sm:$0xff]
    %v483 = vld [vmem:[#allocation8 + $0x778] sm:$0xff]
    %v484 = vld [vmem:[#allocation8 + $0x780] sm:$0xff]
    %v485 = vld [vmem:[#allocation8 + $0x788] sm:$0xff]
    %v486 = vld [vmem:[#allocation8 + $0x790] sm:$0xff]
    %v487 = vld [vmem:[#allocation8 + $0x798] sm:$0xff]
    %v488 = vld [vmem:[#allocation8 + $0x7a0] sm:$0xff]
    %v489 = vld [vmem:[#allocation8 + $0x7a8] sm:$0xff]
    %v490 = vld [vmem:[#allocation8 + $0x7b0] sm:$0xff]
    %v491 = vld [vmem:[#allocation8 + $0x7b8] sm:$0xff]
    %v492 = vld [vmem:[#allocation8 + $0x7c0] sm:$0xff]
    %v493 = vld [vmem:[#allocation8 + $0x7c8] sm:$0xff]
    %v494 = vld [vmem:[#allocation8 + $0x7d0] sm:$0xff]
    %v495 = vld [vmem:[#allocation8 + $0x7d8] sm:$0xff]
    %v496 = vld [vmem:[#allocation8 + $0x7e0] sm:$0xff]
    %v497 = vld [vmem:[#allocation8 + $0x7e8] sm:$0xff]
    %v498 = vld [vmem:[#allocation8 + $0x7f0] sm:$0xff]
    %v499 = vld [vmem:[#allocation8 + $0x7f8] sm:$0xff]
    %v500 = vld [vmem:[#allocation10] sm:$0xf]
    %vm501 = vcmask 523264
    %v503 = vsel %vm501, %v209, 0
    %505 = vmatprep.subr.mxu0 0.0
    %506 = vmatpush1.xpose.msra.mxu0 %v503
    %507 = vmatprep.subr.mxu0 0.0
    %508 = vmatpush1.xpose.msra.mxu0 0.0
    %509 = vmatprep.subr.mxu0 0.0
    %510 = vmatpush1.xpose.msra.mxu0 0.0
    %511 = vmatprep.subr.mxu0 0.0
    %512 = vmatpush1.xpose.msra.mxu0 0.0
    %513 = vmatprep.subr.mxu0 0.0
    %514 = vmatpush1.xpose.msra.mxu0 0.0
    %515 = vmatprep.subr.mxu0 0.0
    %516 = vmatpush1.xpose.msra.mxu0 0.0
    %517 = vmatprep.subr.mxu0 0.0
    %518 = vmatpush1.xpose.msra.mxu0 0.0
    %519 = vmatprep.subr.mxu0 0.0
    %520 = vmatpush1.xpose.msra.mxu0 0.0
    %521 = vmatprep.subr.mxu0 0.0
    %522 = vmatpush1.xpose.msra.mxu0 0.0
    %523 = vmatprep.subr.mxu0 0.0
    %524 = vmatpush1.xpose.msra.mxu0 0.0
    %525 = vmatprep.subr.mxu0 0.0
    %526 = vmatpush1.xpose.msra.mxu0 0.0
    %527 = vmatprep.subr.mxu0 0.0
    %528 = vmatpush1.xpose.msra.mxu0 0.0
    %529 = vmatprep.subr.mxu0 0.0
    %530 = vmatpush1.xpose.msra.mxu0 0.0
    %531 = vmatprep.subr.mxu0 0.0
    %532 = vmatpush1.xpose.msra.mxu0 0.0
    %533 = vmatprep.subr.mxu0 0.0
    %534 = vmatpush1.xpose.msra.mxu0 0.0
    %535 = vmatprep.subr.mxu0 0.0
    %536 = vmatpush1.xpose.msra.mxu0 0.0
    %537 = vmatprep.subr.mxu0 0.0
    %538 = vmatpush1.xpose.msra.mxu0 0.0
    %539 = vmatprep.subr.mxu0 0.0
    %540 = vmatpush1.xpose.msra.mxu0 0.0
    %541 = vmatprep.subr.mxu0 0.0
    %542 = vmatpush1.xpose.msra.mxu0 0.0
    %543 = vmatprep.subr.mxu0 0.0
    %544 = vmatpush1.xpose.msra.mxu0 0.0
    %545 = vmatprep.subr.mxu0 0.0
    %546 = vmatpush1.xpose.msra.mxu0 0.0
    %547 = vmatprep.subr.mxu0 0.0
    %548 = vmatpush1.xpose.msra.mxu0 0.0
    %549 = vmatprep.subr.mxu0 0.0
    %550 = vmatpush1.xpose.msra.mxu0 0.0
    %551 = vmatprep.subr.mxu0 0.0
    %552 = vmatpush1.xpose.msra.mxu0 0.0
    %553 = vmatprep.subr.mxu0 0.0
    %554 = vmatpush1.xpose.msra.mxu0 0.0
    %555 = vmatprep.subr.mxu0 0.0
    %556 = vmatpush1.xpose.msra.mxu0 0.0
    %557 = vmatprep.subr.mxu0 0.0
    %558 = vmatpush1.xpose.msra.mxu0 0.0
    %559 = vmatprep.subr.mxu0 0.0
    %560 = vmatpush1.xpose.msra.mxu0 0.0
    %561 = vmatprep.subr.mxu0 0.0
    %562 = vmatpush1.xpose.msra.mxu0 0.0
    %563 = vmatprep.subr.mxu0 0.0
    %564 = vmatpush1.xpose.msra.mxu0 0.0
    %565 = vmatprep.subr.mxu0 0.0
    %566 = vmatpush1.xpose.msra.mxu0 0.0
    %567 = vmatprep.subr.mxu0 0.0
    %568 = vmatpush1.xpose.msra.mxu0 0.0
    %569 = vmatprep.mubr.f32.mxu0 0.0
    %570 = vmatmul.mubr.f32.gmra.mrb[0].mxu0 %v503
    %v571 = vpop.f32.mrb[0].mxu0
    %v572 = vadd.f32 0.0, %v571
    %v573 = vpop.f32.mrb[0].mxu0
    %574 = vdwg.mxu0
    %v576 = vsel %vm501, %v210, 0
    %578 = vmatprep.subr.mxu0 0.0
    %579 = vmatpush1.xpose.msra.mxu0 %v576
    %580 = vmatprep.subr.mxu0 0.0
    %581 = vmatpush1.xpose.msra.mxu0 0.0
    %582 = vmatprep.subr.mxu0 0.0
    %583 = vmatpush1.xpose.msra.mxu0 0.0
    %584 = vmatprep.subr.mxu0 0.0
    %585 = vmatpush1.xpose.msra.mxu0 0.0
    %586 = vmatprep.subr.mxu0 0.0
    %587 = vmatpush1.xpose.msra.mxu0 0.0
    %588 = vmatprep.subr.mxu0 0.0
    %589 = vmatpush1.xpose.msra.mxu0 0.0
    %590 = vmatprep.subr.mxu0 0.0
    %591 = vmatpush1.xpose.msra.mxu0 0.0
    %592 = vmatprep.subr.mxu0 0.0
    %593 = vmatpush1.xpose.msra.mxu0 0.0
    %594 = vmatprep.subr.mxu0 0.0
    %595 = vmatpush1.xpose.msra.mxu0 0.0
    %596 = vmatprep.subr.mxu0 0.0
    %597 = vmatpush1.xpose.msra.mxu0 0.0
    %598 = vmatprep.subr.mxu0 0.0
    %599 = vmatpush1.xpose.msra.mxu0 0.0
    %600 = vmatprep.subr.mxu0 0.0
    %601 = vmatpush1.xpose.msra.mxu0 0.0
    %602 = vmatprep.subr.mxu0 0.0
    %603 = vmatpush1.xpose.msra.mxu0 0.0
    %604 = vmatprep.subr.mxu0 0.0
    %605 = vmatpush1.xpose.msra.mxu0 0.0
    %606 = vmatprep.subr.mxu0 0.0
    %607 = vmatpush1.xpose.msra.mxu0 0.0
    %608 = vmatprep.subr.mxu0 0.0
    %609 = vmatpush1.xpose.msra.mxu0 0.0
    %610 = vmatprep.subr.mxu0 0.0
    %611 = vmatpush1.xpose.msra.mxu0 0.0
    %612 = vmatprep.subr.mxu0 0.0
    %613 = vmatpush1.xpose.msra.mxu0 0.0
    %614 = vmatprep.subr.mxu0 0.0
    %615 = vmatpush1.xpose.msra.mxu0 0.0
    %616 = vmatprep.subr.mxu0 0.0
    %617 = vmatpush1.xpose.msra.mxu0 0.0
    %618 = vmatprep.subr.mxu0 0.0
    %619 = vmatpush1.xpose.msra.mxu0 0.0
    %620 = vmatprep.subr.mxu0 0.0
    %621 = vmatpush1.xpose.msra.mxu0 0.0
    %622 = vmatprep.subr.mxu0 0.0
    %623 = vmatpush1.xpose.msra.mxu0 0.0
    %624 = vmatprep.subr.mxu0 0.0
    %625 = vmatpush1.xpose.msra.mxu0 0.0
    %626 = vmatprep.subr.mxu0 0.0
    %627 = vmatpush1.xpose.msra.mxu0 0.0
    %628 = vmatprep.subr.mxu0 0.0
    %629 = vmatpush1.xpose.msra.mxu0 0.0
    %630 = vmatprep.subr.mxu0 0.0
    %631 = vmatpush1.xpose.msra.mxu0 0.0
    %632 = vmatprep.subr.mxu0 0.0
    %633 = vmatpush1.xpose.msra.mxu0 0.0
    %634 = vmatprep.subr.mxu0 0.0
    %635 = vmatpush1.xpose.msra.mxu0 0.0
    %636 = vmatprep.subr.mxu0 0.0
    %637 = vmatpush1.xpose.msra.mxu0 0.0
    %638 = vmatprep.subr.mxu0 0.0
    %639 = vmatpush1.xpose.msra.mxu0 0.0
    %640 = vmatprep.subr.mxu0 0.0
    %641 = vmatpush1.xpose.msra.mxu0 0.0
    %642 = vmatprep.mubr.f32.mxu0 0.0
    %643 = vmatmul.mubr.f32.gmra.mrb[0].mxu0 %v576
    %v644 = vpop.f32.mrb[0].mxu0
    %v645 = vadd.f32 0.0, %v644
    %v646 = vpop.f32.mrb[0].mxu0
    %647 = vdwg.mxu0
    %v648 = vmul.f32 %v209, %v209
    %v649 = vmul.f32 %v210, %v210
    %v650 = vsel %vm501, %v648, 0.0
    %651 = vadd.xlane.f32.xlu0 %v650
    %v652 = vpop.xlane.xlu0 %651
    %v653 = vsel %vm501, %v649, 0.0
    %654 = vadd.xlane.f32.xlu0 %v653
    %v655 = vpop.xlane.xlu0 %654
    %v658 = vlaneseq
    %v659 = vand.u32 %v658, 127
    %v660 = vlaneseq
    %v661 = vshrl.u32 %v660, 7
    %v662 = vsub.s32 %v659, %v661
    %v663 = vrot.slane %v652, %v662
    %v664 = vlaneseq
    %v665 = vshrl.u32 %v664, 7
    %v666 = vsub.s32 %v659, %v665
    %v667 = vrot.slane %v655, %v666
    %vm668 = vcmask 1042434
    %v669 = vsel %vm668, %v663, %v663
    %vm670 = vcmask 1043459
    %v671 = vsel %vm670, %v663, %v669
    %vm672 = vcmask 1044484
    %v673 = vsel %vm672, %v663, %v671
    %vm674 = vcmask 1045509
    %v675 = vsel %vm674, %v663, %v673
    %vm676 = vcmask 1046534
    %v677 = vsel %vm676, %v663, %v675
    %vm678 = vcmask 1047559
    %v679 = vsel %vm678, %v663, %v677
    %v680 = vsel %vm668, %v667, %v667
    %v681 = vsel %vm670, %v667, %v680
    %v682 = vsel %vm672, %v667, %v681
    %v683 = vsel %vm674, %v667, %v682
    %v684 = vsel %vm676, %v667, %v683
    %v685 = vsel %vm678, %v667, %v684
    %v688 = vadd.f32 %v652, %v679
    %v689 = vadd.f32 %v655, %v685
    %v690 = vmul.f32 %v572, 2.0
    %v691 = vmul.f32 %v645, 2.0
    %v692 = vsub.f32 %v688, %v690
    %v693 = vsub.f32 %v689, %v691
    %v694 = vmax.f32 %v692, 0.0
    %v695 = vmax.f32 %v693, 0.0
    %v696 = vsub.f32 0.0, %v694
    %v697 = vsub.f32 0.0, %v695
    %v698 = vmul.f32 %v696, 1.442695
    %v699 = vpow.pop %v698
    %v700 = vmul.f32 %v697, 1.442695
    %v701 = vpow.pop %v700
    %vm702 = vcmask 64512
    %v703 = vsel %vm702, %v699, 0.0
    %704 = vadd.xlane.f32.xlu0 %v703
    %v705 = vpop.xlane.xlu0 %704
    %v706 = vsel %vm702, %v701, 0.0
    %707 = vadd.xlane.f32.xlu0 %v706
    %v708 = vpop.xlane.xlu0 %707
    %v709 = vrcp.pop %v705
    %v710 = vrcp.pop %v708
    %v711 = vmul.f32 %v699, %v709
    %v712 = vmul.f32 %v701, %v710
    %v714 = vsel %vm702, %v711, 0
    %716 = vmatprep.subr.mxu0 0.0
    %717 = vmatpush1.msra.mxu0 %v209
    %718 = vmatprep.subr.mxu0 0.0
    %719 = vmatpush1.msra.mxu0 0.0
    %720 = vmatprep.subr.mxu0 0.0
    %721 = vmatpush1.msra.mxu0 0.0
    %722 = vmatprep.subr.mxu0 0.0
    %723 = vmatpush1.msra.mxu0 0.0
    %724 = vmatprep.subr.mxu0 0.0
    %725 = vmatpush1.msra.mxu0 0.0
    %726 = vmatprep.subr.mxu0 0.0
    %727 = vmatpush1.msra.mxu0 0.0
    %728 = vmatprep.subr.mxu0 0.0
    %729 = vmatpush1.msra.mxu0 0.0
    %730 = vmatprep.subr.mxu0 0.0
    %731 = vmatpush1.msra.mxu0 0.0
    %732 = vmatprep.subr.mxu0 0.0
    %733 = vmatpush1.msra.mxu0 0.0
    %734 = vmatprep.subr.mxu0 0.0
    %735 = vmatpush1.msra.mxu0 0.0
    %736 = vmatprep.subr.mxu0 0.0
    %737 = vmatpush1.msra.mxu0 0.0
    %738 = vmatprep.subr.mxu0 0.0
    %739 = vmatpush1.msra.mxu0 0.0
    %740 = vmatprep.subr.mxu0 0.0
    %741 = vmatpush1.msra.mxu0 0.0
    %742 = vmatprep.subr.mxu0 0.0
    %743 = vmatpush1.msra.mxu0 0.0
    %744 = vmatprep.subr.mxu0 0.0
    %745 = vmatpush1.msra.mxu0 0.0
    %746 = vmatprep.subr.mxu0 0.0
    %747 = vmatpush1.msra.mxu0 0.0
    %748 = vmatprep.subr.mxu0 0.0
    %749 = vmatpush1.msra.mxu0 0.0
    %750 = vmatprep.subr.mxu0 0.0
    %751 = vmatpush1.msra.mxu0 0.0
    %752 = vmatprep.subr.mxu0 0.0
    %753 = vmatpush1.msra.mxu0 0.0
    %754 = vmatprep.subr.mxu0 0.0
    %755 = vmatpush1.msra.mxu0 0.0
    %756 = vmatprep.subr.mxu0 0.0
    %757 = vmatpush1.msra.mxu0 0.0
    %758 = vmatprep.subr.mxu0 0.0
    %759 = vmatpush1.msra.mxu0 0.0
    %760 = vmatprep.subr.mxu0 0.0
    %761 = vmatpush1.msra.mxu0 0.0
    %762 = vmatprep.subr.mxu0 0.0
    %763 = vmatpush1.msra.mxu0 0.0
    %764 = vmatprep.subr.mxu0 0.0
    %765 = vmatpush1.msra.mxu0 0.0
    %766 = vmatprep.subr.mxu0 0.0
    %767 = vmatpush1.msra.mxu0 0.0
    %768 = vmatprep.subr.mxu0 0.0
    %769 = vmatpush1.msra.mxu0 0.0
    %770 = vmatprep.subr.mxu0 0.0
    %771 = vmatpush1.msra.mxu0 0.0
    %772 = vmatprep.subr.mxu0 0.0
    %773 = vmatpush1.msra.mxu0 0.0
    %774 = vmatprep.subr.mxu0 0.0
    %775 = vmatpush1.msra.mxu0 0.0
    %776 = vmatprep.subr.mxu0 0.0
    %777 = vmatpush1.msra.mxu0 0.0
    %778 = vmatprep.subr.mxu0 0.0
    %779 = vmatpush1.msra.mxu0 0.0
    %780 = vmatprep.mubr.f32.mxu0 0.0
    %781 = vmatmul.mubr.f32.gmra.mrb[0].mxu0 %v714
    %v782 = vpop.f32.mrb[0].mxu0
    %v783 = vadd.f32 %v209, %v782
    %v784 = vpop.f32.mrb[0].mxu0
    %785 = vdwg.mxu0
    %v787 = vsel %vm702, %v712, 0
    %789 = vmatprep.subr.mxu0 0.0
    %790 = vmatpush1.msra.mxu0 %v210
    %791 = vmatprep.subr.mxu0 0.0
    %792 = vmatpush1.msra.mxu0 0.0
    %793 = vmatprep.subr.mxu0 0.0
    %794 = vmatpush1.msra.mxu0 0.0
    %795 = vmatprep.subr.mxu0 0.0
    %796 = vmatpush1.msra.mxu0 0.0
    %797 = vmatprep.subr.mxu0 0.0
    %798 = vmatpush1.msra.mxu0 0.0
    %799 = vmatprep.subr.mxu0 0.0
    %800 = vmatpush1.msra.mxu0 0.0
    %801 = vmatprep.subr.mxu0 0.0
    %802 = vmatpush1.msra.mxu0 0.0
    %803 = vmatprep.subr.mxu0 0.0
    %804 = vmatpush1.msra.mxu0 0.0
    %805 = vmatprep.subr.mxu0 0.0
    %806 = vmatpush1.msra.mxu0 0.0
    %807 = vmatprep.subr.mxu0 0.0
    %808 = vmatpush1.msra.mxu0 0.0
    %809 = vmatprep.subr.mxu0 0.0
    %810 = vmatpush1.msra.mxu0 0.0
    %811 = vmatprep.subr.mxu0 0.0
    %812 = vmatpush1.msra.mxu0 0.0
    %813 = vmatprep.subr.mxu0 0.0
    %814 = vmatpush1.msra.mxu0 0.0
    %815 = vmatprep.subr.mxu0 0.0
    %816 = vmatpush1.msra.mxu0 0.0
    %817 = vmatprep.subr.mxu0 0.0
    %818 = vmatpush1.msra.mxu0 0.0
    %819 = vmatprep.subr.mxu0 0.0
    %820 = vmatpush1.msra.mxu0 0.0
    %821 = vmatprep.subr.mxu0 0.0
    %822 = vmatpush1.msra.mxu0 0.0
    %823 = vmatprep.subr.mxu0 0.0
    %824 = vmatpush1.msra.mxu0 0.0
    %825 = vmatprep.subr.mxu0 0.0
    %826 = vmatpush1.msra.mxu0 0.0
    %827 = vmatprep.subr.mxu0 0.0
    %828 = vmatpush1.msra.mxu0 0.0
    %829 = vmatprep.subr.mxu0 0.0
    %830 = vmatpush1.msra.mxu0 0.0
    %831 = vmatprep.subr.mxu0 0.0
    %832 = vmatpush1.msra.mxu0 0.0
    %833 = vmatprep.subr.mxu0 0.0
    %834 = vmatpush1.msra.mxu0 0.0
    %835 = vmatprep.subr.mxu0 0.0
    %836 = vmatpush1.msra.mxu0 0.0
    %837 = vmatprep.subr.mxu0 0.0
    %838 = vmatpush1.msra.mxu0 0.0
    %839 = vmatprep.subr.mxu0 0.0
    %840 = vmatpush1.msra.mxu0 0.0
    %841 = vmatprep.subr.mxu0 0.0
    %842 = vmatpush1.msra.mxu0 0.0
    %843 = vmatprep.subr.mxu0 0.0
    %844 = vmatpush1.msra.mxu0 0.0
    %845 = vmatprep.subr.mxu0 0.0
    %846 = vmatpush1.msra.mxu0 0.0
    %847 = vmatprep.subr.mxu0 0.0
    %848 = vmatpush1.msra.mxu0 0.0
    %849 = vmatprep.subr.mxu0 0.0
    %850 = vmatpush1.msra.mxu0 0.0
    %851 = vmatprep.subr.mxu0 0.0
    %852 = vmatpush1.msra.mxu0 0.0
    %853 = vmatprep.mubr.f32.mxu0 0.0
    %854 = vmatmul.mubr.f32.gmra.mrb[0].mxu0 %v787
    %v855 = vpop.f32.mrb[0].mxu0
    %v856 = vadd.f32 %v210, %v855
    %v857 = vpop.f32.mrb[0].mxu0
    %858 = vdwg.mxu0
    %v860 = vlaneseq
    %v861 = vshrl.u32 %v860, 7
    %v862 = vsub.s32 0, %v861
    %v863 = vrot.slane %v243, %v862
    %v864 = vlaneseq
    %v865 = vshrl.u32 %v864, 7
    %v866 = vsub.s32 1, %v865
    %v867 = vrot.slane %v243, %v866
    %v868 = vlaneseq
    %v869 = vshrl.u32 %v868, 7
    %v870 = vsub.s32 2, %v869
    %v871 = vrot.slane %v243, %v870
    %v872 = vlaneseq
    %v873 = vshrl.u32 %v872, 7
    %v874 = vsub.s32 3, %v873
    %v875 = vrot.slane %v243, %v874
    %v881 = vsel %vm501, %v783, 0
    %v884 = vsel %vm501, %v856, 0
    %886 = vmatprep.subr.mxu0 %v212
    %887 = vmatpush1.msra.mxu0 %v211
    %888 = vmatprep.subr.mxu0 %v216
    %889 = vmatpush1.msra.mxu0 %v215
    %890 = vmatprep.subr.mxu0 %v220
    %891 = vmatpush1.msra.mxu0 %v219
    %892 = vmatprep.subr.mxu0 %v224
    %893 = vmatpush1.msra.mxu0 %v223
    %894 = vmatprep.subr.mxu0 %v228
    %895 = vmatpush1.msra.mxu0 %v227
    %896 = vmatprep.subr.mxu0 %v232
    %897 = vmatpush1.msra.mxu0 %v231
    %898 = vmatprep.subr.mxu0 %v236
    %899 = vmatpush1.msra.mxu0 %v235
    %900 = vmatprep.subr.mxu0 %v240
    %901 = vmatpush1.msra.mxu0 %v239
    %902 = vmatprep.subr.mxu0 0.0
    %903 = vmatpush1.msra.mxu0 0.0
    %904 = vmatprep.subr.mxu0 0.0
    %905 = vmatpush1.msra.mxu0 0.0
    %906 = vmatprep.subr.mxu0 0.0
    %907 = vmatpush1.msra.mxu0 0.0
    %908 = vmatprep.subr.mxu0 0.0
    %909 = vmatpush1.msra.mxu0 0.0
    %910 = vmatprep.subr.mxu0 0.0
    %911 = vmatpush1.msra.mxu0 0.0
    %912 = vmatprep.subr.mxu0 0.0
    %913 = vmatpush1.msra.mxu0 0.0
    %914 = vmatprep.subr.mxu0 0.0
    %915 = vmatpush1.msra.mxu0 0.0
    %916 = vmatprep.subr.mxu0 0.0
    %917 = vmatpush1.msra.mxu0 0.0
    %918 = vmatprep.subr.mxu0 0.0
    %919 = vmatpush1.msra.mxu0 0.0
    %920 = vmatprep.subr.mxu0 0.0
    %921 = vmatpush1.msra.mxu0 0.0
    %922 = vmatprep.subr.mxu0 0.0
    %923 = vmatpush1.msra.mxu0 0.0
    %924 = vmatprep.subr.mxu0 0.0
    %925 = vmatpush1.msra.mxu0 0.0
    %926 = vmatprep.subr.mxu0 0.0
    %927 = vmatpush1.msra.mxu0 0.0
    %928 = vmatprep.subr.mxu0 0.0
    %929 = vmatpush1.msra.mxu0 0.0
    %930 = vmatprep.subr.mxu0 0.0
    %931 = vmatpush1.msra.mxu0 0.0
    %932 = vmatprep.subr.mxu0 0.0
    %933 = vmatpush1.msra.mxu0 0.0
    %934 = vmatprep.subr.mxu0 0.0
    %935 = vmatpush1.msra.mxu0 0.0
    %936 = vmatprep.subr.mxu0 0.0
    %937 = vmatpush1.msra.mxu0 0.0
    %938 = vmatprep.subr.mxu0 0.0
    %939 = vmatpush1.msra.mxu0 0.0
    %940 = vmatprep.subr.mxu0 0.0
    %941 = vmatpush1.msra.mxu0 0.0
    %942 = vmatprep.subr.mxu0 0.0
    %943 = vmatpush1.msra.mxu0 0.0
    %944 = vmatprep.subr.mxu0 0.0
    %945 = vmatpush1.msra.mxu0 0.0
    %946 = vmatprep.subr.mxu0 0.0
    %947 = vmatpush1.msra.mxu0 0.0
    %948 = vmatprep.subr.mxu0 0.0
    %949 = vmatpush1.msra.mxu0 0.0
    %950 = vmatprep.mubr.f32.mxu0 0.0
    %951 = vmatmul.mubr.f32.gmra.mrb[0].mxu0 %v881
    %v952 = vpop.f32.mrb[0].mxu0
    %v953 = vadd.f32 %v863, %v952
    %v954 = vpop.f32.mrb[0].mxu0
    %v955 = vadd.f32 %v867, %v954
    %956 = vmatprep.mubr.f32.mxu0 0.0
    %957 = vmatmul.mubr.f32.gmra.mrb[0].mxu0 %v884
    %v958 = vpop.f32.mrb[0].mxu0
    %v959 = vadd.f32 %v863, %v958
    %v960 = vpop.f32.mrb[0].mxu0
    %v961 = vadd.f32 %v867, %v960
    %962 = vdwg.mxu0
    %963 = vmatprep.subr.mxu0 %v214
    %964 = vmatpush1.msra.mxu0 %v213
    %965 = vmatprep.subr.mxu0 %v218
    %966 = vmatpush1.msra.mxu0 %v217
    %967 = vmatprep.subr.mxu0 %v222
    %968 = vmatpush1.msra.mxu0 %v221
    %969 = vmatprep.subr.mxu0 %v226
    %970 = vmatpush1.msra.mxu0 %v225
    %971 = vmatprep.subr.mxu0 %v230
    %972 = vmatpush1.msra.mxu0 %v229
    %973 = vmatprep.subr.mxu0 %v234
    %974 = vmatpush1.msra.mxu0 %v233
    %975 = vmatprep.subr.mxu0 %v238
    %976 = vmatpush1.msra.mxu0 %v237
    %977 = vmatprep.subr.mxu0 %v242
    %978 = vmatpush1.msra.mxu0 %v241
    %979 = vmatprep.subr.mxu0 0.0
    %980 = vmatpush1.msra.mxu0 0.0
    %981 = vmatprep.subr.mxu0 0.0
    %982 = vmatpush1.msra.mxu0 0.0
    %983 = vmatprep.subr.mxu0 0.0
    %984 = vmatpush1.msra.mxu0 0.0
    %985 = vmatprep.subr.mxu0 0.0
    %986 = vmatpush1.msra.mxu0 0.0
    %987 = vmatprep.subr.mxu0 0.0
    %988 = vmatpush1.msra.mxu0 0.0
    %989 = vmatprep.subr.mxu0 0.0
    %990 = vmatpush1.msra.mxu0 0.0
    %991 = vmatprep.subr.mxu0 0.0
    %992 = vmatpush1.msra.mxu0 0.0
    %993 = vmatprep.subr.mxu0 0.0
    %994 = vmatpush1.msra.mxu0 0.0
    %995 = vmatprep.subr.mxu0 0.0
    %996 = vmatpush1.msra.mxu0 0.0
    %997 = vmatprep.subr.mxu0 0.0
    %998 = vmatpush1.msra.mxu0 0.0
    %999 = vmatprep.subr.mxu0 0.0
    %1000 = vmatpush1.msra.mxu0 0.0
    %1001 = vmatprep.subr.mxu0 0.0
    %1002 = vmatpush1.msra.mxu0 0.0
    %1003 = vmatprep.subr.mxu0 0.0
    %1004 = vmatpush1.msra.mxu0 0.0
    %1005 = vmatprep.subr.mxu0 0.0
    %1006 = vmatpush1.msra.mxu0 0.0
    %1007 = vmatprep.subr.mxu0 0.0
    %1008 = vmatpush1.msra.mxu0 0.0
    %1009 = vmatprep.subr.mxu0 0.0
    %1010 = vmatpush1.msra.mxu0 0.0
    %1011 = vmatprep.subr.mxu0 0.0
    %1012 = vmatpush1.msra.mxu0 0.0
    %1013 = vmatprep.subr.mxu0 0.0
    %1014 = vmatpush1.msra.mxu0 0.0
    %1015 = vmatprep.subr.mxu0 0.0
    %1016 = vmatpush1.msra.mxu0 0.0
    %1017 = vmatprep.subr.mxu0 0.0
    %1018 = vmatpush1.msra.mxu0 0.0
    %1019 = vmatprep.subr.mxu0 0.0
    %1020 = vmatpush1.msra.mxu0 0.0
    %1021 = vmatprep.subr.mxu0 0.0
    %1022 = vmatpush1.msra.mxu0 0.0
    %1023 = vmatprep.subr.mxu0 0.0
    %1024 = vmatpush1.msra.mxu0 0.0
    %1025 = vmatprep.subr.mxu0 0.0
    %1026 = vmatpush1.msra.mxu0 0.0
    %1027 = vmatprep.mubr.f32.mxu0 0.0
    %1028 = vmatmul.mubr.f32.gmra.mrb[0].mxu0 %v881
    %v1029 = vpop.f32.mrb[0].mxu0
    %v1030 = vadd.f32 %v871, %v1029
    %v1031 = vpop.f32.mrb[0].mxu0
    %v1032 = vadd.f32 %v875, %v1031
    %1033 = vmatprep.mubr.f32.mxu0 0.0
    %1034 = vmatmul.mubr.f32.gmra.mrb[0].mxu0 %v884
    %v1035 = vpop.f32.mrb[0].mxu0
    %v1036 = vadd.f32 %v871, %v1035
    %v1037 = vpop.f32.mrb[0].mxu0
    %v1038 = vadd.f32 %v875, %v1037
    %1039 = vdwg.mxu0
    %vm1040 = vcmp.gt.f32.partialorder %v953, 0.0
    %vm1041 = vcmp.gt.f32.partialorder %v955, 0.0
    %vm1042 = vcmp.gt.f32.partialorder %v1030, 0.0
    %vm1043 = vcmp.gt.f32.partialorder %v1032, 0.0
    %vm1044 = vcmp.gt.f32.partialorder %v959, 0.0
    %vm1045 = vcmp.gt.f32.partialorder %v961, 0.0
    %vm1046 = vcmp.gt.f32.partialorder %v1036, 0.0
    %vm1047 = vcmp.gt.f32.partialorder %v1038, 0.0
    %v1048 = vmul.f32 %v953, 0.01
    %v1049 = vmul.f32 %v955, 0.01
    %v1050 = vmul.f32 %v1030, 0.01
    %v1051 = vmul.f32 %v1032, 0.01
    %v1052 = vmul.f32 %v959, 0.01
    %v1053 = vmul.f32 %v961, 0.01
    %v1054 = vmul.f32 %v1036, 0.01
    %v1055 = vmul.f32 %v1038, 0.01
    %v1056 = vsel %vm1040, %v953, %v1048
    %v1057 = vsel %vm1041, %v955, %v1049
    %v1058 = vsel %vm1042, %v1030, %v1050
    %v1059 = vsel %vm1043, %v1032, %v1051
    %v1060 = vsel %vm1044, %v959, %v1052
    %v1061 = vsel %vm1045, %v961, %v1053
    %v1062 = vsel %vm1046, %v1036, %v1054
    %v1063 = vsel %vm1047, %v1038, %v1055
    %v1065 = vlaneseq
    %v1066 = vshrl.u32 %v1065, 7
    %v1067 = vsub.s32 0, %v1066
    %v1068 = vrot.slane %v500, %v1067
    %v1069 = vlaneseq
    %v1070 = vshrl.u32 %v1069, 7
    %v1071 = vsub.s32 1, %v1070
    %v1072 = vrot.slane %v500, %v1071
    %v1073 = vlaneseq
    %v1074 = vshrl.u32 %v1073, 7
    %v1075 = vsub.s32 2, %v1074
    %v1076 = vrot.slane %v500, %v1075
    %v1077 = vlaneseq
    %v1078 = vshrl.u32 %v1077, 7
    %v1079 = vsub.s32 3, %v1078
    %v1080 = vrot.slane %v500, %v1079
    %1085 = vmatprep.subr.mxu0 %v245
    %1086 = vmatpush1.msra.mxu0 %v244
    %1087 = vmatprep.subr.mxu0 %v249
    %1088 = vmatpush1.msra.mxu0 %v248
    %1089 = vmatprep.subr.mxu0 %v253
    %1090 = vmatpush1.msra.mxu0 %v252
    %1091 = vmatprep.subr.mxu0 %v257
    %1092 = vmatpush1.msra.mxu0 %v256
    %1093 = vmatprep.subr.mxu0 %v261
    %1094 = vmatpush1.msra.mxu0 %v260
    %1095 = vmatprep.subr.mxu0 %v265
    %1096 = vmatpush1.msra.mxu0 %v264
    %1097 = vmatprep.subr.mxu0 %v269
    %1098 = vmatpush1.msra.mxu0 %v268
    %1099 = vmatprep.subr.mxu0 %v273
    %1100 = vmatpush1.msra.mxu0 %v272
    %1101 = vmatprep.subr.mxu0 %v277
    %1102 = vmatpush1.msra.mxu0 %v276
    %1103 = vmatprep.subr.mxu0 %v281
    %1104 = vmatpush1.msra.mxu0 %v280
    %1105 = vmatprep.subr.mxu0 %v285
    %1106 = vmatpush1.msra.mxu0 %v284
    %1107 = vmatprep.subr.mxu0 %v289
    %1108 = vmatpush1.msra.mxu0 %v288
    %1109 = vmatprep.subr.mxu0 %v293
    %1110 = vmatpush1.msra.mxu0 %v292
    %1111 = vmatprep.subr.mxu0 %v297
    %1112 = vmatpush1.msra.mxu0 %v296
    %1113 = vmatprep.subr.mxu0 %v301
    %1114 = vmatpush1.msra.mxu0 %v300
    %1115 = vmatprep.subr.mxu0 %v305
    %1116 = vmatpush1.msra.mxu0 %v304
    %1117 = vmatprep.subr.mxu0 %v309
    %1118 = vmatpush1.msra.mxu0 %v308
    %1119 = vmatprep.subr.mxu0 %v313
    %1120 = vmatpush1.msra.mxu0 %v312
    %1121 = vmatprep.subr.mxu0 %v317
    %1122 = vmatpush1.msra.mxu0 %v316
    %1123 = vmatprep.subr.mxu0 %v321
    %1124 = vmatpush1.msra.mxu0 %v320
    %1125 = vmatprep.subr.mxu0 %v325
    %1126 = vmatpush1.msra.mxu0 %v324
    %1127 = vmatprep.subr.mxu0 %v329
    %1128 = vmatpush1.msra.mxu0 %v328
    %1129 = vmatprep.subr.mxu0 %v333
    %1130 = vmatpush1.msra.mxu0 %v332
    %1131 = vmatprep.subr.mxu0 %v337
    %1132 = vmatpush1.msra.mxu0 %v336
    %1133 = vmatprep.subr.mxu0 %v341
    %1134 = vmatpush1.msra.mxu0 %v340
    %1135 = vmatprep.subr.mxu0 %v345
    %1136 = vmatpush1.msra.mxu0 %v344
    %1137 = vmatprep.subr.mxu0 %v349
    %1138 = vmatpush1.msra.mxu0 %v348
    %1139 = vmatprep.subr.mxu0 %v353
    %1140 = vmatpush1.msra.mxu0 %v352
    %1141 = vmatprep.subr.mxu0 %v357
    %1142 = vmatpush1.msra.mxu0 %v356
    %1143 = vmatprep.subr.mxu0 %v361
    %1144 = vmatpush1.msra.mxu0 %v360
    %1145 = vmatprep.subr.mxu0 %v365
    %1146 = vmatpush1.msra.mxu0 %v364
    %1147 = vmatprep.subr.mxu0 %v369
    %1148 = vmatpush1.msra.mxu0 %v368
    %1149 = vmatprep.mubr.f32.mxu0 %v1057
    %1150 = vmatmul.mubr.f32.gmra.mrb[0].mxu0 %v1056
    %v1151 = vpop.f32.mrb[0].mxu0
    %v1152 = vadd.f32 %v1068, %v1151
    %v1153 = vpop.f32.mrb[0].mxu0
    %v1154 = vadd.f32 %v1072, %v1153
    %1155 = vmatprep.mubr.f32.mxu0 %v1061
    %1156 = vmatmul.mubr.f32.gmra.mrb[0].mxu0 %v1060
    %v1157 = vpop.f32.mrb[0].mxu0
    %v1158 = vadd.f32 %v1068, %v1157
    %v1159 = vpop.f32.mrb[0].mxu0
    %v1160 = vadd.f32 %v1072, %v1159
    %1161 = vdwg.mxu0
    %1162 = vmatprep.subr.mxu0 %v373
    %1163 = vmatpush1.msra.mxu0 %v372
    %1164 = vmatprep.subr.mxu0 %v377
    %1165 = vmatpush1.msra.mxu0 %v376
    %1166 = vmatprep.subr.mxu0 %v381
    %1167 = vmatpush1.msra.mxu0 %v380
    %1168 = vmatprep.subr.mxu0 %v385
    %1169 = vmatpush1.msra.mxu0 %v384
    %1170 = vmatprep.subr.mxu0 %v389
    %1171 = vmatpush1.msra.mxu0 %v388
    %1172 = vmatprep.subr.mxu0 %v393
    %1173 = vmatpush1.msra.mxu0 %v392
    %1174 = vmatprep.subr.mxu0 %v397
    %1175 = vmatpush1.msra.mxu0 %v396
    %1176 = vmatprep.subr.mxu0 %v401
    %1177 = vmatpush1.msra.mxu0 %v400
    %1178 = vmatprep.subr.mxu0 %v405
    %1179 = vmatpush1.msra.mxu0 %v404
    %1180 = vmatprep.subr.mxu0 %v409
    %1181 = vmatpush1.msra.mxu0 %v408
    %1182 = vmatprep.subr.mxu0 %v413
    %1183 = vmatpush1.msra.mxu0 %v412
    %1184 = vmatprep.subr.mxu0 %v417
    %1185 = vmatpush1.msra.mxu0 %v416
    %1186 = vmatprep.subr.mxu0 %v421
    %1187 = vmatpush1.msra.mxu0 %v420
    %1188 = vmatprep.subr.mxu0 %v425
    %1189 = vmatpush1.msra.mxu0 %v424
    %1190 = vmatprep.subr.mxu0 %v429
    %1191 = vmatpush1.msra.mxu0 %v428
    %1192 = vmatprep.subr.mxu0 %v433
    %1193 = vmatpush1.msra.mxu0 %v432
    %1194 = vmatprep.subr.mxu0 %v437
    %1195 = vmatpush1.msra.mxu0 %v436
    %1196 = vmatprep.subr.mxu0 %v441
    %1197 = vmatpush1.msra.mxu0 %v440
    %1198 = vmatprep.subr.mxu0 %v445
    %1199 = vmatpush1.msra.mxu0 %v444
    %1200 = vmatprep.subr.mxu0 %v449
    %1201 = vmatpush1.msra.mxu0 %v448
    %1202 = vmatprep.subr.mxu0 %v453
    %1203 = vmatpush1.msra.mxu0 %v452
    %1204 = vmatprep.subr.mxu0 %v457
    %1205 = vmatpush1.msra.mxu0 %v456
    %1206 = vmatprep.subr.mxu0 %v461
    %1207 = vmatpush1.msra.mxu0 %v460
    %1208 = vmatprep.subr.mxu0 %v465
    %1209 = vmatpush1.msra.mxu0 %v464
    %1210 = vmatprep.subr.mxu0 %v469
    %1211 = vmatpush1.msra.mxu0 %v468
    %1212 = vmatprep.subr.mxu0 %v473
    %1213 = vmatpush1.msra.mxu0 %v472
    %1214 = vmatprep.subr.mxu0 %v477
    %1215 = vmatpush1.msra.mxu0 %v476
    %1216 = vmatprep.subr.mxu0 %v481
    %1217 = vmatpush1.msra.mxu0 %v480
    %1218 = vmatprep.subr.mxu0 %v485
    %1219 = vmatpush1.msra.mxu0 %v484
    %1220 = vmatprep.subr.mxu0 %v489
    %1221 = vmatpush1.msra.mxu0 %v488
    %1222 = vmatprep.subr.mxu0 %v493
    %1223 = vmatpush1.msra.mxu0 %v492
    %1224 = vmatprep.subr.mxu0 %v497
    %1225 = vmatpush1.msra.mxu0 %v496
    %1226 = vmatprep.mubr.f32.mxu0 %v1059
    %1227 = vmatmul.mubr.f32.gmra.mrb[0].mxu0 %v1058
    %v1228 = vpop.f32.mrb[0].mxu0
    %v1229 = vadd.f32 %v1152, %v1228
    %v1230 = vpop.f32.mrb[0].mxu0
    %v1231 = vadd.f32 %v1154, %v1230
    %1232 = vmatprep.mubr.f32.mxu0 %v1063
    %1233 = vmatmul.mubr.f32.gmra.mrb[0].mxu0 %v1062
    %v1234 = vpop.f32.mrb[0].mxu0
    %v1235 = vadd.f32 %v1158, %v1234
    %v1236 = vpop.f32.mrb[0].mxu0
    %v1237 = vadd.f32 %v1160, %v1236
    %1238 = vdwg.mxu0
    %1239 = vmatprep.subr.mxu0 %v247
    %1240 = vmatpush1.msra.mxu0 %v246
    %1241 = vmatprep.subr.mxu0 %v251
    %1242 = vmatpush1.msra.mxu0 %v250
    %1243 = vmatprep.subr.mxu0 %v255
    %1244 = vmatpush1.msra.mxu0 %v254
    %1245 = vmatprep.subr.mxu0 %v259
    %1246 = vmatpush1.msra.mxu0 %v258
    %1247 = vmatprep.subr.mxu0 %v263
    %1248 = vmatpush1.msra.mxu0 %v262
    %1249 = vmatprep.subr.mxu0 %v267
    %1250 = vmatpush1.msra.mxu0 %v266
    %1251 = vmatprep.subr.mxu0 %v271
    %1252 = vmatpush1.msra.mxu0 %v270
    %1253 = vmatprep.subr.mxu0 %v275
    %1254 = vmatpush1.msra.mxu0 %v274
    %1255 = vmatprep.subr.mxu0 %v279
    %1256 = vmatpush1.msra.mxu0 %v278
    %1257 = vmatprep.subr.mxu0 %v283
    %1258 = vmatpush1.msra.mxu0 %v282
    %1259 = vmatprep.subr.mxu0 %v287
    %1260 = vmatpush1.msra.mxu0 %v286
    %1261 = vmatprep.subr.mxu0 %v291
    %1262 = vmatpush1.msra.mxu0 %v290
    %1263 = vmatprep.subr.mxu0 %v295
    %1264 = vmatpush1.msra.mxu0 %v294
    %1265 = vmatprep.subr.mxu0 %v299
    %1266 = vmatpush1.msra.mxu0 %v298
    %1267 = vmatprep.subr.mxu0 %v303
    %1268 = vmatpush1.msra.mxu0 %v302
    %1269 = vmatprep.subr.mxu0 %v307
    %1270 = vmatpush1.msra.mxu0 %v306
    %1271 = vmatprep.subr.mxu0 %v311
    %1272 = vmatpush1.msra.mxu0 %v310
    %1273 = vmatprep.subr.mxu0 %v315
    %1274 = vmatpush1.msra.mxu0 %v314
    %1275 = vmatprep.subr.mxu0 %v319
    %1276 = vmatpush1.msra.mxu0 %v318
    %1277 = vmatprep.subr.mxu0 %v323
    %1278 = vmatpush1.msra.mxu0 %v322
    %1279 = vmatprep.subr.mxu0 %v327
    %1280 = vmatpush1.msra.mxu0 %v326
    %1281 = vmatprep.subr.mxu0 %v331
    %1282 = vmatpush1.msra.mxu0 %v330
    %1283 = vmatprep.subr.mxu0 %v335
    %1284 = vmatpush1.msra.mxu0 %v334
    %1285 = vmatprep.subr.mxu0 %v339
    %1286 = vmatpush1.msra.mxu0 %v338
    %1287 = vmatprep.subr.mxu0 %v343
    %1288 = vmatpush1.msra.mxu0 %v342
    %1289 = vmatprep.subr.mxu0 %v347
    %1290 = vmatpush1.msra.mxu0 %v346
    %1291 = vmatprep.subr.mxu0 %v351
    %1292 = vmatpush1.msra.mxu0 %v350
    %1293 = vmatprep.subr.mxu0 %v355
    %1294 = vmatpush1.msra.mxu0 %v354
    %1295 = vmatprep.subr.mxu0 %v359
    %1296 = vmatpush1.msra.mxu0 %v358
    %1297 = vmatprep.subr.mxu0 %v363
    %1298 = vmatpush1.msra.mxu0 %v362
    %1299 = vmatprep.subr.mxu0 %v367
    %1300 = vmatpush1.msra.mxu0 %v366
    %1301 = vmatprep.subr.mxu0 %v371
    %1302 = vmatpush1.msra.mxu0 %v370
    %1303 = vmatprep.mubr.f32.mxu0 %v1057
    %1304 = vmatmul.mubr.f32.gmra.mrb[0].mxu0 %v1056
    %v1305 = vpop.f32.mrb[0].mxu0
    %v1306 = vadd.f32 %v1076, %v1305
    %v1307 = vpop.f32.mrb[0].mxu0
    %v1308 = vadd.f32 %v1080, %v1307
    %1309 = vmatprep.mubr.f32.mxu0 %v1061
    %1310 = vmatmul.mubr.f32.gmra.mrb[0].mxu0 %v1060
    %v1311 = vpop.f32.mrb[0].mxu0
    %v1312 = vadd.f32 %v1076, %v1311
    %v1313 = vpop.f32.mrb[0].mxu0
    %v1314 = vadd.f32 %v1080, %v1313
    %1315 = vdwg.mxu0
    %1316 = vmatprep.subr.mxu0 %v375
    %1317 = vmatpush1.msra.mxu0 %v374
    %1318 = vmatprep.subr.mxu0 %v379
    %1319 = vmatpush1.msra.mxu0 %v378
    %1320 = vmatprep.subr.mxu0 %v383
    %1321 = vmatpush1.msra.mxu0 %v382
    %1322 = vmatprep.subr.mxu0 %v387
    %1323 = vmatpush1.msra.mxu0 %v386
    %1324 = vmatprep.subr.mxu0 %v391
    %1325 = vmatpush1.msra.mxu0 %v390
    %1326 = vmatprep.subr.mxu0 %v395
    %1327 = vmatpush1.msra.mxu0 %v394
    %1328 = vmatprep.subr.mxu0 %v399
    %1329 = vmatpush1.msra.mxu0 %v398
    %1330 = vmatprep.subr.mxu0 %v403
    %1331 = vmatpush1.msra.mxu0 %v402
    %1332 = vmatprep.subr.mxu0 %v407
    %1333 = vmatpush1.msra.mxu0 %v406
    %1334 = vmatprep.subr.mxu0 %v411
    %1335 = vmatpush1.msra.mxu0 %v410
    %1336 = vmatprep.subr.mxu0 %v415
    %1337 = vmatpush1.msra.mxu0 %v414
    %1338 = vmatprep.subr.mxu0 %v419
    %1339 = vmatpush1.msra.mxu0 %v418
    %1340 = vmatprep.subr.mxu0 %v423
    %1341 = vmatpush1.msra.mxu0 %v422
    %1342 = vmatprep.subr.mxu0 %v427
    %1343 = vmatpush1.msra.mxu0 %v426
    %1344 = vmatprep.subr.mxu0 %v431
    %1345 = vmatpush1.msra.mxu0 %v430
    %1346 = vmatprep.subr.mxu0 %v435
    %1347 = vmatpush1.msra.mxu0 %v434
    %1348 = vmatprep.subr.mxu0 %v439
    %1349 = vmatpush1.msra.mxu0 %v438
    %1350 = vmatprep.subr.mxu0 %v443
    %1351 = vmatpush1.msra.mxu0 %v442
    %1352 = vmatprep.subr.mxu0 %v447
    %1353 = vmatpush1.msra.mxu0 %v446
    %1354 = vmatprep.subr.mxu0 %v451
    %1355 = vmatpush1.msra.mxu0 %v450
    %1356 = vmatprep.subr.mxu0 %v455
    %1357 = vmatpush1.msra.mxu0 %v454
    %1358 = vmatprep.subr.mxu0 %v459
    %1359 = vmatpush1.msra.mxu0 %v458
    %1360 = vmatprep.subr.mxu0 %v463
    %1361 = vmatpush1.msra.mxu0 %v462
    %1362 = vmatprep.subr.mxu0 %v467
    %1363 = vmatpush1.msra.mxu0 %v466
    %1364 = vmatprep.subr.mxu0 %v471
    %1365 = vmatpush1.msra.mxu0 %v470
    %1366 = vmatprep.subr.mxu0 %v475
    %1367 = vmatpush1.msra.mxu0 %v474
    %1368 = vmatprep.subr.mxu0 %v479
    %1369 = vmatpush1.msra.mxu0 %v478
    %1370 = vmatprep.subr.mxu0 %v483
    %1371 = vmatpush1.msra.mxu0 %v482
    %1372 = vmatprep.subr.mxu0 %v487
    %1373 = vmatpush1.msra.mxu0 %v486
    %1374 = vmatprep.subr.mxu0 %v491
    %1375 = vmatpush1.msra.mxu0 %v490
    %1376 = vmatprep.subr.mxu0 %v495
    %1377 = vmatpush1.msra.mxu0 %v494
    %1378 = vmatprep.subr.mxu0 %v499
    %1379 = vmatpush1.msra.mxu0 %v498
    %1380 = vmatprep.mubr.f32.mxu0 %v1059
    %1381 = vmatmul.mubr.f32.gmra.mrb[0].mxu0 %v1058
    %v1382 = vpop.f32.mrb[0].mxu0
    %v1383 = vadd.f32 %v1306, %v1382
    %v1384 = vpop.f32.mrb[0].mxu0
    %v1385 = vadd.f32 %v1308, %v1384
    %1386 = vmatprep.mubr.f32.mxu0 %v1063
    %1387 = vmatmul.mubr.f32.gmra.mrb[0].mxu0 %v1062
    %v1388 = vpop.f32.mrb[0].mxu0
    %v1389 = vadd.f32 %v1312, %v1388
    %v1390 = vpop.f32.mrb[0].mxu0
    %v1391 = vadd.f32 %v1314, %v1390
    %1392 = vdwg.mxu0
    %v1393 = vld [vmem:[#allocation11] sm:$0xff]
    %v1394 = vld [vmem:[#allocation11 + $0x8] sm:$0xff]
    %v1395 = vld [vmem:[#allocation11 + $0x10] sm:$0xff]
    %v1396 = vld [vmem:[#allocation11 + $0x18] sm:$0xff]
    %v1397 = vld [vmem:[#allocation11 + $0x20] sm:$0xff]
    %v1398 = vld [vmem:[#allocation11 + $0x28] sm:$0xff]
    %v1399 = vld [vmem:[#allocation11 + $0x30] sm:$0xff]
    %v1400 = vld [vmem:[#allocation11 + $0x38] sm:$0xff]
    %v1401 = vld [vmem:[#allocation11 + $0x40] sm:$0xff]
    %v1402 = vld [vmem:[#allocation11 + $0x48] sm:$0xff]
    %v1403 = vld [vmem:[#allocation11 + $0x50] sm:$0xff]
    %v1404 = vld [vmem:[#allocation11 + $0x58] sm:$0xff]
    %v1405 = vld [vmem:[#allocation11 + $0x60] sm:$0xff]
    %v1406 = vld [vmem:[#allocation11 + $0x68] sm:$0xff]
    %v1407 = vld [vmem:[#allocation11 + $0x70] sm:$0xff]
    %v1408 = vld [vmem:[#allocation11 + $0x78] sm:$0xff]
    %v1409 = vld [vmem:[#allocation11 + $0x80] sm:$0xff]
    %v1410 = vld [vmem:[#allocation11 + $0x88] sm:$0xff]
    %v1411 = vld [vmem:[#allocation11 + $0x90] sm:$0xff]
    %v1412 = vld [vmem:[#allocation11 + $0x98] sm:$0xff]
    %v1413 = vld [vmem:[#allocation11 + $0xa0] sm:$0xff]
    %v1414 = vld [vmem:[#allocation11 + $0xa8] sm:$0xff]
    %v1415 = vld [vmem:[#allocation11 + $0xb0] sm:$0xff]
    %v1416 = vld [vmem:[#allocation11 + $0xb8] sm:$0xff]
    %v1417 = vld [vmem:[#allocation11 + $0xc0] sm:$0xff]
    %v1418 = vld [vmem:[#allocation11 + $0xc8] sm:$0xff]
    %v1419 = vld [vmem:[#allocation11 + $0xd0] sm:$0xff]
    %v1420 = vld [vmem:[#allocation11 + $0xd8] sm:$0xff]
    %v1421 = vld [vmem:[#allocation11 + $0xe0] sm:$0xff]
    %v1422 = vld [vmem:[#allocation11 + $0xe8] sm:$0xff]
    %v1423 = vld [vmem:[#allocation11 + $0xf0] sm:$0xff]
    %v1424 = vld [vmem:[#allocation11 + $0xf8] sm:$0xff]
    %v1425 = vld [vmem:[#allocation11 + $0x100] sm:$0xff]
    %v1426 = vld [vmem:[#allocation11 + $0x108] sm:$0xff]
    %v1427 = vld [vmem:[#allocation11 + $0x110] sm:$0xff]
    %v1428 = vld [vmem:[#allocation11 + $0x118] sm:$0xff]
    %v1429 = vld [vmem:[#allocation11 + $0x120] sm:$0xff]
    %v1430 = vld [vmem:[#allocation11 + $0x128] sm:$0xff]
    %v1431 = vld [vmem:[#allocation11 + $0x130] sm:$0xff]
    %v1432 = vld [vmem:[#allocation11 + $0x138] sm:$0xff]
    %v1433 = vld [vmem:[#allocation11 + $0x140] sm:$0xff]
    %v1434 = vld [vmem:[#allocation11 + $0x148] sm:$0xff]
    %v1435 = vld [vmem:[#allocation11 + $0x150] sm:$0xff]
    %v1436 = vld [vmem:[#allocation11 + $0x158] sm:$0xff]
    %v1437 = vld [vmem:[#allocation11 + $0x160] sm:$0xff]
    %v1438 = vld [vmem:[#allocation11 + $0x168] sm:$0xff]
    %v1439 = vld [vmem:[#allocation11 + $0x170] sm:$0xff]
    %v1440 = vld [vmem:[#allocation11 + $0x178] sm:$0xff]
    %v1441 = vld [vmem:[#allocation11 + $0x180] sm:$0xff]
    %v1442 = vld [vmem:[#allocation11 + $0x188] sm:$0xff]
    %v1443 = vld [vmem:[#allocation11 + $0x190] sm:$0xff]
    %v1444 = vld [vmem:[#allocation11 + $0x198] sm:$0xff]
    %v1445 = vld [vmem:[#allocation11 + $0x1a0] sm:$0xff]
    %v1446 = vld [vmem:[#allocation11 + $0x1a8] sm:$0xff]
    %v1447 = vld [vmem:[#allocation11 + $0x1b0] sm:$0xff]
    %v1448 = vld [vmem:[#allocation11 + $0x1b8] sm:$0xff]
    %v1449 = vld [vmem:[#allocation11 + $0x1c0] sm:$0xff]
    %v1450 = vld [vmem:[#allocation11 + $0x1c8] sm:$0xff]
    %v1451 = vld [vmem:[#allocation11 + $0x1d0] sm:$0xff]
    %v1452 = vld [vmem:[#allocation11 + $0x1d8] sm:$0xff]
    %v1453 = vld [vmem:[#allocation11 + $0x1e0] sm:$0xff]
    %v1454 = vld [vmem:[#allocation11 + $0x1e8] sm:$0xff]
    %v1455 = vld [vmem:[#allocation11 + $0x1f0] sm:$0xff]
    %v1456 = vld [vmem:[#allocation11 + $0x1f8] sm:$0xff]
    %v1457 = vld [vmem:[#allocation11 + $0x200] sm:$0xff]
    %v1458 = vld [vmem:[#allocation11 + $0x208] sm:$0xff]
    %v1459 = vld [vmem:[#allocation11 + $0x210] sm:$0xff]
    %v1460 = vld [vmem:[#allocation11 + $0x218] sm:$0xff]
    %v1461 = vld [vmem:[#allocation11 + $0x220] sm:$0xff]
    %v1462 = vld [vmem:[#allocation11 + $0x228] sm:$0xff]
    %v1463 = vld [vmem:[#allocation11 + $0x230] sm:$0xff]
    %v1464 = vld [vmem:[#allocation11 + $0x238] sm:$0xff]
    %v1465 = vld [vmem:[#allocation11 + $0x240] sm:$0xff]
    %v1466 = vld [vmem:[#allocation11 + $0x248] sm:$0xff]
    %v1467 = vld [vmem:[#allocation11 + $0x250] sm:$0xff]
    %v1468 = vld [vmem:[#allocation11 + $0x258] sm:$0xff]
    %v1469 = vld [vmem:[#allocation11 + $0x260] sm:$0xff]
    %v1470 = vld [vmem:[#allocation11 + $0x268] sm:$0xff]
    %v1471 = vld [vmem:[#allocation11 + $0x270] sm:$0xff]
    %v1472 = vld [vmem:[#allocation11 + $0x278] sm:$0xff]
    %v1473 = vld [vmem:[#allocation11 + $0x280] sm:$0xff]
    %v1474 = vld [vmem:[#allocation11 + $0x288] sm:$0xff]
    %v1475 = vld [vmem:[#allocation11 + $0x290] sm:$0xff]
    %v1476 = vld [vmem:[#allocation11 + $0x298] sm:$0xff]
    %v1477 = vld [vmem:[#allocation11 + $0x2a0] sm:$0xff]
    %v1478 = vld [vmem:[#allocation11 + $0x2a8] sm:$0xff]
    %v1479 = vld [vmem:[#allocation11 + $0x2b0] sm:$0xff]
    %v1480 = vld [vmem:[#allocation11 + $0x2b8] sm:$0xff]
    %v1481 = vld [vmem:[#allocation11 + $0x2c0] sm:$0xff]
    %v1482 = vld [vmem:[#allocation11 + $0x2c8] sm:$0xff]
    %v1483 = vld [vmem:[#allocation11 + $0x2d0] sm:$0xff]
    %v1484 = vld [vmem:[#allocation11 + $0x2d8] sm:$0xff]
    %v1485 = vld [vmem:[#allocation11 + $0x2e0] sm:$0xff]
    %v1486 = vld [vmem:[#allocation11 + $0x2e8] sm:$0xff]
    %v1487 = vld [vmem:[#allocation11 + $0x2f0] sm:$0xff]
    %v1488 = vld [vmem:[#allocation11 + $0x2f8] sm:$0xff]
    %v1489 = vld [vmem:[#allocation11 + $0x300] sm:$0xff]
    %v1490 = vld [vmem:[#allocation11 + $0x308] sm:$0xff]
    %v1491 = vld [vmem:[#allocation11 + $0x310] sm:$0xff]
    %v1492 = vld [vmem:[#allocation11 + $0x318] sm:$0xff]
    %v1493 = vld [vmem:[#allocation11 + $0x320] sm:$0xff]
    %v1494 = vld [vmem:[#allocation11 + $0x328] sm:$0xff]
    %v1495 = vld [vmem:[#allocation11 + $0x330] sm:$0xff]
    %v1496 = vld [vmem:[#allocation11 + $0x338] sm:$0xff]
    %v1497 = vld [vmem:[#allocation11 + $0x340] sm:$0xff]
    %v1498 = vld [vmem:[#allocation11 + $0x348] sm:$0xff]
    %v1499 = vld [vmem:[#allocation11 + $0x350] sm:$0xff]
    %v1500 = vld [vmem:[#allocation11 + $0x358] sm:$0xff]
    %v1501 = vld [vmem:[#allocation11 + $0x360] sm:$0xff]
    %v1502 = vld [vmem:[#allocation11 + $0x368] sm:$0xff]
    %v1503 = vld [vmem:[#allocation11 + $0x370] sm:$0xff]
    %v1504 = vld [vmem:[#allocation11 + $0x378] sm:$0xff]
    %v1505 = vld [vmem:[#allocation11 + $0x380] sm:$0xff]
    %v1506 = vld [vmem:[#allocation11 + $0x388] sm:$0xff]
    %v1507 = vld [vmem:[#allocation11 + $0x390] sm:$0xff]
    %v1508 = vld [vmem:[#allocation11 + $0x398] sm:$0xff]
    %v1509 = vld [vmem:[#allocation11 + $0x3a0] sm:$0xff]
    %v1510 = vld [vmem:[#allocation11 + $0x3a8] sm:$0xff]
    %v1511 = vld [vmem:[#allocation11 + $0x3b0] sm:$0xff]
    %v1512 = vld [vmem:[#allocation11 + $0x3b8] sm:$0xff]
    %v1513 = vld [vmem:[#allocation11 + $0x3c0] sm:$0xff]
    %v1514 = vld [vmem:[#allocation11 + $0x3c8] sm:$0xff]
    %v1515 = vld [vmem:[#allocation11 + $0x3d0] sm:$0xff]
    %v1516 = vld [vmem:[#allocation11 + $0x3d8] sm:$0xff]
    %v1517 = vld [vmem:[#allocation11 + $0x3e0] sm:$0xff]
    %v1518 = vld [vmem:[#allocation11 + $0x3e8] sm:$0xff]
    %v1519 = vld [vmem:[#allocation11 + $0x3f0] sm:$0xff]
    %v1520 = vld [vmem:[#allocation11 + $0x3f8] sm:$0xff]
    %v1521 = vld [vmem:[#allocation11 + $0x400] sm:$0xff]
    %v1522 = vld [vmem:[#allocation11 + $0x408] sm:$0xff]
    %v1523 = vld [vmem:[#allocation11 + $0x410] sm:$0xff]
    %v1524 = vld [vmem:[#allocation11 + $0x418] sm:$0xff]
    %v1525 = vld [vmem:[#allocation11 + $0x420] sm:$0xff]
    %v1526 = vld [vmem:[#allocation11 + $0x428] sm:$0xff]
    %v1527 = vld [vmem:[#allocation11 + $0x430] sm:$0xff]
    %v1528 = vld [vmem:[#allocation11 + $0x438] sm:$0xff]
    %v1529 = vld [vmem:[#allocation11 + $0x440] sm:$0xff]
    %v1530 = vld [vmem:[#allocation11 + $0x448] sm:$0xff]
    %v1531 = vld [vmem:[#allocation11 + $0x450] sm:$0xff]
    %v1532 = vld [vmem:[#allocation11 + $0x458] sm:$0xff]
    %v1533 = vld [vmem:[#allocation11 + $0x460] sm:$0xff]
    %v1534 = vld [vmem:[#allocation11 + $0x468] sm:$0xff]
    %v1535 = vld [vmem:[#allocation11 + $0x470] sm:$0xff]
    %v1536 = vld [vmem:[#allocation11 + $0x478] sm:$0xff]
    %v1537 = vld [vmem:[#allocation11 + $0x480] sm:$0xff]
    %v1538 = vld [vmem:[#allocation11 + $0x488] sm:$0xff]
    %v1539 = vld [vmem:[#allocation11 + $0x490] sm:$0xff]
    %v1540 = vld [vmem:[#allocation11 + $0x498] sm:$0xff]
    %v1541 = vld [vmem:[#allocation11 + $0x4a0] sm:$0xff]
    %v1542 = vld [vmem:[#allocation11 + $0x4a8] sm:$0xff]
    %v1543 = vld [vmem:[#allocation11 + $0x4b0] sm:$0xff]
    %v1544 = vld [vmem:[#allocation11 + $0x4b8] sm:$0xff]
    %v1545 = vld [vmem:[#allocation11 + $0x4c0] sm:$0xff]
    %v1546 = vld [vmem:[#allocation11 + $0x4c8] sm:$0xff]
    %v1547 = vld [vmem:[#allocation11 + $0x4d0] sm:$0xff]
    %v1548 = vld [vmem:[#allocation11 + $0x4d8] sm:$0xff]
    %v1549 = vld [vmem:[#allocation11 + $0x4e0] sm:$0xff]
    %v1550 = vld [vmem:[#allocation11 + $0x4e8] sm:$0xff]
    %v1551 = vld [vmem:[#allocation11 + $0x4f0] sm:$0xff]
    %v1552 = vld [vmem:[#allocation11 + $0x4f8] sm:$0xff]
    %v1553 = vld [vmem:[#allocation11 + $0x500] sm:$0xff]
    %v1554 = vld [vmem:[#allocation11 + $0x508] sm:$0xff]
    %v1555 = vld [vmem:[#allocation11 + $0x510] sm:$0xff]
    %v1556 = vld [vmem:[#allocation11 + $0x518] sm:$0xff]
    %v1557 = vld [vmem:[#allocation11 + $0x520] sm:$0xff]
    %v1558 = vld [vmem:[#allocation11 + $0x528] sm:$0xff]
    %v1559 = vld [vmem:[#allocation11 + $0x530] sm:$0xff]
    %v1560 = vld [vmem:[#allocation11 + $0x538] sm:$0xff]
    %v1561 = vld [vmem:[#allocation11 + $0x540] sm:$0xff]
    %v1562 = vld [vmem:[#allocation11 + $0x548] sm:$0xff]
    %v1563 = vld [vmem:[#allocation11 + $0x550] sm:$0xff]
    %v1564 = vld [vmem:[#allocation11 + $0x558] sm:$0xff]
    %v1565 = vld [vmem:[#allocation11 + $0x560] sm:$0xff]
    %v1566 = vld [vmem:[#allocation11 + $0x568] sm:$0xff]
    %v1567 = vld [vmem:[#allocation11 + $0x570] sm:$0xff]
    %v1568 = vld [vmem:[#allocation11 + $0x578] sm:$0xff]
    %v1569 = vld [vmem:[#allocation11 + $0x580] sm:$0xff]
    %v1570 = vld [vmem:[#allocation11 + $0x588] sm:$0xff]
    %v1571 = vld [vmem:[#allocation11 + $0x590] sm:$0xff]
    %v1572 = vld [vmem:[#allocation11 + $0x598] sm:$0xff]
    %v1573 = vld [vmem:[#allocation11 + $0x5a0] sm:$0xff]
    %v1574 = vld [vmem:[#allocation11 + $0x5a8] sm:$0xff]
    %v1575 = vld [vmem:[#allocation11 + $0x5b0] sm:$0xff]
    %v1576 = vld [vmem:[#allocation11 + $0x5b8] sm:$0xff]
    %v1577 = vld [vmem:[#allocation11 + $0x5c0] sm:$0xff]
    %v1578 = vld [vmem:[#allocation11 + $0x5c8] sm:$0xff]
    %v1579 = vld [vmem:[#allocation11 + $0x5d0] sm:$0xff]
    %v1580 = vld [vmem:[#allocation11 + $0x5d8] sm:$0xff]
    %v1581 = vld [vmem:[#allocation11 + $0x5e0] sm:$0xff]
    %v1582 = vld [vmem:[#allocation11 + $0x5e8] sm:$0xff]
    %v1583 = vld [vmem:[#allocation11 + $0x5f0] sm:$0xff]
    %v1584 = vld [vmem:[#allocation11 + $0x5f8] sm:$0xff]
    %v1585 = vld [vmem:[#allocation11 + $0x600] sm:$0xff]
    %v1586 = vld [vmem:[#allocation11 + $0x608] sm:$0xff]
    %v1587 = vld [vmem:[#allocation11 + $0x610] sm:$0xff]
    %v1588 = vld [vmem:[#allocation11 + $0x618] sm:$0xff]
    %v1589 = vld [vmem:[#allocation11 + $0x620] sm:$0xff]
    %v1590 = vld [vmem:[#allocation11 + $0x628] sm:$0xff]
    %v1591 = vld [vmem:[#allocation11 + $0x630] sm:$0xff]
    %v1592 = vld [vmem:[#allocation11 + $0x638] sm:$0xff]
    %v1593 = vld [vmem:[#allocation11 + $0x640] sm:$0xff]
    %v1594 = vld [vmem:[#allocation11 + $0x648] sm:$0xff]
    %v1595 = vld [vmem:[#allocation11 + $0x650] sm:$0xff]
    %v1596 = vld [vmem:[#allocation11 + $0x658] sm:$0xff]
    %v1597 = vld [vmem:[#allocation11 + $0x660] sm:$0xff]
    %v1598 = vld [vmem:[#allocation11 + $0x668] sm:$0xff]
    %v1599 = vld [vmem:[#allocation11 + $0x670] sm:$0xff]
    %v1600 = vld [vmem:[#allocation11 + $0x678] sm:$0xff]
    %v1601 = vld [vmem:[#allocation11 + $0x680] sm:$0xff]
    %v1602 = vld [vmem:[#allocation11 + $0x688] sm:$0xff]
    %v1603 = vld [vmem:[#allocation11 + $0x690] sm:$0xff]
    %v1604 = vld [vmem:[#allocation11 + $0x698] sm:$0xff]
    %v1605 = vld [vmem:[#allocation11 + $0x6a0] sm:$0xff]
    %v1606 = vld [vmem:[#allocation11 + $0x6a8] sm:$0xff]
    %v1607 = vld [vmem:[#allocation11 + $0x6b0] sm:$0xff]
    %v1608 = vld [vmem:[#allocation11 + $0x6b8] sm:$0xff]
    %v1609 = vld [vmem:[#allocation11 + $0x6c0] sm:$0xff]
    %v1610 = vld [vmem:[#allocation11 + $0x6c8] sm:$0xff]
    %v1611 = vld [vmem:[#allocation11 + $0x6d0] sm:$0xff]
    %v1612 = vld [vmem:[#allocation11 + $0x6d8] sm:$0xff]
    %v1613 = vld [vmem:[#allocation11 + $0x6e0] sm:$0xff]
    %v1614 = vld [vmem:[#allocation11 + $0x6e8] sm:$0xff]
    %v1615 = vld [vmem:[#allocation11 + $0x6f0] sm:$0xff]
    %v1616 = vld [vmem:[#allocation11 + $0x6f8] sm:$0xff]
    %v1617 = vld [vmem:[#allocation11 + $0x700] sm:$0xff]
    %v1618 = vld [vmem:[#allocation11 + $0x708] sm:$0xff]
    %v1619 = vld [vmem:[#allocation11 + $0x710] sm:$0xff]
    %v1620 = vld [vmem:[#allocation11 + $0x718] sm:$0xff]
    %v1621 = vld [vmem:[#allocation11 + $0x720] sm:$0xff]
    %v1622 = vld [vmem:[#allocation11 + $0x728] sm:$0xff]
    %v1623 = vld [vmem:[#allocation11 + $0x730] sm:$0xff]
    %v1624 = vld [vmem:[#allocation11 + $0x738] sm:$0xff]
    %v1625 = vld [vmem:[#allocation11 + $0x740] sm:$0xff]
    %v1626 = vld [vmem:[#allocation11 + $0x748] sm:$0xff]
    %v1627 = vld [vmem:[#allocation11 + $0x750] sm:$0xff]
    %v1628 = vld [vmem:[#allocation11 + $0x758] sm:$0xff]
    %v1629 = vld [vmem:[#allocation11 + $0x760] sm:$0xff]
    %v1630 = vld [vmem:[#allocation11 + $0x768] sm:$0xff]
    %v1631 = vld [vmem:[#allocation11 + $0x770] sm:$0xff]
    %v1632 = vld [vmem:[#allocation11 + $0x778] sm:$0xff]
    %v1633 = vld [vmem:[#allocation11 + $0x780] sm:$0xff]
    %v1634 = vld [vmem:[#allocation11 + $0x788] sm:$0xff]
    %v1635 = vld [vmem:[#allocation11 + $0x790] sm:$0xff]
    %v1636 = vld [vmem:[#allocation11 + $0x798] sm:$0xff]
    %v1637 = vld [vmem:[#allocation11 + $0x7a0] sm:$0xff]
    %v1638 = vld [vmem:[#allocation11 + $0x7a8] sm:$0xff]
    %v1639 = vld [vmem:[#allocation11 + $0x7b0] sm:$0xff]
    %v1640 = vld [vmem:[#allocation11 + $0x7b8] sm:$0xff]
    %v1641 = vld [vmem:[#allocation11 + $0x7c0] sm:$0xff]
    %v1642 = vld [vmem:[#allocation11 + $0x7c8] sm:$0xff]
    %v1643 = vld [vmem:[#allocation11 + $0x7d0] sm:$0xff]
    %v1644 = vld [vmem:[#allocation11 + $0x7d8] sm:$0xff]
    %v1645 = vld [vmem:[#allocation11 + $0x7e0] sm:$0xff]
    %v1646 = vld [vmem:[#allocation11 + $0x7e8] sm:$0xff]
    %v1647 = vld [vmem:[#allocation11 + $0x7f0] sm:$0xff]
    %v1648 = vld [vmem:[#allocation11 + $0x7f8] sm:$0xff]
    %v1649 = vld [vmem:[#allocation13] sm:$0xf]
    %v1650 = vld [vmem:[#allocation14] sm:$0xff]
    %v1651 = vld [vmem:[#allocation14 + $0x8] sm:$0xff]
    %v1652 = vld [vmem:[#allocation14 + $0x10] sm:$0xff]
    %v1653 = vld [vmem:[#allocation14 + $0x18] sm:$0xff]
    %v1654 = vld [vmem:[#allocation14 + $0x20] sm:$0xff]
    %v1655 = vld [vmem:[#allocation14 + $0x28] sm:$0xff]
    %v1656 = vld [vmem:[#allocation14 + $0x30] sm:$0xff]
    %v1657 = vld [vmem:[#allocation14 + $0x38] sm:$0xff]
    %v1658 = vld [vmem:[#allocation14 + $0x40] sm:$0xff]
    %v1659 = vld [vmem:[#allocation14 + $0x48] sm:$0xff]
    %v1660 = vld [vmem:[#allocation14 + $0x50] sm:$0xff]
    %v1661 = vld [vmem:[#allocation14 + $0x58] sm:$0xff]
    %v1662 = vld [vmem:[#allocation14 + $0x60] sm:$0xff]
    %v1663 = vld [vmem:[#allocation14 + $0x68] sm:$0xff]
    %v1664 = vld [vmem:[#allocation14 + $0x70] sm:$0xff]
    %v1665 = vld [vmem:[#allocation14 + $0x78] sm:$0xff]
    %v1666 = vld [vmem:[#allocation14 + $0x80] sm:$0xff]
    %v1667 = vld [vmem:[#allocation14 + $0x88] sm:$0xff]
    %v1668 = vld [vmem:[#allocation14 + $0x90] sm:$0xff]
    %v1669 = vld [vmem:[#allocation14 + $0x98] sm:$0xff]
    %v1670 = vld [vmem:[#allocation14 + $0xa0] sm:$0xff]
    %v1671 = vld [vmem:[#allocation14 + $0xa8] sm:$0xff]
    %v1672 = vld [vmem:[#allocation14 + $0xb0] sm:$0xff]
    %v1673 = vld [vmem:[#allocation14 + $0xb8] sm:$0xff]
    %v1674 = vld [vmem:[#allocation14 + $0xc0] sm:$0xff]
    %v1675 = vld [vmem:[#allocation14 + $0xc8] sm:$0xff]
    %v1676 = vld [vmem:[#allocation14 + $0xd0] sm:$0xff]
    %v1677 = vld [vmem:[#allocation14 + $0xd8] sm:$0xff]
    %v1678 = vld [vmem:[#allocation14 + $0xe0] sm:$0xff]
    %v1679 = vld [vmem:[#allocation14 + $0xe8] sm:$0xff]
    %v1680 = vld [vmem:[#allocation14 + $0xf0] sm:$0xff]
    %v1681 = vld [vmem:[#allocation14 + $0xf8] sm:$0xff]
    %v1682 = vld [vmem:[#allocation14 + $0x100] sm:$0xff]
    %v1683 = vld [vmem:[#allocation14 + $0x108] sm:$0xff]
    %v1684 = vld [vmem:[#allocation14 + $0x110] sm:$0xff]
    %v1685 = vld [vmem:[#allocation14 + $0x118] sm:$0xff]
    %v1686 = vld [vmem:[#allocation14 + $0x120] sm:$0xff]
    %v1687 = vld [vmem:[#allocation14 + $0x128] sm:$0xff]
    %v1688 = vld [vmem:[#allocation14 + $0x130] sm:$0xff]
    %v1689 = vld [vmem:[#allocation14 + $0x138] sm:$0xff]
    %v1690 = vld [vmem:[#allocation14 + $0x140] sm:$0xff]
    %v1691 = vld [vmem:[#allocation14 + $0x148] sm:$0xff]
    %v1692 = vld [vmem:[#allocation14 + $0x150] sm:$0xff]
    %v1693 = vld [vmem:[#allocation14 + $0x158] sm:$0xff]
    %v1694 = vld [vmem:[#allocation14 + $0x160] sm:$0xff]
    %v1695 = vld [vmem:[#allocation14 + $0x168] sm:$0xff]
    %v1696 = vld [vmem:[#allocation14 + $0x170] sm:$0xff]
    %v1697 = vld [vmem:[#allocation14 + $0x178] sm:$0xff]
    %v1698 = vld [vmem:[#allocation14 + $0x180] sm:$0xff]
    %v1699 = vld [vmem:[#allocation14 + $0x188] sm:$0xff]
    %v1700 = vld [vmem:[#allocation14 + $0x190] sm:$0xff]
    %v1701 = vld [vmem:[#allocation14 + $0x198] sm:$0xff]
    %v1702 = vld [vmem:[#allocation14 + $0x1a0] sm:$0xff]
    %v1703 = vld [vmem:[#allocation14 + $0x1a8] sm:$0xff]
    %v1704 = vld [vmem:[#allocation14 + $0x1b0] sm:$0xff]
    %v1705 = vld [vmem:[#allocation14 + $0x1b8] sm:$0xff]
    %v1706 = vld [vmem:[#allocation14 + $0x1c0] sm:$0xff]
    %v1707 = vld [vmem:[#allocation14 + $0x1c8] sm:$0xff]
    %v1708 = vld [vmem:[#allocation14 + $0x1d0] sm:$0xff]
    %v1709 = vld [vmem:[#allocation14 + $0x1d8] sm:$0xff]
    %v1710 = vld [vmem:[#allocation14 + $0x1e0] sm:$0xff]
    %v1711 = vld [vmem:[#allocation14 + $0x1e8] sm:$0xff]
    %v1712 = vld [vmem:[#allocation14 + $0x1f0] sm:$0xff]
    %v1713 = vld [vmem:[#allocation14 + $0x1f8] sm:$0xff]
    %v1714 = vld [vmem:[#allocation14 + $0x200] sm:$0xff]
    %v1715 = vld [vmem:[#allocation14 + $0x208] sm:$0xff]
    %v1716 = vld [vmem:[#allocation14 + $0x210] sm:$0xff]
    %v1717 = vld [vmem:[#allocation14 + $0x218] sm:$0xff]
    %v1718 = vld [vmem:[#allocation14 + $0x220] sm:$0xff]
    %v1719 = vld [vmem:[#allocation14 + $0x228] sm:$0xff]
    %v1720 = vld [vmem:[#allocation14 + $0x230] sm:$0xff]
    %v1721 = vld [vmem:[#allocation14 + $0x238] sm:$0xff]
    %v1722 = vld [vmem:[#allocation14 + $0x240] sm:$0xff]
    %v1723 = vld [vmem:[#allocation14 + $0x248] sm:$0xff]
    %v1724 = vld [vmem:[#allocation14 + $0x250] sm:$0xff]
    %v1725 = vld [vmem:[#allocation14 + $0x258] sm:$0xff]
    %v1726 = vld [vmem:[#allocation14 + $0x260] sm:$0xff]
    %v1727 = vld [vmem:[#allocation14 + $0x268] sm:$0xff]
    %v1728 = vld [vmem:[#allocation14 + $0x270] sm:$0xff]
    %v1729 = vld [vmem:[#allocation14 + $0x278] sm:$0xff]
    %v1730 = vld [vmem:[#allocation14 + $0x280] sm:$0xff]
    %v1731 = vld [vmem:[#allocation14 + $0x288] sm:$0xff]
    %v1732 = vld [vmem:[#allocation14 + $0x290] sm:$0xff]
    %v1733 = vld [vmem:[#allocation14 + $0x298] sm:$0xff]
    %v1734 = vld [vmem:[#allocation14 + $0x2a0] sm:$0xff]
    %v1735 = vld [vmem:[#allocation14 + $0x2a8] sm:$0xff]
    %v1736 = vld [vmem:[#allocation14 + $0x2b0] sm:$0xff]
    %v1737 = vld [vmem:[#allocation14 + $0x2b8] sm:$0xff]
    %v1738 = vld [vmem:[#allocation14 + $0x2c0] sm:$0xff]
    %v1739 = vld [vmem:[#allocation14 + $0x2c8] sm:$0xff]
    %v1740 = vld [vmem:[#allocation14 + $0x2d0] sm:$0xff]
    %v1741 = vld [vmem:[#allocation14 + $0x2d8] sm:$0xff]
    %v1742 = vld [vmem:[#allocation14 + $0x2e0] sm:$0xff]
    %v1743 = vld [vmem:[#allocation14 + $0x2e8] sm:$0xff]
    %v1744 = vld [vmem:[#allocation14 + $0x2f0] sm:$0xff]
    %v1745 = vld [vmem:[#allocation14 + $0x2f8] sm:$0xff]
    %v1746 = vld [vmem:[#allocation14 + $0x300] sm:$0xff]
    %v1747 = vld [vmem:[#allocation14 + $0x308] sm:$0xff]
    %v1748 = vld [vmem:[#allocation14 + $0x310] sm:$0xff]
    %v1749 = vld [vmem:[#allocation14 + $0x318] sm:$0xff]
    %v1750 = vld [vmem:[#allocation14 + $0x320] sm:$0xff]
    %v1751 = vld [vmem:[#allocation14 + $0x328] sm:$0xff]
    %v1752 = vld [vmem:[#allocation14 + $0x330] sm:$0xff]
    %v1753 = vld [vmem:[#allocation14 + $0x338] sm:$0xff]
    %v1754 = vld [vmem:[#allocation14 + $0x340] sm:$0xff]
    %v1755 = vld [vmem:[#allocation14 + $0x348] sm:$0xff]
    %v1756 = vld [vmem:[#allocation14 + $0x350] sm:$0xff]
    %v1757 = vld [vmem:[#allocation14 + $0x358] sm:$0xff]
    %v1758 = vld [vmem:[#allocation14 + $0x360] sm:$0xff]
    %v1759 = vld [vmem:[#allocation14 + $0x368] sm:$0xff]
    %v1760 = vld [vmem:[#allocation14 + $0x370] sm:$0xff]
    %v1761 = vld [vmem:[#allocation14 + $0x378] sm:$0xff]
    %v1762 = vld [vmem:[#allocation14 + $0x380] sm:$0xff]
    %v1763 = vld [vmem:[#allocation14 + $0x388] sm:$0xff]
    %v1764 = vld [vmem:[#allocation14 + $0x390] sm:$0xff]
    %v1765 = vld [vmem:[#allocation14 + $0x398] sm:$0xff]
    %v1766 = vld [vmem:[#allocation14 + $0x3a0] sm:$0xff]
    %v1767 = vld [vmem:[#allocation14 + $0x3a8] sm:$0xff]
    %v1768 = vld [vmem:[#allocation14 + $0x3b0] sm:$0xff]
    %v1769 = vld [vmem:[#allocation14 + $0x3b8] sm:$0xff]
    %v1770 = vld [vmem:[#allocation14 + $0x3c0] sm:$0xff]
    %v1771 = vld [vmem:[#allocation14 + $0x3c8] sm:$0xff]
    %v1772 = vld [vmem:[#allocation14 + $0x3d0] sm:$0xff]
    %v1773 = vld [vmem:[#allocation14 + $0x3d8] sm:$0xff]
    %v1774 = vld [vmem:[#allocation14 + $0x3e0] sm:$0xff]
    %v1775 = vld [vmem:[#allocation14 + $0x3e8] sm:$0xff]
    %v1776 = vld [vmem:[#allocation14 + $0x3f0] sm:$0xff]
    %v1777 = vld [vmem:[#allocation14 + $0x3f8] sm:$0xff]
    %v1778 = vld [vmem:[#allocation14 + $0x400] sm:$0xff]
    %v1779 = vld [vmem:[#allocation14 + $0x408] sm:$0xff]
    %v1780 = vld [vmem:[#allocation14 + $0x410] sm:$0xff]
    %v1781 = vld [vmem:[#allocation14 + $0x418] sm:$0xff]
    %v1782 = vld [vmem:[#allocation14 + $0x420] sm:$0xff]
    %v1783 = vld [vmem:[#allocation14 + $0x428] sm:$0xff]
    %v1784 = vld [vmem:[#allocation14 + $0x430] sm:$0xff]
    %v1785 = vld [vmem:[#allocation14 + $0x438] sm:$0xff]
    %v1786 = vld [vmem:[#allocation14 + $0x440] sm:$0xff]
    %v1787 = vld [vmem:[#allocation14 + $0x448] sm:$0xff]
    %v1788 = vld [vmem:[#allocation14 + $0x450] sm:$0xff]
    %v1789 = vld [vmem:[#allocation14 + $0x458] sm:$0xff]
    %v1790 = vld [vmem:[#allocation14 + $0x460] sm:$0xff]
    %v1791 = vld [vmem:[#allocation14 + $0x468] sm:$0xff]
    %v1792 = vld [vmem:[#allocation14 + $0x470] sm:$0xff]
    %v1793 = vld [vmem:[#allocation14 + $0x478] sm:$0xff]
    %v1794 = vld [vmem:[#allocation14 + $0x480] sm:$0xff]
    %v1795 = vld [vmem:[#allocation14 + $0x488] sm:$0xff]
    %v1796 = vld [vmem:[#allocation14 + $0x490] sm:$0xff]
    %v1797 = vld [vmem:[#allocation14 + $0x498] sm:$0xff]
    %v1798 = vld [vmem:[#allocation14 + $0x4a0] sm:$0xff]
    %v1799 = vld [vmem:[#allocation14 + $0x4a8] sm:$0xff]
    %v1800 = vld [vmem:[#allocation14 + $0x4b0] sm:$0xff]
    %v1801 = vld [vmem:[#allocation14 + $0x4b8] sm:$0xff]
    %v1802 = vld [vmem:[#allocation14 + $0x4c0] sm:$0xff]
    %v1803 = vld [vmem:[#allocation14 + $0x4c8] sm:$0xff]
    %v1804 = vld [vmem:[#allocation14 + $0x4d0] sm:$0xff]
    %v1805 = vld [vmem:[#allocation14 + $0x4d8] sm:$0xff]
    %v1806 = vld [vmem:[#allocation14 + $0x4e0] sm:$0xff]
    %v1807 = vld [vmem:[#allocation14 + $0x4e8] sm:$0xff]
    %v1808 = vld [vmem:[#allocation14 + $0x4f0] sm:$0xff]
    %v1809 = vld [vmem:[#allocation14 + $0x4f8] sm:$0xff]
    %v1810 = vld [vmem:[#allocation14 + $0x500] sm:$0xff]
    %v1811 = vld [vmem:[#allocation14 + $0x508] sm:$0xff]
    %v1812 = vld [vmem:[#allocation14 + $0x510] sm:$0xff]
    %v1813 = vld [vmem:[#allocation14 + $0x518] sm:$0xff]
    %v1814 = vld [vmem:[#allocation14 + $0x520] sm:$0xff]
    %v1815 = vld [vmem:[#allocation14 + $0x528] sm:$0xff]
    %v1816 = vld [vmem:[#allocation14 + $0x530] sm:$0xff]
    %v1817 = vld [vmem:[#allocation14 + $0x538] sm:$0xff]
    %v1818 = vld [vmem:[#allocation14 + $0x540] sm:$0xff]
    %v1819 = vld [vmem:[#allocation14 + $0x548] sm:$0xff]
    %v1820 = vld [vmem:[#allocation14 + $0x550] sm:$0xff]
    %v1821 = vld [vmem:[#allocation14 + $0x558] sm:$0xff]
    %v1822 = vld [vmem:[#allocation14 + $0x560] sm:$0xff]
    %v1823 = vld [vmem:[#allocation14 + $0x568] sm:$0xff]
    %v1824 = vld [vmem:[#allocation14 + $0x570] sm:$0xff]
    %v1825 = vld [vmem:[#allocation14 + $0x578] sm:$0xff]
    %v1826 = vld [vmem:[#allocation14 + $0x580] sm:$0xff]
    %v1827 = vld [vmem:[#allocation14 + $0x588] sm:$0xff]
    %v1828 = vld [vmem:[#allocation14 + $0x590] sm:$0xff]
    %v1829 = vld [vmem:[#allocation14 + $0x598] sm:$0xff]
    %v1830 = vld [vmem:[#allocation14 + $0x5a0] sm:$0xff]
    %v1831 = vld [vmem:[#allocation14 + $0x5a8] sm:$0xff]
    %v1832 = vld [vmem:[#allocation14 + $0x5b0] sm:$0xff]
    %v1833 = vld [vmem:[#allocation14 + $0x5b8] sm:$0xff]
    %v1834 = vld [vmem:[#allocation14 + $0x5c0] sm:$0xff]
    %v1835 = vld [vmem:[#allocation14 + $0x5c8] sm:$0xff]
    %v1836 = vld [vmem:[#allocation14 + $0x5d0] sm:$0xff]
    %v1837 = vld [vmem:[#allocation14 + $0x5d8] sm:$0xff]
    %v1838 = vld [vmem:[#allocation14 + $0x5e0] sm:$0xff]
    %v1839 = vld [vmem:[#allocation14 + $0x5e8] sm:$0xff]
    %v1840 = vld [vmem:[#allocation14 + $0x5f0] sm:$0xff]
    %v1841 = vld [vmem:[#allocation14 + $0x5f8] sm:$0xff]
    %v1842 = vld [vmem:[#allocation14 + $0x600] sm:$0xff]
    %v1843 = vld [vmem:[#allocation14 + $0x608] sm:$0xff]
    %v1844 = vld [vmem:[#allocation14 + $0x610] sm:$0xff]
    %v1845 = vld [vmem:[#allocation14 + $0x618] sm:$0xff]
    %v1846 = vld [vmem:[#allocation14 + $0x620] sm:$0xff]
    %v1847 = vld [vmem:[#allocation14 + $0x628] sm:$0xff]
    %v1848 = vld [vmem:[#allocation14 + $0x630] sm:$0xff]
    %v1849 = vld [vmem:[#allocation14 + $0x638] sm:$0xff]
    %v1850 = vld [vmem:[#allocation14 + $0x640] sm:$0xff]
    %v1851 = vld [vmem:[#allocation14 + $0x648] sm:$0xff]
    %v1852 = vld [vmem:[#allocation14 + $0x650] sm:$0xff]
    %v1853 = vld [vmem:[#allocation14 + $0x658] sm:$0xff]
    %v1854 = vld [vmem:[#allocation14 + $0x660] sm:$0xff]
    %v1855 = vld [vmem:[#allocation14 + $0x668] sm:$0xff]
    %v1856 = vld [vmem:[#allocation14 + $0x670] sm:$0xff]
    %v1857 = vld [vmem:[#allocation14 + $0x678] sm:$0xff]
    %v1858 = vld [vmem:[#allocation14 + $0x680] sm:$0xff]
    %v1859 = vld [vmem:[#allocation14 + $0x688] sm:$0xff]
    %v1860 = vld [vmem:[#allocation14 + $0x690] sm:$0xff]
    %v1861 = vld [vmem:[#allocation14 + $0x698] sm:$0xff]
    %v1862 = vld [vmem:[#allocation14 + $0x6a0] sm:$0xff]
    %v1863 = vld [vmem:[#allocation14 + $0x6a8] sm:$0xff]
    %v1864 = vld [vmem:[#allocation14 + $0x6b0] sm:$0xff]
    %v1865 = vld [vmem:[#allocation14 + $0x6b8] sm:$0xff]
    %v1866 = vld [vmem:[#allocation14 + $0x6c0] sm:$0xff]
    %v1867 = vld [vmem:[#allocation14 + $0x6c8] sm:$0xff]
    %v1868 = vld [vmem:[#allocation14 + $0x6d0] sm:$0xff]
    %v1869 = vld [vmem:[#allocation14 + $0x6d8] sm:$0xff]
    %v1870 = vld [vmem:[#allocation14 + $0x6e0] sm:$0xff]
    %v1871 = vld [vmem:[#allocation14 + $0x6e8] sm:$0xff]
    %v1872 = vld [vmem:[#allocation14 + $0x6f0] sm:$0xff]
    %v1873 = vld [vmem:[#allocation14 + $0x6f8] sm:$0xff]
    %v1874 = vld [vmem:[#allocation14 + $0x700] sm:$0xff]
    %v1875 = vld [vmem:[#allocation14 + $0x708] sm:$0xff]
    %v1876 = vld [vmem:[#allocation14 + $0x710] sm:$0xff]
    %v1877 = vld [vmem:[#allocation14 + $0x718] sm:$0xff]
    %v1878 = vld [vmem:[#allocation14 + $0x720] sm:$0xff]
    %v1879 = vld [vmem:[#allocation14 + $0x728] sm:$0xff]
    %v1880 = vld [vmem:[#allocation14 + $0x730] sm:$0xff]
    %v1881 = vld [vmem:[#allocation14 + $0x738] sm:$0xff]
    %v1882 = vld [vmem:[#allocation14 + $0x740] sm:$0xff]
    %v1883 = vld [vmem:[#allocation14 + $0x748] sm:$0xff]
    %v1884 = vld [vmem:[#allocation14 + $0x750] sm:$0xff]
    %v1885 = vld [vmem:[#allocation14 + $0x758] sm:$0xff]
    %v1886 = vld [vmem:[#allocation14 + $0x760] sm:$0xff]
    %v1887 = vld [vmem:[#allocation14 + $0x768] sm:$0xff]
    %v1888 = vld [vmem:[#allocation14 + $0x770] sm:$0xff]
    %v1889 = vld [vmem:[#allocation14 + $0x778] sm:$0xff]
    %v1890 = vld [vmem:[#allocation14 + $0x780] sm:$0xff]
    %v1891 = vld [vmem:[#allocation14 + $0x788] sm:$0xff]
    %v1892 = vld [vmem:[#allocation14 + $0x790] sm:$0xff]
    %v1893 = vld [vmem:[#allocation14 + $0x798] sm:$0xff]
    %v1894 = vld [vmem:[#allocation14 + $0x7a0] sm:$0xff]
    %v1895 = vld [vmem:[#allocation14 + $0x7a8] sm:$0xff]
    %v1896 = vld [vmem:[#allocation14 + $0x7b0] sm:$0xff]
    %v1897 = vld [vmem:[#allocation14 + $0x7b8] sm:$0xff]
    %v1898 = vld [vmem:[#allocation14 + $0x7c0] sm:$0xff]
    %v1899 = vld [vmem:[#allocation14 + $0x7c8] sm:$0xff]
    %v1900 = vld [vmem:[#allocation14 + $0x7d0] sm:$0xff]
    %v1901 = vld [vmem:[#allocation14 + $0x7d8] sm:$0xff]
    %v1902 = vld [vmem:[#allocation14 + $0x7e0] sm:$0xff]
    %v1903 = vld [vmem:[#allocation14 + $0x7e8] sm:$0xff]
    %v1904 = vld [vmem:[#allocation14 + $0x7f0] sm:$0xff]
    %v1905 = vld [vmem:[#allocation14 + $0x7f8] sm:$0xff]
    %v1906 = vld [vmem:[#allocation14 + $0x800] sm:$0xff]
    %v1907 = vld [vmem:[#allocation14 + $0x808] sm:$0xff]
    %v1908 = vld [vmem:[#allocation14 + $0x810] sm:$0xff]
    %v1909 = vld [vmem:[#allocation14 + $0x818] sm:$0xff]
    %v1910 = vld [vmem:[#allocation14 + $0x820] sm:$0xff]
    %v1911 = vld [vmem:[#allocation14 + $0x828] sm:$0xff]
    %v1912 = vld [vmem:[#allocation14 + $0x830] sm:$0xff]
    %v1913 = vld [vmem:[#allocation14 + $0x838] sm:$0xff]
    %v1914 = vld [vmem:[#allocation14 + $0x840] sm:$0xff]
    %v1915 = vld [vmem:[#allocation14 + $0x848] sm:$0xff]
    %v1916 = vld [vmem:[#allocation14 + $0x850] sm:$0xff]
    %v1917 = vld [vmem:[#allocation14 + $0x858] sm:$0xff]
    %v1918 = vld [vmem:[#allocation14 + $0x860] sm:$0xff]
    %v1919 = vld [vmem:[#allocation14 + $0x868] sm:$0xff]
    %v1920 = vld [vmem:[#allocation14 + $0x870] sm:$0xff]
    %v1921 = vld [vmem:[#allocation14 + $0x878] sm:$0xff]
    %v1922 = vld [vmem:[#allocation14 + $0x880] sm:$0xff]
    %v1923 = vld [vmem:[#allocation14 + $0x888] sm:$0xff]
    %v1924 = vld [vmem:[#allocation14 + $0x890] sm:$0xff]
    %v1925 = vld [vmem:[#allocation14 + $0x898] sm:$0xff]
    %v1926 = vld [vmem:[#allocation14 + $0x8a0] sm:$0xff]
    %v1927 = vld [vmem:[#allocation14 + $0x8a8] sm:$0xff]
    %v1928 = vld [vmem:[#allocation14 + $0x8b0] sm:$0xff]
    %v1929 = vld [vmem:[#allocation14 + $0x8b8] sm:$0xff]
    %v1930 = vld [vmem:[#allocation14 + $0x8c0] sm:$0xff]
    %v1931 = vld [vmem:[#allocation14 + $0x8c8] sm:$0xff]
    %v1932 = vld [vmem:[#allocation14 + $0x8d0] sm:$0xff]
    %v1933 = vld [vmem:[#allocation14 + $0x8d8] sm:$0xff]
    %v1934 = vld [vmem:[#allocation14 + $0x8e0] sm:$0xff]
    %v1935 = vld [vmem:[#allocation14 + $0x8e8] sm:$0xff]
    %v1936 = vld [vmem:[#allocation14 + $0x8f0] sm:$0xff]
    %v1937 = vld [vmem:[#allocation14 + $0x8f8] sm:$0xff]
    %v1938 = vld [vmem:[#allocation14 + $0x900] sm:$0xff]
    %v1939 = vld [vmem:[#allocation14 + $0x908] sm:$0xff]
    %v1940 = vld [vmem:[#allocation14 + $0x910] sm:$0xff]
    %v1941 = vld [vmem:[#allocation14 + $0x918] sm:$0xff]
    %v1942 = vld [vmem:[#allocation14 + $0x920] sm:$0xff]
    %v1943 = vld [vmem:[#allocation14 + $0x928] sm:$0xff]
    %v1944 = vld [vmem:[#allocation14 + $0x930] sm:$0xff]
    %v1945 = vld [vmem:[#allocation14 + $0x938] sm:$0xff]
    %v1946 = vld [vmem:[#allocation14 + $0x940] sm:$0xff]
    %v1947 = vld [vmem:[#allocation14 + $0x948] sm:$0xff]
    %v1948 = vld [vmem:[#allocation14 + $0x950] sm:$0xff]
    %v1949 = vld [vmem:[#allocation14 + $0x958] sm:$0xff]
    %v1950 = vld [vmem:[#allocation14 + $0x960] sm:$0xff]
    %v1951 = vld [vmem:[#allocation14 + $0x968] sm:$0xff]
    %v1952 = vld [vmem:[#allocation14 + $0x970] sm:$0xff]
    %v1953 = vld [vmem:[#allocation14 + $0x978] sm:$0xff]
    %v1954 = vld [vmem:[#allocation14 + $0x980] sm:$0xff]
    %v1955 = vld [vmem:[#allocation14 + $0x988] sm:$0xff]
    %v1956 = vld [vmem:[#allocation14 + $0x990] sm:$0xff]
    %v1957 = vld [vmem:[#allocation14 + $0x998] sm:$0xff]
    %v1958 = vld [vmem:[#allocation14 + $0x9a0] sm:$0xff]
    %v1959 = vld [vmem:[#allocation14 + $0x9a8] sm:$0xff]
    %v1960 = vld [vmem:[#allocation14 + $0x9b0] sm:$0xff]
    %v1961 = vld [vmem:[#allocation14 + $0x9b8] sm:$0xff]
    %v1962 = vld [vmem:[#allocation14 + $0x9c0] sm:$0xff]
    %v1963 = vld [vmem:[#allocation14 + $0x9c8] sm:$0xff]
    %v1964 = vld [vmem:[#allocation14 + $0x9d0] sm:$0xff]
    %v1965 = vld [vmem:[#allocation14 + $0x9d8] sm:$0xff]
    %v1966 = vld [vmem:[#allocation14 + $0x9e0] sm:$0xff]
    %v1967 = vld [vmem:[#allocation14 + $0x9e8] sm:$0xff]
    %v1968 = vld [vmem:[#allocation14 + $0x9f0] sm:$0xff]
    %v1969 = vld [vmem:[#allocation14 + $0x9f8] sm:$0xff]
    %v1970 = vld [vmem:[#allocation14 + $0xa00] sm:$0xff]
    %v1971 = vld [vmem:[#allocation14 + $0xa08] sm:$0xff]
    %v1972 = vld [vmem:[#allocation14 + $0xa10] sm:$0xff]
    %v1973 = vld [vmem:[#allocation14 + $0xa18] sm:$0xff]
    %v1974 = vld [vmem:[#allocation14 + $0xa20] sm:$0xff]
    %v1975 = vld [vmem:[#allocation14 + $0xa28] sm:$0xff]
    %v1976 = vld [vmem:[#allocation14 + $0xa30] sm:$0xff]
    %v1977 = vld [vmem:[#allocation14 + $0xa38] sm:$0xff]
    %v1978 = vld [vmem:[#allocation14 + $0xa40] sm:$0xff]
    %v1979 = vld [vmem:[#allocation14 + $0xa48] sm:$0xff]
    %v1980 = vld [vmem:[#allocation14 + $0xa50] sm:$0xff]
    %v1981 = vld [vmem:[#allocation14 + $0xa58] sm:$0xff]
    %v1982 = vld [vmem:[#allocation14 + $0xa60] sm:$0xff]
    %v1983 = vld [vmem:[#allocation14 + $0xa68] sm:$0xff]
    %v1984 = vld [vmem:[#allocation14 + $0xa70] sm:$0xff]
    %v1985 = vld [vmem:[#allocation14 + $0xa78] sm:$0xff]
    %v1986 = vld [vmem:[#allocation14 + $0xa80] sm:$0xff]
    %v1987 = vld [vmem:[#allocation14 + $0xa88] sm:$0xff]
    %v1988 = vld [vmem:[#allocation14 + $0xa90] sm:$0xff]
    %v1989 = vld [vmem:[#allocation14 + $0xa98] sm:$0xff]
    %v1990 = vld [vmem:[#allocation14 + $0xaa0] sm:$0xff]
    %v1991 = vld [vmem:[#allocation14 + $0xaa8] sm:$0xff]
    %v1992 = vld [vmem:[#allocation14 + $0xab0] sm:$0xff]
    %v1993 = vld [vmem:[#allocation14 + $0xab8] sm:$0xff]
    %v1994 = vld [vmem:[#allocation14 + $0xac0] sm:$0xff]
    %v1995 = vld [vmem:[#allocation14 + $0xac8] sm:$0xff]
    %v1996 = vld [vmem:[#allocation14 + $0xad0] sm:$0xff]
    %v1997 = vld [vmem:[#allocation14 + $0xad8] sm:$0xff]
    %v1998 = vld [vmem:[#allocation14 + $0xae0] sm:$0xff]
    %v1999 = vld [vmem:[#allocation14 + $0xae8] sm:$0xff]
    %v2000 = vld [vmem:[#allocation14 + $0xaf0] sm:$0xff]
    %v2001 = vld [vmem:[#allocation14 + $0xaf8] sm:$0xff]
    %v2002 = vld [vmem:[#allocation14 + $0xb00] sm:$0xff]
    %v2003 = vld [vmem:[#allocation14 + $0xb08] sm:$0xff]
    %v2004 = vld [vmem:[#allocation14 + $0xb10] sm:$0xff]
    %v2005 = vld [vmem:[#allocation14 + $0xb18] sm:$0xff]
    %v2006 = vld [vmem:[#allocation14 + $0xb20] sm:$0xff]
    %v2007 = vld [vmem:[#allocation14 + $0xb28] sm:$0xff]
    %v2008 = vld [vmem:[#allocation14 + $0xb30] sm:$0xff]
    %v2009 = vld [vmem:[#allocation14 + $0xb38] sm:$0xff]
    %v2010 = vld [vmem:[#allocation14 + $0xb40] sm:$0xff]
    %v2011 = vld [vmem:[#allocation14 + $0xb48] sm:$0xff]
    %v2012 = vld [vmem:[#allocation14 + $0xb50] sm:$0xff]
    %v2013 = vld [vmem:[#allocation14 + $0xb58] sm:$0xff]
    %v2014 = vld [vmem:[#allocation14 + $0xb60] sm:$0xff]
    %v2015 = vld [vmem:[#allocation14 + $0xb68] sm:$0xff]
    %v2016 = vld [vmem:[#allocation14 + $0xb70] sm:$0xff]
    %v2017 = vld [vmem:[#allocation14 + $0xb78] sm:$0xff]
    %v2018 = vld [vmem:[#allocation14 + $0xb80] sm:$0xff]
    %v2019 = vld [vmem:[#allocation14 + $0xb88] sm:$0xff]
    %v2020 = vld [vmem:[#allocation14 + $0xb90] sm:$0xff]
    %v2021 = vld [vmem:[#allocation14 + $0xb98] sm:$0xff]
    %v2022 = vld [vmem:[#allocation14 + $0xba0] sm:$0xff]
    %v2023 = vld [vmem:[#allocation14 + $0xba8] sm:$0xff]
    %v2024 = vld [vmem:[#allocation14 + $0xbb0] sm:$0xff]
    %v2025 = vld [vmem:[#allocation14 + $0xbb8] sm:$0xff]
    %v2026 = vld [vmem:[#allocation14 + $0xbc0] sm:$0xff]
    %v2027 = vld [vmem:[#allocation14 + $0xbc8] sm:$0xff]
    %v2028 = vld [vmem:[#allocation14 + $0xbd0] sm:$0xff]
    %v2029 = vld [vmem:[#allocation14 + $0xbd8] sm:$0xff]
    %v2030 = vld [vmem:[#allocation14 + $0xbe0] sm:$0xff]
    %v2031 = vld [vmem:[#allocation14 + $0xbe8] sm:$0xff]
    %v2032 = vld [vmem:[#allocation14 + $0xbf0] sm:$0xff]
    %v2033 = vld [vmem:[#allocation14 + $0xbf8] sm:$0xff]
    %v2034 = vld [vmem:[#allocation16] sm:$0x3f]
    %2035 = vmatprep.subr.mxu0 %v1231
    %2036 = vmatpush1.xpose.msra.mxu0 %v1229
    %2037 = vmatprep.subr.mxu0 0.0
    %2038 = vmatpush1.xpose.msra.mxu0 0.0
    %2039 = vmatprep.subr.mxu0 0.0
    %2040 = vmatpush1.xpose.msra.mxu0 0.0
    %2041 = vmatprep.subr.mxu0 0.0
    %2042 = vmatpush1.xpose.msra.mxu0 0.0
    %2043 = vmatprep.subr.mxu0 0.0
    %2044 = vmatpush1.xpose.msra.mxu0 0.0
    %2045 = vmatprep.subr.mxu0 0.0
    %2046 = vmatpush1.xpose.msra.mxu0 0.0
    %2047 = vmatprep.subr.mxu0 0.0
    %2048 = vmatpush1.xpose.msra.mxu0 0.0
    %2049 = vmatprep.subr.mxu0 0.0
    %2050 = vmatpush1.xpose.msra.mxu0 0.0
    %2051 = vmatprep.subr.mxu0 0.0
    %2052 = vmatpush1.xpose.msra.mxu0 0.0
    %2053 = vmatprep.subr.mxu0 0.0
    %2054 = vmatpush1.xpose.msra.mxu0 0.0
    %2055 = vmatprep.subr.mxu0 0.0
    %2056 = vmatpush1.xpose.msra.mxu0 0.0
    %2057 = vmatprep.subr.mxu0 0.0
    %2058 = vmatpush1.xpose.msra.mxu0 0.0
    %2059 = vmatprep.subr.mxu0 0.0
    %2060 = vmatpush1.xpose.msra.mxu0 0.0
    %2061 = vmatprep.subr.mxu0 0.0
    %2062 = vmatpush1.xpose.msra.mxu0 0.0
    %2063 = vmatprep.subr.mxu0 0.0
    %2064 = vmatpush1.xpose.msra.mxu0 0.0
    %2065 = vmatprep.subr.mxu0 0.0
    %2066 = vmatpush1.xpose.msra.mxu0 0.0
    %2067 = vmatprep.subr.mxu0 0.0
    %2068 = vmatpush1.xpose.msra.mxu0 0.0
    %2069 = vmatprep.subr.mxu0 0.0
    %2070 = vmatpush1.xpose.msra.mxu0 0.0
    %2071 = vmatprep.subr.mxu0 0.0
    %2072 = vmatpush1.xpose.msra.mxu0 0.0
    %2073 = vmatprep.subr.mxu0 0.0
    %2074 = vmatpush1.xpose.msra.mxu0 0.0
    %2075 = vmatprep.subr.mxu0 0.0
    %2076 = vmatpush1.xpose.msra.mxu0 0.0
    %2077 = vmatprep.subr.mxu0 0.0
    %2078 = vmatpush1.xpose.msra.mxu0 0.0
    %2079 = vmatprep.subr.mxu0 0.0
    %2080 = vmatpush1.xpose.msra.mxu0 0.0
    %2081 = vmatprep.subr.mxu0 0.0
    %2082 = vmatpush1.xpose.msra.mxu0 0.0
    %2083 = vmatprep.subr.mxu0 0.0
    %2084 = vmatpush1.xpose.msra.mxu0 0.0
    %2085 = vmatprep.subr.mxu0 0.0
    %2086 = vmatpush1.xpose.msra.mxu0 0.0
    %2087 = vmatprep.subr.mxu0 0.0
    %2088 = vmatpush1.xpose.msra.mxu0 0.0
    %2089 = vmatprep.subr.mxu0 0.0
    %2090 = vmatpush1.xpose.msra.mxu0 0.0
    %2091 = vmatprep.subr.mxu0 0.0
    %2092 = vmatpush1.xpose.msra.mxu0 0.0
    %2093 = vmatprep.subr.mxu0 0.0
    %2094 = vmatpush1.xpose.msra.mxu0 0.0
    %2095 = vmatprep.subr.mxu0 0.0
    %2096 = vmatpush1.xpose.msra.mxu0 0.0
    %2097 = vmatprep.subr.mxu0 0.0
    %2098 = vmatpush1.xpose.msra.mxu0 0.0
    %2099 = vmatprep.mubr.f32.mxu0 %v1231
    %2100 = vmatmul.mubr.f32.gmra.mrb[0].mxu0 %v1229
    %v2101 = vpop.f32.mrb[0].mxu0
    %v2102 = vadd.f32 0.0, %v2101
    %v2103 = vpop.f32.mrb[0].mxu0
    %2104 = vdwg.mxu0
    %2105 = vmatprep.subr.mxu0 %v1385
    %2106 = vmatpush1.xpose.msra.mxu0 %v1383
    %2107 = vmatprep.subr.mxu0 0.0
    %2108 = vmatpush1.xpose.msra.mxu0 0.0
    %2109 = vmatprep.subr.mxu0 0.0
    %2110 = vmatpush1.xpose.msra.mxu0 0.0
    %2111 = vmatprep.subr.mxu0 0.0
    %2112 = vmatpush1.xpose.msra.mxu0 0.0
    %2113 = vmatprep.subr.mxu0 0.0
    %2114 = vmatpush1.xpose.msra.mxu0 0.0
    %2115 = vmatprep.subr.mxu0 0.0
    %2116 = vmatpush1.xpose.msra.mxu0 0.0
    %2117 = vmatprep.subr.mxu0 0.0
    %2118 = vmatpush1.xpose.msra.mxu0 0.0
    %2119 = vmatprep.subr.mxu0 0.0
    %2120 = vmatpush1.xpose.msra.mxu0 0.0
    %2121 = vmatprep.subr.mxu0 0.0
    %2122 = vmatpush1.xpose.msra.mxu0 0.0
    %2123 = vmatprep.subr.mxu0 0.0
    %2124 = vmatpush1.xpose.msra.mxu0 0.0
    %2125 = vmatprep.subr.mxu0 0.0
    %2126 = vmatpush1.xpose.msra.mxu0 0.0
    %2127 = vmatprep.subr.mxu0 0.0
    %2128 = vmatpush1.xpose.msra.mxu0 0.0
    %2129 = vmatprep.subr.mxu0 0.0
    %2130 = vmatpush1.xpose.msra.mxu0 0.0
    %2131 = vmatprep.subr.mxu0 0.0
    %2132 = vmatpush1.xpose.msra.mxu0 0.0
    %2133 = vmatprep.subr.mxu0 0.0
    %2134 = vmatpush1.xpose.msra.mxu0 0.0
    %2135 = vmatprep.subr.mxu0 0.0
    %2136 = vmatpush1.xpose.msra.mxu0 0.0
    %2137 = vmatprep.subr.mxu0 0.0
    %2138 = vmatpush1.xpose.msra.mxu0 0.0
    %2139 = vmatprep.subr.mxu0 0.0
    %2140 = vmatpush1.xpose.msra.mxu0 0.0
    %2141 = vmatprep.subr.mxu0 0.0
    %2142 = vmatpush1.xpose.msra.mxu0 0.0
    %2143 = vmatprep.subr.mxu0 0.0
    %2144 = vmatpush1.xpose.msra.mxu0 0.0
    %2145 = vmatprep.subr.mxu0 0.0
    %2146 = vmatpush1.xpose.msra.mxu0 0.0
    %2147 = vmatprep.subr.mxu0 0.0
    %2148 = vmatpush1.xpose.msra.mxu0 0.0
    %2149 = vmatprep.subr.mxu0 0.0
    %2150 = vmatpush1.xpose.msra.mxu0 0.0
    %2151 = vmatprep.subr.mxu0 0.0
    %2152 = vmatpush1.xpose.msra.mxu0 0.0
    %2153 = vmatprep.subr.mxu0 0.0
    %2154 = vmatpush1.xpose.msra.mxu0 0.0
    %2155 = vmatprep.subr.mxu0 0.0
    %2156 = vmatpush1.xpose.msra.mxu0 0.0
    %2157 = vmatprep.subr.mxu0 0.0
    %2158 = vmatpush1.xpose.msra.mxu0 0.0
    %2159 = vmatprep.subr.mxu0 0.0
    %2160 = vmatpush1.xpose.msra.mxu0 0.0
    %2161 = vmatprep.subr.mxu0 0.0
    %2162 = vmatpush1.xpose.msra.mxu0 0.0
    %2163 = vmatprep.subr.mxu0 0.0
    %2164 = vmatpush1.xpose.msra.mxu0 0.0
    %2165 = vmatprep.subr.mxu0 0.0
    %2166 = vmatpush1.xpose.msra.mxu0 0.0
    %2167 = vmatprep.subr.mxu0 0.0
    %2168 = vmatpush1.xpose.msra.mxu0 0.0
    %2169 = vmatprep.mubr.f32.mxu0 %v1385
    %2170 = vmatmul.mubr.f32.gmra.mrb[0].mxu0 %v1383
    %v2171 = vpop.f32.mrb[0].mxu0
    %v2172 = vadd.f32 %v2102, %v2171
    %v2173 = vpop.f32.mrb[0].mxu0
    %2174 = vdwg.mxu0
    %2175 = vmatprep.subr.mxu0 %v1237
    %2176 = vmatpush1.xpose.msra.mxu0 %v1235
    %2177 = vmatprep.subr.mxu0 0.0
    %2178 = vmatpush1.xpose.msra.mxu0 0.0
    %2179 = vmatprep.subr.mxu0 0.0
    %2180 = vmatpush1.xpose.msra.mxu0 0.0
    %2181 = vmatprep.subr.mxu0 0.0
    %2182 = vmatpush1.xpose.msra.mxu0 0.0
    %2183 = vmatprep.subr.mxu0 0.0
    %2184 = vmatpush1.xpose.msra.mxu0 0.0
    %2185 = vmatprep.subr.mxu0 0.0
    %2186 = vmatpush1.xpose.msra.mxu0 0.0
    %2187 = vmatprep.subr.mxu0 0.0
    %2188 = vmatpush1.xpose.msra.mxu0 0.0
    %2189 = vmatprep.subr.mxu0 0.0
    %2190 = vmatpush1.xpose.msra.mxu0 0.0
    %2191 = vmatprep.subr.mxu0 0.0
    %2192 = vmatpush1.xpose.msra.mxu0 0.0
    %2193 = vmatprep.subr.mxu0 0.0
    %2194 = vmatpush1.xpose.msra.mxu0 0.0
    %2195 = vmatprep.subr.mxu0 0.0
    %2196 = vmatpush1.xpose.msra.mxu0 0.0
    %2197 = vmatprep.subr.mxu0 0.0
    %2198 = vmatpush1.xpose.msra.mxu0 0.0
    %2199 = vmatprep.subr.mxu0 0.0
    %2200 = vmatpush1.xpose.msra.mxu0 0.0
    %2201 = vmatprep.subr.mxu0 0.0
    %2202 = vmatpush1.xpose.msra.mxu0 0.0
    %2203 = vmatprep.subr.mxu0 0.0
    %2204 = vmatpush1.xpose.msra.mxu0 0.0
    %2205 = vmatprep.subr.mxu0 0.0
    %2206 = vmatpush1.xpose.msra.mxu0 0.0
    %2207 = vmatprep.subr.mxu0 0.0
    %2208 = vmatpush1.xpose.msra.mxu0 0.0
    %2209 = vmatprep.subr.mxu0 0.0
    %2210 = vmatpush1.xpose.msra.mxu0 0.0
    %2211 = vmatprep.subr.mxu0 0.0
    %2212 = vmatpush1.xpose.msra.mxu0 0.0
    %2213 = vmatprep.subr.mxu0 0.0
    %2214 = vmatpush1.xpose.msra.mxu0 0.0
    %2215 = vmatprep.subr.mxu0 0.0
    %2216 = vmatpush1.xpose.msra.mxu0 0.0
    %2217 = vmatprep.subr.mxu0 0.0
    %2218 = vmatpush1.xpose.msra.mxu0 0.0
    %2219 = vmatprep.subr.mxu0 0.0
    %2220 = vmatpush1.xpose.msra.mxu0 0.0
    %2221 = vmatprep.subr.mxu0 0.0
    %2222 = vmatpush1.xpose.msra.mxu0 0.0
    %2223 = vmatprep.subr.mxu0 0.0
    %2224 = vmatpush1.xpose.msra.mxu0 0.0
    %2225 = vmatprep.subr.mxu0 0.0
    %2226 = vmatpush1.xpose.msra.mxu0 0.0
    %2227 = vmatprep.subr.mxu0 0.0
    %2228 = vmatpush1.xpose.msra.mxu0 0.0
    %2229 = vmatprep.subr.mxu0 0.0
    %2230 = vmatpush1.xpose.msra.mxu0 0.0
    %2231 = vmatprep.subr.mxu0 0.0
    %2232 = vmatpush1.xpose.msra.mxu0 0.0
    %2233 = vmatprep.subr.mxu0 0.0
    %2234 = vmatpush1.xpose.msra.mxu0 0.0
    %2235 = vmatprep.subr.mxu0 0.0
    %2236 = vmatpush1.xpose.msra.mxu0 0.0
    %2237 = vmatprep.subr.mxu0 0.0
    %2238 = vmatpush1.xpose.msra.mxu0 0.0
    %2239 = vmatprep.mubr.f32.mxu0 %v1237
    %2240 = vmatmul.mubr.f32.gmra.mrb[0].mxu0 %v1235
    %v2241 = vpop.f32.mrb[0].mxu0
    %v2242 = vadd.f32 0.0, %v2241
    %v2243 = vpop.f32.mrb[0].mxu0
    %2244 = vdwg.mxu0
    %2245 = vmatprep.subr.mxu0 %v1391
    %2246 = vmatpush1.xpose.msra.mxu0 %v1389
    %2247 = vmatprep.subr.mxu0 0.0
    %2248 = vmatpush1.xpose.msra.mxu0 0.0
    %2249 = vmatprep.subr.mxu0 0.0
    %2250 = vmatpush1.xpose.msra.mxu0 0.0
    %2251 = vmatprep.subr.mxu0 0.0
    %2252 = vmatpush1.xpose.msra.mxu0 0.0
    %2253 = vmatprep.subr.mxu0 0.0
    %2254 = vmatpush1.xpose.msra.mxu0 0.0
    %2255 = vmatprep.subr.mxu0 0.0
    %2256 = vmatpush1.xpose.msra.mxu0 0.0
    %2257 = vmatprep.subr.mxu0 0.0
    %2258 = vmatpush1.xpose.msra.mxu0 0.0
    %2259 = vmatprep.subr.mxu0 0.0
    %2260 = vmatpush1.xpose.msra.mxu0 0.0
    %2261 = vmatprep.subr.mxu0 0.0
    %2262 = vmatpush1.xpose.msra.mxu0 0.0
    %2263 = vmatprep.subr.mxu0 0.0
    %2264 = vmatpush1.xpose.msra.mxu0 0.0
    %2265 = vmatprep.subr.mxu0 0.0
    %2266 = vmatpush1.xpose.msra.mxu0 0.0
    %2267 = vmatprep.subr.mxu0 0.0
    %2268 = vmatpush1.xpose.msra.mxu0 0.0
    %2269 = vmatprep.subr.mxu0 0.0
    %2270 = vmatpush1.xpose.msra.mxu0 0.0
    %2271 = vmatprep.subr.mxu0 0.0
    %2272 = vmatpush1.xpose.msra.mxu0 0.0
    %2273 = vmatprep.subr.mxu0 0.0
    %2274 = vmatpush1.xpose.msra.mxu0 0.0
    %2275 = vmatprep.subr.mxu0 0.0
    %2276 = vmatpush1.xpose.msra.mxu0 0.0
    %2277 = vmatprep.subr.mxu0 0.0
    %2278 = vmatpush1.xpose.msra.mxu0 0.0
    %2279 = vmatprep.subr.mxu0 0.0
    %2280 = vmatpush1.xpose.msra.mxu0 0.0
    %2281 = vmatprep.subr.mxu0 0.0
    %2282 = vmatpush1.xpose.msra.mxu0 0.0
    %2283 = vmatprep.subr.mxu0 0.0
    %2284 = vmatpush1.xpose.msra.mxu0 0.0
    %2285 = vmatprep.subr.mxu0 0.0
    %2286 = vmatpush1.xpose.msra.mxu0 0.0
    %2287 = vmatprep.subr.mxu0 0.0
    %2288 = vmatpush1.xpose.msra.mxu0 0.0
    %2289 = vmatprep.subr.mxu0 0.0
    %2290 = vmatpush1.xpose.msra.mxu0 0.0
    %2291 = vmatprep.subr.mxu0 0.0
    %2292 = vmatpush1.xpose.msra.mxu0 0.0
    %2293 = vmatprep.subr.mxu0 0.0
    %2294 = vmatpush1.xpose.msra.mxu0 0.0
    %2295 = vmatprep.subr.mxu0 0.0
    %2296 = vmatpush1.xpose.msra.mxu0 0.0
    %2297 = vmatprep.subr.mxu0 0.0
    %2298 = vmatpush1.xpose.msra.mxu0 0.0
    %2299 = vmatprep.subr.mxu0 0.0
    %2300 = vmatpush1.xpose.msra.mxu0 0.0
    %2301 = vmatprep.subr.mxu0 0.0
    %2302 = vmatpush1.xpose.msra.mxu0 0.0
    %2303 = vmatprep.subr.mxu0 0.0
    %2304 = vmatpush1.xpose.msra.mxu0 0.0
    %2305 = vmatprep.subr.mxu0 0.0
    %2306 = vmatpush1.xpose.msra.mxu0 0.0
    %2307 = vmatprep.subr.mxu0 0.0
    %2308 = vmatpush1.xpose.msra.mxu0 0.0
    %2309 = vmatprep.mubr.f32.mxu0 %v1391
    %2310 = vmatmul.mubr.f32.gmra.mrb[0].mxu0 %v1389
    %v2311 = vpop.f32.mrb[0].mxu0
    %v2312 = vadd.f32 %v2242, %v2311
    %v2313 = vpop.f32.mrb[0].mxu0
    %2314 = vdwg.mxu0
    %v2315 = vmul.f32 %v1229, %v1229
    %v2316 = vmul.f32 %v1231, %v1231
    %v2317 = vmul.f32 %v1383, %v1383
    %v2318 = vmul.f32 %v1385, %v1385
    %v2319 = vmul.f32 %v1235, %v1235
    %v2320 = vmul.f32 %v1237, %v1237
    %v2321 = vmul.f32 %v1389, %v1389
    %v2322 = vmul.f32 %v1391, %v1391
    %v2323 = vadd.f32 %v2315, %v2316
    %v2324 = vadd.f32 %v2323, %v2317
    %v2325 = vadd.f32 %v2324, %v2318
    %2326 = vadd.xlane.f32.xlu0 %v2325
    %v2327 = vpop.xlane.xlu0 %2326
    %v2328 = vadd.f32 %v2319, %v2320
    %v2329 = vadd.f32 %v2328, %v2321
    %v2330 = vadd.f32 %v2329, %v2322
    %2331 = vadd.xlane.f32.xlu0 %v2330
    %v2332 = vpop.xlane.xlu0 %2331
    %v2335 = vlaneseq
    %v2336 = vshrl.u32 %v2335, 7
    %v2337 = vsub.s32 %v659, %v2336
    %v2338 = vrot.slane %v2327, %v2337
    %v2339 = vlaneseq
    %v2340 = vshrl.u32 %v2339, 7
    %v2341 = vsub.s32 %v659, %v2340
    %v2342 = vrot.slane %v2332, %v2341
    %v2343 = vsel %vm668, %v2338, %v2338
    %v2344 = vsel %vm670, %v2338, %v2343
    %v2345 = vsel %vm672, %v2338, %v2344
    %v2346 = vsel %vm674, %v2338, %v2345
    %v2347 = vsel %vm676, %v2338, %v2346
    %v2348 = vsel %vm678, %v2338, %v2347
    %v2349 = vsel %vm668, %v2342, %v2342
    %v2350 = vsel %vm670, %v2342, %v2349
    %v2351 = vsel %vm672, %v2342, %v2350
    %v2352 = vsel %vm674, %v2342, %v2351
    %v2353 = vsel %vm676, %v2342, %v2352
    %v2354 = vsel %vm678, %v2342, %v2353
    %v2357 = vadd.f32 %v2327, %v2348
    %v2358 = vadd.f32 %v2332, %v2354
    %v2359 = vmul.f32 %v2172, 2.0
    %v2360 = vmul.f32 %v2312, 2.0
    %v2361 = vsub.f32 %v2357, %v2359
    %v2362 = vsub.f32 %v2358, %v2360
    %v2363 = vmax.f32 %v2361, 0.0
    %v2364 = vmax.f32 %v2362, 0.0
    %v2365 = vsub.f32 0.0, %v2363
    %v2366 = vsub.f32 0.0, %v2364
    %v2367 = vmul.f32 %v2365, 1.442695
    %v2368 = vpow.pop %v2367
    %v2369 = vmul.f32 %v2366, 1.442695
    %v2370 = vpow.pop %v2369
    %v2371 = vsel %vm702, %v2368, 0.0
    %2372 = vadd.xlane.f32.xlu0 %v2371
    %v2373 = vpop.xlane.xlu0 %2372
    %v2374 = vsel %vm702, %v2370, 0.0
    %2375 = vadd.xlane.f32.xlu0 %v2374
    %v2376 = vpop.xlane.xlu0 %2375
    %v2377 = vrcp.pop %v2373
    %v2378 = vrcp.pop %v2376
    %v2379 = vmul.f32 %v2368, %v2377
    %v2380 = vmul.f32 %v2370, %v2378
    %v2382 = vsel %vm702, %v2379, 0
    %2384 = vmatprep.subr.mxu0 %v1231
    %2385 = vmatpush1.msra.mxu0 %v1229
    %2386 = vmatprep.subr.mxu0 0.0
    %2387 = vmatpush1.msra.mxu0 0.0
    %2388 = vmatprep.subr.mxu0 0.0
    %2389 = vmatpush1.msra.mxu0 0.0
    %2390 = vmatprep.subr.mxu0 0.0
    %2391 = vmatpush1.msra.mxu0 0.0
    %2392 = vmatprep.subr.mxu0 0.0
    %2393 = vmatpush1.msra.mxu0 0.0
    %2394 = vmatprep.subr.mxu0 0.0
    %2395 = vmatpush1.msra.mxu0 0.0
    %2396 = vmatprep.subr.mxu0 0.0
    %2397 = vmatpush1.msra.mxu0 0.0
    %2398 = vmatprep.subr.mxu0 0.0
    %2399 = vmatpush1.msra.mxu0 0.0
    %2400 = vmatprep.subr.mxu0 0.0
    %2401 = vmatpush1.msra.mxu0 0.0
    %2402 = vmatprep.subr.mxu0 0.0
    %2403 = vmatpush1.msra.mxu0 0.0
    %2404 = vmatprep.subr.mxu0 0.0
    %2405 = vmatpush1.msra.mxu0 0.0
    %2406 = vmatprep.subr.mxu0 0.0
    %2407 = vmatpush1.msra.mxu0 0.0
    %2408 = vmatprep.subr.mxu0 0.0
    %2409 = vmatpush1.msra.mxu0 0.0
    %2410 = vmatprep.subr.mxu0 0.0
    %2411 = vmatpush1.msra.mxu0 0.0
    %2412 = vmatprep.subr.mxu0 0.0
    %2413 = vmatpush1.msra.mxu0 0.0
    %2414 = vmatprep.subr.mxu0 0.0
    %2415 = vmatpush1.msra.mxu0 0.0
    %2416 = vmatprep.subr.mxu0 0.0
    %2417 = vmatpush1.msra.mxu0 0.0
    %2418 = vmatprep.subr.mxu0 0.0
    %2419 = vmatpush1.msra.mxu0 0.0
    %2420 = vmatprep.subr.mxu0 0.0
    %2421 = vmatpush1.msra.mxu0 0.0
    %2422 = vmatprep.subr.mxu0 0.0
    %2423 = vmatpush1.msra.mxu0 0.0
    %2424 = vmatprep.subr.mxu0 0.0
    %2425 = vmatpush1.msra.mxu0 0.0
    %2426 = vmatprep.subr.mxu0 0.0
    %2427 = vmatpush1.msra.mxu0 0.0
    %2428 = vmatprep.subr.mxu0 0.0
    %2429 = vmatpush1.msra.mxu0 0.0
    %2430 = vmatprep.subr.mxu0 0.0
    %2431 = vmatpush1.msra.mxu0 0.0
    %2432 = vmatprep.subr.mxu0 0.0
    %2433 = vmatpush1.msra.mxu0 0.0
    %2434 = vmatprep.subr.mxu0 0.0
    %2435 = vmatpush1.msra.mxu0 0.0
    %2436 = vmatprep.subr.mxu0 0.0
    %2437 = vmatpush1.msra.mxu0 0.0
    %2438 = vmatprep.subr.mxu0 0.0
    %2439 = vmatpush1.msra.mxu0 0.0
    %2440 = vmatprep.subr.mxu0 0.0
    %2441 = vmatpush1.msra.mxu0 0.0
    %2442 = vmatprep.subr.mxu0 0.0
    %2443 = vmatpush1.msra.mxu0 0.0
    %2444 = vmatprep.subr.mxu0 0.0
    %2445 = vmatpush1.msra.mxu0 0.0
    %2446 = vmatprep.subr.mxu0 0.0
    %2447 = vmatpush1.msra.mxu0 0.0
    %2448 = vmatprep.mubr.f32.mxu0 0.0
    %2449 = vmatmul.mubr.f32.gmra.mrb[0].mxu0 %v2382
    %v2450 = vpop.f32.mrb[0].mxu0
    %v2451 = vadd.f32 %v1229, %v2450
    %v2452 = vpop.f32.mrb[0].mxu0
    %v2453 = vadd.f32 %v1231, %v2452
    %2454 = vdwg.mxu0
    %2455 = vmatprep.subr.mxu0 %v1385
    %2456 = vmatpush1.msra.mxu0 %v1383
    %2457 = vmatprep.subr.mxu0 0.0
    %2458 = vmatpush1.msra.mxu0 0.0
    %2459 = vmatprep.subr.mxu0 0.0
    %2460 = vmatpush1.msra.mxu0 0.0
    %2461 = vmatprep.subr.mxu0 0.0
    %2462 = vmatpush1.msra.mxu0 0.0
    %2463 = vmatprep.subr.mxu0 0.0
    %2464 = vmatpush1.msra.mxu0 0.0
    %2465 = vmatprep.subr.mxu0 0.0
    %2466 = vmatpush1.msra.mxu0 0.0
    %2467 = vmatprep.subr.mxu0 0.0
    %2468 = vmatpush1.msra.mxu0 0.0
    %2469 = vmatprep.subr.mxu0 0.0
    %2470 = vmatpush1.msra.mxu0 0.0
    %2471 = vmatprep.subr.mxu0 0.0
    %2472 = vmatpush1.msra.mxu0 0.0
    %2473 = vmatprep.subr.mxu0 0.0
    %2474 = vmatpush1.msra.mxu0 0.0
    %2475 = vmatprep.subr.mxu0 0.0
    %2476 = vmatpush1.msra.mxu0 0.0
    %2477 = vmatprep.subr.mxu0 0.0
    %2478 = vmatpush1.msra.mxu0 0.0
    %2479 = vmatprep.subr.mxu0 0.0
    %2480 = vmatpush1.msra.mxu0 0.0
    %2481 = vmatprep.subr.mxu0 0.0
    %2482 = vmatpush1.msra.mxu0 0.0
    %2483 = vmatprep.subr.mxu0 0.0
    %2484 = vmatpush1.msra.mxu0 0.0
    %2485 = vmatprep.subr.mxu0 0.0
    %2486 = vmatpush1.msra.mxu0 0.0
    %2487 = vmatprep.subr.mxu0 0.0
    %2488 = vmatpush1.msra.mxu0 0.0
    %2489 = vmatprep.subr.mxu0 0.0
    %2490 = vmatpush1.msra.mxu0 0.0
    %2491 = vmatprep.subr.mxu0 0.0
    %2492 = vmatpush1.msra.mxu0 0.0
    %2493 = vmatprep.subr.mxu0 0.0
    %2494 = vmatpush1.msra.mxu0 0.0
    %2495 = vmatprep.subr.mxu0 0.0
    %2496 = vmatpush1.msra.mxu0 0.0
    %2497 = vmatprep.subr.mxu0 0.0
    %2498 = vmatpush1.msra.mxu0 0.0
    %2499 = vmatprep.subr.mxu0 0.0
    %2500 = vmatpush1.msra.mxu0 0.0
    %2501 = vmatprep.subr.mxu0 0.0
    %2502 = vmatpush1.msra.mxu0 0.0
    %2503 = vmatprep.subr.mxu0 0.0
    %2504 = vmatpush1.msra.mxu0 0.0
    %2505 = vmatprep.subr.mxu0 0.0
    %2506 = vmatpush1.msra.mxu0 0.0
    %2507 = vmatprep.subr.mxu0 0.0
    %2508 = vmatpush1.msra.mxu0 0.0
    %2509 = vmatprep.subr.mxu0 0.0
    %2510 = vmatpush1.msra.mxu0 0.0
    %2511 = vmatprep.subr.mxu0 0.0
    %2512 = vmatpush1.msra.mxu0 0.0
    %2513 = vmatprep.subr.mxu0 0.0
    %2514 = vmatpush1.msra.mxu0 0.0
    %2515 = vmatprep.subr.mxu0 0.0
    %2516 = vmatpush1.msra.mxu0 0.0
    %2517 = vmatprep.subr.mxu0 0.0
    %2518 = vmatpush1.msra.mxu0 0.0
    %2519 = vmatprep.mubr.f32.mxu0 0.0
    %2520 = vmatmul.mubr.f32.gmra.mrb[0].mxu0 %v2382
    %v2521 = vpop.f32.mrb[0].mxu0
    %v2522 = vadd.f32 %v1383, %v2521
    %v2523 = vpop.f32.mrb[0].mxu0
    %v2524 = vadd.f32 %v1385, %v2523
    %2525 = vdwg.mxu0
    %v2527 = vsel %vm702, %v2380, 0
    %2529 = vmatprep.subr.mxu0 %v1237
    %2530 = vmatpush1.msra.mxu0 %v1235
    %2531 = vmatprep.subr.mxu0 0.0
    %2532 = vmatpush1.msra.mxu0 0.0
    %2533 = vmatprep.subr.mxu0 0.0
    %2534 = vmatpush1.msra.mxu0 0.0
    %2535 = vmatprep.subr.mxu0 0.0
    %2536 = vmatpush1.msra.mxu0 0.0
    %2537 = vmatprep.subr.mxu0 0.0
    %2538 = vmatpush1.msra.mxu0 0.0
    %2539 = vmatprep.subr.mxu0 0.0
    %2540 = vmatpush1.msra.mxu0 0.0
    %2541 = vmatprep.subr.mxu0 0.0
    %2542 = vmatpush1.msra.mxu0 0.0
    %2543 = vmatprep.subr.mxu0 0.0
    %2544 = vmatpush1.msra.mxu0 0.0
    %2545 = vmatprep.subr.mxu0 0.0
    %2546 = vmatpush1.msra.mxu0 0.0
    %2547 = vmatprep.subr.mxu0 0.0
    %2548 = vmatpush1.msra.mxu0 0.0
    %2549 = vmatprep.subr.mxu0 0.0
    %2550 = vmatpush1.msra.mxu0 0.0
    %2551 = vmatprep.subr.mxu0 0.0
    %2552 = vmatpush1.msra.mxu0 0.0
    %2553 = vmatprep.subr.mxu0 0.0
    %2554 = vmatpush1.msra.mxu0 0.0
    %2555 = vmatprep.subr.mxu0 0.0
    %2556 = vmatpush1.msra.mxu0 0.0
    %2557 = vmatprep.subr.mxu0 0.0
    %2558 = vmatpush1.msra.mxu0 0.0
    %2559 = vmatprep.subr.mxu0 0.0
    %2560 = vmatpush1.msra.mxu0 0.0
    %2561 = vmatprep.subr.mxu0 0.0
    %2562 = vmatpush1.msra.mxu0 0.0
    %2563 = vmatprep.subr.mxu0 0.0
    %2564 = vmatpush1.msra.mxu0 0.0
    %2565 = vmatprep.subr.mxu0 0.0
    %2566 = vmatpush1.msra.mxu0 0.0
    %2567 = vmatprep.subr.mxu0 0.0
    %2568 = vmatpush1.msra.mxu0 0.0
    %2569 = vmatprep.subr.mxu0 0.0
    %2570 = vmatpush1.msra.mxu0 0.0
    %2571 = vmatprep.subr.mxu0 0.0
    %2572 = vmatpush1.msra.mxu0 0.0
    %2573 = vmatprep.subr.mxu0 0.0
    %2574 = vmatpush1.msra.mxu0 0.0
    %2575 = vmatprep.subr.mxu0 0.0
    %2576 = vmatpush1.msra.mxu0 0.0
    %2577 = vmatprep.subr.mxu0 0.0
    %2578 = vmatpush1.msra.mxu0 0.0
    %2579 = vmatprep.subr.mxu0 0.0
    %2580 = vmatpush1.msra.mxu0 0.0
    %2581 = vmatprep.subr.mxu0 0.0
    %2582 = vmatpush1.msra.mxu0 0.0
    %2583 = vmatprep.subr.mxu0 0.0
    %2584 = vmatpush1.msra.mxu0 0.0
    %2585 = vmatprep.subr.mxu0 0.0
    %2586 = vmatpush1.msra.mxu0 0.0
    %2587 = vmatprep.subr.mxu0 0.0
    %2588 = vmatpush1.msra.mxu0 0.0
    %2589 = vmatprep.subr.mxu0 0.0
    %2590 = vmatpush1.msra.mxu0 0.0
    %2591 = vmatprep.subr.mxu0 0.0
    %2592 = vmatpush1.msra.mxu0 0.0
    %2593 = vmatprep.mubr.f32.mxu0 0.0
    %2594 = vmatmul.mubr.f32.gmra.mrb[0].mxu0 %v2527
    %v2595 = vpop.f32.mrb[0].mxu0
    %v2596 = vadd.f32 %v1235, %v2595
    %v2597 = vpop.f32.mrb[0].mxu0
    %v2598 = vadd.f32 %v1237, %v2597
    %2599 = vdwg.mxu0
    %2600 = vmatprep.subr.mxu0 %v1391
    %2601 = vmatpush1.msra.mxu0 %v1389
    %2602 = vmatprep.subr.mxu0 0.0
    %2603 = vmatpush1.msra.mxu0 0.0
    %2604 = vmatprep.subr.mxu0 0.0
    %2605 = vmatpush1.msra.mxu0 0.0
    %2606 = vmatprep.subr.mxu0 0.0
    %2607 = vmatpush1.msra.mxu0 0.0
    %2608 = vmatprep.subr.mxu0 0.0
    %2609 = vmatpush1.msra.mxu0 0.0
    %2610 = vmatprep.subr.mxu0 0.0
    %2611 = vmatpush1.msra.mxu0 0.0
    %2612 = vmatprep.subr.mxu0 0.0
    %2613 = vmatpush1.msra.mxu0 0.0
    %2614 = vmatprep.subr.mxu0 0.0
    %2615 = vmatpush1.msra.mxu0 0.0
    %2616 = vmatprep.subr.mxu0 0.0
    %2617 = vmatpush1.msra.mxu0 0.0
    %2618 = vmatprep.subr.mxu0 0.0
    %2619 = vmatpush1.msra.mxu0 0.0
    %2620 = vmatprep.subr.mxu0 0.0
    %2621 = vmatpush1.msra.mxu0 0.0
    %2622 = vmatprep.subr.mxu0 0.0
    %2623 = vmatpush1.msra.mxu0 0.0
    %2624 = vmatprep.subr.mxu0 0.0
    %2625 = vmatpush1.msra.mxu0 0.0
    %2626 = vmatprep.subr.mxu0 0.0
    %2627 = vmatpush1.msra.mxu0 0.0
    %2628 = vmatprep.subr.mxu0 0.0
    %2629 = vmatpush1.msra.mxu0 0.0
    %2630 = vmatprep.subr.mxu0 0.0
    %2631 = vmatpush1.msra.mxu0 0.0
    %2632 = vmatprep.subr.mxu0 0.0
    %2633 = vmatpush1.msra.mxu0 0.0
    %2634 = vmatprep.subr.mxu0 0.0
    %2635 = vmatpush1.msra.mxu0 0.0
    %2636 = vmatprep.subr.mxu0 0.0
    %2637 = vmatpush1.msra.mxu0 0.0
    %2638 = vmatprep.subr.mxu0 0.0
    %2639 = vmatpush1.msra.mxu0 0.0
    %2640 = vmatprep.subr.mxu0 0.0
    %2641 = vmatpush1.msra.mxu0 0.0
    %2642 = vmatprep.subr.mxu0 0.0
    %2643 = vmatpush1.msra.mxu0 0.0
    %2644 = vmatprep.subr.mxu0 0.0
    %2645 = vmatpush1.msra.mxu0 0.0
    %2646 = vmatprep.subr.mxu0 0.0
    %2647 = vmatpush1.msra.mxu0 0.0
    %2648 = vmatprep.subr.mxu0 0.0
    %2649 = vmatpush1.msra.mxu0 0.0
    %2650 = vmatprep.subr.mxu0 0.0
    %2651 = vmatpush1.msra.mxu0 0.0
    %2652 = vmatprep.subr.mxu0 0.0
    %2653 = vmatpush1.msra.mxu0 0.0
    %2654 = vmatprep.subr.mxu0 0.0
    %2655 = vmatpush1.msra.mxu0 0.0
    %2656 = vmatprep.subr.mxu0 0.0
    %2657 = vmatpush1.msra.mxu0 0.0
    %2658 = vmatprep.subr.mxu0 0.0
    %2659 = vmatpush1.msra.mxu0 0.0
    %2660 = vmatprep.subr.mxu0 0.0
    %2661 = vmatpush1.msra.mxu0 0.0
    %2662 = vmatprep.subr.mxu0 0.0
    %2663 = vmatpush1.msra.mxu0 0.0
    %2664 = vmatprep.mubr.f32.mxu0 0.0
    %2665 = vmatmul.mubr.f32.gmra.mrb[0].mxu0 %v2527
    %v2666 = vpop.f32.mrb[0].mxu0
    %v2667 = vadd.f32 %v1389, %v2666
    %v2668 = vpop.f32.mrb[0].mxu0
    %v2669 = vadd.f32 %v1391, %v2668
    %2670 = vdwg.mxu0
    %v2672 = vlaneseq
    %v2673 = vshrl.u32 %v2672, 7
    %v2674 = vsub.s32 0, %v2673
    %v2675 = vrot.slane %v1649, %v2674
    %v2676 = vlaneseq
    %v2677 = vshrl.u32 %v2676, 7
    %v2678 = vsub.s32 1, %v2677
    %v2679 = vrot.slane %v1649, %v2678
    %v2680 = vlaneseq
    %v2681 = vshrl.u32 %v2680, 7
    %v2682 = vsub.s32 2, %v2681
    %v2683 = vrot.slane %v1649, %v2682
    %v2684 = vlaneseq
    %v2685 = vshrl.u32 %v2684, 7
    %v2686 = vsub.s32 3, %v2685
    %v2687 = vrot.slane %v1649, %v2686
    %2692 = vmatprep.subr.mxu0 %v1394
    %2693 = vmatpush1.msra.mxu0 %v1393
    %2694 = vmatprep.subr.mxu0 %v1398
    %2695 = vmatpush1.msra.mxu0 %v1397
    %2696 = vmatprep.subr.mxu0 %v1402
    %2697 = vmatpush1.msra.mxu0 %v1401
    %2698 = vmatprep.subr.mxu0 %v1406
    %2699 = vmatpush1.msra.mxu0 %v1405
    %2700 = vmatprep.subr.mxu0 %v1410
    %2701 = vmatpush1.msra.mxu0 %v1409
    %2702 = vmatprep.subr.mxu0 %v1414
    %2703 = vmatpush1.msra.mxu0 %v1413
    %2704 = vmatprep.subr.mxu0 %v1418
    %2705 = vmatpush1.msra.mxu0 %v1417
    %2706 = vmatprep.subr.mxu0 %v1422
    %2707 = vmatpush1.msra.mxu0 %v1421
    %2708 = vmatprep.subr.mxu0 %v1426
    %2709 = vmatpush1.msra.mxu0 %v1425
    %2710 = vmatprep.subr.mxu0 %v1430
    %2711 = vmatpush1.msra.mxu0 %v1429
    %2712 = vmatprep.subr.mxu0 %v1434
    %2713 = vmatpush1.msra.mxu0 %v1433
    %2714 = vmatprep.subr.mxu0 %v1438
    %2715 = vmatpush1.msra.mxu0 %v1437
    %2716 = vmatprep.subr.mxu0 %v1442
    %2717 = vmatpush1.msra.mxu0 %v1441
    %2718 = vmatprep.subr.mxu0 %v1446
    %2719 = vmatpush1.msra.mxu0 %v1445
    %2720 = vmatprep.subr.mxu0 %v1450
    %2721 = vmatpush1.msra.mxu0 %v1449
    %2722 = vmatprep.subr.mxu0 %v1454
    %2723 = vmatpush1.msra.mxu0 %v1453
    %2724 = vmatprep.subr.mxu0 %v1458
    %2725 = vmatpush1.msra.mxu0 %v1457
    %2726 = vmatprep.subr.mxu0 %v1462
    %2727 = vmatpush1.msra.mxu0 %v1461
    %2728 = vmatprep.subr.mxu0 %v1466
    %2729 = vmatpush1.msra.mxu0 %v1465
    %2730 = vmatprep.subr.mxu0 %v1470
    %2731 = vmatpush1.msra.mxu0 %v1469
    %2732 = vmatprep.subr.mxu0 %v1474
    %2733 = vmatpush1.msra.mxu0 %v1473
    %2734 = vmatprep.subr.mxu0 %v1478
    %2735 = vmatpush1.msra.mxu0 %v1477
    %2736 = vmatprep.subr.mxu0 %v1482
    %2737 = vmatpush1.msra.mxu0 %v1481
    %2738 = vmatprep.subr.mxu0 %v1486
    %2739 = vmatpush1.msra.mxu0 %v1485
    %2740 = vmatprep.subr.mxu0 %v1490
    %2741 = vmatpush1.msra.mxu0 %v1489
    %2742 = vmatprep.subr.mxu0 %v1494
    %2743 = vmatpush1.msra.mxu0 %v1493
    %2744 = vmatprep.subr.mxu0 %v1498
    %2745 = vmatpush1.msra.mxu0 %v1497
    %2746 = vmatprep.subr.mxu0 %v1502
    %2747 = vmatpush1.msra.mxu0 %v1501
    %2748 = vmatprep.subr.mxu0 %v1506
    %2749 = vmatpush1.msra.mxu0 %v1505
    %2750 = vmatprep.subr.mxu0 %v1510
    %2751 = vmatpush1.msra.mxu0 %v1509
    %2752 = vmatprep.subr.mxu0 %v1514
    %2753 = vmatpush1.msra.mxu0 %v1513
    %2754 = vmatprep.subr.mxu0 %v1518
    %2755 = vmatpush1.msra.mxu0 %v1517
    %2756 = vmatprep.mubr.f32.mxu0 %v2453
    %2757 = vmatmul.mubr.f32.gmra.mrb[0].mxu0 %v2451
    %v2758 = vpop.f32.mrb[0].mxu0
    %v2759 = vadd.f32 %v2675, %v2758
    %v2760 = vpop.f32.mrb[0].mxu0
    %v2761 = vadd.f32 %v2679, %v2760
    %2762 = vmatprep.mubr.f32.mxu0 %v2598
    %2763 = vmatmul.mubr.f32.gmra.mrb[0].mxu0 %v2596
    %v2764 = vpop.f32.mrb[0].mxu0
    %v2765 = vadd.f32 %v2675, %v2764
    %v2766 = vpop.f32.mrb[0].mxu0
    %v2767 = vadd.f32 %v2679, %v2766
    %2768 = vdwg.mxu0
    %2769 = vmatprep.subr.mxu0 %v1522
    %2770 = vmatpush1.msra.mxu0 %v1521
    %2771 = vmatprep.subr.mxu0 %v1526
    %2772 = vmatpush1.msra.mxu0 %v1525
    %2773 = vmatprep.subr.mxu0 %v1530
    %2774 = vmatpush1.msra.mxu0 %v1529
    %2775 = vmatprep.subr.mxu0 %v1534
    %2776 = vmatpush1.msra.mxu0 %v1533
    %2777 = vmatprep.subr.mxu0 %v1538
    %2778 = vmatpush1.msra.mxu0 %v1537
    %2779 = vmatprep.subr.mxu0 %v1542
    %2780 = vmatpush1.msra.mxu0 %v1541
    %2781 = vmatprep.subr.mxu0 %v1546
    %2782 = vmatpush1.msra.mxu0 %v1545
    %2783 = vmatprep.subr.mxu0 %v1550
    %2784 = vmatpush1.msra.mxu0 %v1549
    %2785 = vmatprep.subr.mxu0 %v1554
    %2786 = vmatpush1.msra.mxu0 %v1553
    %2787 = vmatprep.subr.mxu0 %v1558
    %2788 = vmatpush1.msra.mxu0 %v1557
    %2789 = vmatprep.subr.mxu0 %v1562
    %2790 = vmatpush1.msra.mxu0 %v1561
    %2791 = vmatprep.subr.mxu0 %v1566
    %2792 = vmatpush1.msra.mxu0 %v1565
    %2793 = vmatprep.subr.mxu0 %v1570
    %2794 = vmatpush1.msra.mxu0 %v1569
    %2795 = vmatprep.subr.mxu0 %v1574
    %2796 = vmatpush1.msra.mxu0 %v1573
    %2797 = vmatprep.subr.mxu0 %v1578
    %2798 = vmatpush1.msra.mxu0 %v1577
    %2799 = vmatprep.subr.mxu0 %v1582
    %2800 = vmatpush1.msra.mxu0 %v1581
    %2801 = vmatprep.subr.mxu0 %v1586
    %2802 = vmatpush1.msra.mxu0 %v1585
    %2803 = vmatprep.subr.mxu0 %v1590
    %2804 = vmatpush1.msra.mxu0 %v1589
    %2805 = vmatprep.subr.mxu0 %v1594
    %2806 = vmatpush1.msra.mxu0 %v1593
    %2807 = vmatprep.subr.mxu0 %v1598
    %2808 = vmatpush1.msra.mxu0 %v1597
    %2809 = vmatprep.subr.mxu0 %v1602
    %2810 = vmatpush1.msra.mxu0 %v1601
    %2811 = vmatprep.subr.mxu0 %v1606
    %2812 = vmatpush1.msra.mxu0 %v1605
    %2813 = vmatprep.subr.mxu0 %v1610
    %2814 = vmatpush1.msra.mxu0 %v1609
    %2815 = vmatprep.subr.mxu0 %v1614
    %2816 = vmatpush1.msra.mxu0 %v1613
    %2817 = vmatprep.subr.mxu0 %v1618
    %2818 = vmatpush1.msra.mxu0 %v1617
    %2819 = vmatprep.subr.mxu0 %v1622
    %2820 = vmatpush1.msra.mxu0 %v1621
    %2821 = vmatprep.subr.mxu0 %v1626
    %2822 = vmatpush1.msra.mxu0 %v1625
    %2823 = vmatprep.subr.mxu0 %v1630
    %2824 = vmatpush1.msra.mxu0 %v1629
    %2825 = vmatprep.subr.mxu0 %v1634
    %2826 = vmatpush1.msra.mxu0 %v1633
    %2827 = vmatprep.subr.mxu0 %v1638
    %2828 = vmatpush1.msra.mxu0 %v1637
    %2829 = vmatprep.subr.mxu0 %v1642
    %2830 = vmatpush1.msra.mxu0 %v1641
    %2831 = vmatprep.subr.mxu0 %v1646
    %2832 = vmatpush1.msra.mxu0 %v1645
    %2833 = vmatprep.mubr.f32.mxu0 %v2524
    %2834 = vmatmul.mubr.f32.gmra.mrb[0].mxu0 %v2522
    %v2835 = vpop.f32.mrb[0].mxu0
    %v2836 = vadd.f32 %v2759, %v2835
    %v2837 = vpop.f32.mrb[0].mxu0
    %v2838 = vadd.f32 %v2761, %v2837
    %2839 = vmatprep.mubr.f32.mxu0 %v2669
    %2840 = vmatmul.mubr.f32.gmra.mrb[0].mxu0 %v2667
    %v2841 = vpop.f32.mrb[0].mxu0
    %v2842 = vadd.f32 %v2765, %v2841
    %v2843 = vpop.f32.mrb[0].mxu0
    %v2844 = vadd.f32 %v2767, %v2843
    %2845 = vdwg.mxu0
    %2846 = vmatprep.subr.mxu0 %v1396
    %2847 = vmatpush1.msra.mxu0 %v1395
    %2848 = vmatprep.subr.mxu0 %v1400
    %2849 = vmatpush1.msra.mxu0 %v1399
    %2850 = vmatprep.subr.mxu0 %v1404
    %2851 = vmatpush1.msra.mxu0 %v1403
    %2852 = vmatprep.subr.mxu0 %v1408
    %2853 = vmatpush1.msra.mxu0 %v1407
    %2854 = vmatprep.subr.mxu0 %v1412
    %2855 = vmatpush1.msra.mxu0 %v1411
    %2856 = vmatprep.subr.mxu0 %v1416
    %2857 = vmatpush1.msra.mxu0 %v1415
    %2858 = vmatprep.subr.mxu0 %v1420
    %2859 = vmatpush1.msra.mxu0 %v1419
    %2860 = vmatprep.subr.mxu0 %v1424
    %2861 = vmatpush1.msra.mxu0 %v1423
    %2862 = vmatprep.subr.mxu0 %v1428
    %2863 = vmatpush1.msra.mxu0 %v1427
    %2864 = vmatprep.subr.mxu0 %v1432
    %2865 = vmatpush1.msra.mxu0 %v1431
    %2866 = vmatprep.subr.mxu0 %v1436
    %2867 = vmatpush1.msra.mxu0 %v1435
    %2868 = vmatprep.subr.mxu0 %v1440
    %2869 = vmatpush1.msra.mxu0 %v1439
    %2870 = vmatprep.subr.mxu0 %v1444
    %2871 = vmatpush1.msra.mxu0 %v1443
    %2872 = vmatprep.subr.mxu0 %v1448
    %2873 = vmatpush1.msra.mxu0 %v1447
    %2874 = vmatprep.subr.mxu0 %v1452
    %2875 = vmatpush1.msra.mxu0 %v1451
    %2876 = vmatprep.subr.mxu0 %v1456
    %2877 = vmatpush1.msra.mxu0 %v1455
    %2878 = vmatprep.subr.mxu0 %v1460
    %2879 = vmatpush1.msra.mxu0 %v1459
    %2880 = vmatprep.subr.mxu0 %v1464
    %2881 = vmatpush1.msra.mxu0 %v1463
    %2882 = vmatprep.subr.mxu0 %v1468
    %2883 = vmatpush1.msra.mxu0 %v1467
    %2884 = vmatprep.subr.mxu0 %v1472
    %2885 = vmatpush1.msra.mxu0 %v1471
    %2886 = vmatprep.subr.mxu0 %v1476
    %2887 = vmatpush1.msra.mxu0 %v1475
    %2888 = vmatprep.subr.mxu0 %v1480
    %2889 = vmatpush1.msra.mxu0 %v1479
    %2890 = vmatprep.subr.mxu0 %v1484
    %2891 = vmatpush1.msra.mxu0 %v1483
    %2892 = vmatprep.subr.mxu0 %v1488
    %2893 = vmatpush1.msra.mxu0 %v1487
    %2894 = vmatprep.subr.mxu0 %v1492
    %2895 = vmatpush1.msra.mxu0 %v1491
    %2896 = vmatprep.subr.mxu0 %v1496
    %2897 = vmatpush1.msra.mxu0 %v1495
    %2898 = vmatprep.subr.mxu0 %v1500
    %2899 = vmatpush1.msra.mxu0 %v1499
    %2900 = vmatprep.subr.mxu0 %v1504
    %2901 = vmatpush1.msra.mxu0 %v1503
    %2902 = vmatprep.subr.mxu0 %v1508
    %2903 = vmatpush1.msra.mxu0 %v1507
    %2904 = vmatprep.subr.mxu0 %v1512
    %2905 = vmatpush1.msra.mxu0 %v1511
    %2906 = vmatprep.subr.mxu0 %v1516
    %2907 = vmatpush1.msra.mxu0 %v1515
    %2908 = vmatprep.subr.mxu0 %v1520
    %2909 = vmatpush1.msra.mxu0 %v1519
    %2910 = vmatprep.mubr.f32.mxu0 %v2453
    %2911 = vmatmul.mubr.f32.gmra.mrb[0].mxu0 %v2451
    %v2912 = vpop.f32.mrb[0].mxu0
    %v2913 = vadd.f32 %v2683, %v2912
    %v2914 = vpop.f32.mrb[0].mxu0
    %v2915 = vadd.f32 %v2687, %v2914
    %2916 = vmatprep.mubr.f32.mxu0 %v2598
    %2917 = vmatmul.mubr.f32.gmra.mrb[0].mxu0 %v2596
    %v2918 = vpop.f32.mrb[0].mxu0
    %v2919 = vadd.f32 %v2683, %v2918
    %v2920 = vpop.f32.mrb[0].mxu0
    %v2921 = vadd.f32 %v2687, %v2920
    %2922 = vdwg.mxu0
    %2923 = vmatprep.subr.mxu0 %v1524
    %2924 = vmatpush1.msra.mxu0 %v1523
    %2925 = vmatprep.subr.mxu0 %v1528
    %2926 = vmatpush1.msra.mxu0 %v1527
    %2927 = vmatprep.subr.mxu0 %v1532
    %2928 = vmatpush1.msra.mxu0 %v1531
    %2929 = vmatprep.subr.mxu0 %v1536
    %2930 = vmatpush1.msra.mxu0 %v1535
    %2931 = vmatprep.subr.mxu0 %v1540
    %2932 = vmatpush1.msra.mxu0 %v1539
    %2933 = vmatprep.subr.mxu0 %v1544
    %2934 = vmatpush1.msra.mxu0 %v1543
    %2935 = vmatprep.subr.mxu0 %v1548
    %2936 = vmatpush1.msra.mxu0 %v1547
    %2937 = vmatprep.subr.mxu0 %v1552
    %2938 = vmatpush1.msra.mxu0 %v1551
    %2939 = vmatprep.subr.mxu0 %v1556
    %2940 = vmatpush1.msra.mxu0 %v1555
    %2941 = vmatprep.subr.mxu0 %v1560
    %2942 = vmatpush1.msra.mxu0 %v1559
    %2943 = vmatprep.subr.mxu0 %v1564
    %2944 = vmatpush1.msra.mxu0 %v1563
    %2945 = vmatprep.subr.mxu0 %v1568
    %2946 = vmatpush1.msra.mxu0 %v1567
    %2947 = vmatprep.subr.mxu0 %v1572
    %2948 = vmatpush1.msra.mxu0 %v1571
    %2949 = vmatprep.subr.mxu0 %v1576
    %2950 = vmatpush1.msra.mxu0 %v1575
    %2951 = vmatprep.subr.mxu0 %v1580
    %2952 = vmatpush1.msra.mxu0 %v1579
    %2953 = vmatprep.subr.mxu0 %v1584
    %2954 = vmatpush1.msra.mxu0 %v1583
    %2955 = vmatprep.subr.mxu0 %v1588
    %2956 = vmatpush1.msra.mxu0 %v1587
    %2957 = vmatprep.subr.mxu0 %v1592
    %2958 = vmatpush1.msra.mxu0 %v1591
    %2959 = vmatprep.subr.mxu0 %v1596
    %2960 = vmatpush1.msra.mxu0 %v1595
    %2961 = vmatprep.subr.mxu0 %v1600
    %2962 = vmatpush1.msra.mxu0 %v1599
    %2963 = vmatprep.subr.mxu0 %v1604
    %2964 = vmatpush1.msra.mxu0 %v1603
    %2965 = vmatprep.subr.mxu0 %v1608
    %2966 = vmatpush1.msra.mxu0 %v1607
    %2967 = vmatprep.subr.mxu0 %v1612
    %2968 = vmatpush1.msra.mxu0 %v1611
    %2969 = vmatprep.subr.mxu0 %v1616
    %2970 = vmatpush1.msra.mxu0 %v1615
    %2971 = vmatprep.subr.mxu0 %v1620
    %2972 = vmatpush1.msra.mxu0 %v1619
    %2973 = vmatprep.subr.mxu0 %v1624
    %2974 = vmatpush1.msra.mxu0 %v1623
    %2975 = vmatprep.subr.mxu0 %v1628
    %2976 = vmatpush1.msra.mxu0 %v1627
    %2977 = vmatprep.subr.mxu0 %v1632
    %2978 = vmatpush1.msra.mxu0 %v1631
    %2979 = vmatprep.subr.mxu0 %v1636
    %2980 = vmatpush1.msra.mxu0 %v1635
    %2981 = vmatprep.subr.mxu0 %v1640
    %2982 = vmatpush1.msra.mxu0 %v1639
    %2983 = vmatprep.subr.mxu0 %v1644
    %2984 = vmatpush1.msra.mxu0 %v1643
    %2985 = vmatprep.subr.mxu0 %v1648
    %2986 = vmatpush1.msra.mxu0 %v1647
    %2987 = vmatprep.mubr.f32.mxu0 %v2524
    %2988 = vmatmul.mubr.f32.gmra.mrb[0].mxu0 %v2522
    %v2989 = vpop.f32.mrb[0].mxu0
    %v2990 = vadd.f32 %v2913, %v2989
    %v2991 = vpop.f32.mrb[0].mxu0
    %v2992 = vadd.f32 %v2915, %v2991
    %2993 = vmatprep.mubr.f32.mxu0 %v2669
    %2994 = vmatmul.mubr.f32.gmra.mrb[0].mxu0 %v2667
    %v2995 = vpop.f32.mrb[0].mxu0
    %v2996 = vadd.f32 %v2919, %v2995
    %v2997 = vpop.f32.mrb[0].mxu0
    %v2998 = vadd.f32 %v2921, %v2997
    %2999 = vdwg.mxu0
    %vm3000 = vcmp.gt.f32.partialorder %v2836, 0.0
    %vm3001 = vcmp.gt.f32.partialorder %v2838, 0.0
    %vm3002 = vcmp.gt.f32.partialorder %v2990, 0.0
    %vm3003 = vcmp.gt.f32.partialorder %v2992, 0.0
    %vm3004 = vcmp.gt.f32.partialorder %v2842, 0.0
    %vm3005 = vcmp.gt.f32.partialorder %v2844, 0.0
    %vm3006 = vcmp.gt.f32.partialorder %v2996, 0.0
    %vm3007 = vcmp.gt.f32.partialorder %v2998, 0.0
    %v3008 = vmul.f32 %v2836, 0.01
    %v3009 = vmul.f32 %v2838, 0.01
    %v3010 = vmul.f32 %v2990, 0.01
    %v3011 = vmul.f32 %v2992, 0.01
    %v3012 = vmul.f32 %v2842, 0.01
    %v3013 = vmul.f32 %v2844, 0.01
    %v3014 = vmul.f32 %v2996, 0.01
    %v3015 = vmul.f32 %v2998, 0.01
    %v3016 = vsel %vm3000, %v2836, %v3008
    %v3017 = vsel %vm3001, %v2838, %v3009
    %v3018 = vsel %vm3002, %v2990, %v3010
    %v3019 = vsel %vm3003, %v2992, %v3011
    %v3020 = vsel %vm3004, %v2842, %v3012
    %v3021 = vsel %vm3005, %v2844, %v3013
    %v3022 = vsel %vm3006, %v2996, %v3014
    %v3023 = vsel %vm3007, %v2998, %v3015
    %v3025 = vlaneseq
    %v3026 = vshrl.u32 %v3025, 7
    %v3027 = vsub.s32 0, %v3026
    %v3028 = vrot.slane %v2034, %v3027
    %v3029 = vlaneseq
    %v3030 = vshrl.u32 %v3029, 7
    %v3031 = vsub.s32 1, %v3030
    %v3032 = vrot.slane %v2034, %v3031
    %v3033 = vlaneseq
    %v3034 = vshrl.u32 %v3033, 7
    %v3035 = vsub.s32 2, %v3034
    %v3036 = vrot.slane %v2034, %v3035
    %v3037 = vlaneseq
    %v3038 = vshrl.u32 %v3037, 7
    %v3039 = vsub.s32 3, %v3038
    %v3040 = vrot.slane %v2034, %v3039
    %v3041 = vlaneseq
    %v3042 = vshrl.u32 %v3041, 7
    %v3043 = vsub.s32 4, %v3042
    %v3044 = vrot.slane %v2034, %v3043
    %v3045 = vlaneseq
    %v3046 = vshrl.u32 %v3045, 7
    %v3047 = vsub.s32 5, %v3046
    %v3048 = vrot.slane %v2034, %v3047
    %3055 = vmatprep.subr.mxu0 %v1651
    %3056 = vmatpush1.msra.mxu0 %v1650
    %3057 = vmatprep.subr.mxu0 %v1657
    %3058 = vmatpush1.msra.mxu0 %v1656
    %3059 = vmatprep.subr.mxu0 %v1663
    %3060 = vmatpush1.msra.mxu0 %v1662
    %3061 = vmatprep.subr.mxu0 %v1669
    %3062 = vmatpush1.msra.mxu0 %v1668
    %3063 = vmatprep.subr.mxu0 %v1675
    %3064 = vmatpush1.msra.mxu0 %v1674
    %3065 = vmatprep.subr.mxu0 %v1681
    %3066 = vmatpush1.msra.mxu0 %v1680
    %3067 = vmatprep.subr.mxu0 %v1687
    %3068 = vmatpush1.msra.mxu0 %v1686
    %3069 = vmatprep.subr.mxu0 %v1693
    %3070 = vmatpush1.msra.mxu0 %v1692
    %3071 = vmatprep.subr.mxu0 %v1699
    %3072 = vmatpush1.msra.mxu0 %v1698
    %3073 = vmatprep.subr.mxu0 %v1705
    %3074 = vmatpush1.msra.mxu0 %v1704
    %3075 = vmatprep.subr.mxu0 %v1711
    %3076 = vmatpush1.msra.mxu0 %v1710
    %3077 = vmatprep.subr.mxu0 %v1717
    %3078 = vmatpush1.msra.mxu0 %v1716
    %3079 = vmatprep.subr.mxu0 %v1723
    %3080 = vmatpush1.msra.mxu0 %v1722
    %3081 = vmatprep.subr.mxu0 %v1729
    %3082 = vmatpush1.msra.mxu0 %v1728
    %3083 = vmatprep.subr.mxu0 %v1735
    %3084 = vmatpush1.msra.mxu0 %v1734
    %3085 = vmatprep.subr.mxu0 %v1741
    %3086 = vmatpush1.msra.mxu0 %v1740
    %3087 = vmatprep.subr.mxu0 %v1747
    %3088 = vmatpush1.msra.mxu0 %v1746
    %3089 = vmatprep.subr.mxu0 %v1753
    %3090 = vmatpush1.msra.mxu0 %v1752
    %3091 = vmatprep.subr.mxu0 %v1759
    %3092 = vmatpush1.msra.mxu0 %v1758
    %3093 = vmatprep.subr.mxu0 %v1765
    %3094 = vmatpush1.msra.mxu0 %v1764
    %3095 = vmatprep.subr.mxu0 %v1771
    %3096 = vmatpush1.msra.mxu0 %v1770
    %3097 = vmatprep.subr.mxu0 %v1777
    %3098 = vmatpush1.msra.mxu0 %v1776
    %3099 = vmatprep.subr.mxu0 %v1783
    %3100 = vmatpush1.msra.mxu0 %v1782
    %3101 = vmatprep.subr.mxu0 %v1789
    %3102 = vmatpush1.msra.mxu0 %v1788
    %3103 = vmatprep.subr.mxu0 %v1795
    %3104 = vmatpush1.msra.mxu0 %v1794
    %3105 = vmatprep.subr.mxu0 %v1801
    %3106 = vmatpush1.msra.mxu0 %v1800
    %3107 = vmatprep.subr.mxu0 %v1807
    %3108 = vmatpush1.msra.mxu0 %v1806
    %3109 = vmatprep.subr.mxu0 %v1813
    %3110 = vmatpush1.msra.mxu0 %v1812
    %3111 = vmatprep.subr.mxu0 %v1819
    %3112 = vmatpush1.msra.mxu0 %v1818
    %3113 = vmatprep.subr.mxu0 %v1825
    %3114 = vmatpush1.msra.mxu0 %v1824
    %3115 = vmatprep.subr.mxu0 %v1831
    %3116 = vmatpush1.msra.mxu0 %v1830
    %3117 = vmatprep.subr.mxu0 %v1837
    %3118 = vmatpush1.msra.mxu0 %v1836
    %3119 = vmatprep.mubr.f32.mxu0 %v3017
    %3120 = vmatmul.mubr.f32.gmra.mrb[0].mxu0 %v3016
    %v3121 = vpop.f32.mrb[0].mxu0
    %v3122 = vadd.f32 %v3028, %v3121
    %v3123 = vpop.f32.mrb[0].mxu0
    %v3124 = vadd.f32 %v3032, %v3123
    %3125 = vmatprep.mubr.f32.mxu0 %v3021
    %3126 = vmatmul.mubr.f32.gmra.mrb[0].mxu0 %v3020
    %v3127 = vpop.f32.mrb[0].mxu0
    %v3128 = vadd.f32 %v3028, %v3127
    %v3129 = vpop.f32.mrb[0].mxu0
    %v3130 = vadd.f32 %v3032, %v3129
    %3131 = vdwg.mxu0
    %3132 = vmatprep.subr.mxu0 %v1843
    %3133 = vmatpush1.msra.mxu0 %v1842
    %3134 = vmatprep.subr.mxu0 %v1849
    %3135 = vmatpush1.msra.mxu0 %v1848
    %3136 = vmatprep.subr.mxu0 %v1855
    %3137 = vmatpush1.msra.mxu0 %v1854
    %3138 = vmatprep.subr.mxu0 %v1861
    %3139 = vmatpush1.msra.mxu0 %v1860
    %3140 = vmatprep.subr.mxu0 %v1867
    %3141 = vmatpush1.msra.mxu0 %v1866
    %3142 = vmatprep.subr.mxu0 %v1873
    %3143 = vmatpush1.msra.mxu0 %v1872
    %3144 = vmatprep.subr.mxu0 %v1879
    %3145 = vmatpush1.msra.mxu0 %v1878
    %3146 = vmatprep.subr.mxu0 %v1885
    %3147 = vmatpush1.msra.mxu0 %v1884
    %3148 = vmatprep.subr.mxu0 %v1891
    %3149 = vmatpush1.msra.mxu0 %v1890
    %3150 = vmatprep.subr.mxu0 %v1897
    %3151 = vmatpush1.msra.mxu0 %v1896
    %3152 = vmatprep.subr.mxu0 %v1903
    %3153 = vmatpush1.msra.mxu0 %v1902
    %3154 = vmatprep.subr.mxu0 %v1909
    %3155 = vmatpush1.msra.mxu0 %v1908
    %3156 = vmatprep.subr.mxu0 %v1915
    %3157 = vmatpush1.msra.mxu0 %v1914
    %3158 = vmatprep.subr.mxu0 %v1921
    %3159 = vmatpush1.msra.mxu0 %v1920
    %3160 = vmatprep.subr.mxu0 %v1927
    %3161 = vmatpush1.msra.mxu0 %v1926
    %3162 = vmatprep.subr.mxu0 %v1933
    %3163 = vmatpush1.msra.mxu0 %v1932
    %3164 = vmatprep.subr.mxu0 %v1939
    %3165 = vmatpush1.msra.mxu0 %v1938
    %3166 = vmatprep.subr.mxu0 %v1945
    %3167 = vmatpush1.msra.mxu0 %v1944
    %3168 = vmatprep.subr.mxu0 %v1951
    %3169 = vmatpush1.msra.mxu0 %v1950
    %3170 = vmatprep.subr.mxu0 %v1957
    %3171 = vmatpush1.msra.mxu0 %v1956
    %3172 = vmatprep.subr.mxu0 %v1963
    %3173 = vmatpush1.msra.mxu0 %v1962
    %3174 = vmatprep.subr.mxu0 %v1969
    %3175 = vmatpush1.msra.mxu0 %v1968
    %3176 = vmatprep.subr.mxu0 %v1975
    %3177 = vmatpush1.msra.mxu0 %v1974
    %3178 = vmatprep.subr.mxu0 %v1981
    %3179 = vmatpush1.msra.mxu0 %v1980
    %3180 = vmatprep.subr.mxu0 %v1987
    %3181 = vmatpush1.msra.mxu0 %v1986
    %3182 = vmatprep.subr.mxu0 %v1993
    %3183 = vmatpush1.msra.mxu0 %v1992
    %3184 = vmatprep.subr.mxu0 %v1999
    %3185 = vmatpush1.msra.mxu0 %v1998
    %3186 = vmatprep.subr.mxu0 %v2005
    %3187 = vmatpush1.msra.mxu0 %v2004
    %3188 = vmatprep.subr.mxu0 %v2011
    %3189 = vmatpush1.msra.mxu0 %v2010
    %3190 = vmatprep.subr.mxu0 %v2017
    %3191 = vmatpush1.msra.mxu0 %v2016
    %3192 = vmatprep.subr.mxu0 %v2023
    %3193 = vmatpush1.msra.mxu0 %v2022
    %3194 = vmatprep.subr.mxu0 %v2029
    %3195 = vmatpush1.msra.mxu0 %v2028
    %3196 = vmatprep.mubr.f32.mxu0 %v3019
    %3197 = vmatmul.mubr.f32.gmra.mrb[0].mxu0 %v3018
    %v3198 = vpop.f32.mrb[0].mxu0
    %v3199 = vadd.f32 %v3122, %v3198
    %v3200 = vpop.f32.mrb[0].mxu0
    %v3201 = vadd.f32 %v3124, %v3200
    %3202 = vmatprep.mubr.f32.mxu0 %v3023
    %3203 = vmatmul.mubr.f32.gmra.mrb[0].mxu0 %v3022
    %v3204 = vpop.f32.mrb[0].mxu0
    %v3205 = vadd.f32 %v3128, %v3204
    %v3206 = vpop.f32.mrb[0].mxu0
    %v3207 = vadd.f32 %v3130, %v3206
    %3208 = vdwg.mxu0
    %3209 = vmatprep.subr.mxu0 %v1653
    %3210 = vmatpush1.msra.mxu0 %v1652
    %3211 = vmatprep.subr.mxu0 %v1659
    %3212 = vmatpush1.msra.mxu0 %v1658
    %3213 = vmatprep.subr.mxu0 %v1665
    %3214 = vmatpush1.msra.mxu0 %v1664
    %3215 = vmatprep.subr.mxu0 %v1671
    %3216 = vmatpush1.msra.mxu0 %v1670
    %3217 = vmatprep.subr.mxu0 %v1677
    %3218 = vmatpush1.msra.mxu0 %v1676
    %3219 = vmatprep.subr.mxu0 %v1683
    %3220 = vmatpush1.msra.mxu0 %v1682
    %3221 = vmatprep.subr.mxu0 %v1689
    %3222 = vmatpush1.msra.mxu0 %v1688
    %3223 = vmatprep.subr.mxu0 %v1695
    %3224 = vmatpush1.msra.mxu0 %v1694
    %3225 = vmatprep.subr.mxu0 %v1701
    %3226 = vmatpush1.msra.mxu0 %v1700
    %3227 = vmatprep.subr.mxu0 %v1707
    %3228 = vmatpush1.msra.mxu0 %v1706
    %3229 = vmatprep.subr.mxu0 %v1713
    %3230 = vmatpush1.msra.mxu0 %v1712
    %3231 = vmatprep.subr.mxu0 %v1719
    %3232 = vmatpush1.msra.mxu0 %v1718
    %3233 = vmatprep.subr.mxu0 %v1725
    %3234 = vmatpush1.msra.mxu0 %v1724
    %3235 = vmatprep.subr.mxu0 %v1731
    %3236 = vmatpush1.msra.mxu0 %v1730
    %3237 = vmatprep.subr.mxu0 %v1737
    %3238 = vmatpush1.msra.mxu0 %v1736
    %3239 = vmatprep.subr.mxu0 %v1743
    %3240 = vmatpush1.msra.mxu0 %v1742
    %3241 = vmatprep.subr.mxu0 %v1749
    %3242 = vmatpush1.msra.mxu0 %v1748
    %3243 = vmatprep.subr.mxu0 %v1755
    %3244 = vmatpush1.msra.mxu0 %v1754
    %3245 = vmatprep.subr.mxu0 %v1761
    %3246 = vmatpush1.msra.mxu0 %v1760
    %3247 = vmatprep.subr.mxu0 %v1767
    %3248 = vmatpush1.msra.mxu0 %v1766
    %3249 = vmatprep.subr.mxu0 %v1773
    %3250 = vmatpush1.msra.mxu0 %v1772
    %3251 = vmatprep.subr.mxu0 %v1779
    %3252 = vmatpush1.msra.mxu0 %v1778
    %3253 = vmatprep.subr.mxu0 %v1785
    %3254 = vmatpush1.msra.mxu0 %v1784
    %3255 = vmatprep.subr.mxu0 %v1791
    %3256 = vmatpush1.msra.mxu0 %v1790
    %3257 = vmatprep.subr.mxu0 %v1797
    %3258 = vmatpush1.msra.mxu0 %v1796
    %3259 = vmatprep.subr.mxu0 %v1803
    %3260 = vmatpush1.msra.mxu0 %v1802
    %3261 = vmatprep.subr.mxu0 %v1809
    %3262 = vmatpush1.msra.mxu0 %v1808
    %3263 = vmatprep.subr.mxu0 %v1815
    %3264 = vmatpush1.msra.mxu0 %v1814
    %3265 = vmatprep.subr.mxu0 %v1821
    %3266 = vmatpush1.msra.mxu0 %v1820
    %3267 = vmatprep.subr.mxu0 %v1827
    %3268 = vmatpush1.msra.mxu0 %v1826
    %3269 = vmatprep.subr.mxu0 %v1833
    %3270 = vmatpush1.msra.mxu0 %v1832
    %3271 = vmatprep.subr.mxu0 %v1839
    %3272 = vmatpush1.msra.mxu0 %v1838
    %3273 = vmatprep.mubr.f32.mxu0 %v3017
    %3274 = vmatmul.mubr.f32.gmra.mrb[0].mxu0 %v3016
    %v3275 = vpop.f32.mrb[0].mxu0
    %v3276 = vadd.f32 %v3036, %v3275
    %v3277 = vpop.f32.mrb[0].mxu0
    %v3278 = vadd.f32 %v3040, %v3277
    %3279 = vmatprep.mubr.f32.mxu0 %v3021
    %3280 = vmatmul.mubr.f32.gmra.mrb[0].mxu0 %v3020
    %v3281 = vpop.f32.mrb[0].mxu0
    %v3282 = vadd.f32 %v3036, %v3281
    %v3283 = vpop.f32.mrb[0].mxu0
    %v3284 = vadd.f32 %v3040, %v3283
    %3285 = vdwg.mxu0
    %3286 = vmatprep.subr.mxu0 %v1845
    %3287 = vmatpush1.msra.mxu0 %v1844
    %3288 = vmatprep.subr.mxu0 %v1851
    %3289 = vmatpush1.msra.mxu0 %v1850
    %3290 = vmatprep.subr.mxu0 %v1857
    %3291 = vmatpush1.msra.mxu0 %v1856
    %3292 = vmatprep.subr.mxu0 %v1863
    %3293 = vmatpush1.msra.mxu0 %v1862
    %3294 = vmatprep.subr.mxu0 %v1869
    %3295 = vmatpush1.msra.mxu0 %v1868
    %3296 = vmatprep.subr.mxu0 %v1875
    %3297 = vmatpush1.msra.mxu0 %v1874
    %3298 = vmatprep.subr.mxu0 %v1881
    %3299 = vmatpush1.msra.mxu0 %v1880
    %3300 = vmatprep.subr.mxu0 %v1887
    %3301 = vmatpush1.msra.mxu0 %v1886
    %3302 = vmatprep.subr.mxu0 %v1893
    %3303 = vmatpush1.msra.mxu0 %v1892
    %3304 = vmatprep.subr.mxu0 %v1899
    %3305 = vmatpush1.msra.mxu0 %v1898
    %3306 = vmatprep.subr.mxu0 %v1905
    %3307 = vmatpush1.msra.mxu0 %v1904
    %3308 = vmatprep.subr.mxu0 %v1911
    %3309 = vmatpush1.msra.mxu0 %v1910
    %3310 = vmatprep.subr.mxu0 %v1917
    %3311 = vmatpush1.msra.mxu0 %v1916
    %3312 = vmatprep.subr.mxu0 %v1923
    %3313 = vmatpush1.msra.mxu0 %v1922
    %3314 = vmatprep.subr.mxu0 %v1929
    %3315 = vmatpush1.msra.mxu0 %v1928
    %3316 = vmatprep.subr.mxu0 %v1935
    %3317 = vmatpush1.msra.mxu0 %v1934
    %3318 = vmatprep.subr.mxu0 %v1941
    %3319 = vmatpush1.msra.mxu0 %v1940
    %3320 = vmatprep.subr.mxu0 %v1947
    %3321 = vmatpush1.msra.mxu0 %v1946
    %3322 = vmatprep.subr.mxu0 %v1953
    %3323 = vmatpush1.msra.mxu0 %v1952
    %3324 = vmatprep.subr.mxu0 %v1959
    %3325 = vmatpush1.msra.mxu0 %v1958
    %3326 = vmatprep.subr.mxu0 %v1965
    %3327 = vmatpush1.msra.mxu0 %v1964
    %3328 = vmatprep.subr.mxu0 %v1971
    %3329 = vmatpush1.msra.mxu0 %v1970
    %3330 = vmatprep.subr.mxu0 %v1977
    %3331 = vmatpush1.msra.mxu0 %v1976
    %3332 = vmatprep.subr.mxu0 %v1983
    %3333 = vmatpush1.msra.mxu0 %v1982
    %3334 = vmatprep.subr.mxu0 %v1989
    %3335 = vmatpush1.msra.mxu0 %v1988
    %3336 = vmatprep.subr.mxu0 %v1995
    %3337 = vmatpush1.msra.mxu0 %v1994
    %3338 = vmatprep.subr.mxu0 %v2001
    %3339 = vmatpush1.msra.mxu0 %v2000
    %3340 = vmatprep.subr.mxu0 %v2007
    %3341 = vmatpush1.msra.mxu0 %v2006
    %3342 = vmatprep.subr.mxu0 %v2013
    %3343 = vmatpush1.msra.mxu0 %v2012
    %3344 = vmatprep.subr.mxu0 %v2019
    %3345 = vmatpush1.msra.mxu0 %v2018
    %3346 = vmatprep.subr.mxu0 %v2025
    %3347 = vmatpush1.msra.mxu0 %v2024
    %3348 = vmatprep.subr.mxu0 %v2031
    %3349 = vmatpush1.msra.mxu0 %v2030
    %3350 = vmatprep.mubr.f32.mxu0 %v3019
    %3351 = vmatmul.mubr.f32.gmra.mrb[0].mxu0 %v3018
    %v3352 = vpop.f32.mrb[0].mxu0
    %v3353 = vadd.f32 %v3276, %v3352
    %v3354 = vpop.f32.mrb[0].mxu0
    %v3355 = vadd.f32 %v3278, %v3354
    %3356 = vmatprep.mubr.f32.mxu0 %v3023
    %3357 = vmatmul.mubr.f32.gmra.mrb[0].mxu0 %v3022
    %v3358 = vpop.f32.mrb[0].mxu0
    %v3359 = vadd.f32 %v3282, %v3358
    %v3360 = vpop.f32.mrb[0].mxu0
    %v3361 = vadd.f32 %v3284, %v3360
    %3362 = vdwg.mxu0
    %3363 = vmatprep.subr.mxu0 %v1655
    %3364 = vmatpush1.msra.mxu0 %v1654
    %3365 = vmatprep.subr.mxu0 %v1661
    %3366 = vmatpush1.msra.mxu0 %v1660
    %3367 = vmatprep.subr.mxu0 %v1667
    %3368 = vmatpush1.msra.mxu0 %v1666
    %3369 = vmatprep.subr.mxu0 %v1673
    %3370 = vmatpush1.msra.mxu0 %v1672
    %3371 = vmatprep.subr.mxu0 %v1679
    %3372 = vmatpush1.msra.mxu0 %v1678
    %3373 = vmatprep.subr.mxu0 %v1685
    %3374 = vmatpush1.msra.mxu0 %v1684
    %3375 = vmatprep.subr.mxu0 %v1691
    %3376 = vmatpush1.msra.mxu0 %v1690
    %3377 = vmatprep.subr.mxu0 %v1697
    %3378 = vmatpush1.msra.mxu0 %v1696
    %3379 = vmatprep.subr.mxu0 %v1703
    %3380 = vmatpush1.msra.mxu0 %v1702
    %3381 = vmatprep.subr.mxu0 %v1709
    %3382 = vmatpush1.msra.mxu0 %v1708
    %3383 = vmatprep.subr.mxu0 %v1715
    %3384 = vmatpush1.msra.mxu0 %v1714
    %3385 = vmatprep.subr.mxu0 %v1721
    %3386 = vmatpush1.msra.mxu0 %v1720
    %3387 = vmatprep.subr.mxu0 %v1727
    %3388 = vmatpush1.msra.mxu0 %v1726
    %3389 = vmatprep.subr.mxu0 %v1733
    %3390 = vmatpush1.msra.mxu0 %v1732
    %3391 = vmatprep.subr.mxu0 %v1739
    %3392 = vmatpush1.msra.mxu0 %v1738
    %3393 = vmatprep.subr.mxu0 %v1745
    %3394 = vmatpush1.msra.mxu0 %v1744
    %3395 = vmatprep.subr.mxu0 %v1751
    %3396 = vmatpush1.msra.mxu0 %v1750
    %3397 = vmatprep.subr.mxu0 %v1757
    %3398 = vmatpush1.msra.mxu0 %v1756
    %3399 = vmatprep.subr.mxu0 %v1763
    %3400 = vmatpush1.msra.mxu0 %v1762
    %3401 = vmatprep.subr.mxu0 %v1769
    %3402 = vmatpush1.msra.mxu0 %v1768
    %3403 = vmatprep.subr.mxu0 %v1775
    %3404 = vmatpush1.msra.mxu0 %v1774
    %3405 = vmatprep.subr.mxu0 %v1781
    %3406 = vmatpush1.msra.mxu0 %v1780
    %3407 = vmatprep.subr.mxu0 %v1787
    %3408 = vmatpush1.msra.mxu0 %v1786
    %3409 = vmatprep.subr.mxu0 %v1793
    %3410 = vmatpush1.msra.mxu0 %v1792
    %3411 = vmatprep.subr.mxu0 %v1799
    %3412 = vmatpush1.msra.mxu0 %v1798
    %3413 = vmatprep.subr.mxu0 %v1805
    %3414 = vmatpush1.msra.mxu0 %v1804
    %3415 = vmatprep.subr.mxu0 %v1811
    %3416 = vmatpush1.msra.mxu0 %v1810
    %3417 = vmatprep.subr.mxu0 %v1817
    %3418 = vmatpush1.msra.mxu0 %v1816
    %3419 = vmatprep.subr.mxu0 %v1823
    %3420 = vmatpush1.msra.mxu0 %v1822
    %3421 = vmatprep.subr.mxu0 %v1829
    %3422 = vmatpush1.msra.mxu0 %v1828
    %3423 = vmatprep.subr.mxu0 %v1835
    %3424 = vmatpush1.msra.mxu0 %v1834
    %3425 = vmatprep.subr.mxu0 %v1841
    %3426 = vmatpush1.msra.mxu0 %v1840
    %3427 = vmatprep.mubr.f32.mxu0 %v3017
    %3428 = vmatmul.mubr.f32.gmra.mrb[0].mxu0 %v3016
    %v3429 = vpop.f32.mrb[0].mxu0
    %v3430 = vadd.f32 %v3044, %v3429
    %v3431 = vpop.f32.mrb[0].mxu0
    %v3432 = vadd.f32 %v3048, %v3431
    %3433 = vmatprep.mubr.f32.mxu0 %v3021
    %3434 = vmatmul.mubr.f32.gmra.mrb[0].mxu0 %v3020
    %v3435 = vpop.f32.mrb[0].mxu0
    %v3436 = vadd.f32 %v3044, %v3435
    %v3437 = vpop.f32.mrb[0].mxu0
    %v3438 = vadd.f32 %v3048, %v3437
    %3439 = vdwg.mxu0
    %3440 = vmatprep.subr.mxu0 %v1847
    %3441 = vmatpush1.msra.mxu0 %v1846
    %3442 = vmatprep.subr.mxu0 %v1853
    %3443 = vmatpush1.msra.mxu0 %v1852
    %3444 = vmatprep.subr.mxu0 %v1859
    %3445 = vmatpush1.msra.mxu0 %v1858
    %3446 = vmatprep.subr.mxu0 %v1865
    %3447 = vmatpush1.msra.mxu0 %v1864
    %3448 = vmatprep.subr.mxu0 %v1871
    %3449 = vmatpush1.msra.mxu0 %v1870
    %3450 = vmatprep.subr.mxu0 %v1877
    %3451 = vmatpush1.msra.mxu0 %v1876
    %3452 = vmatprep.subr.mxu0 %v1883
    %3453 = vmatpush1.msra.mxu0 %v1882
    %3454 = vmatprep.subr.mxu0 %v1889
    %3455 = vmatpush1.msra.mxu0 %v1888
    %3456 = vmatprep.subr.mxu0 %v1895
    %3457 = vmatpush1.msra.mxu0 %v1894
    %3458 = vmatprep.subr.mxu0 %v1901
    %3459 = vmatpush1.msra.mxu0 %v1900
    %3460 = vmatprep.subr.mxu0 %v1907
    %3461 = vmatpush1.msra.mxu0 %v1906
    %3462 = vmatprep.subr.mxu0 %v1913
    %3463 = vmatpush1.msra.mxu0 %v1912
    %3464 = vmatprep.subr.mxu0 %v1919
    %3465 = vmatpush1.msra.mxu0 %v1918
    %3466 = vmatprep.subr.mxu0 %v1925
    %3467 = vmatpush1.msra.mxu0 %v1924
    %3468 = vmatprep.subr.mxu0 %v1931
    %3469 = vmatpush1.msra.mxu0 %v1930
    %3470 = vmatprep.subr.mxu0 %v1937
    %3471 = vmatpush1.msra.mxu0 %v1936
    %3472 = vmatprep.subr.mxu0 %v1943
    %3473 = vmatpush1.msra.mxu0 %v1942
    %3474 = vmatprep.subr.mxu0 %v1949
    %3475 = vmatpush1.msra.mxu0 %v1948
    %3476 = vmatprep.subr.mxu0 %v1955
    %3477 = vmatpush1.msra.mxu0 %v1954
    %3478 = vmatprep.subr.mxu0 %v1961
    %3479 = vmatpush1.msra.mxu0 %v1960
    %3480 = vmatprep.subr.mxu0 %v1967
    %3481 = vmatpush1.msra.mxu0 %v1966
    %3482 = vmatprep.subr.mxu0 %v1973
    %3483 = vmatpush1.msra.mxu0 %v1972
    %3484 = vmatprep.subr.mxu0 %v1979
    %3485 = vmatpush1.msra.mxu0 %v1978
    %3486 = vmatprep.subr.mxu0 %v1985
    %3487 = vmatpush1.msra.mxu0 %v1984
    %3488 = vmatprep.subr.mxu0 %v1991
    %3489 = vmatpush1.msra.mxu0 %v1990
    %3490 = vmatprep.subr.mxu0 %v1997
    %3491 = vmatpush1.msra.mxu0 %v1996
    %3492 = vmatprep.subr.mxu0 %v2003
    %3493 = vmatpush1.msra.mxu0 %v2002
    %3494 = vmatprep.subr.mxu0 %v2009
    %3495 = vmatpush1.msra.mxu0 %v2008
    %3496 = vmatprep.subr.mxu0 %v2015
    %3497 = vmatpush1.msra.mxu0 %v2014
    %3498 = vmatprep.subr.mxu0 %v2021
    %3499 = vmatpush1.msra.mxu0 %v2020
    %3500 = vmatprep.subr.mxu0 %v2027
    %3501 = vmatpush1.msra.mxu0 %v2026
    %3502 = vmatprep.subr.mxu0 %v2033
    %3503 = vmatpush1.msra.mxu0 %v2032
    %3504 = vmatprep.mubr.f32.mxu0 %v3019
    %3505 = vmatmul.mubr.f32.gmra.mrb[0].mxu0 %v3018
    %v3506 = vpop.f32.mrb[0].mxu0
    %v3507 = vadd.f32 %v3430, %v3506
    %v3508 = vpop.f32.mrb[0].mxu0
    %v3509 = vadd.f32 %v3432, %v3508
    %3510 = vmatprep.mubr.f32.mxu0 %v3023
    %3511 = vmatmul.mubr.f32.gmra.mrb[0].mxu0 %v3022
    %v3512 = vpop.f32.mrb[0].mxu0
    %v3513 = vadd.f32 %v3436, %v3512
    %v3514 = vpop.f32.mrb[0].mxu0
    %v3515 = vadd.f32 %v3438, %v3514
    %3516 = vdwg.mxu0
    %v3517 = vld [vmem:[#allocation17] sm:$0xff]
    %v3518 = vld [vmem:[#allocation17 + $0x8] sm:$0xff]
    %v3519 = vld [vmem:[#allocation17 + $0x10] sm:$0xff]
    %v3520 = vld [vmem:[#allocation17 + $0x18] sm:$0xff]
    %v3521 = vld [vmem:[#allocation17 + $0x20] sm:$0xff]
    %v3522 = vld [vmem:[#allocation17 + $0x28] sm:$0xff]
    %v3523 = vld [vmem:[#allocation17 + $0x30] sm:$0xff]
    %v3524 = vld [vmem:[#allocation17 + $0x38] sm:$0xff]
    %v3525 = vld [vmem:[#allocation17 + $0x40] sm:$0xff]
    %v3526 = vld [vmem:[#allocation17 + $0x48] sm:$0xff]
    %v3527 = vld [vmem:[#allocation17 + $0x50] sm:$0xff]
    %v3528 = vld [vmem:[#allocation17 + $0x58] sm:$0xff]
    %v3529 = vld [vmem:[#allocation17 + $0x60] sm:$0xff]
    %v3530 = vld [vmem:[#allocation17 + $0x68] sm:$0xff]
    %v3531 = vld [vmem:[#allocation17 + $0x70] sm:$0xff]
    %v3532 = vld [vmem:[#allocation17 + $0x78] sm:$0xff]
    %v3533 = vld [vmem:[#allocation17 + $0x80] sm:$0xff]
    %v3534 = vld [vmem:[#allocation17 + $0x88] sm:$0xff]
    %v3535 = vld [vmem:[#allocation17 + $0x90] sm:$0xff]
    %v3536 = vld [vmem:[#allocation17 + $0x98] sm:$0xff]
    %v3537 = vld [vmem:[#allocation17 + $0xa0] sm:$0xff]
    %v3538 = vld [vmem:[#allocation17 + $0xa8] sm:$0xff]
    %v3539 = vld [vmem:[#allocation17 + $0xb0] sm:$0xff]
    %v3540 = vld [vmem:[#allocation17 + $0xb8] sm:$0xff]
    %v3541 = vld [vmem:[#allocation17 + $0xc0] sm:$0xff]
    %v3542 = vld [vmem:[#allocation17 + $0xc8] sm:$0xff]
    %v3543 = vld [vmem:[#allocation17 + $0xd0] sm:$0xff]
    %v3544 = vld [vmem:[#allocation17 + $0xd8] sm:$0xff]
    %v3545 = vld [vmem:[#allocation17 + $0xe0] sm:$0xff]
    %v3546 = vld [vmem:[#allocation17 + $0xe8] sm:$0xff]
    %v3547 = vld [vmem:[#allocation17 + $0xf0] sm:$0xff]
    %v3548 = vld [vmem:[#allocation17 + $0xf8] sm:$0xff]
    %v3549 = vld [vmem:[#allocation17 + $0x100] sm:$0xff]
    %v3550 = vld [vmem:[#allocation17 + $0x108] sm:$0xff]
    %v3551 = vld [vmem:[#allocation17 + $0x110] sm:$0xff]
    %v3552 = vld [vmem:[#allocation17 + $0x118] sm:$0xff]
    %v3553 = vld [vmem:[#allocation17 + $0x120] sm:$0xff]
    %v3554 = vld [vmem:[#allocation17 + $0x128] sm:$0xff]
    %v3555 = vld [vmem:[#allocation17 + $0x130] sm:$0xff]
    %v3556 = vld [vmem:[#allocation17 + $0x138] sm:$0xff]
    %v3557 = vld [vmem:[#allocation17 + $0x140] sm:$0xff]
    %v3558 = vld [vmem:[#allocation17 + $0x148] sm:$0xff]
    %v3559 = vld [vmem:[#allocation17 + $0x150] sm:$0xff]
    %v3560 = vld [vmem:[#allocation17 + $0x158] sm:$0xff]
    %v3561 = vld [vmem:[#allocation17 + $0x160] sm:$0xff]
    %v3562 = vld [vmem:[#allocation17 + $0x168] sm:$0xff]
    %v3563 = vld [vmem:[#allocation17 + $0x170] sm:$0xff]
    %v3564 = vld [vmem:[#allocation17 + $0x178] sm:$0xff]
    %v3565 = vld [vmem:[#allocation17 + $0x180] sm:$0xff]
    %v3566 = vld [vmem:[#allocation17 + $0x188] sm:$0xff]
    %v3567 = vld [vmem:[#allocation17 + $0x190] sm:$0xff]
    %v3568 = vld [vmem:[#allocation17 + $0x198] sm:$0xff]
    %v3569 = vld [vmem:[#allocation17 + $0x1a0] sm:$0xff]
    %v3570 = vld [vmem:[#allocation17 + $0x1a8] sm:$0xff]
    %v3571 = vld [vmem:[#allocation17 + $0x1b0] sm:$0xff]
    %v3572 = vld [vmem:[#allocation17 + $0x1b8] sm:$0xff]
    %v3573 = vld [vmem:[#allocation17 + $0x1c0] sm:$0xff]
    %v3574 = vld [vmem:[#allocation17 + $0x1c8] sm:$0xff]
    %v3575 = vld [vmem:[#allocation17 + $0x1d0] sm:$0xff]
    %v3576 = vld [vmem:[#allocation17 + $0x1d8] sm:$0xff]
    %v3577 = vld [vmem:[#allocation17 + $0x1e0] sm:$0xff]
    %v3578 = vld [vmem:[#allocation17 + $0x1e8] sm:$0xff]
    %v3579 = vld [vmem:[#allocation17 + $0x1f0] sm:$0xff]
    %v3580 = vld [vmem:[#allocation17 + $0x1f8] sm:$0xff]
    %v3581 = vld [vmem:[#allocation17 + $0x200] sm:$0xff]
    %v3582 = vld [vmem:[#allocation17 + $0x208] sm:$0xff]
    %v3583 = vld [vmem:[#allocation17 + $0x210] sm:$0xff]
    %v3584 = vld [vmem:[#allocation17 + $0x218] sm:$0xff]
    %v3585 = vld [vmem:[#allocation17 + $0x220] sm:$0xff]
    %v3586 = vld [vmem:[#allocation17 + $0x228] sm:$0xff]
    %v3587 = vld [vmem:[#allocation17 + $0x230] sm:$0xff]
    %v3588 = vld [vmem:[#allocation17 + $0x238] sm:$0xff]
    %v3589 = vld [vmem:[#allocation17 + $0x240] sm:$0xff]
    %v3590 = vld [vmem:[#allocation17 + $0x248] sm:$0xff]
    %v3591 = vld [vmem:[#allocation17 + $0x250] sm:$0xff]
    %v3592 = vld [vmem:[#allocation17 + $0x258] sm:$0xff]
    %v3593 = vld [vmem:[#allocation17 + $0x260] sm:$0xff]
    %v3594 = vld [vmem:[#allocation17 + $0x268] sm:$0xff]
    %v3595 = vld [vmem:[#allocation17 + $0x270] sm:$0xff]
    %v3596 = vld [vmem:[#allocation17 + $0x278] sm:$0xff]
    %v3597 = vld [vmem:[#allocation17 + $0x280] sm:$0xff]
    %v3598 = vld [vmem:[#allocation17 + $0x288] sm:$0xff]
    %v3599 = vld [vmem:[#allocation17 + $0x290] sm:$0xff]
    %v3600 = vld [vmem:[#allocation17 + $0x298] sm:$0xff]
    %v3601 = vld [vmem:[#allocation17 + $0x2a0] sm:$0xff]
    %v3602 = vld [vmem:[#allocation17 + $0x2a8] sm:$0xff]
    %v3603 = vld [vmem:[#allocation17 + $0x2b0] sm:$0xff]
    %v3604 = vld [vmem:[#allocation17 + $0x2b8] sm:$0xff]
    %v3605 = vld [vmem:[#allocation17 + $0x2c0] sm:$0xff]
    %v3606 = vld [vmem:[#allocation17 + $0x2c8] sm:$0xff]
    %v3607 = vld [vmem:[#allocation17 + $0x2d0] sm:$0xff]
    %v3608 = vld [vmem:[#allocation17 + $0x2d8] sm:$0xff]
    %v3609 = vld [vmem:[#allocation17 + $0x2e0] sm:$0xff]
    %v3610 = vld [vmem:[#allocation17 + $0x2e8] sm:$0xff]
    %v3611 = vld [vmem:[#allocation17 + $0x2f0] sm:$0xff]
    %v3612 = vld [vmem:[#allocation17 + $0x2f8] sm:$0xff]
    %v3613 = vld [vmem:[#allocation17 + $0x300] sm:$0xff]
    %v3614 = vld [vmem:[#allocation17 + $0x308] sm:$0xff]
    %v3615 = vld [vmem:[#allocation17 + $0x310] sm:$0xff]
    %v3616 = vld [vmem:[#allocation17 + $0x318] sm:$0xff]
    %v3617 = vld [vmem:[#allocation17 + $0x320] sm:$0xff]
    %v3618 = vld [vmem:[#allocation17 + $0x328] sm:$0xff]
    %v3619 = vld [vmem:[#allocation17 + $0x330] sm:$0xff]
    %v3620 = vld [vmem:[#allocation17 + $0x338] sm:$0xff]
    %v3621 = vld [vmem:[#allocation17 + $0x340] sm:$0xff]
    %v3622 = vld [vmem:[#allocation17 + $0x348] sm:$0xff]
    %v3623 = vld [vmem:[#allocation17 + $0x350] sm:$0xff]
    %v3624 = vld [vmem:[#allocation17 + $0x358] sm:$0xff]
    %v3625 = vld [vmem:[#allocation17 + $0x360] sm:$0xff]
    %v3626 = vld [vmem:[#allocation17 + $0x368] sm:$0xff]
    %v3627 = vld [vmem:[#allocation17 + $0x370] sm:$0xff]
    %v3628 = vld [vmem:[#allocation17 + $0x378] sm:$0xff]
    %v3629 = vld [vmem:[#allocation17 + $0x380] sm:$0xff]
    %v3630 = vld [vmem:[#allocation17 + $0x388] sm:$0xff]
    %v3631 = vld [vmem:[#allocation17 + $0x390] sm:$0xff]
    %v3632 = vld [vmem:[#allocation17 + $0x398] sm:$0xff]
    %v3633 = vld [vmem:[#allocation17 + $0x3a0] sm:$0xff]
    %v3634 = vld [vmem:[#allocation17 + $0x3a8] sm:$0xff]
    %v3635 = vld [vmem:[#allocation17 + $0x3b0] sm:$0xff]
    %v3636 = vld [vmem:[#allocation17 + $0x3b8] sm:$0xff]
    %v3637 = vld [vmem:[#allocation17 + $0x3c0] sm:$0xff]
    %v3638 = vld [vmem:[#allocation17 + $0x3c8] sm:$0xff]
    %v3639 = vld [vmem:[#allocation17 + $0x3d0] sm:$0xff]
    %v3640 = vld [vmem:[#allocation17 + $0x3d8] sm:$0xff]
    %v3641 = vld [vmem:[#allocation17 + $0x3e0] sm:$0xff]
    %v3642 = vld [vmem:[#allocation17 + $0x3e8] sm:$0xff]
    %v3643 = vld [vmem:[#allocation17 + $0x3f0] sm:$0xff]
    %v3644 = vld [vmem:[#allocation17 + $0x3f8] sm:$0xff]
    %v3645 = vld [vmem:[#allocation17 + $0x400] sm:$0xff]
    %v3646 = vld [vmem:[#allocation17 + $0x408] sm:$0xff]
    %v3647 = vld [vmem:[#allocation17 + $0x410] sm:$0xff]
    %v3648 = vld [vmem:[#allocation17 + $0x418] sm:$0xff]
    %v3649 = vld [vmem:[#allocation17 + $0x420] sm:$0xff]
    %v3650 = vld [vmem:[#allocation17 + $0x428] sm:$0xff]
    %v3651 = vld [vmem:[#allocation17 + $0x430] sm:$0xff]
    %v3652 = vld [vmem:[#allocation17 + $0x438] sm:$0xff]
    %v3653 = vld [vmem:[#allocation17 + $0x440] sm:$0xff]
    %v3654 = vld [vmem:[#allocation17 + $0x448] sm:$0xff]
    %v3655 = vld [vmem:[#allocation17 + $0x450] sm:$0xff]
    %v3656 = vld [vmem:[#allocation17 + $0x458] sm:$0xff]
    %v3657 = vld [vmem:[#allocation17 + $0x460] sm:$0xff]
    %v3658 = vld [vmem:[#allocation17 + $0x468] sm:$0xff]
    %v3659 = vld [vmem:[#allocation17 + $0x470] sm:$0xff]
    %v3660 = vld [vmem:[#allocation17 + $0x478] sm:$0xff]
    %v3661 = vld [vmem:[#allocation17 + $0x480] sm:$0xff]
    %v3662 = vld [vmem:[#allocation17 + $0x488] sm:$0xff]
    %v3663 = vld [vmem:[#allocation17 + $0x490] sm:$0xff]
    %v3664 = vld [vmem:[#allocation17 + $0x498] sm:$0xff]
    %v3665 = vld [vmem:[#allocation17 + $0x4a0] sm:$0xff]
    %v3666 = vld [vmem:[#allocation17 + $0x4a8] sm:$0xff]
    %v3667 = vld [vmem:[#allocation17 + $0x4b0] sm:$0xff]
    %v3668 = vld [vmem:[#allocation17 + $0x4b8] sm:$0xff]
    %v3669 = vld [vmem:[#allocation17 + $0x4c0] sm:$0xff]
    %v3670 = vld [vmem:[#allocation17 + $0x4c8] sm:$0xff]
    %v3671 = vld [vmem:[#allocation17 + $0x4d0] sm:$0xff]
    %v3672 = vld [vmem:[#allocation17 + $0x4d8] sm:$0xff]
    %v3673 = vld [vmem:[#allocation17 + $0x4e0] sm:$0xff]
    %v3674 = vld [vmem:[#allocation17 + $0x4e8] sm:$0xff]
    %v3675 = vld [vmem:[#allocation17 + $0x4f0] sm:$0xff]
    %v3676 = vld [vmem:[#allocation17 + $0x4f8] sm:$0xff]
    %v3677 = vld [vmem:[#allocation17 + $0x500] sm:$0xff]
    %v3678 = vld [vmem:[#allocation17 + $0x508] sm:$0xff]
    %v3679 = vld [vmem:[#allocation17 + $0x510] sm:$0xff]
    %v3680 = vld [vmem:[#allocation17 + $0x518] sm:$0xff]
    %v3681 = vld [vmem:[#allocation17 + $0x520] sm:$0xff]
    %v3682 = vld [vmem:[#allocation17 + $0x528] sm:$0xff]
    %v3683 = vld [vmem:[#allocation17 + $0x530] sm:$0xff]
    %v3684 = vld [vmem:[#allocation17 + $0x538] sm:$0xff]
    %v3685 = vld [vmem:[#allocation17 + $0x540] sm:$0xff]
    %v3686 = vld [vmem:[#allocation17 + $0x548] sm:$0xff]
    %v3687 = vld [vmem:[#allocation17 + $0x550] sm:$0xff]
    %v3688 = vld [vmem:[#allocation17 + $0x558] sm:$0xff]
    %v3689 = vld [vmem:[#allocation17 + $0x560] sm:$0xff]
    %v3690 = vld [vmem:[#allocation17 + $0x568] sm:$0xff]
    %v3691 = vld [vmem:[#allocation17 + $0x570] sm:$0xff]
    %v3692 = vld [vmem:[#allocation17 + $0x578] sm:$0xff]
    %v3693 = vld [vmem:[#allocation17 + $0x580] sm:$0xff]
    %v3694 = vld [vmem:[#allocation17 + $0x588] sm:$0xff]
    %v3695 = vld [vmem:[#allocation17 + $0x590] sm:$0xff]
    %v3696 = vld [vmem:[#allocation17 + $0x598] sm:$0xff]
    %v3697 = vld [vmem:[#allocation17 + $0x5a0] sm:$0xff]
    %v3698 = vld [vmem:[#allocation17 + $0x5a8] sm:$0xff]
    %v3699 = vld [vmem:[#allocation17 + $0x5b0] sm:$0xff]
    %v3700 = vld [vmem:[#allocation17 + $0x5b8] sm:$0xff]
    %v3701 = vld [vmem:[#allocation17 + $0x5c0] sm:$0xff]
    %v3702 = vld [vmem:[#allocation17 + $0x5c8] sm:$0xff]
    %v3703 = vld [vmem:[#allocation17 + $0x5d0] sm:$0xff]
    %v3704 = vld [vmem:[#allocation17 + $0x5d8] sm:$0xff]
    %v3705 = vld [vmem:[#allocation17 + $0x5e0] sm:$0xff]
    %v3706 = vld [vmem:[#allocation17 + $0x5e8] sm:$0xff]
    %v3707 = vld [vmem:[#allocation17 + $0x5f0] sm:$0xff]
    %v3708 = vld [vmem:[#allocation17 + $0x5f8] sm:$0xff]
    %v3709 = vld [vmem:[#allocation17 + $0x600] sm:$0xff]
    %v3710 = vld [vmem:[#allocation17 + $0x608] sm:$0xff]
    %v3711 = vld [vmem:[#allocation17 + $0x610] sm:$0xff]
    %v3712 = vld [vmem:[#allocation17 + $0x618] sm:$0xff]
    %v3713 = vld [vmem:[#allocation17 + $0x620] sm:$0xff]
    %v3714 = vld [vmem:[#allocation17 + $0x628] sm:$0xff]
    %v3715 = vld [vmem:[#allocation17 + $0x630] sm:$0xff]
    %v3716 = vld [vmem:[#allocation17 + $0x638] sm:$0xff]
    %v3717 = vld [vmem:[#allocation17 + $0x640] sm:$0xff]
    %v3718 = vld [vmem:[#allocation17 + $0x648] sm:$0xff]
    %v3719 = vld [vmem:[#allocation17 + $0x650] sm:$0xff]
    %v3720 = vld [vmem:[#allocation17 + $0x658] sm:$0xff]
    %v3721 = vld [vmem:[#allocation17 + $0x660] sm:$0xff]
    %v3722 = vld [vmem:[#allocation17 + $0x668] sm:$0xff]
    %v3723 = vld [vmem:[#allocation17 + $0x670] sm:$0xff]
    %v3724 = vld [vmem:[#allocation17 + $0x678] sm:$0xff]
    %v3725 = vld [vmem:[#allocation17 + $0x680] sm:$0xff]
    %v3726 = vld [vmem:[#allocation17 + $0x688] sm:$0xff]
    %v3727 = vld [vmem:[#allocation17 + $0x690] sm:$0xff]
    %v3728 = vld [vmem:[#allocation17 + $0x698] sm:$0xff]
    %v3729 = vld [vmem:[#allocation17 + $0x6a0] sm:$0xff]
    %v3730 = vld [vmem:[#allocation17 + $0x6a8] sm:$0xff]
    %v3731 = vld [vmem:[#allocation17 + $0x6b0] sm:$0xff]
    %v3732 = vld [vmem:[#allocation17 + $0x6b8] sm:$0xff]
    %v3733 = vld [vmem:[#allocation17 + $0x6c0] sm:$0xff]
    %v3734 = vld [vmem:[#allocation17 + $0x6c8] sm:$0xff]
    %v3735 = vld [vmem:[#allocation17 + $0x6d0] sm:$0xff]
    %v3736 = vld [vmem:[#allocation17 + $0x6d8] sm:$0xff]
    %v3737 = vld [vmem:[#allocation17 + $0x6e0] sm:$0xff]
    %v3738 = vld [vmem:[#allocation17 + $0x6e8] sm:$0xff]
    %v3739 = vld [vmem:[#allocation17 + $0x6f0] sm:$0xff]
    %v3740 = vld [vmem:[#allocation17 + $0x6f8] sm:$0xff]
    %v3741 = vld [vmem:[#allocation17 + $0x700] sm:$0xff]
    %v3742 = vld [vmem:[#allocation17 + $0x708] sm:$0xff]
    %v3743 = vld [vmem:[#allocation17 + $0x710] sm:$0xff]
    %v3744 = vld [vmem:[#allocation17 + $0x718] sm:$0xff]
    %v3745 = vld [vmem:[#allocation17 + $0x720] sm:$0xff]
    %v3746 = vld [vmem:[#allocation17 + $0x728] sm:$0xff]
    %v3747 = vld [vmem:[#allocation17 + $0x730] sm:$0xff]
    %v3748 = vld [vmem:[#allocation17 + $0x738] sm:$0xff]
    %v3749 = vld [vmem:[#allocation17 + $0x740] sm:$0xff]
    %v3750 = vld [vmem:[#allocation17 + $0x748] sm:$0xff]
    %v3751 = vld [vmem:[#allocation17 + $0x750] sm:$0xff]
    %v3752 = vld [vmem:[#allocation17 + $0x758] sm:$0xff]
    %v3753 = vld [vmem:[#allocation17 + $0x760] sm:$0xff]
    %v3754 = vld [vmem:[#allocation17 + $0x768] sm:$0xff]
    %v3755 = vld [vmem:[#allocation17 + $0x770] sm:$0xff]
    %v3756 = vld [vmem:[#allocation17 + $0x778] sm:$0xff]
    %v3757 = vld [vmem:[#allocation17 + $0x780] sm:$0xff]
    %v3758 = vld [vmem:[#allocation17 + $0x788] sm:$0xff]
    %v3759 = vld [vmem:[#allocation17 + $0x790] sm:$0xff]
    %v3760 = vld [vmem:[#allocation17 + $0x798] sm:$0xff]
    %v3761 = vld [vmem:[#allocation17 + $0x7a0] sm:$0xff]
    %v3762 = vld [vmem:[#allocation17 + $0x7a8] sm:$0xff]
    %v3763 = vld [vmem:[#allocation17 + $0x7b0] sm:$0xff]
    %v3764 = vld [vmem:[#allocation17 + $0x7b8] sm:$0xff]
    %v3765 = vld [vmem:[#allocation17 + $0x7c0] sm:$0xff]
    %v3766 = vld [vmem:[#allocation17 + $0x7c8] sm:$0xff]
    %v3767 = vld [vmem:[#allocation17 + $0x7d0] sm:$0xff]
    %v3768 = vld [vmem:[#allocation17 + $0x7d8] sm:$0xff]
    %v3769 = vld [vmem:[#allocation17 + $0x7e0] sm:$0xff]
    %v3770 = vld [vmem:[#allocation17 + $0x7e8] sm:$0xff]
    %v3771 = vld [vmem:[#allocation17 + $0x7f0] sm:$0xff]
    %v3772 = vld [vmem:[#allocation17 + $0x7f8] sm:$0xff]
    %v3773 = vld [vmem:[#allocation17 + $0x800] sm:$0xff]
    %v3774 = vld [vmem:[#allocation17 + $0x808] sm:$0xff]
    %v3775 = vld [vmem:[#allocation17 + $0x810] sm:$0xff]
    %v3776 = vld [vmem:[#allocation17 + $0x818] sm:$0xff]
    %v3777 = vld [vmem:[#allocation17 + $0x820] sm:$0xff]
    %v3778 = vld [vmem:[#allocation17 + $0x828] sm:$0xff]
    %v3779 = vld [vmem:[#allocation17 + $0x830] sm:$0xff]
    %v3780 = vld [vmem:[#allocation17 + $0x838] sm:$0xff]
    %v3781 = vld [vmem:[#allocation17 + $0x840] sm:$0xff]
    %v3782 = vld [vmem:[#allocation17 + $0x848] sm:$0xff]
    %v3783 = vld [vmem:[#allocation17 + $0x850] sm:$0xff]
    %v3784 = vld [vmem:[#allocation17 + $0x858] sm:$0xff]
    %v3785 = vld [vmem:[#allocation17 + $0x860] sm:$0xff]
    %v3786 = vld [vmem:[#allocation17 + $0x868] sm:$0xff]
    %v3787 = vld [vmem:[#allocation17 + $0x870] sm:$0xff]
    %v3788 = vld [vmem:[#allocation17 + $0x878] sm:$0xff]
    %v3789 = vld [vmem:[#allocation17 + $0x880] sm:$0xff]
    %v3790 = vld [vmem:[#allocation17 + $0x888] sm:$0xff]
    %v3791 = vld [vmem:[#allocation17 + $0x890] sm:$0xff]
    %v3792 = vld [vmem:[#allocation17 + $0x898] sm:$0xff]
    %v3793 = vld [vmem:[#allocation17 + $0x8a0] sm:$0xff]
    %v3794 = vld [vmem:[#allocation17 + $0x8a8] sm:$0xff]
    %v3795 = vld [vmem:[#allocation17 + $0x8b0] sm:$0xff]
    %v3796 = vld [vmem:[#allocation17 + $0x8b8] sm:$0xff]
    %v3797 = vld [vmem:[#allocation17 + $0x8c0] sm:$0xff]
    %v3798 = vld [vmem:[#allocation17 + $0x8c8] sm:$0xff]
    %v3799 = vld [vmem:[#allocation17 + $0x8d0] sm:$0xff]
    %v3800 = vld [vmem:[#allocation17 + $0x8d8] sm:$0xff]
    %v3801 = vld [vmem:[#allocation17 + $0x8e0] sm:$0xff]
    %v3802 = vld [vmem:[#allocation17 + $0x8e8] sm:$0xff]
    %v3803 = vld [vmem:[#allocation17 + $0x8f0] sm:$0xff]
    %v3804 = vld [vmem:[#allocation17 + $0x8f8] sm:$0xff]
    %v3805 = vld [vmem:[#allocation17 + $0x900] sm:$0xff]
    %v3806 = vld [vmem:[#allocation17 + $0x908] sm:$0xff]
    %v3807 = vld [vmem:[#allocation17 + $0x910] sm:$0xff]
    %v3808 = vld [vmem:[#allocation17 + $0x918] sm:$0xff]
    %v3809 = vld [vmem:[#allocation17 + $0x920] sm:$0xff]
    %v3810 = vld [vmem:[#allocation17 + $0x928] sm:$0xff]
    %v3811 = vld [vmem:[#allocation17 + $0x930] sm:$0xff]
    %v3812 = vld [vmem:[#allocation17 + $0x938] sm:$0xff]
    %v3813 = vld [vmem:[#allocation17 + $0x940] sm:$0xff]
    %v3814 = vld [vmem:[#allocation17 + $0x948] sm:$0xff]
    %v3815 = vld [vmem:[#allocation17 + $0x950] sm:$0xff]
    %v3816 = vld [vmem:[#allocation17 + $0x958] sm:$0xff]
    %v3817 = vld [vmem:[#allocation17 + $0x960] sm:$0xff]
    %v3818 = vld [vmem:[#allocation17 + $0x968] sm:$0xff]
    %v3819 = vld [vmem:[#allocation17 + $0x970] sm:$0xff]
    %v3820 = vld [vmem:[#allocation17 + $0x978] sm:$0xff]
    %v3821 = vld [vmem:[#allocation17 + $0x980] sm:$0xff]
    %v3822 = vld [vmem:[#allocation17 + $0x988] sm:$0xff]
    %v3823 = vld [vmem:[#allocation17 + $0x990] sm:$0xff]
    %v3824 = vld [vmem:[#allocation17 + $0x998] sm:$0xff]
    %v3825 = vld [vmem:[#allocation17 + $0x9a0] sm:$0xff]
    %v3826 = vld [vmem:[#allocation17 + $0x9a8] sm:$0xff]
    %v3827 = vld [vmem:[#allocation17 + $0x9b0] sm:$0xff]
    %v3828 = vld [vmem:[#allocation17 + $0x9b8] sm:$0xff]
    %v3829 = vld [vmem:[#allocation17 + $0x9c0] sm:$0xff]
    %v3830 = vld [vmem:[#allocation17 + $0x9c8] sm:$0xff]
    %v3831 = vld [vmem:[#allocation17 + $0x9d0] sm:$0xff]
    %v3832 = vld [vmem:[#allocation17 + $0x9d8] sm:$0xff]
    %v3833 = vld [vmem:[#allocation17 + $0x9e0] sm:$0xff]
    %v3834 = vld [vmem:[#allocation17 + $0x9e8] sm:$0xff]
    %v3835 = vld [vmem:[#allocation17 + $0x9f0] sm:$0xff]
    %v3836 = vld [vmem:[#allocation17 + $0x9f8] sm:$0xff]
    %v3837 = vld [vmem:[#allocation17 + $0xa00] sm:$0xff]
    %v3838 = vld [vmem:[#allocation17 + $0xa08] sm:$0xff]
    %v3839 = vld [vmem:[#allocation17 + $0xa10] sm:$0xff]
    %v3840 = vld [vmem:[#allocation17 + $0xa18] sm:$0xff]
    %v3841 = vld [vmem:[#allocation17 + $0xa20] sm:$0xff]
    %v3842 = vld [vmem:[#allocation17 + $0xa28] sm:$0xff]
    %v3843 = vld [vmem:[#allocation17 + $0xa30] sm:$0xff]
    %v3844 = vld [vmem:[#allocation17 + $0xa38] sm:$0xff]
    %v3845 = vld [vmem:[#allocation17 + $0xa40] sm:$0xff]
    %v3846 = vld [vmem:[#allocation17 + $0xa48] sm:$0xff]
    %v3847 = vld [vmem:[#allocation17 + $0xa50] sm:$0xff]
    %v3848 = vld [vmem:[#allocation17 + $0xa58] sm:$0xff]
    %v3849 = vld [vmem:[#allocation17 + $0xa60] sm:$0xff]
    %v3850 = vld [vmem:[#allocation17 + $0xa68] sm:$0xff]
    %v3851 = vld [vmem:[#allocation17 + $0xa70] sm:$0xff]
    %v3852 = vld [vmem:[#allocation17 + $0xa78] sm:$0xff]
    %v3853 = vld [vmem:[#allocation17 + $0xa80] sm:$0xff]
    %v3854 = vld [vmem:[#allocation17 + $0xa88] sm:$0xff]
    %v3855 = vld [vmem:[#allocation17 + $0xa90] sm:$0xff]
    %v3856 = vld [vmem:[#allocation17 + $0xa98] sm:$0xff]
    %v3857 = vld [vmem:[#allocation17 + $0xaa0] sm:$0xff]
    %v3858 = vld [vmem:[#allocation17 + $0xaa8] sm:$0xff]
    %v3859 = vld [vmem:[#allocation17 + $0xab0] sm:$0xff]
    %v3860 = vld [vmem:[#allocation17 + $0xab8] sm:$0xff]
    %v3861 = vld [vmem:[#allocation17 + $0xac0] sm:$0xff]
    %v3862 = vld [vmem:[#allocation17 + $0xac8] sm:$0xff]
    %v3863 = vld [vmem:[#allocation17 + $0xad0] sm:$0xff]
    %v3864 = vld [vmem:[#allocation17 + $0xad8] sm:$0xff]
    %v3865 = vld [vmem:[#allocation17 + $0xae0] sm:$0xff]
    %v3866 = vld [vmem:[#allocation17 + $0xae8] sm:$0xff]
    %v3867 = vld [vmem:[#allocation17 + $0xaf0] sm:$0xff]
    %v3868 = vld [vmem:[#allocation17 + $0xaf8] sm:$0xff]
    %v3869 = vld [vmem:[#allocation17 + $0xb00] sm:$0xff]
    %v3870 = vld [vmem:[#allocation17 + $0xb08] sm:$0xff]
    %v3871 = vld [vmem:[#allocation17 + $0xb10] sm:$0xff]
    %v3872 = vld [vmem:[#allocation17 + $0xb18] sm:$0xff]
    %v3873 = vld [vmem:[#allocation17 + $0xb20] sm:$0xff]
    %v3874 = vld [vmem:[#allocation17 + $0xb28] sm:$0xff]
    %v3875 = vld [vmem:[#allocation17 + $0xb30] sm:$0xff]
    %v3876 = vld [vmem:[#allocation17 + $0xb38] sm:$0xff]
    %v3877 = vld [vmem:[#allocation17 + $0xb40] sm:$0xff]
    %v3878 = vld [vmem:[#allocation17 + $0xb48] sm:$0xff]
    %v3879 = vld [vmem:[#allocation17 + $0xb50] sm:$0xff]
    %v3880 = vld [vmem:[#allocation17 + $0xb58] sm:$0xff]
    %v3881 = vld [vmem:[#allocation17 + $0xb60] sm:$0xff]
    %v3882 = vld [vmem:[#allocation17 + $0xb68] sm:$0xff]
    %v3883 = vld [vmem:[#allocation17 + $0xb70] sm:$0xff]
    %v3884 = vld [vmem:[#allocation17 + $0xb78] sm:$0xff]
    %v3885 = vld [vmem:[#allocation17 + $0xb80] sm:$0xff]
    %v3886 = vld [vmem:[#allocation17 + $0xb88] sm:$0xff]
    %v3887 = vld [vmem:[#allocation17 + $0xb90] sm:$0xff]
    %v3888 = vld [vmem:[#allocation17 + $0xb98] sm:$0xff]
    %v3889 = vld [vmem:[#allocation17 + $0xba0] sm:$0xff]
    %v3890 = vld [vmem:[#allocation17 + $0xba8] sm:$0xff]
    %v3891 = vld [vmem:[#allocation17 + $0xbb0] sm:$0xff]
    %v3892 = vld [vmem:[#allocation17 + $0xbb8] sm:$0xff]
    %v3893 = vld [vmem:[#allocation17 + $0xbc0] sm:$0xff]
    %v3894 = vld [vmem:[#allocation17 + $0xbc8] sm:$0xff]
    %v3895 = vld [vmem:[#allocation17 + $0xbd0] sm:$0xff]
    %v3896 = vld [vmem:[#allocation17 + $0xbd8] sm:$0xff]
    %v3897 = vld [vmem:[#allocation17 + $0xbe0] sm:$0xff]
    %v3898 = vld [vmem:[#allocation17 + $0xbe8] sm:$0xff]
    %v3899 = vld [vmem:[#allocation17 + $0xbf0] sm:$0xff]
    %v3900 = vld [vmem:[#allocation17 + $0xbf8] sm:$0xff]
    %v3901 = vld [vmem:[#allocation17 + $0xc00] sm:$0xff]
    %v3902 = vld [vmem:[#allocation17 + $0xc08] sm:$0xff]
    %v3903 = vld [vmem:[#allocation17 + $0xc10] sm:$0xff]
    %v3904 = vld [vmem:[#allocation17 + $0xc18] sm:$0xff]
    %v3905 = vld [vmem:[#allocation17 + $0xc20] sm:$0xff]
    %v3906 = vld [vmem:[#allocation17 + $0xc28] sm:$0xff]
    %v3907 = vld [vmem:[#allocation17 + $0xc30] sm:$0xff]
    %v3908 = vld [vmem:[#allocation17 + $0xc38] sm:$0xff]
    %v3909 = vld [vmem:[#allocation17 + $0xc40] sm:$0xff]
    %v3910 = vld [vmem:[#allocation17 + $0xc48] sm:$0xff]
    %v3911 = vld [vmem:[#allocation17 + $0xc50] sm:$0xff]
    %v3912 = vld [vmem:[#allocation17 + $0xc58] sm:$0xff]
    %v3913 = vld [vmem:[#allocation17 + $0xc60] sm:$0xff]
    %v3914 = vld [vmem:[#allocation17 + $0xc68] sm:$0xff]
    %v3915 = vld [vmem:[#allocation17 + $0xc70] sm:$0xff]
    %v3916 = vld [vmem:[#allocation17 + $0xc78] sm:$0xff]
    %v3917 = vld [vmem:[#allocation17 + $0xc80] sm:$0xff]
    %v3918 = vld [vmem:[#allocation17 + $0xc88] sm:$0xff]
    %v3919 = vld [vmem:[#allocation17 + $0xc90] sm:$0xff]
    %v3920 = vld [vmem:[#allocation17 + $0xc98] sm:$0xff]
    %v3921 = vld [vmem:[#allocation17 + $0xca0] sm:$0xff]
    %v3922 = vld [vmem:[#allocation17 + $0xca8] sm:$0xff]
    %v3923 = vld [vmem:[#allocation17 + $0xcb0] sm:$0xff]
    %v3924 = vld [vmem:[#allocation17 + $0xcb8] sm:$0xff]
    %v3925 = vld [vmem:[#allocation17 + $0xcc0] sm:$0xff]
    %v3926 = vld [vmem:[#allocation17 + $0xcc8] sm:$0xff]
    %v3927 = vld [vmem:[#allocation17 + $0xcd0] sm:$0xff]
    %v3928 = vld [vmem:[#allocation17 + $0xcd8] sm:$0xff]
    %v3929 = vld [vmem:[#allocation17 + $0xce0] sm:$0xff]
    %v3930 = vld [vmem:[#allocation17 + $0xce8] sm:$0xff]
    %v3931 = vld [vmem:[#allocation17 + $0xcf0] sm:$0xff]
    %v3932 = vld [vmem:[#allocation17 + $0xcf8] sm:$0xff]
    %v3933 = vld [vmem:[#allocation17 + $0xd00] sm:$0xff]
    %v3934 = vld [vmem:[#allocation17 + $0xd08] sm:$0xff]
    %v3935 = vld [vmem:[#allocation17 + $0xd10] sm:$0xff]
    %v3936 = vld [vmem:[#allocation17 + $0xd18] sm:$0xff]
    %v3937 = vld [vmem:[#allocation17 + $0xd20] sm:$0xff]
    %v3938 = vld [vmem:[#allocation17 + $0xd28] sm:$0xff]
    %v3939 = vld [vmem:[#allocation17 + $0xd30] sm:$0xff]
    %v3940 = vld [vmem:[#allocation17 + $0xd38] sm:$0xff]
    %v3941 = vld [vmem:[#allocation17 + $0xd40] sm:$0xff]
    %v3942 = vld [vmem:[#allocation17 + $0xd48] sm:$0xff]
    %v3943 = vld [vmem:[#allocation17 + $0xd50] sm:$0xff]
    %v3944 = vld [vmem:[#allocation17 + $0xd58] sm:$0xff]
    %v3945 = vld [vmem:[#allocation17 + $0xd60] sm:$0xff]
    %v3946 = vld [vmem:[#allocation17 + $0xd68] sm:$0xff]
    %v3947 = vld [vmem:[#allocation17 + $0xd70] sm:$0xff]
    %v3948 = vld [vmem:[#allocation17 + $0xd78] sm:$0xff]
    %v3949 = vld [vmem:[#allocation17 + $0xd80] sm:$0xff]
    %v3950 = vld [vmem:[#allocation17 + $0xd88] sm:$0xff]
    %v3951 = vld [vmem:[#allocation17 + $0xd90] sm:$0xff]
    %v3952 = vld [vmem:[#allocation17 + $0xd98] sm:$0xff]
    %v3953 = vld [vmem:[#allocation17 + $0xda0] sm:$0xff]
    %v3954 = vld [vmem:[#allocation17 + $0xda8] sm:$0xff]
    %v3955 = vld [vmem:[#allocation17 + $0xdb0] sm:$0xff]
    %v3956 = vld [vmem:[#allocation17 + $0xdb8] sm:$0xff]
    %v3957 = vld [vmem:[#allocation17 + $0xdc0] sm:$0xff]
    %v3958 = vld [vmem:[#allocation17 + $0xdc8] sm:$0xff]
    %v3959 = vld [vmem:[#allocation17 + $0xdd0] sm:$0xff]
    %v3960 = vld [vmem:[#allocation17 + $0xdd8] sm:$0xff]
    %v3961 = vld [vmem:[#allocation17 + $0xde0] sm:$0xff]
    %v3962 = vld [vmem:[#allocation17 + $0xde8] sm:$0xff]
    %v3963 = vld [vmem:[#allocation17 + $0xdf0] sm:$0xff]
    %v3964 = vld [vmem:[#allocation17 + $0xdf8] sm:$0xff]
    %v3965 = vld [vmem:[#allocation17 + $0xe00] sm:$0xff]
    %v3966 = vld [vmem:[#allocation17 + $0xe08] sm:$0xff]
    %v3967 = vld [vmem:[#allocation17 + $0xe10] sm:$0xff]
    %v3968 = vld [vmem:[#allocation17 + $0xe18] sm:$0xff]
    %v3969 = vld [vmem:[#allocation17 + $0xe20] sm:$0xff]
    %v3970 = vld [vmem:[#allocation17 + $0xe28] sm:$0xff]
    %v3971 = vld [vmem:[#allocation17 + $0xe30] sm:$0xff]
    %v3972 = vld [vmem:[#allocation17 + $0xe38] sm:$0xff]
    %v3973 = vld [vmem:[#allocation17 + $0xe40] sm:$0xff]
    %v3974 = vld [vmem:[#allocation17 + $0xe48] sm:$0xff]
    %v3975 = vld [vmem:[#allocation17 + $0xe50] sm:$0xff]
    %v3976 = vld [vmem:[#allocation17 + $0xe58] sm:$0xff]
    %v3977 = vld [vmem:[#allocation17 + $0xe60] sm:$0xff]
    %v3978 = vld [vmem:[#allocation17 + $0xe68] sm:$0xff]
    %v3979 = vld [vmem:[#allocation17 + $0xe70] sm:$0xff]
    %v3980 = vld [vmem:[#allocation17 + $0xe78] sm:$0xff]
    %v3981 = vld [vmem:[#allocation17 + $0xe80] sm:$0xff]
    %v3982 = vld [vmem:[#allocation17 + $0xe88] sm:$0xff]
    %v3983 = vld [vmem:[#allocation17 + $0xe90] sm:$0xff]
    %v3984 = vld [vmem:[#allocation17 + $0xe98] sm:$0xff]
    %v3985 = vld [vmem:[#allocation17 + $0xea0] sm:$0xff]
    %v3986 = vld [vmem:[#allocation17 + $0xea8] sm:$0xff]
    %v3987 = vld [vmem:[#allocation17 + $0xeb0] sm:$0xff]
    %v3988 = vld [vmem:[#allocation17 + $0xeb8] sm:$0xff]
    %v3989 = vld [vmem:[#allocation17 + $0xec0] sm:$0xff]
    %v3990 = vld [vmem:[#allocation17 + $0xec8] sm:$0xff]
    %v3991 = vld [vmem:[#allocation17 + $0xed0] sm:$0xff]
    %v3992 = vld [vmem:[#allocation17 + $0xed8] sm:$0xff]
    %v3993 = vld [vmem:[#allocation17 + $0xee0] sm:$0xff]
    %v3994 = vld [vmem:[#allocation17 + $0xee8] sm:$0xff]
    %v3995 = vld [vmem:[#allocation17 + $0xef0] sm:$0xff]
    %v3996 = vld [vmem:[#allocation17 + $0xef8] sm:$0xff]
    %v3997 = vld [vmem:[#allocation17 + $0xf00] sm:$0xff]
    %v3998 = vld [vmem:[#allocation17 + $0xf08] sm:$0xff]
    %v3999 = vld [vmem:[#allocation17 + $0xf10] sm:$0xff]
    %v4000 = vld [vmem:[#allocation17 + $0xf18] sm:$0xff]
    %v4001 = vld [vmem:[#allocation17 + $0xf20] sm:$0xff]
    %v4002 = vld [vmem:[#allocation17 + $0xf28] sm:$0xff]
    %v4003 = vld [vmem:[#allocation17 + $0xf30] sm:$0xff]
    %v4004 = vld [vmem:[#allocation17 + $0xf38] sm:$0xff]
    %v4005 = vld [vmem:[#allocation17 + $0xf40] sm:$0xff]
    %v4006 = vld [vmem:[#allocation17 + $0xf48] sm:$0xff]
    %v4007 = vld [vmem:[#allocation17 + $0xf50] sm:$0xff]
    %v4008 = vld [vmem:[#allocation17 + $0xf58] sm:$0xff]
    %v4009 = vld [vmem:[#allocation17 + $0xf60] sm:$0xff]
    %v4010 = vld [vmem:[#allocation17 + $0xf68] sm:$0xff]
    %v4011 = vld [vmem:[#allocation17 + $0xf70] sm:$0xff]
    %v4012 = vld [vmem:[#allocation17 + $0xf78] sm:$0xff]
    %v4013 = vld [vmem:[#allocation17 + $0xf80] sm:$0xff]
    %v4014 = vld [vmem:[#allocation17 + $0xf88] sm:$0xff]
    %v4015 = vld [vmem:[#allocation17 + $0xf90] sm:$0xff]
    %v4016 = vld [vmem:[#allocation17 + $0xf98] sm:$0xff]
    %v4017 = vld [vmem:[#allocation17 + $0xfa0] sm:$0xff]
    %v4018 = vld [vmem:[#allocation17 + $0xfa8] sm:$0xff]
    %v4019 = vld [vmem:[#allocation17 + $0xfb0] sm:$0xff]
    %v4020 = vld [vmem:[#allocation17 + $0xfb8] sm:$0xff]
    %v4021 = vld [vmem:[#allocation17 + $0xfc0] sm:$0xff]
    %v4022 = vld [vmem:[#allocation17 + $0xfc8] sm:$0xff]
    %v4023 = vld [vmem:[#allocation17 + $0xfd0] sm:$0xff]
    %v4024 = vld [vmem:[#allocation17 + $0xfd8] sm:$0xff]
    %v4025 = vld [vmem:[#allocation17 + $0xfe0] sm:$0xff]
    %v4026 = vld [vmem:[#allocation17 + $0xfe8] sm:$0xff]
    %v4027 = vld [vmem:[#allocation17 + $0xff0] sm:$0xff]
    %v4028 = vld [vmem:[#allocation17 + $0xff8] sm:$0xff]
    %v4029 = vld [vmem:[#allocation17 + $0x1000] sm:$0xff]
    %v4030 = vld [vmem:[#allocation17 + $0x1008] sm:$0xff]
    %v4031 = vld [vmem:[#allocation17 + $0x1010] sm:$0xff]
    %v4032 = vld [vmem:[#allocation17 + $0x1018] sm:$0xff]
    %v4033 = vld [vmem:[#allocation17 + $0x1020] sm:$0xff]
    %v4034 = vld [vmem:[#allocation17 + $0x1028] sm:$0xff]
    %v4035 = vld [vmem:[#allocation17 + $0x1030] sm:$0xff]
    %v4036 = vld [vmem:[#allocation17 + $0x1038] sm:$0xff]
    %v4037 = vld [vmem:[#allocation17 + $0x1040] sm:$0xff]
    %v4038 = vld [vmem:[#allocation17 + $0x1048] sm:$0xff]
    %v4039 = vld [vmem:[#allocation17 + $0x1050] sm:$0xff]
    %v4040 = vld [vmem:[#allocation17 + $0x1058] sm:$0xff]
    %v4041 = vld [vmem:[#allocation17 + $0x1060] sm:$0xff]
    %v4042 = vld [vmem:[#allocation17 + $0x1068] sm:$0xff]
    %v4043 = vld [vmem:[#allocation17 + $0x1070] sm:$0xff]
    %v4044 = vld [vmem:[#allocation17 + $0x1078] sm:$0xff]
    %v4045 = vld [vmem:[#allocation17 + $0x1080] sm:$0xff]
    %v4046 = vld [vmem:[#allocation17 + $0x1088] sm:$0xff]
    %v4047 = vld [vmem:[#allocation17 + $0x1090] sm:$0xff]
    %v4048 = vld [vmem:[#allocation17 + $0x1098] sm:$0xff]
    %v4049 = vld [vmem:[#allocation17 + $0x10a0] sm:$0xff]
    %v4050 = vld [vmem:[#allocation17 + $0x10a8] sm:$0xff]
    %v4051 = vld [vmem:[#allocation17 + $0x10b0] sm:$0xff]
    %v4052 = vld [vmem:[#allocation17 + $0x10b8] sm:$0xff]
    %v4053 = vld [vmem:[#allocation17 + $0x10c0] sm:$0xff]
    %v4054 = vld [vmem:[#allocation17 + $0x10c8] sm:$0xff]
    %v4055 = vld [vmem:[#allocation17 + $0x10d0] sm:$0xff]
    %v4056 = vld [vmem:[#allocation17 + $0x10d8] sm:$0xff]
    %v4057 = vld [vmem:[#allocation17 + $0x10e0] sm:$0xff]
    %v4058 = vld [vmem:[#allocation17 + $0x10e8] sm:$0xff]
    %v4059 = vld [vmem:[#allocation17 + $0x10f0] sm:$0xff]
    %v4060 = vld [vmem:[#allocation17 + $0x10f8] sm:$0xff]
    %v4061 = vld [vmem:[#allocation17 + $0x1100] sm:$0xff]
    %v4062 = vld [vmem:[#allocation17 + $0x1108] sm:$0xff]
    %v4063 = vld [vmem:[#allocation17 + $0x1110] sm:$0xff]
    %v4064 = vld [vmem:[#allocation17 + $0x1118] sm:$0xff]
    %v4065 = vld [vmem:[#allocation17 + $0x1120] sm:$0xff]
    %v4066 = vld [vmem:[#allocation17 + $0x1128] sm:$0xff]
    %v4067 = vld [vmem:[#allocation17 + $0x1130] sm:$0xff]
    %v4068 = vld [vmem:[#allocation17 + $0x1138] sm:$0xff]
    %v4069 = vld [vmem:[#allocation17 + $0x1140] sm:$0xff]
    %v4070 = vld [vmem:[#allocation17 + $0x1148] sm:$0xff]
    %v4071 = vld [vmem:[#allocation17 + $0x1150] sm:$0xff]
    %v4072 = vld [vmem:[#allocation17 + $0x1158] sm:$0xff]
    %v4073 = vld [vmem:[#allocation17 + $0x1160] sm:$0xff]
    %v4074 = vld [vmem:[#allocation17 + $0x1168] sm:$0xff]
    %v4075 = vld [vmem:[#allocation17 + $0x1170] sm:$0xff]
    %v4076 = vld [vmem:[#allocation17 + $0x1178] sm:$0xff]
    %v4077 = vld [vmem:[#allocation17 + $0x1180] sm:$0xff]
    %v4078 = vld [vmem:[#allocation17 + $0x1188] sm:$0xff]
    %v4079 = vld [vmem:[#allocation17 + $0x1190] sm:$0xff]
    %v4080 = vld [vmem:[#allocation17 + $0x1198] sm:$0xff]
    %v4081 = vld [vmem:[#allocation17 + $0x11a0] sm:$0xff]
    %v4082 = vld [vmem:[#allocation17 + $0x11a8] sm:$0xff]
    %v4083 = vld [vmem:[#allocation17 + $0x11b0] sm:$0xff]
    %v4084 = vld [vmem:[#allocation17 + $0x11b8] sm:$0xff]
    %v4085 = vld [vmem:[#allocation17 + $0x11c0] sm:$0xff]
    %v4086 = vld [vmem:[#allocation17 + $0x11c8] sm:$0xff]
    %v4087 = vld [vmem:[#allocation17 + $0x11d0] sm:$0xff]
    %v4088 = vld [vmem:[#allocation17 + $0x11d8] sm:$0xff]
    %v4089 = vld [vmem:[#allocation17 + $0x11e0] sm:$0xff]
    %v4090 = vld [vmem:[#allocation17 + $0x11e8] sm:$0xff]
    %v4091 = vld [vmem:[#allocation17 + $0x11f0] sm:$0xff]
    %v4092 = vld [vmem:[#allocation17 + $0x11f8] sm:$0xff]
    %v4093 = vld [vmem:[#allocation19] sm:$0x3f]
    %v4094 = vld [vmem:[#allocation20] sm:$0xff]
    %v4095 = vld [vmem:[#allocation20 + $0x8] sm:$0xff]
    %v4096 = vld [vmem:[#allocation20 + $0x10] sm:$0xff]
    %v4097 = vld [vmem:[#allocation20 + $0x18] sm:$0xff]
    %v4098 = vld [vmem:[#allocation20 + $0x20] sm:$0xff]
    %v4099 = vld [vmem:[#allocation20 + $0x28] sm:$0xff]
    %v4100 = vld [vmem:[#allocation20 + $0x30] sm:$0xff]
    %v4101 = vld [vmem:[#allocation20 + $0x38] sm:$0xff]
    %v4102 = vld [vmem:[#allocation20 + $0x40] sm:$0xff]
    %v4103 = vld [vmem:[#allocation20 + $0x48] sm:$0xff]
    %v4104 = vld [vmem:[#allocation20 + $0x50] sm:$0xff]
    %v4105 = vld [vmem:[#allocation20 + $0x58] sm:$0xff]
    %v4106 = vld [vmem:[#allocation20 + $0x60] sm:$0xff]
    %v4107 = vld [vmem:[#allocation20 + $0x68] sm:$0xff]
    %v4108 = vld [vmem:[#allocation20 + $0x70] sm:$0xff]
    %v4109 = vld [vmem:[#allocation20 + $0x78] sm:$0xff]
    %v4110 = vld [vmem:[#allocation20 + $0x80] sm:$0xff]
    %v4111 = vld [vmem:[#allocation20 + $0x88] sm:$0xff]
    %v4112 = vld [vmem:[#allocation20 + $0x90] sm:$0xff]
    %v4113 = vld [vmem:[#allocation20 + $0x98] sm:$0xff]
    %v4114 = vld [vmem:[#allocation20 + $0xa0] sm:$0xff]
    %v4115 = vld [vmem:[#allocation20 + $0xa8] sm:$0xff]
    %v4116 = vld [vmem:[#allocation20 + $0xb0] sm:$0xff]
    %v4117 = vld [vmem:[#allocation20 + $0xb8] sm:$0xff]
    %v4118 = vld [vmem:[#allocation20 + $0xc0] sm:$0xff]
    %v4119 = vld [vmem:[#allocation20 + $0xc8] sm:$0xff]
    %v4120 = vld [vmem:[#allocation20 + $0xd0] sm:$0xff]
    %v4121 = vld [vmem:[#allocation20 + $0xd8] sm:$0xff]
    %v4122 = vld [vmem:[#allocation20 + $0xe0] sm:$0xff]
    %v4123 = vld [vmem:[#allocation20 + $0xe8] sm:$0xff]
    %v4124 = vld [vmem:[#allocation20 + $0xf0] sm:$0xff]
    %v4125 = vld [vmem:[#allocation20 + $0xf8] sm:$0xff]
    %v4126 = vld [vmem:[#allocation20 + $0x100] sm:$0xff]
    %v4127 = vld [vmem:[#allocation20 + $0x108] sm:$0xff]
    %v4128 = vld [vmem:[#allocation20 + $0x110] sm:$0xff]
    %v4129 = vld [vmem:[#allocation20 + $0x118] sm:$0xff]
    %v4130 = vld [vmem:[#allocation20 + $0x120] sm:$0xff]
    %v4131 = vld [vmem:[#allocation20 + $0x128] sm:$0xff]
    %v4132 = vld [vmem:[#allocation20 + $0x130] sm:$0xff]
    %v4133 = vld [vmem:[#allocation20 + $0x138] sm:$0xff]
    %v4134 = vld [vmem:[#allocation20 + $0x140] sm:$0xff]
    %v4135 = vld [vmem:[#allocation20 + $0x148] sm:$0xff]
    %v4136 = vld [vmem:[#allocation20 + $0x150] sm:$0xff]
    %v4137 = vld [vmem:[#allocation20 + $0x158] sm:$0xff]
    %v4138 = vld [vmem:[#allocation20 + $0x160] sm:$0xff]
    %v4139 = vld [vmem:[#allocation20 + $0x168] sm:$0xff]
    %v4140 = vld [vmem:[#allocation20 + $0x170] sm:$0xff]
    %v4141 = vld [vmem:[#allocation20 + $0x178] sm:$0xff]
    %v4142 = vld [vmem:[#allocation20 + $0x180] sm:$0xff]
    %v4143 = vld [vmem:[#allocation20 + $0x188] sm:$0xff]
    %v4144 = vld [vmem:[#allocation20 + $0x190] sm:$0xff]
    %v4145 = vld [vmem:[#allocation20 + $0x198] sm:$0xff]
    %v4146 = vld [vmem:[#allocation20 + $0x1a0] sm:$0xff]
    %v4147 = vld [vmem:[#allocation20 + $0x1a8] sm:$0xff]
    %v4148 = vld [vmem:[#allocation20 + $0x1b0] sm:$0xff]
    %v4149 = vld [vmem:[#allocation20 + $0x1b8] sm:$0xff]
    %v4150 = vld [vmem:[#allocation20 + $0x1c0] sm:$0xff]
    %v4151 = vld [vmem:[#allocation20 + $0x1c8] sm:$0xff]
    %v4152 = vld [vmem:[#allocation20 + $0x1d0] sm:$0xff]
    %v4153 = vld [vmem:[#allocation20 + $0x1d8] sm:$0xff]
    %v4154 = vld [vmem:[#allocation20 + $0x1e0] sm:$0xff]
    %v4155 = vld [vmem:[#allocation20 + $0x1e8] sm:$0xff]
    %v4156 = vld [vmem:[#allocation20 + $0x1f0] sm:$0xff]
    %v4157 = vld [vmem:[#allocation20 + $0x1f8] sm:$0xff]
    %v4158 = vld [vmem:[#allocation20 + $0x200] sm:$0xff]
    %v4159 = vld [vmem:[#allocation20 + $0x208] sm:$0xff]
    %v4160 = vld [vmem:[#allocation20 + $0x210] sm:$0xff]
    %v4161 = vld [vmem:[#allocation20 + $0x218] sm:$0xff]
    %v4162 = vld [vmem:[#allocation20 + $0x220] sm:$0xff]
    %v4163 = vld [vmem:[#allocation20 + $0x228] sm:$0xff]
    %v4164 = vld [vmem:[#allocation20 + $0x230] sm:$0xff]
    %v4165 = vld [vmem:[#allocation20 + $0x238] sm:$0xff]
    %v4166 = vld [vmem:[#allocation20 + $0x240] sm:$0xff]
    %v4167 = vld [vmem:[#allocation20 + $0x248] sm:$0xff]
    %v4168 = vld [vmem:[#allocation20 + $0x250] sm:$0xff]
    %v4169 = vld [vmem:[#allocation20 + $0x258] sm:$0xff]
    %v4170 = vld [vmem:[#allocation20 + $0x260] sm:$0xff]
    %v4171 = vld [vmem:[#allocation20 + $0x268] sm:$0xff]
    %v4172 = vld [vmem:[#allocation20 + $0x270] sm:$0xff]
    %v4173 = vld [vmem:[#allocation20 + $0x278] sm:$0xff]
    %v4174 = vld [vmem:[#allocation20 + $0x280] sm:$0xff]
    %v4175 = vld [vmem:[#allocation20 + $0x288] sm:$0xff]
    %v4176 = vld [vmem:[#allocation20 + $0x290] sm:$0xff]
    %v4177 = vld [vmem:[#allocation20 + $0x298] sm:$0xff]
    %v4178 = vld [vmem:[#allocation20 + $0x2a0] sm:$0xff]
    %v4179 = vld [vmem:[#allocation20 + $0x2a8] sm:$0xff]
    %v4180 = vld [vmem:[#allocation20 + $0x2b0] sm:$0xff]
    %v4181 = vld [vmem:[#allocation20 + $0x2b8] sm:$0xff]
    %v4182 = vld [vmem:[#allocation20 + $0x2c0] sm:$0xff]
    %v4183 = vld [vmem:[#allocation20 + $0x2c8] sm:$0xff]
    %v4184 = vld [vmem:[#allocation20 + $0x2d0] sm:$0xff]
    %v4185 = vld [vmem:[#allocation20 + $0x2d8] sm:$0xff]
    %v4186 = vld [vmem:[#allocation20 + $0x2e0] sm:$0xff]
    %v4187 = vld [vmem:[#allocation20 + $0x2e8] sm:$0xff]
    %v4188 = vld [vmem:[#allocation20 + $0x2f0] sm:$0xff]
    %v4189 = vld [vmem:[#allocation20 + $0x2f8] sm:$0xff]
    %v4190 = vld [vmem:[#allocation22] sm:$0x1]
    %4191 = vmatprep.subr.mxu0 %v3201
    %4192 = vmatpush1.xpose.msra.mxu0 %v3199
    %4193 = vmatprep.subr.mxu0 0.0
    %4194 = vmatpush1.xpose.msra.mxu0 0.0
    %4195 = vmatprep.subr.mxu0 0.0
    %4196 = vmatpush1.xpose.msra.mxu0 0.0
    %4197 = vmatprep.subr.mxu0 0.0
    %4198 = vmatpush1.xpose.msra.mxu0 0.0
    %4199 = vmatprep.subr.mxu0 0.0
    %4200 = vmatpush1.xpose.msra.mxu0 0.0
    %4201 = vmatprep.subr.mxu0 0.0
    %4202 = vmatpush1.xpose.msra.mxu0 0.0
    %4203 = vmatprep.subr.mxu0 0.0
    %4204 = vmatpush1.xpose.msra.mxu0 0.0
    %4205 = vmatprep.subr.mxu0 0.0
    %4206 = vmatpush1.xpose.msra.mxu0 0.0
    %4207 = vmatprep.subr.mxu0 0.0
    %4208 = vmatpush1.xpose.msra.mxu0 0.0
    %4209 = vmatprep.subr.mxu0 0.0
    %4210 = vmatpush1.xpose.msra.mxu0 0.0
    %4211 = vmatprep.subr.mxu0 0.0
    %4212 = vmatpush1.xpose.msra.mxu0 0.0
    %4213 = vmatprep.subr.mxu0 0.0
    %4214 = vmatpush1.xpose.msra.mxu0 0.0
    %4215 = vmatprep.subr.mxu0 0.0
    %4216 = vmatpush1.xpose.msra.mxu0 0.0
    %4217 = vmatprep.subr.mxu0 0.0
    %4218 = vmatpush1.xpose.msra.mxu0 0.0
    %4219 = vmatprep.subr.mxu0 0.0
    %4220 = vmatpush1.xpose.msra.mxu0 0.0
    %4221 = vmatprep.subr.mxu0 0.0
    %4222 = vmatpush1.xpose.msra.mxu0 0.0
    %4223 = vmatprep.subr.mxu0 0.0
    %4224 = vmatpush1.xpose.msra.mxu0 0.0
    %4225 = vmatprep.subr.mxu0 0.0
    %4226 = vmatpush1.xpose.msra.mxu0 0.0
    %4227 = vmatprep.subr.mxu0 0.0
    %4228 = vmatpush1.xpose.msra.mxu0 0.0
    %4229 = vmatprep.subr.mxu0 0.0
    %4230 = vmatpush1.xpose.msra.mxu0 0.0
    %4231 = vmatprep.subr.mxu0 0.0
    %4232 = vmatpush1.xpose.msra.mxu0 0.0
    %4233 = vmatprep.subr.mxu0 0.0
    %4234 = vmatpush1.xpose.msra.mxu0 0.0
    %4235 = vmatprep.subr.mxu0 0.0
    %4236 = vmatpush1.xpose.msra.mxu0 0.0
    %4237 = vmatprep.subr.mxu0 0.0
    %4238 = vmatpush1.xpose.msra.mxu0 0.0
    %4239 = vmatprep.subr.mxu0 0.0
    %4240 = vmatpush1.xpose.msra.mxu0 0.0
    %4241 = vmatprep.subr.mxu0 0.0
    %4242 = vmatpush1.xpose.msra.mxu0 0.0
    %4243 = vmatprep.subr.mxu0 0.0
    %4244 = vmatpush1.xpose.msra.mxu0 0.0
    %4245 = vmatprep.subr.mxu0 0.0
    %4246 = vmatpush1.xpose.msra.mxu0 0.0
    %4247 = vmatprep.subr.mxu0 0.0
    %4248 = vmatpush1.xpose.msra.mxu0 0.0
    %4249 = vmatprep.subr.mxu0 0.0
    %4250 = vmatpush1.xpose.msra.mxu0 0.0
    %4251 = vmatprep.subr.mxu0 0.0
    %4252 = vmatpush1.xpose.msra.mxu0 0.0
    %4253 = vmatprep.subr.mxu0 0.0
    %4254 = vmatpush1.xpose.msra.mxu0 0.0
    %4255 = vmatprep.mubr.f32.mxu0 %v3201
    %4256 = vmatmul.mubr.f32.gmra.mrb[0].mxu0 %v3199
    %v4257 = vpop.f32.mrb[0].mxu0
    %v4258 = vadd.f32 0.0, %v4257
    %v4259 = vpop.f32.mrb[0].mxu0
    %4260 = vdwg.mxu0
    %4261 = vmatprep.subr.mxu0 %v3355
    %4262 = vmatpush1.xpose.msra.mxu0 %v3353
    %4263 = vmatprep.subr.mxu0 0.0
    %4264 = vmatpush1.xpose.msra.mxu0 0.0
    %4265 = vmatprep.subr.mxu0 0.0
    %4266 = vmatpush1.xpose.msra.mxu0 0.0
    %4267 = vmatprep.subr.mxu0 0.0
    %4268 = vmatpush1.xpose.msra.mxu0 0.0
    %4269 = vmatprep.subr.mxu0 0.0
    %4270 = vmatpush1.xpose.msra.mxu0 0.0
    %4271 = vmatprep.subr.mxu0 0.0
    %4272 = vmatpush1.xpose.msra.mxu0 0.0
    %4273 = vmatprep.subr.mxu0 0.0
    %4274 = vmatpush1.xpose.msra.mxu0 0.0
    %4275 = vmatprep.subr.mxu0 0.0
    %4276 = vmatpush1.xpose.msra.mxu0 0.0
    %4277 = vmatprep.subr.mxu0 0.0
    %4278 = vmatpush1.xpose.msra.mxu0 0.0
    %4279 = vmatprep.subr.mxu0 0.0
    %4280 = vmatpush1.xpose.msra.mxu0 0.0
    %4281 = vmatprep.subr.mxu0 0.0
    %4282 = vmatpush1.xpose.msra.mxu0 0.0
    %4283 = vmatprep.subr.mxu0 0.0
    %4284 = vmatpush1.xpose.msra.mxu0 0.0
    %4285 = vmatprep.subr.mxu0 0.0
    %4286 = vmatpush1.xpose.msra.mxu0 0.0
    %4287 = vmatprep.subr.mxu0 0.0
    %4288 = vmatpush1.xpose.msra.mxu0 0.0
    %4289 = vmatprep.subr.mxu0 0.0
    %4290 = vmatpush1.xpose.msra.mxu0 0.0
    %4291 = vmatprep.subr.mxu0 0.0
    %4292 = vmatpush1.xpose.msra.mxu0 0.0
    %4293 = vmatprep.subr.mxu0 0.0
    %4294 = vmatpush1.xpose.msra.mxu0 0.0
    %4295 = vmatprep.subr.mxu0 0.0
    %4296 = vmatpush1.xpose.msra.mxu0 0.0
    %4297 = vmatprep.subr.mxu0 0.0
    %4298 = vmatpush1.xpose.msra.mxu0 0.0
    %4299 = vmatprep.subr.mxu0 0.0
    %4300 = vmatpush1.xpose.msra.mxu0 0.0
    %4301 = vmatprep.subr.mxu0 0.0
    %4302 = vmatpush1.xpose.msra.mxu0 0.0
    %4303 = vmatprep.subr.mxu0 0.0
    %4304 = vmatpush1.xpose.msra.mxu0 0.0
    %4305 = vmatprep.subr.mxu0 0.0
    %4306 = vmatpush1.xpose.msra.mxu0 0.0
    %4307 = vmatprep.subr.mxu0 0.0
    %4308 = vmatpush1.xpose.msra.mxu0 0.0
    %4309 = vmatprep.subr.mxu0 0.0
    %4310 = vmatpush1.xpose.msra.mxu0 0.0
    %4311 = vmatprep.subr.mxu0 0.0
    %4312 = vmatpush1.xpose.msra.mxu0 0.0
    %4313 = vmatprep.subr.mxu0 0.0
    %4314 = vmatpush1.xpose.msra.mxu0 0.0
    %4315 = vmatprep.subr.mxu0 0.0
    %4316 = vmatpush1.xpose.msra.mxu0 0.0
    %4317 = vmatprep.subr.mxu0 0.0
    %4318 = vmatpush1.xpose.msra.mxu0 0.0
    %4319 = vmatprep.subr.mxu0 0.0
    %4320 = vmatpush1.xpose.msra.mxu0 0.0
    %4321 = vmatprep.subr.mxu0 0.0
    %4322 = vmatpush1.xpose.msra.mxu0 0.0
    %4323 = vmatprep.subr.mxu0 0.0
    %4324 = vmatpush1.xpose.msra.mxu0 0.0
    %4325 = vmatprep.mubr.f32.mxu0 %v3355
    %4326 = vmatmul.mubr.f32.gmra.mrb[0].mxu0 %v3353
    %v4327 = vpop.f32.mrb[0].mxu0
    %v4328 = vadd.f32 %v4258, %v4327
    %v4329 = vpop.f32.mrb[0].mxu0
    %4330 = vdwg.mxu0
    %4331 = vmatprep.subr.mxu0 %v3509
    %4332 = vmatpush1.xpose.msra.mxu0 %v3507
    %4333 = vmatprep.subr.mxu0 0.0
    %4334 = vmatpush1.xpose.msra.mxu0 0.0
    %4335 = vmatprep.subr.mxu0 0.0
    %4336 = vmatpush1.xpose.msra.mxu0 0.0
    %4337 = vmatprep.subr.mxu0 0.0
    %4338 = vmatpush1.xpose.msra.mxu0 0.0
    %4339 = vmatprep.subr.mxu0 0.0
    %4340 = vmatpush1.xpose.msra.mxu0 0.0
    %4341 = vmatprep.subr.mxu0 0.0
    %4342 = vmatpush1.xpose.msra.mxu0 0.0
    %4343 = vmatprep.subr.mxu0 0.0
    %4344 = vmatpush1.xpose.msra.mxu0 0.0
    %4345 = vmatprep.subr.mxu0 0.0
    %4346 = vmatpush1.xpose.msra.mxu0 0.0
    %4347 = vmatprep.subr.mxu0 0.0
    %4348 = vmatpush1.xpose.msra.mxu0 0.0
    %4349 = vmatprep.subr.mxu0 0.0
    %4350 = vmatpush1.xpose.msra.mxu0 0.0
    %4351 = vmatprep.subr.mxu0 0.0
    %4352 = vmatpush1.xpose.msra.mxu0 0.0
    %4353 = vmatprep.subr.mxu0 0.0
    %4354 = vmatpush1.xpose.msra.mxu0 0.0
    %4355 = vmatprep.subr.mxu0 0.0
    %4356 = vmatpush1.xpose.msra.mxu0 0.0
    %4357 = vmatprep.subr.mxu0 0.0
    %4358 = vmatpush1.xpose.msra.mxu0 0.0
    %4359 = vmatprep.subr.mxu0 0.0
    %4360 = vmatpush1.xpose.msra.mxu0 0.0
    %4361 = vmatprep.subr.mxu0 0.0
    %4362 = vmatpush1.xpose.msra.mxu0 0.0
    %4363 = vmatprep.subr.mxu0 0.0
    %4364 = vmatpush1.xpose.msra.mxu0 0.0
    %4365 = vmatprep.subr.mxu0 0.0
    %4366 = vmatpush1.xpose.msra.mxu0 0.0
    %4367 = vmatprep.subr.mxu0 0.0
    %4368 = vmatpush1.xpose.msra.mxu0 0.0
    %4369 = vmatprep.subr.mxu0 0.0
    %4370 = vmatpush1.xpose.msra.mxu0 0.0
    %4371 = vmatprep.subr.mxu0 0.0
    %4372 = vmatpush1.xpose.msra.mxu0 0.0
    %4373 = vmatprep.subr.mxu0 0.0
    %4374 = vmatpush1.xpose.msra.mxu0 0.0
    %4375 = vmatprep.subr.mxu0 0.0
    %4376 = vmatpush1.xpose.msra.mxu0 0.0
    %4377 = vmatprep.subr.mxu0 0.0
    %4378 = vmatpush1.xpose.msra.mxu0 0.0
    %4379 = vmatprep.subr.mxu0 0.0
    %4380 = vmatpush1.xpose.msra.mxu0 0.0
    %4381 = vmatprep.subr.mxu0 0.0
    %4382 = vmatpush1.xpose.msra.mxu0 0.0
    %4383 = vmatprep.subr.mxu0 0.0
    %4384 = vmatpush1.xpose.msra.mxu0 0.0
    %4385 = vmatprep.subr.mxu0 0.0
    %4386 = vmatpush1.xpose.msra.mxu0 0.0
    %4387 = vmatprep.subr.mxu0 0.0
    %4388 = vmatpush1.xpose.msra.mxu0 0.0
    %4389 = vmatprep.subr.mxu0 0.0
    %4390 = vmatpush1.xpose.msra.mxu0 0.0
    %4391 = vmatprep.subr.mxu0 0.0
    %4392 = vmatpush1.xpose.msra.mxu0 0.0
    %4393 = vmatprep.subr.mxu0 0.0
    %4394 = vmatpush1.xpose.msra.mxu0 0.0
    %4395 = vmatprep.mubr.f32.mxu0 %v3509
    %4396 = vmatmul.mubr.f32.gmra.mrb[0].mxu0 %v3507
    %v4397 = vpop.f32.mrb[0].mxu0
    %v4398 = vadd.f32 %v4328, %v4397
    %v4399 = vpop.f32.mrb[0].mxu0
    %4400 = vdwg.mxu0
    %4401 = vmatprep.subr.mxu0 %v3207
    %4402 = vmatpush1.xpose.msra.mxu0 %v3205
    %4403 = vmatprep.subr.mxu0 0.0
    %4404 = vmatpush1.xpose.msra.mxu0 0.0
    %4405 = vmatprep.subr.mxu0 0.0
    %4406 = vmatpush1.xpose.msra.mxu0 0.0
    %4407 = vmatprep.subr.mxu0 0.0
    %4408 = vmatpush1.xpose.msra.mxu0 0.0
    %4409 = vmatprep.subr.mxu0 0.0
    %4410 = vmatpush1.xpose.msra.mxu0 0.0
    %4411 = vmatprep.subr.mxu0 0.0
    %4412 = vmatpush1.xpose.msra.mxu0 0.0
    %4413 = vmatprep.subr.mxu0 0.0
    %4414 = vmatpush1.xpose.msra.mxu0 0.0
    %4415 = vmatprep.subr.mxu0 0.0
    %4416 = vmatpush1.xpose.msra.mxu0 0.0
    %4417 = vmatprep.subr.mxu0 0.0
    %4418 = vmatpush1.xpose.msra.mxu0 0.0
    %4419 = vmatprep.subr.mxu0 0.0
    %4420 = vmatpush1.xpose.msra.mxu0 0.0
    %4421 = vmatprep.subr.mxu0 0.0
    %4422 = vmatpush1.xpose.msra.mxu0 0.0
    %4423 = vmatprep.subr.mxu0 0.0
    %4424 = vmatpush1.xpose.msra.mxu0 0.0
    %4425 = vmatprep.subr.mxu0 0.0
    %4426 = vmatpush1.xpose.msra.mxu0 0.0
    %4427 = vmatprep.subr.mxu0 0.0
    %4428 = vmatpush1.xpose.msra.mxu0 0.0
    %4429 = vmatprep.subr.mxu0 0.0
    %4430 = vmatpush1.xpose.msra.mxu0 0.0
    %4431 = vmatprep.subr.mxu0 0.0
    %4432 = vmatpush1.xpose.msra.mxu0 0.0
    %4433 = vmatprep.subr.mxu0 0.0
    %4434 = vmatpush1.xpose.msra.mxu0 0.0
    %4435 = vmatprep.subr.mxu0 0.0
    %4436 = vmatpush1.xpose.msra.mxu0 0.0
    %4437 = vmatprep.subr.mxu0 0.0
    %4438 = vmatpush1.xpose.msra.mxu0 0.0
    %4439 = vmatprep.subr.mxu0 0.0
    %4440 = vmatpush1.xpose.msra.mxu0 0.0
    %4441 = vmatprep.subr.mxu0 0.0
    %4442 = vmatpush1.xpose.msra.mxu0 0.0
    %4443 = vmatprep.subr.mxu0 0.0
    %4444 = vmatpush1.xpose.msra.mxu0 0.0
    %4445 = vmatprep.subr.mxu0 0.0
    %4446 = vmatpush1.xpose.msra.mxu0 0.0
    %4447 = vmatprep.subr.mxu0 0.0
    %4448 = vmatpush1.xpose.msra.mxu0 0.0
    %4449 = vmatprep.subr.mxu0 0.0
    %4450 = vmatpush1.xpose.msra.mxu0 0.0
    %4451 = vmatprep.subr.mxu0 0.0
    %4452 = vmatpush1.xpose.msra.mxu0 0.0
    %4453 = vmatprep.subr.mxu0 0.0
    %4454 = vmatpush1.xpose.msra.mxu0 0.0
    %4455 = vmatprep.subr.mxu0 0.0
    %4456 = vmatpush1.xpose.msra.mxu0 0.0
    %4457 = vmatprep.subr.mxu0 0.0
    %4458 = vmatpush1.xpose.msra.mxu0 0.0
    %4459 = vmatprep.subr.mxu0 0.0
    %4460 = vmatpush1.xpose.msra.mxu0 0.0
    %4461 = vmatprep.subr.mxu0 0.0
    %4462 = vmatpush1.xpose.msra.mxu0 0.0
    %4463 = vmatprep.subr.mxu0 0.0
    %4464 = vmatpush1.xpose.msra.mxu0 0.0
    %4465 = vmatprep.mubr.f32.mxu0 %v3207
    %4466 = vmatmul.mubr.f32.gmra.mrb[0].mxu0 %v3205
    %v4467 = vpop.f32.mrb[0].mxu0
    %v4468 = vadd.f32 0.0, %v4467
    %v4469 = vpop.f32.mrb[0].mxu0
    %4470 = vdwg.mxu0
    %4471 = vmatprep.subr.mxu0 %v3361
    %4472 = vmatpush1.xpose.msra.mxu0 %v3359
    %4473 = vmatprep.subr.mxu0 0.0
    %4474 = vmatpush1.xpose.msra.mxu0 0.0
    %4475 = vmatprep.subr.mxu0 0.0
    %4476 = vmatpush1.xpose.msra.mxu0 0.0
    %4477 = vmatprep.subr.mxu0 0.0
    %4478 = vmatpush1.xpose.msra.mxu0 0.0
    %4479 = vmatprep.subr.mxu0 0.0
    %4480 = vmatpush1.xpose.msra.mxu0 0.0
    %4481 = vmatprep.subr.mxu0 0.0
    %4482 = vmatpush1.xpose.msra.mxu0 0.0
    %4483 = vmatprep.subr.mxu0 0.0
    %4484 = vmatpush1.xpose.msra.mxu0 0.0
    %4485 = vmatprep.subr.mxu0 0.0
    %4486 = vmatpush1.xpose.msra.mxu0 0.0
    %4487 = vmatprep.subr.mxu0 0.0
    %4488 = vmatpush1.xpose.msra.mxu0 0.0
    %4489 = vmatprep.subr.mxu0 0.0
    %4490 = vmatpush1.xpose.msra.mxu0 0.0
    %4491 = vmatprep.subr.mxu0 0.0
    %4492 = vmatpush1.xpose.msra.mxu0 0.0
    %4493 = vmatprep.subr.mxu0 0.0
    %4494 = vmatpush1.xpose.msra.mxu0 0.0
    %4495 = vmatprep.subr.mxu0 0.0
    %4496 = vmatpush1.xpose.msra.mxu0 0.0
    %4497 = vmatprep.subr.mxu0 0.0
    %4498 = vmatpush1.xpose.msra.mxu0 0.0
    %4499 = vmatprep.subr.mxu0 0.0
    %4500 = vmatpush1.xpose.msra.mxu0 0.0
    %4501 = vmatprep.subr.mxu0 0.0
    %4502 = vmatpush1.xpose.msra.mxu0 0.0
    %4503 = vmatprep.subr.mxu0 0.0
    %4504 = vmatpush1.xpose.msra.mxu0 0.0
    %4505 = vmatprep.subr.mxu0 0.0
    %4506 = vmatpush1.xpose.msra.mxu0 0.0
    %4507 = vmatprep.subr.mxu0 0.0
    %4508 = vmatpush1.xpose.msra.mxu0 0.0
    %4509 = vmatprep.subr.mxu0 0.0
    %4510 = vmatpush1.xpose.msra.mxu0 0.0
    %4511 = vmatprep.subr.mxu0 0.0
    %4512 = vmatpush1.xpose.msra.mxu0 0.0
    %4513 = vmatprep.subr.mxu0 0.0
    %4514 = vmatpush1.xpose.msra.mxu0 0.0
    %4515 = vmatprep.subr.mxu0 0.0
    %4516 = vmatpush1.xpose.msra.mxu0 0.0
    %4517 = vmatprep.subr.mxu0 0.0
    %4518 = vmatpush1.xpose.msra.mxu0 0.0
    %4519 = vmatprep.subr.mxu0 0.0
    %4520 = vmatpush1.xpose.msra.mxu0 0.0
    %4521 = vmatprep.subr.mxu0 0.0
    %4522 = vmatpush1.xpose.msra.mxu0 0.0
    %4523 = vmatprep.subr.mxu0 0.0
    %4524 = vmatpush1.xpose.msra.mxu0 0.0
    %4525 = vmatprep.subr.mxu0 0.0
    %4526 = vmatpush1.xpose.msra.mxu0 0.0
    %4527 = vmatprep.subr.mxu0 0.0
    %4528 = vmatpush1.xpose.msra.mxu0 0.0
    %4529 = vmatprep.subr.mxu0 0.0
    %4530 = vmatpush1.xpose.msra.mxu0 0.0
    %4531 = vmatprep.subr.mxu0 0.0
    %4532 = vmatpush1.xpose.msra.mxu0 0.0
    %4533 = vmatprep.subr.mxu0 0.0
    %4534 = vmatpush1.xpose.msra.mxu0 0.0
    %4535 = vmatprep.mubr.f32.mxu0 %v3361
    %4536 = vmatmul.mubr.f32.gmra.mrb[0].mxu0 %v3359
    %v4537 = vpop.f32.mrb[0].mxu0
    %v4538 = vadd.f32 %v4468, %v4537
    %v4539 = vpop.f32.mrb[0].mxu0
    %4540 = vdwg.mxu0
    %4541 = vmatprep.subr.mxu0 %v3515
    %4542 = vmatpush1.xpose.msra.mxu0 %v3513
    %4543 = vmatprep.subr.mxu0 0.0
    %4544 = vmatpush1.xpose.msra.mxu0 0.0
    %4545 = vmatprep.subr.mxu0 0.0
    %4546 = vmatpush1.xpose.msra.mxu0 0.0
    %4547 = vmatprep.subr.mxu0 0.0
    %4548 = vmatpush1.xpose.msra.mxu0 0.0
    %4549 = vmatprep.subr.mxu0 0.0
    %4550 = vmatpush1.xpose.msra.mxu0 0.0
    %4551 = vmatprep.subr.mxu0 0.0
    %4552 = vmatpush1.xpose.msra.mxu0 0.0
    %4553 = vmatprep.subr.mxu0 0.0
    %4554 = vmatpush1.xpose.msra.mxu0 0.0
    %4555 = vmatprep.subr.mxu0 0.0
    %4556 = vmatpush1.xpose.msra.mxu0 0.0
    %4557 = vmatprep.subr.mxu0 0.0
    %4558 = vmatpush1.xpose.msra.mxu0 0.0
    %4559 = vmatprep.subr.mxu0 0.0
    %4560 = vmatpush1.xpose.msra.mxu0 0.0
    %4561 = vmatprep.subr.mxu0 0.0
    %4562 = vmatpush1.xpose.msra.mxu0 0.0
    %4563 = vmatprep.subr.mxu0 0.0
    %4564 = vmatpush1.xpose.msra.mxu0 0.0
    %4565 = vmatprep.subr.mxu0 0.0
    %4566 = vmatpush1.xpose.msra.mxu0 0.0
    %4567 = vmatprep.subr.mxu0 0.0
    %4568 = vmatpush1.xpose.msra.mxu0 0.0
    %4569 = vmatprep.subr.mxu0 0.0
    %4570 = vmatpush1.xpose.msra.mxu0 0.0
    %4571 = vmatprep.subr.mxu0 0.0
    %4572 = vmatpush1.xpose.msra.mxu0 0.0
    %4573 = vmatprep.subr.mxu0 0.0
    %4574 = vmatpush1.xpose.msra.mxu0 0.0
    %4575 = vmatprep.subr.mxu0 0.0
    %4576 = vmatpush1.xpose.msra.mxu0 0.0
    %4577 = vmatprep.subr.mxu0 0.0
    %4578 = vmatpush1.xpose.msra.mxu0 0.0
    %4579 = vmatprep.subr.mxu0 0.0
    %4580 = vmatpush1.xpose.msra.mxu0 0.0
    %4581 = vmatprep.subr.mxu0 0.0
    %4582 = vmatpush1.xpose.msra.mxu0 0.0
    %4583 = vmatprep.subr.mxu0 0.0
    %4584 = vmatpush1.xpose.msra.mxu0 0.0
    %4585 = vmatprep.subr.mxu0 0.0
    %4586 = vmatpush1.xpose.msra.mxu0 0.0
    %4587 = vmatprep.subr.mxu0 0.0
    %4588 = vmatpush1.xpose.msra.mxu0 0.0
    %4589 = vmatprep.subr.mxu0 0.0
    %4590 = vmatpush1.xpose.msra.mxu0 0.0
    %4591 = vmatprep.subr.mxu0 0.0
    %4592 = vmatpush1.xpose.msra.mxu0 0.0
    %4593 = vmatprep.subr.mxu0 0.0
    %4594 = vmatpush1.xpose.msra.mxu0 0.0
    %4595 = vmatprep.subr.mxu0 0.0
    %4596 = vmatpush1.xpose.msra.mxu0 0.0
    %4597 = vmatprep.subr.mxu0 0.0
    %4598 = vmatpush1.xpose.msra.mxu0 0.0
    %4599 = vmatprep.subr.mxu0 0.0
    %4600 = vmatpush1.xpose.msra.mxu0 0.0
    %4601 = vmatprep.subr.mxu0 0.0
    %4602 = vmatpush1.xpose.msra.mxu0 0.0
    %4603 = vmatprep.subr.mxu0 0.0
    %4604 = vmatpush1.xpose.msra.mxu0 0.0
    %4605 = vmatprep.mubr.f32.mxu0 %v3515
    %4606 = vmatmul.mubr.f32.gmra.mrb[0].mxu0 %v3513
    %v4607 = vpop.f32.mrb[0].mxu0
    %v4608 = vadd.f32 %v4538, %v4607
    %v4609 = vpop.f32.mrb[0].mxu0
    %4610 = vdwg.mxu0
    %v4611 = vmul.f32 %v3199, %v3199
    %v4612 = vmul.f32 %v3201, %v3201
    %v4613 = vmul.f32 %v3353, %v3353
    %v4614 = vmul.f32 %v3355, %v3355
    %v4615 = vmul.f32 %v3507, %v3507
    %v4616 = vmul.f32 %v3509, %v3509
    %v4617 = vmul.f32 %v3205, %v3205
    %v4618 = vmul.f32 %v3207, %v3207
    %v4619 = vmul.f32 %v3359, %v3359
    %v4620 = vmul.f32 %v3361, %v3361
    %v4621 = vmul.f32 %v3513, %v3513
    %v4622 = vmul.f32 %v3515, %v3515
    %v4623 = vadd.f32 %v4611, %v4612
    %v4624 = vadd.f32 %v4623, %v4613
    %v4625 = vadd.f32 %v4624, %v4614
    %v4626 = vadd.f32 %v4625, %v4615
    %v4627 = vadd.f32 %v4626, %v4616
    %4628 = vadd.xlane.f32.xlu0 %v4627
    %v4629 = vpop.xlane.xlu0 %4628
    %v4630 = vadd.f32 %v4617, %v4618
    %v4631 = vadd.f32 %v4630, %v4619
    %v4632 = vadd.f32 %v4631, %v4620
    %v4633 = vadd.f32 %v4632, %v4621
    %v4634 = vadd.f32 %v4633, %v4622
    %4635 = vadd.xlane.f32.xlu0 %v4634
    %v4636 = vpop.xlane.xlu0 %4635
    %v4639 = vlaneseq
    %v4640 = vshrl.u32 %v4639, 7
    %v4641 = vsub.s32 %v659, %v4640
    %v4642 = vrot.slane %v4629, %v4641
    %v4643 = vlaneseq
    %v4644 = vshrl.u32 %v4643, 7
    %v4645 = vsub.s32 %v659, %v4644
    %v4646 = vrot.slane %v4636, %v4645
    %v4647 = vsel %vm668, %v4642, %v4642
    %v4648 = vsel %vm670, %v4642, %v4647
    %v4649 = vsel %vm672, %v4642, %v4648
    %v4650 = vsel %vm674, %v4642, %v4649
    %v4651 = vsel %vm676, %v4642, %v4650
    %v4652 = vsel %vm678, %v4642, %v4651
    %v4653 = vsel %vm668, %v4646, %v4646
    %v4654 = vsel %vm670, %v4646, %v4653
    %v4655 = vsel %vm672, %v4646, %v4654
    %v4656 = vsel %vm674, %v4646, %v4655
    %v4657 = vsel %vm676, %v4646, %v4656
    %v4658 = vsel %vm678, %v4646, %v4657
    %v4661 = vadd.f32 %v4629, %v4652
    %v4662 = vadd.f32 %v4636, %v4658
    %v4663 = vmul.f32 %v4398, 2.0
    %v4664 = vmul.f32 %v4608, 2.0
    %v4665 = vsub.f32 %v4661, %v4663
    %v4666 = vsub.f32 %v4662, %v4664
    %v4667 = vmax.f32 %v4665, 0.0
    %v4668 = vmax.f32 %v4666, 0.0
    %v4669 = vsub.f32 0.0, %v4667
    %v4670 = vsub.f32 0.0, %v4668
    %v4671 = vmul.f32 %v4669, 1.442695
    %v4672 = vpow.pop %v4671
    %v4673 = vmul.f32 %v4670, 1.442695
    %v4674 = vpow.pop %v4673
    %v4675 = vsel %vm702, %v4672, 0.0
    %4676 = vadd.xlane.f32.xlu0 %v4675
    %v4677 = vpop.xlane.xlu0 %4676
    %v4678 = vsel %vm702, %v4674, 0.0
    %4679 = vadd.xlane.f32.xlu0 %v4678
    %v4680 = vpop.xlane.xlu0 %4679
    %v4681 = vrcp.pop %v4677
    %v4682 = vrcp.pop %v4680
    %v4683 = vmul.f32 %v4672, %v4681
    %v4684 = vmul.f32 %v4674, %v4682
    %v4686 = vsel %vm702, %v4683, 0
    %4688 = vmatprep.subr.mxu0 %v3201
    %4689 = vmatpush1.msra.mxu0 %v3199
    %4690 = vmatprep.subr.mxu0 0.0
    %4691 = vmatpush1.msra.mxu0 0.0
    %4692 = vmatprep.subr.mxu0 0.0
    %4693 = vmatpush1.msra.mxu0 0.0
    %4694 = vmatprep.subr.mxu0 0.0
    %4695 = vmatpush1.msra.mxu0 0.0
    %4696 = vmatprep.subr.mxu0 0.0
    %4697 = vmatpush1.msra.mxu0 0.0
    %4698 = vmatprep.subr.mxu0 0.0
    %4699 = vmatpush1.msra.mxu0 0.0
    %4700 = vmatprep.subr.mxu0 0.0
    %4701 = vmatpush1.msra.mxu0 0.0
    %4702 = vmatprep.subr.mxu0 0.0
    %4703 = vmatpush1.msra.mxu0 0.0
    %4704 = vmatprep.subr.mxu0 0.0
    %4705 = vmatpush1.msra.mxu0 0.0
    %4706 = vmatprep.subr.mxu0 0.0
    %4707 = vmatpush1.msra.mxu0 0.0
    %4708 = vmatprep.subr.mxu0 0.0
    %4709 = vmatpush1.msra.mxu0 0.0
    %4710 = vmatprep.subr.mxu0 0.0
    %4711 = vmatpush1.msra.mxu0 0.0
    %4712 = vmatprep.subr.mxu0 0.0
    %4713 = vmatpush1.msra.mxu0 0.0
    %4714 = vmatprep.subr.mxu0 0.0
    %4715 = vmatpush1.msra.mxu0 0.0
    %4716 = vmatprep.subr.mxu0 0.0
    %4717 = vmatpush1.msra.mxu0 0.0
    %4718 = vmatprep.subr.mxu0 0.0
    %4719 = vmatpush1.msra.mxu0 0.0
    %4720 = vmatprep.subr.mxu0 0.0
    %4721 = vmatpush1.msra.mxu0 0.0
    %4722 = vmatprep.subr.mxu0 0.0
    %4723 = vmatpush1.msra.mxu0 0.0
    %4724 = vmatprep.subr.mxu0 0.0
    %4725 = vmatpush1.msra.mxu0 0.0
    %4726 = vmatprep.subr.mxu0 0.0
    %4727 = vmatpush1.msra.mxu0 0.0
    %4728 = vmatprep.subr.mxu0 0.0
    %4729 = vmatpush1.msra.mxu0 0.0
    %4730 = vmatprep.subr.mxu0 0.0
    %4731 = vmatpush1.msra.mxu0 0.0
    %4732 = vmatprep.subr.mxu0 0.0
    %4733 = vmatpush1.msra.mxu0 0.0
    %4734 = vmatprep.subr.mxu0 0.0
    %4735 = vmatpush1.msra.mxu0 0.0
    %4736 = vmatprep.subr.mxu0 0.0
    %4737 = vmatpush1.msra.mxu0 0.0
    %4738 = vmatprep.subr.mxu0 0.0
    %4739 = vmatpush1.msra.mxu0 0.0
    %4740 = vmatprep.subr.mxu0 0.0
    %4741 = vmatpush1.msra.mxu0 0.0
    %4742 = vmatprep.subr.mxu0 0.0
    %4743 = vmatpush1.msra.mxu0 0.0
    %4744 = vmatprep.subr.mxu0 0.0
    %4745 = vmatpush1.msra.mxu0 0.0
    %4746 = vmatprep.subr.mxu0 0.0
    %4747 = vmatpush1.msra.mxu0 0.0
    %4748 = vmatprep.subr.mxu0 0.0
    %4749 = vmatpush1.msra.mxu0 0.0
    %4750 = vmatprep.subr.mxu0 0.0
    %4751 = vmatpush1.msra.mxu0 0.0
    %4752 = vmatprep.mubr.f32.mxu0 0.0
    %4753 = vmatmul.mubr.f32.gmra.mrb[0].mxu0 %v4686
    %v4754 = vpop.f32.mrb[0].mxu0
    %v4755 = vadd.f32 %v3199, %v4754
    %v4756 = vpop.f32.mrb[0].mxu0
    %v4757 = vadd.f32 %v3201, %v4756
    %4758 = vdwg.mxu0
    %4759 = vmatprep.subr.mxu0 %v3355
    %4760 = vmatpush1.msra.mxu0 %v3353
    %4761 = vmatprep.subr.mxu0 0.0
    %4762 = vmatpush1.msra.mxu0 0.0
    %4763 = vmatprep.subr.mxu0 0.0
    %4764 = vmatpush1.msra.mxu0 0.0
    %4765 = vmatprep.subr.mxu0 0.0
    %4766 = vmatpush1.msra.mxu0 0.0
    %4767 = vmatprep.subr.mxu0 0.0
    %4768 = vmatpush1.msra.mxu0 0.0
    %4769 = vmatprep.subr.mxu0 0.0
    %4770 = vmatpush1.msra.mxu0 0.0
    %4771 = vmatprep.subr.mxu0 0.0
    %4772 = vmatpush1.msra.mxu0 0.0
    %4773 = vmatprep.subr.mxu0 0.0
    %4774 = vmatpush1.msra.mxu0 0.0
    %4775 = vmatprep.subr.mxu0 0.0
    %4776 = vmatpush1.msra.mxu0 0.0
    %4777 = vmatprep.subr.mxu0 0.0
    %4778 = vmatpush1.msra.mxu0 0.0
    %4779 = vmatprep.subr.mxu0 0.0
    %4780 = vmatpush1.msra.mxu0 0.0
    %4781 = vmatprep.subr.mxu0 0.0
    %4782 = vmatpush1.msra.mxu0 0.0
    %4783 = vmatprep.subr.mxu0 0.0
    %4784 = vmatpush1.msra.mxu0 0.0
    %4785 = vmatprep.subr.mxu0 0.0
    %4786 = vmatpush1.msra.mxu0 0.0
    %4787 = vmatprep.subr.mxu0 0.0
    %4788 = vmatpush1.msra.mxu0 0.0
    %4789 = vmatprep.subr.mxu0 0.0
    %4790 = vmatpush1.msra.mxu0 0.0
    %4791 = vmatprep.subr.mxu0 0.0
    %4792 = vmatpush1.msra.mxu0 0.0
    %4793 = vmatprep.subr.mxu0 0.0
    %4794 = vmatpush1.msra.mxu0 0.0
    %4795 = vmatprep.subr.mxu0 0.0
    %4796 = vmatpush1.msra.mxu0 0.0
    %4797 = vmatprep.subr.mxu0 0.0
    %4798 = vmatpush1.msra.mxu0 0.0
    %4799 = vmatprep.subr.mxu0 0.0
    %4800 = vmatpush1.msra.mxu0 0.0
    %4801 = vmatprep.subr.mxu0 0.0
    %4802 = vmatpush1.msra.mxu0 0.0
    %4803 = vmatprep.subr.mxu0 0.0
    %4804 = vmatpush1.msra.mxu0 0.0
    %4805 = vmatprep.subr.mxu0 0.0
    %4806 = vmatpush1.msra.mxu0 0.0
    %4807 = vmatprep.subr.mxu0 0.0
    %4808 = vmatpush1.msra.mxu0 0.0
    %4809 = vmatprep.subr.mxu0 0.0
    %4810 = vmatpush1.msra.mxu0 0.0
    %4811 = vmatprep.subr.mxu0 0.0
    %4812 = vmatpush1.msra.mxu0 0.0
    %4813 = vmatprep.subr.mxu0 0.0
    %4814 = vmatpush1.msra.mxu0 0.0
    %4815 = vmatprep.subr.mxu0 0.0
    %4816 = vmatpush1.msra.mxu0 0.0
    %4817 = vmatprep.subr.mxu0 0.0
    %4818 = vmatpush1.msra.mxu0 0.0
    %4819 = vmatprep.subr.mxu0 0.0
    %4820 = vmatpush1.msra.mxu0 0.0
    %4821 = vmatprep.subr.mxu0 0.0
    %4822 = vmatpush1.msra.mxu0 0.0
    %4823 = vmatprep.mubr.f32.mxu0 0.0
    %4824 = vmatmul.mubr.f32.gmra.mrb[0].mxu0 %v4686
    %v4825 = vpop.f32.mrb[0].mxu0
    %v4826 = vadd.f32 %v3353, %v4825
    %v4827 = vpop.f32.mrb[0].mxu0
    %v4828 = vadd.f32 %v3355, %v4827
    %4829 = vdwg.mxu0
    %4830 = vmatprep.subr.mxu0 %v3509
    %4831 = vmatpush1.msra.mxu0 %v3507
    %4832 = vmatprep.subr.mxu0 0.0
    %4833 = vmatpush1.msra.mxu0 0.0
    %4834 = vmatprep.subr.mxu0 0.0
    %4835 = vmatpush1.msra.mxu0 0.0
    %4836 = vmatprep.subr.mxu0 0.0
    %4837 = vmatpush1.msra.mxu0 0.0
    %4838 = vmatprep.subr.mxu0 0.0
    %4839 = vmatpush1.msra.mxu0 0.0
    %4840 = vmatprep.subr.mxu0 0.0
    %4841 = vmatpush1.msra.mxu0 0.0
    %4842 = vmatprep.subr.mxu0 0.0
    %4843 = vmatpush1.msra.mxu0 0.0
    %4844 = vmatprep.subr.mxu0 0.0
    %4845 = vmatpush1.msra.mxu0 0.0
    %4846 = vmatprep.subr.mxu0 0.0
    %4847 = vmatpush1.msra.mxu0 0.0
    %4848 = vmatprep.subr.mxu0 0.0
    %4849 = vmatpush1.msra.mxu0 0.0
    %4850 = vmatprep.subr.mxu0 0.0
    %4851 = vmatpush1.msra.mxu0 0.0
    %4852 = vmatprep.subr.mxu0 0.0
    %4853 = vmatpush1.msra.mxu0 0.0
    %4854 = vmatprep.subr.mxu0 0.0
    %4855 = vmatpush1.msra.mxu0 0.0
    %4856 = vmatprep.subr.mxu0 0.0
    %4857 = vmatpush1.msra.mxu0 0.0
    %4858 = vmatprep.subr.mxu0 0.0
    %4859 = vmatpush1.msra.mxu0 0.0
    %4860 = vmatprep.subr.mxu0 0.0
    %4861 = vmatpush1.msra.mxu0 0.0
    %4862 = vmatprep.subr.mxu0 0.0
    %4863 = vmatpush1.msra.mxu0 0.0
    %4864 = vmatprep.subr.mxu0 0.0
    %4865 = vmatpush1.msra.mxu0 0.0
    %4866 = vmatprep.subr.mxu0 0.0
    %4867 = vmatpush1.msra.mxu0 0.0
    %4868 = vmatprep.subr.mxu0 0.0
    %4869 = vmatpush1.msra.mxu0 0.0
    %4870 = vmatprep.subr.mxu0 0.0
    %4871 = vmatpush1.msra.mxu0 0.0
    %4872 = vmatprep.subr.mxu0 0.0
    %4873 = vmatpush1.msra.mxu0 0.0
    %4874 = vmatprep.subr.mxu0 0.0
    %4875 = vmatpush1.msra.mxu0 0.0
    %4876 = vmatprep.subr.mxu0 0.0
    %4877 = vmatpush1.msra.mxu0 0.0
    %4878 = vmatprep.subr.mxu0 0.0
    %4879 = vmatpush1.msra.mxu0 0.0
    %4880 = vmatprep.subr.mxu0 0.0
    %4881 = vmatpush1.msra.mxu0 0.0
    %4882 = vmatprep.subr.mxu0 0.0
    %4883 = vmatpush1.msra.mxu0 0.0
    %4884 = vmatprep.subr.mxu0 0.0
    %4885 = vmatpush1.msra.mxu0 0.0
    %4886 = vmatprep.subr.mxu0 0.0
    %4887 = vmatpush1.msra.mxu0 0.0
    %4888 = vmatprep.subr.mxu0 0.0
    %4889 = vmatpush1.msra.mxu0 0.0
    %4890 = vmatprep.subr.mxu0 0.0
    %4891 = vmatpush1.msra.mxu0 0.0
    %4892 = vmatprep.subr.mxu0 0.0
    %4893 = vmatpush1.msra.mxu0 0.0
    %4894 = vmatprep.mubr.f32.mxu0 0.0
    %4895 = vmatmul.mubr.f32.gmra.mrb[0].mxu0 %v4686
    %v4896 = vpop.f32.mrb[0].mxu0
    %v4897 = vadd.f32 %v3507, %v4896
    %v4898 = vpop.f32.mrb[0].mxu0
    %v4899 = vadd.f32 %v3509, %v4898
    %4900 = vdwg.mxu0
    %v4902 = vsel %vm702, %v4684, 0
    %4904 = vmatprep.subr.mxu0 %v3207
    %4905 = vmatpush1.msra.mxu0 %v3205
    %4906 = vmatprep.subr.mxu0 0.0
    %4907 = vmatpush1.msra.mxu0 0.0
    %4908 = vmatprep.subr.mxu0 0.0
    %4909 = vmatpush1.msra.mxu0 0.0
    %4910 = vmatprep.subr.mxu0 0.0
    %4911 = vmatpush1.msra.mxu0 0.0
    %4912 = vmatprep.subr.mxu0 0.0
    %4913 = vmatpush1.msra.mxu0 0.0
    %4914 = vmatprep.subr.mxu0 0.0
    %4915 = vmatpush1.msra.mxu0 0.0
    %4916 = vmatprep.subr.mxu0 0.0
    %4917 = vmatpush1.msra.mxu0 0.0
    %4918 = vmatprep.subr.mxu0 0.0
    %4919 = vmatpush1.msra.mxu0 0.0
    %4920 = vmatprep.subr.mxu0 0.0
    %4921 = vmatpush1.msra.mxu0 0.0
    %4922 = vmatprep.subr.mxu0 0.0
    %4923 = vmatpush1.msra.mxu0 0.0
    %4924 = vmatprep.subr.mxu0 0.0
    %4925 = vmatpush1.msra.mxu0 0.0
    %4926 = vmatprep.subr.mxu0 0.0
    %4927 = vmatpush1.msra.mxu0 0.0
    %4928 = vmatprep.subr.mxu0 0.0
    %4929 = vmatpush1.msra.mxu0 0.0
    %4930 = vmatprep.subr.mxu0 0.0
    %4931 = vmatpush1.msra.mxu0 0.0
    %4932 = vmatprep.subr.mxu0 0.0
    %4933 = vmatpush1.msra.mxu0 0.0
    %4934 = vmatprep.subr.mxu0 0.0
    %4935 = vmatpush1.msra.mxu0 0.0
    %4936 = vmatprep.subr.mxu0 0.0
    %4937 = vmatpush1.msra.mxu0 0.0
    %4938 = vmatprep.subr.mxu0 0.0
    %4939 = vmatpush1.msra.mxu0 0.0
    %4940 = vmatprep.subr.mxu0 0.0
    %4941 = vmatpush1.msra.mxu0 0.0
    %4942 = vmatprep.subr.mxu0 0.0
    %4943 = vmatpush1.msra.mxu0 0.0
    %4944 = vmatprep.subr.mxu0 0.0
    %4945 = vmatpush1.msra.mxu0 0.0
    %4946 = vmatprep.subr.mxu0 0.0
    %4947 = vmatpush1.msra.mxu0 0.0
    %4948 = vmatprep.subr.mxu0 0.0
    %4949 = vmatpush1.msra.mxu0 0.0
    %4950 = vmatprep.subr.mxu0 0.0
    %4951 = vmatpush1.msra.mxu0 0.0
    %4952 = vmatprep.subr.mxu0 0.0
    %4953 = vmatpush1.msra.mxu0 0.0
    %4954 = vmatprep.subr.mxu0 0.0
    %4955 = vmatpush1.msra.mxu0 0.0
    %4956 = vmatprep.subr.mxu0 0.0
    %4957 = vmatpush1.msra.mxu0 0.0
    %4958 = vmatprep.subr.mxu0 0.0
    %4959 = vmatpush1.msra.mxu0 0.0
    %4960 = vmatprep.subr.mxu0 0.0
    %4961 = vmatpush1.msra.mxu0 0.0
    %4962 = vmatprep.subr.mxu0 0.0
    %4963 = vmatpush1.msra.mxu0 0.0
    %4964 = vmatprep.subr.mxu0 0.0
    %4965 = vmatpush1.msra.mxu0 0.0
    %4966 = vmatprep.subr.mxu0 0.0
    %4967 = vmatpush1.msra.mxu0 0.0
    %4968 = vmatprep.mubr.f32.mxu0 0.0
    %4969 = vmatmul.mubr.f32.gmra.mrb[0].mxu0 %v4902
    %v4970 = vpop.f32.mrb[0].mxu0
    %v4971 = vadd.f32 %v3205, %v4970
    %v4972 = vpop.f32.mrb[0].mxu0
    %v4973 = vadd.f32 %v3207, %v4972
    %4974 = vdwg.mxu0
    %4975 = vmatprep.subr.mxu0 %v3361
    %4976 = vmatpush1.msra.mxu0 %v3359
    %4977 = vmatprep.subr.mxu0 0.0
    %4978 = vmatpush1.msra.mxu0 0.0
    %4979 = vmatprep.subr.mxu0 0.0
    %4980 = vmatpush1.msra.mxu0 0.0
    %4981 = vmatprep.subr.mxu0 0.0
    %4982 = vmatpush1.msra.mxu0 0.0
    %4983 = vmatprep.subr.mxu0 0.0
    %4984 = vmatpush1.msra.mxu0 0.0
    %4985 = vmatprep.subr.mxu0 0.0
    %4986 = vmatpush1.msra.mxu0 0.0
    %4987 = vmatprep.subr.mxu0 0.0
    %4988 = vmatpush1.msra.mxu0 0.0
    %4989 = vmatprep.subr.mxu0 0.0
    %4990 = vmatpush1.msra.mxu0 0.0
    %4991 = vmatprep.subr.mxu0 0.0
    %4992 = vmatpush1.msra.mxu0 0.0
    %4993 = vmatprep.subr.mxu0 0.0
    %4994 = vmatpush1.msra.mxu0 0.0
    %4995 = vmatprep.subr.mxu0 0.0
    %4996 = vmatpush1.msra.mxu0 0.0
    %4997 = vmatprep.subr.mxu0 0.0
    %4998 = vmatpush1.msra.mxu0 0.0
    %4999 = vmatprep.subr.mxu0 0.0
    %5000 = vmatpush1.msra.mxu0 0.0
    %5001 = vmatprep.subr.mxu0 0.0
    %5002 = vmatpush1.msra.mxu0 0.0
    %5003 = vmatprep.subr.mxu0 0.0
    %5004 = vmatpush1.msra.mxu0 0.0
    %5005 = vmatprep.subr.mxu0 0.0
    %5006 = vmatpush1.msra.mxu0 0.0
    %5007 = vmatprep.subr.mxu0 0.0
    %5008 = vmatpush1.msra.mxu0 0.0
    %5009 = vmatprep.subr.mxu0 0.0
    %5010 = vmatpush1.msra.mxu0 0.0
    %5011 = vmatprep.subr.mxu0 0.0
    %5012 = vmatpush1.msra.mxu0 0.0
    %5013 = vmatprep.subr.mxu0 0.0
    %5014 = vmatpush1.msra.mxu0 0.0
    %5015 = vmatprep.subr.mxu0 0.0
    %5016 = vmatpush1.msra.mxu0 0.0
    %5017 = vmatprep.subr.mxu0 0.0
    %5018 = vmatpush1.msra.mxu0 0.0
    %5019 = vmatprep.subr.mxu0 0.0
    %5020 = vmatpush1.msra.mxu0 0.0
    %5021 = vmatprep.subr.mxu0 0.0
    %5022 = vmatpush1.msra.mxu0 0.0
    %5023 = vmatprep.subr.mxu0 0.0
    %5024 = vmatpush1.msra.mxu0 0.0
    %5025 = vmatprep.subr.mxu0 0.0
    %5026 = vmatpush1.msra.mxu0 0.0
    %5027 = vmatprep.subr.mxu0 0.0
    %5028 = vmatpush1.msra.mxu0 0.0
    %5029 = vmatprep.subr.mxu0 0.0
    %5030 = vmatpush1.msra.mxu0 0.0
    %5031 = vmatprep.subr.mxu0 0.0
    %5032 = vmatpush1.msra.mxu0 0.0
    %5033 = vmatprep.subr.mxu0 0.0
    %5034 = vmatpush1.msra.mxu0 0.0
    %5035 = vmatprep.subr.mxu0 0.0
    %5036 = vmatpush1.msra.mxu0 0.0
    %5037 = vmatprep.subr.mxu0 0.0
    %5038 = vmatpush1.msra.mxu0 0.0
    %5039 = vmatprep.mubr.f32.mxu0 0.0
    %5040 = vmatmul.mubr.f32.gmra.mrb[0].mxu0 %v4902
    %v5041 = vpop.f32.mrb[0].mxu0
    %v5042 = vadd.f32 %v3359, %v5041
    %v5043 = vpop.f32.mrb[0].mxu0
    %v5044 = vadd.f32 %v3361, %v5043
    %5045 = vdwg.mxu0
    %5046 = vmatprep.subr.mxu0 %v3515
    %5047 = vmatpush1.msra.mxu0 %v3513
    %5048 = vmatprep.subr.mxu0 0.0
    %5049 = vmatpush1.msra.mxu0 0.0
    %5050 = vmatprep.subr.mxu0 0.0
    %5051 = vmatpush1.msra.mxu0 0.0
    %5052 = vmatprep.subr.mxu0 0.0
    %5053 = vmatpush1.msra.mxu0 0.0
    %5054 = vmatprep.subr.mxu0 0.0
    %5055 = vmatpush1.msra.mxu0 0.0
    %5056 = vmatprep.subr.mxu0 0.0
    %5057 = vmatpush1.msra.mxu0 0.0
    %5058 = vmatprep.subr.mxu0 0.0
    %5059 = vmatpush1.msra.mxu0 0.0
    %5060 = vmatprep.subr.mxu0 0.0
    %5061 = vmatpush1.msra.mxu0 0.0
    %5062 = vmatprep.subr.mxu0 0.0
    %5063 = vmatpush1.msra.mxu0 0.0
    %5064 = vmatprep.subr.mxu0 0.0
    %5065 = vmatpush1.msra.mxu0 0.0
    %5066 = vmatprep.subr.mxu0 0.0
    %5067 = vmatpush1.msra.mxu0 0.0
    %5068 = vmatprep.subr.mxu0 0.0
    %5069 = vmatpush1.msra.mxu0 0.0
    %5070 = vmatprep.subr.mxu0 0.0
    %5071 = vmatpush1.msra.mxu0 0.0
    %5072 = vmatprep.subr.mxu0 0.0
    %5073 = vmatpush1.msra.mxu0 0.0
    %5074 = vmatprep.subr.mxu0 0.0
    %5075 = vmatpush1.msra.mxu0 0.0
    %5076 = vmatprep.subr.mxu0 0.0
    %5077 = vmatpush1.msra.mxu0 0.0
    %5078 = vmatprep.subr.mxu0 0.0
    %5079 = vmatpush1.msra.mxu0 0.0
    %5080 = vmatprep.subr.mxu0 0.0
    %5081 = vmatpush1.msra.mxu0 0.0
    %5082 = vmatprep.subr.mxu0 0.0
    %5083 = vmatpush1.msra.mxu0 0.0
    %5084 = vmatprep.subr.mxu0 0.0
    %5085 = vmatpush1.msra.mxu0 0.0
    %5086 = vmatprep.subr.mxu0 0.0
    %5087 = vmatpush1.msra.mxu0 0.0
    %5088 = vmatprep.subr.mxu0 0.0
    %5089 = vmatpush1.msra.mxu0 0.0
    %5090 = vmatprep.subr.mxu0 0.0
    %5091 = vmatpush1.msra.mxu0 0.0
    %5092 = vmatprep.subr.mxu0 0.0
    %5093 = vmatpush1.msra.mxu0 0.0
    %5094 = vmatprep.subr.mxu0 0.0
    %5095 = vmatpush1.msra.mxu0 0.0
    %5096 = vmatprep.subr.mxu0 0.0
    %5097 = vmatpush1.msra.mxu0 0.0
    %5098 = vmatprep.subr.mxu0 0.0
    %5099 = vmatpush1.msra.mxu0 0.0
    %5100 = vmatprep.subr.mxu0 0.0
    %5101 = vmatpush1.msra.mxu0 0.0
    %5102 = vmatprep.subr.mxu0 0.0
    %5103 = vmatpush1.msra.mxu0 0.0
    %5104 = vmatprep.subr.mxu0 0.0
    %5105 = vmatpush1.msra.mxu0 0.0
    %5106 = vmatprep.subr.mxu0 0.0
    %5107 = vmatpush1.msra.mxu0 0.0
    %5108 = vmatprep.subr.mxu0 0.0
    %5109 = vmatpush1.msra.mxu0 0.0
    %5110 = vmatprep.mubr.f32.mxu0 0.0
    %5111 = vmatmul.mubr.f32.gmra.mrb[0].mxu0 %v4902
    %v5112 = vpop.f32.mrb[0].mxu0
    %v5113 = vadd.f32 %v3513, %v5112
    %v5114 = vpop.f32.mrb[0].mxu0
    %v5115 = vadd.f32 %v3515, %v5114
    %5116 = vdwg.mxu0
    %v5118 = vlaneseq
    %v5119 = vshrl.u32 %v5118, 7
    %v5120 = vsub.s32 0, %v5119
    %v5121 = vrot.slane %v4093, %v5120
    %v5122 = vlaneseq
    %v5123 = vshrl.u32 %v5122, 7
    %v5124 = vsub.s32 1, %v5123
    %v5125 = vrot.slane %v4093, %v5124
    %v5126 = vlaneseq
    %v5127 = vshrl.u32 %v5126, 7
    %v5128 = vsub.s32 2, %v5127
    %v5129 = vrot.slane %v4093, %v5128
    %v5130 = vlaneseq
    %v5131 = vshrl.u32 %v5130, 7
    %v5132 = vsub.s32 3, %v5131
    %v5133 = vrot.slane %v4093, %v5132
    %v5134 = vlaneseq
    %v5135 = vshrl.u32 %v5134, 7
    %v5136 = vsub.s32 4, %v5135
    %v5137 = vrot.slane %v4093, %v5136
    %v5138 = vlaneseq
    %v5139 = vshrl.u32 %v5138, 7
    %v5140 = vsub.s32 5, %v5139
    %v5141 = vrot.slane %v4093, %v5140
    %5148 = vmatprep.subr.mxu0 %v3518
    %5149 = vmatpush1.msra.mxu0 %v3517
    %5150 = vmatprep.subr.mxu0 %v3524
    %5151 = vmatpush1.msra.mxu0 %v3523
    %5152 = vmatprep.subr.mxu0 %v3530
    %5153 = vmatpush1.msra.mxu0 %v3529
    %5154 = vmatprep.subr.mxu0 %v3536
    %5155 = vmatpush1.msra.mxu0 %v3535
    %5156 = vmatprep.subr.mxu0 %v3542
    %5157 = vmatpush1.msra.mxu0 %v3541
    %5158 = vmatprep.subr.mxu0 %v3548
    %5159 = vmatpush1.msra.mxu0 %v3547
    %5160 = vmatprep.subr.mxu0 %v3554
    %5161 = vmatpush1.msra.mxu0 %v3553
    %5162 = vmatprep.subr.mxu0 %v3560
    %5163 = vmatpush1.msra.mxu0 %v3559
    %5164 = vmatprep.subr.mxu0 %v3566
    %5165 = vmatpush1.msra.mxu0 %v3565
    %5166 = vmatprep.subr.mxu0 %v3572
    %5167 = vmatpush1.msra.mxu0 %v3571
    %5168 = vmatprep.subr.mxu0 %v3578
    %5169 = vmatpush1.msra.mxu0 %v3577
    %5170 = vmatprep.subr.mxu0 %v3584
    %5171 = vmatpush1.msra.mxu0 %v3583
    %5172 = vmatprep.subr.mxu0 %v3590
    %5173 = vmatpush1.msra.mxu0 %v3589
    %5174 = vmatprep.subr.mxu0 %v3596
    %5175 = vmatpush1.msra.mxu0 %v3595
    %5176 = vmatprep.subr.mxu0 %v3602
    %5177 = vmatpush1.msra.mxu0 %v3601
    %5178 = vmatprep.subr.mxu0 %v3608
    %5179 = vmatpush1.msra.mxu0 %v3607
    %5180 = vmatprep.subr.mxu0 %v3614
    %5181 = vmatpush1.msra.mxu0 %v3613
    %5182 = vmatprep.subr.mxu0 %v3620
    %5183 = vmatpush1.msra.mxu0 %v3619
    %5184 = vmatprep.subr.mxu0 %v3626
    %5185 = vmatpush1.msra.mxu0 %v3625
    %5186 = vmatprep.subr.mxu0 %v3632
    %5187 = vmatpush1.msra.mxu0 %v3631
    %5188 = vmatprep.subr.mxu0 %v3638
    %5189 = vmatpush1.msra.mxu0 %v3637
    %5190 = vmatprep.subr.mxu0 %v3644
    %5191 = vmatpush1.msra.mxu0 %v3643
    %5192 = vmatprep.subr.mxu0 %v3650
    %5193 = vmatpush1.msra.mxu0 %v3649
    %5194 = vmatprep.subr.mxu0 %v3656
    %5195 = vmatpush1.msra.mxu0 %v3655
    %5196 = vmatprep.subr.mxu0 %v3662
    %5197 = vmatpush1.msra.mxu0 %v3661
    %5198 = vmatprep.subr.mxu0 %v3668
    %5199 = vmatpush1.msra.mxu0 %v3667
    %5200 = vmatprep.subr.mxu0 %v3674
    %5201 = vmatpush1.msra.mxu0 %v3673
    %5202 = vmatprep.subr.mxu0 %v3680
    %5203 = vmatpush1.msra.mxu0 %v3679
    %5204 = vmatprep.subr.mxu0 %v3686
    %5205 = vmatpush1.msra.mxu0 %v3685
    %5206 = vmatprep.subr.mxu0 %v3692
    %5207 = vmatpush1.msra.mxu0 %v3691
    %5208 = vmatprep.subr.mxu0 %v3698
    %5209 = vmatpush1.msra.mxu0 %v3697
    %5210 = vmatprep.subr.mxu0 %v3704
    %5211 = vmatpush1.msra.mxu0 %v3703
    %5212 = vmatprep.mubr.f32.mxu0 %v4757
    %5213 = vmatmul.mubr.f32.gmra.mrb[0].mxu0 %v4755
    %v5214 = vpop.f32.mrb[0].mxu0
    %v5215 = vadd.f32 %v5121, %v5214
    %v5216 = vpop.f32.mrb[0].mxu0
    %v5217 = vadd.f32 %v5125, %v5216
    %5218 = vmatprep.mubr.f32.mxu0 %v4973
    %5219 = vmatmul.mubr.f32.gmra.mrb[0].mxu0 %v4971
    %v5220 = vpop.f32.mrb[0].mxu0
    %v5221 = vadd.f32 %v5121, %v5220
    %v5222 = vpop.f32.mrb[0].mxu0
    %v5223 = vadd.f32 %v5125, %v5222
    %5224 = vdwg.mxu0
    %5225 = vmatprep.subr.mxu0 %v3710
    %5226 = vmatpush1.msra.mxu0 %v3709
    %5227 = vmatprep.subr.mxu0 %v3716
    %5228 = vmatpush1.msra.mxu0 %v3715
    %5229 = vmatprep.subr.mxu0 %v3722
    %5230 = vmatpush1.msra.mxu0 %v3721
    %5231 = vmatprep.subr.mxu0 %v3728
    %5232 = vmatpush1.msra.mxu0 %v3727
    %5233 = vmatprep.subr.mxu0 %v3734
    %5234 = vmatpush1.msra.mxu0 %v3733
    %5235 = vmatprep.subr.mxu0 %v3740
    %5236 = vmatpush1.msra.mxu0 %v3739
    %5237 = vmatprep.subr.mxu0 %v3746
    %5238 = vmatpush1.msra.mxu0 %v3745
    %5239 = vmatprep.subr.mxu0 %v3752
    %5240 = vmatpush1.msra.mxu0 %v3751
    %5241 = vmatprep.subr.mxu0 %v3758
    %5242 = vmatpush1.msra.mxu0 %v3757
    %5243 = vmatprep.subr.mxu0 %v3764
    %5244 = vmatpush1.msra.mxu0 %v3763
    %5245 = vmatprep.subr.mxu0 %v3770
    %5246 = vmatpush1.msra.mxu0 %v3769
    %5247 = vmatprep.subr.mxu0 %v3776
    %5248 = vmatpush1.msra.mxu0 %v3775
    %5249 = vmatprep.subr.mxu0 %v3782
    %5250 = vmatpush1.msra.mxu0 %v3781
    %5251 = vmatprep.subr.mxu0 %v3788
    %5252 = vmatpush1.msra.mxu0 %v3787
    %5253 = vmatprep.subr.mxu0 %v3794
    %5254 = vmatpush1.msra.mxu0 %v3793
    %5255 = vmatprep.subr.mxu0 %v3800
    %5256 = vmatpush1.msra.mxu0 %v3799
    %5257 = vmatprep.subr.mxu0 %v3806
    %5258 = vmatpush1.msra.mxu0 %v3805
    %5259 = vmatprep.subr.mxu0 %v3812
    %5260 = vmatpush1.msra.mxu0 %v3811
    %5261 = vmatprep.subr.mxu0 %v3818
    %5262 = vmatpush1.msra.mxu0 %v3817
    %5263 = vmatprep.subr.mxu0 %v3824
    %5264 = vmatpush1.msra.mxu0 %v3823
    %5265 = vmatprep.subr.mxu0 %v3830
    %5266 = vmatpush1.msra.mxu0 %v3829
    %5267 = vmatprep.subr.mxu0 %v3836
    %5268 = vmatpush1.msra.mxu0 %v3835
    %5269 = vmatprep.subr.mxu0 %v3842
    %5270 = vmatpush1.msra.mxu0 %v3841
    %5271 = vmatprep.subr.mxu0 %v3848
    %5272 = vmatpush1.msra.mxu0 %v3847
    %5273 = vmatprep.subr.mxu0 %v3854
    %5274 = vmatpush1.msra.mxu0 %v3853
    %5275 = vmatprep.subr.mxu0 %v3860
    %5276 = vmatpush1.msra.mxu0 %v3859
    %5277 = vmatprep.subr.mxu0 %v3866
    %5278 = vmatpush1.msra.mxu0 %v3865
    %5279 = vmatprep.subr.mxu0 %v3872
    %5280 = vmatpush1.msra.mxu0 %v3871
    %5281 = vmatprep.subr.mxu0 %v3878
    %5282 = vmatpush1.msra.mxu0 %v3877
    %5283 = vmatprep.subr.mxu0 %v3884
    %5284 = vmatpush1.msra.mxu0 %v3883
    %5285 = vmatprep.subr.mxu0 %v3890
    %5286 = vmatpush1.msra.mxu0 %v3889
    %5287 = vmatprep.subr.mxu0 %v3896
    %5288 = vmatpush1.msra.mxu0 %v3895
    %5289 = vmatprep.mubr.f32.mxu0 %v4828
    %5290 = vmatmul.mubr.f32.gmra.mrb[0].mxu0 %v4826
    %v5291 = vpop.f32.mrb[0].mxu0
    %v5292 = vadd.f32 %v5215, %v5291
    %v5293 = vpop.f32.mrb[0].mxu0
    %v5294 = vadd.f32 %v5217, %v5293
    %5295 = vmatprep.mubr.f32.mxu0 %v5044
    %5296 = vmatmul.mubr.f32.gmra.mrb[0].mxu0 %v5042
    %v5297 = vpop.f32.mrb[0].mxu0
    %v5298 = vadd.f32 %v5221, %v5297
    %v5299 = vpop.f32.mrb[0].mxu0
    %v5300 = vadd.f32 %v5223, %v5299
    %5301 = vdwg.mxu0
    %5302 = vmatprep.subr.mxu0 %v3902
    %5303 = vmatpush1.msra.mxu0 %v3901
    %5304 = vmatprep.subr.mxu0 %v3908
    %5305 = vmatpush1.msra.mxu0 %v3907
    %5306 = vmatprep.subr.mxu0 %v3914
    %5307 = vmatpush1.msra.mxu0 %v3913
    %5308 = vmatprep.subr.mxu0 %v3920
    %5309 = vmatpush1.msra.mxu0 %v3919
    %5310 = vmatprep.subr.mxu0 %v3926
    %5311 = vmatpush1.msra.mxu0 %v3925
    %5312 = vmatprep.subr.mxu0 %v3932
    %5313 = vmatpush1.msra.mxu0 %v3931
    %5314 = vmatprep.subr.mxu0 %v3938
    %5315 = vmatpush1.msra.mxu0 %v3937
    %5316 = vmatprep.subr.mxu0 %v3944
    %5317 = vmatpush1.msra.mxu0 %v3943
    %5318 = vmatprep.subr.mxu0 %v3950
    %5319 = vmatpush1.msra.mxu0 %v3949
    %5320 = vmatprep.subr.mxu0 %v3956
    %5321 = vmatpush1.msra.mxu0 %v3955
    %5322 = vmatprep.subr.mxu0 %v3962
    %5323 = vmatpush1.msra.mxu0 %v3961
    %5324 = vmatprep.subr.mxu0 %v3968
    %5325 = vmatpush1.msra.mxu0 %v3967
    %5326 = vmatprep.subr.mxu0 %v3974
    %5327 = vmatpush1.msra.mxu0 %v3973
    %5328 = vmatprep.subr.mxu0 %v3980
    %5329 = vmatpush1.msra.mxu0 %v3979
    %5330 = vmatprep.subr.mxu0 %v3986
    %5331 = vmatpush1.msra.mxu0 %v3985
    %5332 = vmatprep.subr.mxu0 %v3992
    %5333 = vmatpush1.msra.mxu0 %v3991
    %5334 = vmatprep.subr.mxu0 %v3998
    %5335 = vmatpush1.msra.mxu0 %v3997
    %5336 = vmatprep.subr.mxu0 %v4004
    %5337 = vmatpush1.msra.mxu0 %v4003
    %5338 = vmatprep.subr.mxu0 %v4010
    %5339 = vmatpush1.msra.mxu0 %v4009
    %5340 = vmatprep.subr.mxu0 %v4016
    %5341 = vmatpush1.msra.mxu0 %v4015
    %5342 = vmatprep.subr.mxu0 %v4022
    %5343 = vmatpush1.msra.mxu0 %v4021
    %5344 = vmatprep.subr.mxu0 %v4028
    %5345 = vmatpush1.msra.mxu0 %v4027
    %5346 = vmatprep.subr.mxu0 %v4034
    %5347 = vmatpush1.msra.mxu0 %v4033
    %5348 = vmatprep.subr.mxu0 %v4040
    %5349 = vmatpush1.msra.mxu0 %v4039
    %5350 = vmatprep.subr.mxu0 %v4046
    %5351 = vmatpush1.msra.mxu0 %v4045
    %5352 = vmatprep.subr.mxu0 %v4052
    %5353 = vmatpush1.msra.mxu0 %v4051
    %5354 = vmatprep.subr.mxu0 %v4058
    %5355 = vmatpush1.msra.mxu0 %v4057
    %5356 = vmatprep.subr.mxu0 %v4064
    %5357 = vmatpush1.msra.mxu0 %v4063
    %5358 = vmatprep.subr.mxu0 %v4070
    %5359 = vmatpush1.msra.mxu0 %v4069
    %5360 = vmatprep.subr.mxu0 %v4076
    %5361 = vmatpush1.msra.mxu0 %v4075
    %5362 = vmatprep.subr.mxu0 %v4082
    %5363 = vmatpush1.msra.mxu0 %v4081
    %5364 = vmatprep.subr.mxu0 %v4088
    %5365 = vmatpush1.msra.mxu0 %v4087
    %5366 = vmatprep.mubr.f32.mxu0 %v4899
    %5367 = vmatmul.mubr.f32.gmra.mrb[0].mxu0 %v4897
    %v5368 = vpop.f32.mrb[0].mxu0
    %v5369 = vadd.f32 %v5292, %v5368
    %v5370 = vpop.f32.mrb[0].mxu0
    %v5371 = vadd.f32 %v5294, %v5370
    %5372 = vmatprep.mubr.f32.mxu0 %v5115
    %5373 = vmatmul.mubr.f32.gmra.mrb[0].mxu0 %v5113
    %v5374 = vpop.f32.mrb[0].mxu0
    %v5375 = vadd.f32 %v5298, %v5374
    %v5376 = vpop.f32.mrb[0].mxu0
    %v5377 = vadd.f32 %v5300, %v5376
    %5378 = vdwg.mxu0
    %5379 = vmatprep.subr.mxu0 %v3520
    %5380 = vmatpush1.msra.mxu0 %v3519
    %5381 = vmatprep.subr.mxu0 %v3526
    %5382 = vmatpush1.msra.mxu0 %v3525
    %5383 = vmatprep.subr.mxu0 %v3532
    %5384 = vmatpush1.msra.mxu0 %v3531
    %5385 = vmatprep.subr.mxu0 %v3538
    %5386 = vmatpush1.msra.mxu0 %v3537
    %5387 = vmatprep.subr.mxu0 %v3544
    %5388 = vmatpush1.msra.mxu0 %v3543
    %5389 = vmatprep.subr.mxu0 %v3550
    %5390 = vmatpush1.msra.mxu0 %v3549
    %5391 = vmatprep.subr.mxu0 %v3556
    %5392 = vmatpush1.msra.mxu0 %v3555
    %5393 = vmatprep.subr.mxu0 %v3562
    %5394 = vmatpush1.msra.mxu0 %v3561
    %5395 = vmatprep.subr.mxu0 %v3568
    %5396 = vmatpush1.msra.mxu0 %v3567
    %5397 = vmatprep.subr.mxu0 %v3574
    %5398 = vmatpush1.msra.mxu0 %v3573
    %5399 = vmatprep.subr.mxu0 %v3580
    %5400 = vmatpush1.msra.mxu0 %v3579
    %5401 = vmatprep.subr.mxu0 %v3586
    %5402 = vmatpush1.msra.mxu0 %v3585
    %5403 = vmatprep.subr.mxu0 %v3592
    %5404 = vmatpush1.msra.mxu0 %v3591
    %5405 = vmatprep.subr.mxu0 %v3598
    %5406 = vmatpush1.msra.mxu0 %v3597
    %5407 = vmatprep.subr.mxu0 %v3604
    %5408 = vmatpush1.msra.mxu0 %v3603
    %5409 = vmatprep.subr.mxu0 %v3610
    %5410 = vmatpush1.msra.mxu0 %v3609
    %5411 = vmatprep.subr.mxu0 %v3616
    %5412 = vmatpush1.msra.mxu0 %v3615
    %5413 = vmatprep.subr.mxu0 %v3622
    %5414 = vmatpush1.msra.mxu0 %v3621
    %5415 = vmatprep.subr.mxu0 %v3628
    %5416 = vmatpush1.msra.mxu0 %v3627
    %5417 = vmatprep.subr.mxu0 %v3634
    %5418 = vmatpush1.msra.mxu0 %v3633
    %5419 = vmatprep.subr.mxu0 %v3640
    %5420 = vmatpush1.msra.mxu0 %v3639
    %5421 = vmatprep.subr.mxu0 %v3646
    %5422 = vmatpush1.msra.mxu0 %v3645
    %5423 = vmatprep.subr.mxu0 %v3652
    %5424 = vmatpush1.msra.mxu0 %v3651
    %5425 = vmatprep.subr.mxu0 %v3658
    %5426 = vmatpush1.msra.mxu0 %v3657
    %5427 = vmatprep.subr.mxu0 %v3664
    %5428 = vmatpush1.msra.mxu0 %v3663
    %5429 = vmatprep.subr.mxu0 %v3670
    %5430 = vmatpush1.msra.mxu0 %v3669
    %5431 = vmatprep.subr.mxu0 %v3676
    %5432 = vmatpush1.msra.mxu0 %v3675
    %5433 = vmatprep.subr.mxu0 %v3682
    %5434 = vmatpush1.msra.mxu0 %v3681
    %5435 = vmatprep.subr.mxu0 %v3688
    %5436 = vmatpush1.msra.mxu0 %v3687
    %5437 = vmatprep.subr.mxu0 %v3694
    %5438 = vmatpush1.msra.mxu0 %v3693
    %5439 = vmatprep.subr.mxu0 %v3700
    %5440 = vmatpush1.msra.mxu0 %v3699
    %5441 = vmatprep.subr.mxu0 %v3706
    %5442 = vmatpush1.msra.mxu0 %v3705
    %5443 = vmatprep.mubr.f32.mxu0 %v4757
    %5444 = vmatmul.mubr.f32.gmra.mrb[0].mxu0 %v4755
    %v5445 = vpop.f32.mrb[0].mxu0
    %v5446 = vadd.f32 %v5129, %v5445
    %v5447 = vpop.f32.mrb[0].mxu0
    %v5448 = vadd.f32 %v5133, %v5447
    %5449 = vmatprep.mubr.f32.mxu0 %v4973
    %5450 = vmatmul.mubr.f32.gmra.mrb[0].mxu0 %v4971
    %v5451 = vpop.f32.mrb[0].mxu0
    %v5452 = vadd.f32 %v5129, %v5451
    %v5453 = vpop.f32.mrb[0].mxu0
    %v5454 = vadd.f32 %v5133, %v5453
    %5455 = vdwg.mxu0
    %5456 = vmatprep.subr.mxu0 %v3712
    %5457 = vmatpush1.msra.mxu0 %v3711
    %5458 = vmatprep.subr.mxu0 %v3718
    %5459 = vmatpush1.msra.mxu0 %v3717
    %5460 = vmatprep.subr.mxu0 %v3724
    %5461 = vmatpush1.msra.mxu0 %v3723
    %5462 = vmatprep.subr.mxu0 %v3730
    %5463 = vmatpush1.msra.mxu0 %v3729
    %5464 = vmatprep.subr.mxu0 %v3736
    %5465 = vmatpush1.msra.mxu0 %v3735
    %5466 = vmatprep.subr.mxu0 %v3742
    %5467 = vmatpush1.msra.mxu0 %v3741
    %5468 = vmatprep.subr.mxu0 %v3748
    %5469 = vmatpush1.msra.mxu0 %v3747
    %5470 = vmatprep.subr.mxu0 %v3754
    %5471 = vmatpush1.msra.mxu0 %v3753
    %5472 = vmatprep.subr.mxu0 %v3760
    %5473 = vmatpush1.msra.mxu0 %v3759
    %5474 = vmatprep.subr.mxu0 %v3766
    %5475 = vmatpush1.msra.mxu0 %v3765
    %5476 = vmatprep.subr.mxu0 %v3772
    %5477 = vmatpush1.msra.mxu0 %v3771
    %5478 = vmatprep.subr.mxu0 %v3778
    %5479 = vmatpush1.msra.mxu0 %v3777
    %5480 = vmatprep.subr.mxu0 %v3784
    %5481 = vmatpush1.msra.mxu0 %v3783
    %5482 = vmatprep.subr.mxu0 %v3790
    %5483 = vmatpush1.msra.mxu0 %v3789
    %5484 = vmatprep.subr.mxu0 %v3796
    %5485 = vmatpush1.msra.mxu0 %v3795
    %5486 = vmatprep.subr.mxu0 %v3802
    %5487 = vmatpush1.msra.mxu0 %v3801
    %5488 = vmatprep.subr.mxu0 %v3808
    %5489 = vmatpush1.msra.mxu0 %v3807
    %5490 = vmatprep.subr.mxu0 %v3814
    %5491 = vmatpush1.msra.mxu0 %v3813
    %5492 = vmatprep.subr.mxu0 %v3820
    %5493 = vmatpush1.msra.mxu0 %v3819
    %5494 = vmatprep.subr.mxu0 %v3826
    %5495 = vmatpush1.msra.mxu0 %v3825
    %5496 = vmatprep.subr.mxu0 %v3832
    %5497 = vmatpush1.msra.mxu0 %v3831
    %5498 = vmatprep.subr.mxu0 %v3838
    %5499 = vmatpush1.msra.mxu0 %v3837
    %5500 = vmatprep.subr.mxu0 %v3844
    %5501 = vmatpush1.msra.mxu0 %v3843
    %5502 = vmatprep.subr.mxu0 %v3850
    %5503 = vmatpush1.msra.mxu0 %v3849
    %5504 = vmatprep.subr.mxu0 %v3856
    %5505 = vmatpush1.msra.mxu0 %v3855
    %5506 = vmatprep.subr.mxu0 %v3862
    %5507 = vmatpush1.msra.mxu0 %v3861
    %5508 = vmatprep.subr.mxu0 %v3868
    %5509 = vmatpush1.msra.mxu0 %v3867
    %5510 = vmatprep.subr.mxu0 %v3874
    %5511 = vmatpush1.msra.mxu0 %v3873
    %5512 = vmatprep.subr.mxu0 %v3880
    %5513 = vmatpush1.msra.mxu0 %v3879
    %5514 = vmatprep.subr.mxu0 %v3886
    %5515 = vmatpush1.msra.mxu0 %v3885
    %5516 = vmatprep.subr.mxu0 %v3892
    %5517 = vmatpush1.msra.mxu0 %v3891
    %5518 = vmatprep.subr.mxu0 %v3898
    %5519 = vmatpush1.msra.mxu0 %v3897
    %5520 = vmatprep.mubr.f32.mxu0 %v4828
    %5521 = vmatmul.mubr.f32.gmra.mrb[0].mxu0 %v4826
    %v5522 = vpop.f32.mrb[0].mxu0
    %v5523 = vadd.f32 %v5446, %v5522
    %v5524 = vpop.f32.mrb[0].mxu0
    %v5525 = vadd.f32 %v5448, %v5524
    %5526 = vmatprep.mubr.f32.mxu0 %v5044
    %5527 = vmatmul.mubr.f32.gmra.mrb[0].mxu0 %v5042
    %v5528 = vpop.f32.mrb[0].mxu0
    %v5529 = vadd.f32 %v5452, %v5528
    %v5530 = vpop.f32.mrb[0].mxu0
    %v5531 = vadd.f32 %v5454, %v5530
    %5532 = vdwg.mxu0
    %5533 = vmatprep.subr.mxu0 %v3904
    %5534 = vmatpush1.msra.mxu0 %v3903
    %5535 = vmatprep.subr.mxu0 %v3910
    %5536 = vmatpush1.msra.mxu0 %v3909
    %5537 = vmatprep.subr.mxu0 %v3916
    %5538 = vmatpush1.msra.mxu0 %v3915
    %5539 = vmatprep.subr.mxu0 %v3922
    %5540 = vmatpush1.msra.mxu0 %v3921
    %5541 = vmatprep.subr.mxu0 %v3928
    %5542 = vmatpush1.msra.mxu0 %v3927
    %5543 = vmatprep.subr.mxu0 %v3934
    %5544 = vmatpush1.msra.mxu0 %v3933
    %5545 = vmatprep.subr.mxu0 %v3940
    %5546 = vmatpush1.msra.mxu0 %v3939
    %5547 = vmatprep.subr.mxu0 %v3946
    %5548 = vmatpush1.msra.mxu0 %v3945
    %5549 = vmatprep.subr.mxu0 %v3952
    %5550 = vmatpush1.msra.mxu0 %v3951
    %5551 = vmatprep.subr.mxu0 %v3958
    %5552 = vmatpush1.msra.mxu0 %v3957
    %5553 = vmatprep.subr.mxu0 %v3964
    %5554 = vmatpush1.msra.mxu0 %v3963
    %5555 = vmatprep.subr.mxu0 %v3970
    %5556 = vmatpush1.msra.mxu0 %v3969
    %5557 = vmatprep.subr.mxu0 %v3976
    %5558 = vmatpush1.msra.mxu0 %v3975
    %5559 = vmatprep.subr.mxu0 %v3982
    %5560 = vmatpush1.msra.mxu0 %v3981
    %5561 = vmatprep.subr.mxu0 %v3988
    %5562 = vmatpush1.msra.mxu0 %v3987
    %5563 = vmatprep.subr.mxu0 %v3994
    %5564 = vmatpush1.msra.mxu0 %v3993
    %5565 = vmatprep.subr.mxu0 %v4000
    %5566 = vmatpush1.msra.mxu0 %v3999
    %5567 = vmatprep.subr.mxu0 %v4006
    %5568 = vmatpush1.msra.mxu0 %v4005
    %5569 = vmatprep.subr.mxu0 %v4012
    %5570 = vmatpush1.msra.mxu0 %v4011
    %5571 = vmatprep.subr.mxu0 %v4018
    %5572 = vmatpush1.msra.mxu0 %v4017
    %5573 = vmatprep.subr.mxu0 %v4024
    %5574 = vmatpush1.msra.mxu0 %v4023
    %5575 = vmatprep.subr.mxu0 %v4030
    %5576 = vmatpush1.msra.mxu0 %v4029
    %5577 = vmatprep.subr.mxu0 %v4036
    %5578 = vmatpush1.msra.mxu0 %v4035
    %5579 = vmatprep.subr.mxu0 %v4042
    %5580 = vmatpush1.msra.mxu0 %v4041
    %5581 = vmatprep.subr.mxu0 %v4048
    %5582 = vmatpush1.msra.mxu0 %v4047
    %5583 = vmatprep.subr.mxu0 %v4054
    %5584 = vmatpush1.msra.mxu0 %v4053
    %5585 = vmatprep.subr.mxu0 %v4060
    %5586 = vmatpush1.msra.mxu0 %v4059
    %5587 = vmatprep.subr.mxu0 %v4066
    %5588 = vmatpush1.msra.mxu0 %v4065
    %5589 = vmatprep.subr.mxu0 %v4072
    %5590 = vmatpush1.msra.mxu0 %v4071
    %5591 = vmatprep.subr.mxu0 %v4078
    %5592 = vmatpush1.msra.mxu0 %v4077
    %5593 = vmatprep.subr.mxu0 %v4084
    %5594 = vmatpush1.msra.mxu0 %v4083
    %5595 = vmatprep.subr.mxu0 %v4090
    %5596 = vmatpush1.msra.mxu0 %v4089
    %5597 = vmatprep.mubr.f32.mxu0 %v4899
    %5598 = vmatmul.mubr.f32.gmra.mrb[0].mxu0 %v4897
    %v5599 = vpop.f32.mrb[0].mxu0
    %v5600 = vadd.f32 %v5523, %v5599
    %v5601 = vpop.f32.mrb[0].mxu0
    %v5602 = vadd.f32 %v5525, %v5601
    %5603 = vmatprep.mubr.f32.mxu0 %v5115
    %5604 = vmatmul.mubr.f32.gmra.mrb[0].mxu0 %v5113
    %v5605 = vpop.f32.mrb[0].mxu0
    %v5606 = vadd.f32 %v5529, %v5605
    %v5607 = vpop.f32.mrb[0].mxu0
    %v5608 = vadd.f32 %v5531, %v5607
    %5609 = vdwg.mxu0
    %5610 = vmatprep.subr.mxu0 %v3522
    %5611 = vmatpush1.msra.mxu0 %v3521
    %5612 = vmatprep.subr.mxu0 %v3528
    %5613 = vmatpush1.msra.mxu0 %v3527
    %5614 = vmatprep.subr.mxu0 %v3534
    %5615 = vmatpush1.msra.mxu0 %v3533
    %5616 = vmatprep.subr.mxu0 %v3540
    %5617 = vmatpush1.msra.mxu0 %v3539
    %5618 = vmatprep.subr.mxu0 %v3546
    %5619 = vmatpush1.msra.mxu0 %v3545
    %5620 = vmatprep.subr.mxu0 %v3552
    %5621 = vmatpush1.msra.mxu0 %v3551
    %5622 = vmatprep.subr.mxu0 %v3558
    %5623 = vmatpush1.msra.mxu0 %v3557
    %5624 = vmatprep.subr.mxu0 %v3564
    %5625 = vmatpush1.msra.mxu0 %v3563
    %5626 = vmatprep.subr.mxu0 %v3570
    %5627 = vmatpush1.msra.mxu0 %v3569
    %5628 = vmatprep.subr.mxu0 %v3576
    %5629 = vmatpush1.msra.mxu0 %v3575
    %5630 = vmatprep.subr.mxu0 %v3582
    %5631 = vmatpush1.msra.mxu0 %v3581
    %5632 = vmatprep.subr.mxu0 %v3588
    %5633 = vmatpush1.msra.mxu0 %v3587
    %5634 = vmatprep.subr.mxu0 %v3594
    %5635 = vmatpush1.msra.mxu0 %v3593
    %5636 = vmatprep.subr.mxu0 %v3600
    %5637 = vmatpush1.msra.mxu0 %v3599
    %5638 = vmatprep.subr.mxu0 %v3606
    %5639 = vmatpush1.msra.mxu0 %v3605
    %5640 = vmatprep.subr.mxu0 %v3612
    %5641 = vmatpush1.msra.mxu0 %v3611
    %5642 = vmatprep.subr.mxu0 %v3618
    %5643 = vmatpush1.msra.mxu0 %v3617
    %5644 = vmatprep.subr.mxu0 %v3624
    %5645 = vmatpush1.msra.mxu0 %v3623
    %5646 = vmatprep.subr.mxu0 %v3630
    %5647 = vmatpush1.msra.mxu0 %v3629
    %5648 = vmatprep.subr.mxu0 %v3636
    %5649 = vmatpush1.msra.mxu0 %v3635
    %5650 = vmatprep.subr.mxu0 %v3642
    %5651 = vmatpush1.msra.mxu0 %v3641
    %5652 = vmatprep.subr.mxu0 %v3648
    %5653 = vmatpush1.msra.mxu0 %v3647
    %5654 = vmatprep.subr.mxu0 %v3654
    %5655 = vmatpush1.msra.mxu0 %v3653
    %5656 = vmatprep.subr.mxu0 %v3660
    %5657 = vmatpush1.msra.mxu0 %v3659
    %5658 = vmatprep.subr.mxu0 %v3666
    %5659 = vmatpush1.msra.mxu0 %v3665
    %5660 = vmatprep.subr.mxu0 %v3672
    %5661 = vmatpush1.msra.mxu0 %v3671
    %5662 = vmatprep.subr.mxu0 %v3678
    %5663 = vmatpush1.msra.mxu0 %v3677
    %5664 = vmatprep.subr.mxu0 %v3684
    %5665 = vmatpush1.msra.mxu0 %v3683
    %5666 = vmatprep.subr.mxu0 %v3690
    %5667 = vmatpush1.msra.mxu0 %v3689
    %5668 = vmatprep.subr.mxu0 %v3696
    %5669 = vmatpush1.msra.mxu0 %v3695
    %5670 = vmatprep.subr.mxu0 %v3702
    %5671 = vmatpush1.msra.mxu0 %v3701
    %5672 = vmatprep.subr.mxu0 %v3708
    %5673 = vmatpush1.msra.mxu0 %v3707
    %5674 = vmatprep.mubr.f32.mxu0 %v4757
    %5675 = vmatmul.mubr.f32.gmra.mrb[0].mxu0 %v4755
    %v5676 = vpop.f32.mrb[0].mxu0
    %v5677 = vadd.f32 %v5137, %v5676
    %v5678 = vpop.f32.mrb[0].mxu0
    %v5679 = vadd.f32 %v5141, %v5678
    %5680 = vmatprep.mubr.f32.mxu0 %v4973
    %5681 = vmatmul.mubr.f32.gmra.mrb[0].mxu0 %v4971
    %v5682 = vpop.f32.mrb[0].mxu0
    %v5683 = vadd.f32 %v5137, %v5682
    %v5684 = vpop.f32.mrb[0].mxu0
    %v5685 = vadd.f32 %v5141, %v5684
    %5686 = vdwg.mxu0
    %5687 = vmatprep.subr.mxu0 %v3714
    %5688 = vmatpush1.msra.mxu0 %v3713
    %5689 = vmatprep.subr.mxu0 %v3720
    %5690 = vmatpush1.msra.mxu0 %v3719
    %5691 = vmatprep.subr.mxu0 %v3726
    %5692 = vmatpush1.msra.mxu0 %v3725
    %5693 = vmatprep.subr.mxu0 %v3732
    %5694 = vmatpush1.msra.mxu0 %v3731
    %5695 = vmatprep.subr.mxu0 %v3738
    %5696 = vmatpush1.msra.mxu0 %v3737
    %5697 = vmatprep.subr.mxu0 %v3744
    %5698 = vmatpush1.msra.mxu0 %v3743
    %5699 = vmatprep.subr.mxu0 %v3750
    %5700 = vmatpush1.msra.mxu0 %v3749
    %5701 = vmatprep.subr.mxu0 %v3756
    %5702 = vmatpush1.msra.mxu0 %v3755
    %5703 = vmatprep.subr.mxu0 %v3762
    %5704 = vmatpush1.msra.mxu0 %v3761
    %5705 = vmatprep.subr.mxu0 %v3768
    %5706 = vmatpush1.msra.mxu0 %v3767
    %5707 = vmatprep.subr.mxu0 %v3774
    %5708 = vmatpush1.msra.mxu0 %v3773
    %5709 = vmatprep.subr.mxu0 %v3780
    %5710 = vmatpush1.msra.mxu0 %v3779
    %5711 = vmatprep.subr.mxu0 %v3786
    %5712 = vmatpush1.msra.mxu0 %v3785
    %5713 = vmatprep.subr.mxu0 %v3792
    %5714 = vmatpush1.msra.mxu0 %v3791
    %5715 = vmatprep.subr.mxu0 %v3798
    %5716 = vmatpush1.msra.mxu0 %v3797
    %5717 = vmatprep.subr.mxu0 %v3804
    %5718 = vmatpush1.msra.mxu0 %v3803
    %5719 = vmatprep.subr.mxu0 %v3810
    %5720 = vmatpush1.msra.mxu0 %v3809
    %5721 = vmatprep.subr.mxu0 %v3816
    %5722 = vmatpush1.msra.mxu0 %v3815
    %5723 = vmatprep.subr.mxu0 %v3822
    %5724 = vmatpush1.msra.mxu0 %v3821
    %5725 = vmatprep.subr.mxu0 %v3828
    %5726 = vmatpush1.msra.mxu0 %v3827
    %5727 = vmatprep.subr.mxu0 %v3834
    %5728 = vmatpush1.msra.mxu0 %v3833
    %5729 = vmatprep.subr.mxu0 %v3840
    %5730 = vmatpush1.msra.mxu0 %v3839
    %5731 = vmatprep.subr.mxu0 %v3846
    %5732 = vmatpush1.msra.mxu0 %v3845
    %5733 = vmatprep.subr.mxu0 %v3852
    %5734 = vmatpush1.msra.mxu0 %v3851
    %5735 = vmatprep.subr.mxu0 %v3858
    %5736 = vmatpush1.msra.mxu0 %v3857
    %5737 = vmatprep.subr.mxu0 %v3864
    %5738 = vmatpush1.msra.mxu0 %v3863
    %5739 = vmatprep.subr.mxu0 %v3870
    %5740 = vmatpush1.msra.mxu0 %v3869
    %5741 = vmatprep.subr.mxu0 %v3876
    %5742 = vmatpush1.msra.mxu0 %v3875
    %5743 = vmatprep.subr.mxu0 %v3882
    %5744 = vmatpush1.msra.mxu0 %v3881
    %5745 = vmatprep.subr.mxu0 %v3888
    %5746 = vmatpush1.msra.mxu0 %v3887
    %5747 = vmatprep.subr.mxu0 %v3894
    %5748 = vmatpush1.msra.mxu0 %v3893
    %5749 = vmatprep.subr.mxu0 %v3900
    %5750 = vmatpush1.msra.mxu0 %v3899
    %5751 = vmatprep.mubr.f32.mxu0 %v4828
    %5752 = vmatmul.mubr.f32.gmra.mrb[0].mxu0 %v4826
    %v5753 = vpop.f32.mrb[0].mxu0
    %v5754 = vadd.f32 %v5677, %v5753
    %v5755 = vpop.f32.mrb[0].mxu0
    %v5756 = vadd.f32 %v5679, %v5755
    %5757 = vmatprep.mubr.f32.mxu0 %v5044
    %5758 = vmatmul.mubr.f32.gmra.mrb[0].mxu0 %v5042
    %v5759 = vpop.f32.mrb[0].mxu0
    %v5760 = vadd.f32 %v5683, %v5759
    %v5761 = vpop.f32.mrb[0].mxu0
    %v5762 = vadd.f32 %v5685, %v5761
    %5763 = vdwg.mxu0
    %5764 = vmatprep.subr.mxu0 %v3906
    %5765 = vmatpush1.msra.mxu0 %v3905
    %5766 = vmatprep.subr.mxu0 %v3912
    %5767 = vmatpush1.msra.mxu0 %v3911
    %5768 = vmatprep.subr.mxu0 %v3918
    %5769 = vmatpush1.msra.mxu0 %v3917
    %5770 = vmatprep.subr.mxu0 %v3924
    %5771 = vmatpush1.msra.mxu0 %v3923
    %5772 = vmatprep.subr.mxu0 %v3930
    %5773 = vmatpush1.msra.mxu0 %v3929
    %5774 = vmatprep.subr.mxu0 %v3936
    %5775 = vmatpush1.msra.mxu0 %v3935
    %5776 = vmatprep.subr.mxu0 %v3942
    %5777 = vmatpush1.msra.mxu0 %v3941
    %5778 = vmatprep.subr.mxu0 %v3948
    %5779 = vmatpush1.msra.mxu0 %v3947
    %5780 = vmatprep.subr.mxu0 %v3954
    %5781 = vmatpush1.msra.mxu0 %v3953
    %5782 = vmatprep.subr.mxu0 %v3960
    %5783 = vmatpush1.msra.mxu0 %v3959
    %5784 = vmatprep.subr.mxu0 %v3966
    %5785 = vmatpush1.msra.mxu0 %v3965
    %5786 = vmatprep.subr.mxu0 %v3972
    %5787 = vmatpush1.msra.mxu0 %v3971
    %5788 = vmatprep.subr.mxu0 %v3978
    %5789 = vmatpush1.msra.mxu0 %v3977
    %5790 = vmatprep.subr.mxu0 %v3984
    %5791 = vmatpush1.msra.mxu0 %v3983
    %5792 = vmatprep.subr.mxu0 %v3990
    %5793 = vmatpush1.msra.mxu0 %v3989
    %5794 = vmatprep.subr.mxu0 %v3996
    %5795 = vmatpush1.msra.mxu0 %v3995
    %5796 = vmatprep.subr.mxu0 %v4002
    %5797 = vmatpush1.msra.mxu0 %v4001
    %5798 = vmatprep.subr.mxu0 %v4008
    %5799 = vmatpush1.msra.mxu0 %v4007
    %5800 = vmatprep.subr.mxu0 %v4014
    %5801 = vmatpush1.msra.mxu0 %v4013
    %5802 = vmatprep.subr.mxu0 %v4020
    %5803 = vmatpush1.msra.mxu0 %v4019
    %5804 = vmatprep.subr.mxu0 %v4026
    %5805 = vmatpush1.msra.mxu0 %v4025
    %5806 = vmatprep.subr.mxu0 %v4032
    %5807 = vmatpush1.msra.mxu0 %v4031
    %5808 = vmatprep.subr.mxu0 %v4038
    %5809 = vmatpush1.msra.mxu0 %v4037
    %5810 = vmatprep.subr.mxu0 %v4044
    %5811 = vmatpush1.msra.mxu0 %v4043
    %5812 = vmatprep.subr.mxu0 %v4050
    %5813 = vmatpush1.msra.mxu0 %v4049
    %5814 = vmatprep.subr.mxu0 %v4056
    %5815 = vmatpush1.msra.mxu0 %v4055
    %5816 = vmatprep.subr.mxu0 %v4062
    %5817 = vmatpush1.msra.mxu0 %v4061
    %5818 = vmatprep.subr.mxu0 %v4068
    %5819 = vmatpush1.msra.mxu0 %v4067
    %5820 = vmatprep.subr.mxu0 %v4074
    %5821 = vmatpush1.msra.mxu0 %v4073
    %5822 = vmatprep.subr.mxu0 %v4080
    %5823 = vmatpush1.msra.mxu0 %v4079
    %5824 = vmatprep.subr.mxu0 %v4086
    %5825 = vmatpush1.msra.mxu0 %v4085
    %5826 = vmatprep.subr.mxu0 %v4092
    %5827 = vmatpush1.msra.mxu0 %v4091
    %5828 = vmatprep.mubr.f32.mxu0 %v4899
    %5829 = vmatmul.mubr.f32.gmra.mrb[0].mxu0 %v4897
    %v5830 = vpop.f32.mrb[0].mxu0
    %v5831 = vadd.f32 %v5754, %v5830
    %v5832 = vpop.f32.mrb[0].mxu0
    %v5833 = vadd.f32 %v5756, %v5832
    %5834 = vmatprep.mubr.f32.mxu0 %v5115
    %5835 = vmatmul.mubr.f32.gmra.mrb[0].mxu0 %v5113
    %v5836 = vpop.f32.mrb[0].mxu0
    %v5837 = vadd.f32 %v5760, %v5836
    %v5838 = vpop.f32.mrb[0].mxu0
    %v5839 = vadd.f32 %v5762, %v5838
    %5840 = vdwg.mxu0
    %vm5841 = vcmp.gt.f32.partialorder %v5369, 0.0
    %vm5842 = vcmp.gt.f32.partialorder %v5371, 0.0
    %vm5843 = vcmp.gt.f32.partialorder %v5600, 0.0
    %vm5844 = vcmp.gt.f32.partialorder %v5602, 0.0
    %vm5845 = vcmp.gt.f32.partialorder %v5831, 0.0
    %vm5846 = vcmp.gt.f32.partialorder %v5833, 0.0
    %vm5847 = vcmp.gt.f32.partialorder %v5375, 0.0
    %vm5848 = vcmp.gt.f32.partialorder %v5377, 0.0
    %vm5849 = vcmp.gt.f32.partialorder %v5606, 0.0
    %vm5850 = vcmp.gt.f32.partialorder %v5608, 0.0
    %vm5851 = vcmp.gt.f32.partialorder %v5837, 0.0
    %vm5852 = vcmp.gt.f32.partialorder %v5839, 0.0
    %v5853 = vmul.f32 %v5369, 0.01
    %v5854 = vmul.f32 %v5371, 0.01
    %v5855 = vmul.f32 %v5600, 0.01
    %v5856 = vmul.f32 %v5602, 0.01
    %v5857 = vmul.f32 %v5831, 0.01
    %v5858 = vmul.f32 %v5833, 0.01
    %v5859 = vmul.f32 %v5375, 0.01
    %v5860 = vmul.f32 %v5377, 0.01
    %v5861 = vmul.f32 %v5606, 0.01
    %v5862 = vmul.f32 %v5608, 0.01
    %v5863 = vmul.f32 %v5837, 0.01
    %v5864 = vmul.f32 %v5839, 0.01
    %v5865 = vsel %vm5841, %v5369, %v5853
    %v5866 = vsel %vm5842, %v5371, %v5854
    %v5867 = vsel %vm5843, %v5600, %v5855
    %v5868 = vsel %vm5844, %v5602, %v5856
    %v5869 = vsel %vm5845, %v5831, %v5857
    %v5870 = vsel %vm5846, %v5833, %v5858
    %v5871 = vsel %vm5847, %v5375, %v5859
    %v5872 = vsel %vm5848, %v5377, %v5860
    %v5873 = vsel %vm5849, %v5606, %v5861
    %v5874 = vsel %vm5850, %v5608, %v5862
    %v5875 = vsel %vm5851, %v5837, %v5863
    %v5876 = vsel %vm5852, %v5839, %v5864
    %v5878 = vlaneseq
    %v5879 = vshrl.u32 %v5878, 7
    %v5880 = vsub.s32 0, %v5879
    %v5881 = vrot.slane %v4190, %v5880
    %5883 = vmatprep.subr.mxu0 0.0
    %5884 = vmatpush1.msra.mxu0 %v4094
    %5885 = vmatprep.subr.mxu0 0.0
    %5886 = vmatpush1.msra.mxu0 %v4095
    %5887 = vmatprep.subr.mxu0 0.0
    %5888 = vmatpush1.msra.mxu0 %v4096
    %5889 = vmatprep.subr.mxu0 0.0
    %5890 = vmatpush1.msra.mxu0 %v4097
    %5891 = vmatprep.subr.mxu0 0.0
    %5892 = vmatpush1.msra.mxu0 %v4098
    %5893 = vmatprep.subr.mxu0 0.0
    %5894 = vmatpush1.msra.mxu0 %v4099
    %5895 = vmatprep.subr.mxu0 0.0
    %5896 = vmatpush1.msra.mxu0 %v4100
    %5897 = vmatprep.subr.mxu0 0.0
    %5898 = vmatpush1.msra.mxu0 %v4101
    %5899 = vmatprep.subr.mxu0 0.0
    %5900 = vmatpush1.msra.mxu0 %v4102
    %5901 = vmatprep.subr.mxu0 0.0
    %5902 = vmatpush1.msra.mxu0 %v4103
    %5903 = vmatprep.subr.mxu0 0.0
    %5904 = vmatpush1.msra.mxu0 %v4104
    %5905 = vmatprep.subr.mxu0 0.0
    %5906 = vmatpush1.msra.mxu0 %v4105
    %5907 = vmatprep.subr.mxu0 0.0
    %5908 = vmatpush1.msra.mxu0 %v4106
    %5909 = vmatprep.subr.mxu0 0.0
    %5910 = vmatpush1.msra.mxu0 %v4107
    %5911 = vmatprep.subr.mxu0 0.0
    %5912 = vmatpush1.msra.mxu0 %v4108
    %5913 = vmatprep.subr.mxu0 0.0
    %5914 = vmatpush1.msra.mxu0 %v4109
    %5915 = vmatprep.subr.mxu0 0.0
    %5916 = vmatpush1.msra.mxu0 %v4110
    %5917 = vmatprep.subr.mxu0 0.0
    %5918 = vmatpush1.msra.mxu0 %v4111
    %5919 = vmatprep.subr.mxu0 0.0
    %5920 = vmatpush1.msra.mxu0 %v4112
    %5921 = vmatprep.subr.mxu0 0.0
    %5922 = vmatpush1.msra.mxu0 %v4113
    %5923 = vmatprep.subr.mxu0 0.0
    %5924 = vmatpush1.msra.mxu0 %v4114
    %5925 = vmatprep.subr.mxu0 0.0
    %5926 = vmatpush1.msra.mxu0 %v4115
    %5927 = vmatprep.subr.mxu0 0.0
    %5928 = vmatpush1.msra.mxu0 %v4116
    %5929 = vmatprep.subr.mxu0 0.0
    %5930 = vmatpush1.msra.mxu0 %v4117
    %5931 = vmatprep.subr.mxu0 0.0
    %5932 = vmatpush1.msra.mxu0 %v4118
    %5933 = vmatprep.subr.mxu0 0.0
    %5934 = vmatpush1.msra.mxu0 %v4119
    %5935 = vmatprep.subr.mxu0 0.0
    %5936 = vmatpush1.msra.mxu0 %v4120
    %5937 = vmatprep.subr.mxu0 0.0
    %5938 = vmatpush1.msra.mxu0 %v4121
    %5939 = vmatprep.subr.mxu0 0.0
    %5940 = vmatpush1.msra.mxu0 %v4122
    %5941 = vmatprep.subr.mxu0 0.0
    %5942 = vmatpush1.msra.mxu0 %v4123
    %5943 = vmatprep.subr.mxu0 0.0
    %5944 = vmatpush1.msra.mxu0 %v4124
    %5945 = vmatprep.subr.mxu0 0.0
    %5946 = vmatpush1.msra.mxu0 %v4125
    %5947 = vmatprep.mubr.f32.mxu0 %v5866
    %5948 = vmatmul.mubr.f32.gmra.mrb[0].mxu0 %v5865
    %v5949 = vpop.f32.mrb[0].mxu0
    %v5950 = vadd.f32 %v5881, %v5949
    %v5951 = vpop.f32.mrb[0].mxu0
    %5952 = vmatprep.mubr.f32.mxu0 %v5872
    %5953 = vmatmul.mubr.f32.gmra.mrb[0].mxu0 %v5871
    %v5954 = vpop.f32.mrb[0].mxu0
    %v5955 = vadd.f32 %v5881, %v5954
    %v5956 = vpop.f32.mrb[0].mxu0
    %5957 = vdwg.mxu0
    %5958 = vmatprep.subr.mxu0 0.0
    %5959 = vmatpush1.msra.mxu0 %v4126
    %5960 = vmatprep.subr.mxu0 0.0
    %5961 = vmatpush1.msra.mxu0 %v4127
    %5962 = vmatprep.subr.mxu0 0.0
    %5963 = vmatpush1.msra.mxu0 %v4128
    %5964 = vmatprep.subr.mxu0 0.0
    %5965 = vmatpush1.msra.mxu0 %v4129
    %5966 = vmatprep.subr.mxu0 0.0
    %5967 = vmatpush1.msra.mxu0 %v4130
    %5968 = vmatprep.subr.mxu0 0.0
    %5969 = vmatpush1.msra.mxu0 %v4131
    %5970 = vmatprep.subr.mxu0 0.0
    %5971 = vmatpush1.msra.mxu0 %v4132
    %5972 = vmatprep.subr.mxu0 0.0
    %5973 = vmatpush1.msra.mxu0 %v4133
    %5974 = vmatprep.subr.mxu0 0.0
    %5975 = vmatpush1.msra.mxu0 %v4134
    %5976 = vmatprep.subr.mxu0 0.0
    %5977 = vmatpush1.msra.mxu0 %v4135
    %5978 = vmatprep.subr.mxu0 0.0
    %5979 = vmatpush1.msra.mxu0 %v4136
    %5980 = vmatprep.subr.mxu0 0.0
    %5981 = vmatpush1.msra.mxu0 %v4137
    %5982 = vmatprep.subr.mxu0 0.0
    %5983 = vmatpush1.msra.mxu0 %v4138
    %5984 = vmatprep.subr.mxu0 0.0
    %5985 = vmatpush1.msra.mxu0 %v4139
    %5986 = vmatprep.subr.mxu0 0.0
    %5987 = vmatpush1.msra.mxu0 %v4140
    %5988 = vmatprep.subr.mxu0 0.0
    %5989 = vmatpush1.msra.mxu0 %v4141
    %5990 = vmatprep.subr.mxu0 0.0
    %5991 = vmatpush1.msra.mxu0 %v4142
    %5992 = vmatprep.subr.mxu0 0.0
    %5993 = vmatpush1.msra.mxu0 %v4143
    %5994 = vmatprep.subr.mxu0 0.0
    %5995 = vmatpush1.msra.mxu0 %v4144
    %5996 = vmatprep.subr.mxu0 0.0
    %5997 = vmatpush1.msra.mxu0 %v4145
    %5998 = vmatprep.subr.mxu0 0.0
    %5999 = vmatpush1.msra.mxu0 %v4146
    %6000 = vmatprep.subr.mxu0 0.0
    %6001 = vmatpush1.msra.mxu0 %v4147
    %6002 = vmatprep.subr.mxu0 0.0
    %6003 = vmatpush1.msra.mxu0 %v4148
    %6004 = vmatprep.subr.mxu0 0.0
    %6005 = vmatpush1.msra.mxu0 %v4149
    %6006 = vmatprep.subr.mxu0 0.0
    %6007 = vmatpush1.msra.mxu0 %v4150
    %6008 = vmatprep.subr.mxu0 0.0
    %6009 = vmatpush1.msra.mxu0 %v4151
    %6010 = vmatprep.subr.mxu0 0.0
    %6011 = vmatpush1.msra.mxu0 %v4152
    %6012 = vmatprep.subr.mxu0 0.0
    %6013 = vmatpush1.msra.mxu0 %v4153
    %6014 = vmatprep.subr.mxu0 0.0
    %6015 = vmatpush1.msra.mxu0 %v4154
    %6016 = vmatprep.subr.mxu0 0.0
    %6017 = vmatpush1.msra.mxu0 %v4155
    %6018 = vmatprep.subr.mxu0 0.0
    %6019 = vmatpush1.msra.mxu0 %v4156
    %6020 = vmatprep.subr.mxu0 0.0
    %6021 = vmatpush1.msra.mxu0 %v4157
    %6022 = vmatprep.mubr.f32.mxu0 %v5868
    %6023 = vmatmul.mubr.f32.gmra.mrb[0].mxu0 %v5867
    %v6024 = vpop.f32.mrb[0].mxu0
    %v6025 = vadd.f32 %v5950, %v6024
    %v6026 = vpop.f32.mrb[0].mxu0
    %6027 = vmatprep.mubr.f32.mxu0 %v5874
    %6028 = vmatmul.mubr.f32.gmra.mrb[0].mxu0 %v5873
    %v6029 = vpop.f32.mrb[0].mxu0
    %v6030 = vadd.f32 %v5955, %v6029
    %v6031 = vpop.f32.mrb[0].mxu0
    %6032 = vdwg.mxu0
    %6033 = vmatprep.subr.mxu0 0.0
    %6034 = vmatpush1.msra.mxu0 %v4158
    %6035 = vmatprep.subr.mxu0 0.0
    %6036 = vmatpush1.msra.mxu0 %v4159
    %6037 = vmatprep.subr.mxu0 0.0
    %6038 = vmatpush1.msra.mxu0 %v4160
    %6039 = vmatprep.subr.mxu0 0.0
    %6040 = vmatpush1.msra.mxu0 %v4161
    %6041 = vmatprep.subr.mxu0 0.0
    %6042 = vmatpush1.msra.mxu0 %v4162
    %6043 = vmatprep.subr.mxu0 0.0
    %6044 = vmatpush1.msra.mxu0 %v4163
    %6045 = vmatprep.subr.mxu0 0.0
    %6046 = vmatpush1.msra.mxu0 %v4164
    %6047 = vmatprep.subr.mxu0 0.0
    %6048 = vmatpush1.msra.mxu0 %v4165
    %6049 = vmatprep.subr.mxu0 0.0
    %6050 = vmatpush1.msra.mxu0 %v4166
    %6051 = vmatprep.subr.mxu0 0.0
    %6052 = vmatpush1.msra.mxu0 %v4167
    %6053 = vmatprep.subr.mxu0 0.0
    %6054 = vmatpush1.msra.mxu0 %v4168
    %6055 = vmatprep.subr.mxu0 0.0
    %6056 = vmatpush1.msra.mxu0 %v4169
    %6057 = vmatprep.subr.mxu0 0.0
    %6058 = vmatpush1.msra.mxu0 %v4170
    %6059 = vmatprep.subr.mxu0 0.0
    %6060 = vmatpush1.msra.mxu0 %v4171
    %6061 = vmatprep.subr.mxu0 0.0
    %6062 = vmatpush1.msra.mxu0 %v4172
    %6063 = vmatprep.subr.mxu0 0.0
    %6064 = vmatpush1.msra.mxu0 %v4173
    %6065 = vmatprep.subr.mxu0 0.0
    %6066 = vmatpush1.msra.mxu0 %v4174
    %6067 = vmatprep.subr.mxu0 0.0
    %6068 = vmatpush1.msra.mxu0 %v4175
    %6069 = vmatprep.subr.mxu0 0.0
    %6070 = vmatpush1.msra.mxu0 %v4176
    %6071 = vmatprep.subr.mxu0 0.0
    %6072 = vmatpush1.msra.mxu0 %v4177
    %6073 = vmatprep.subr.mxu0 0.0
    %6074 = vmatpush1.msra.mxu0 %v4178
    %6075 = vmatprep.subr.mxu0 0.0
    %6076 = vmatpush1.msra.mxu0 %v4179
    %6077 = vmatprep.subr.mxu0 0.0
    %6078 = vmatpush1.msra.mxu0 %v4180
    %6079 = vmatprep.subr.mxu0 0.0
    %6080 = vmatpush1.msra.mxu0 %v4181
    %6081 = vmatprep.subr.mxu0 0.0
    %6082 = vmatpush1.msra.mxu0 %v4182
    %6083 = vmatprep.subr.mxu0 0.0
    %6084 = vmatpush1.msra.mxu0 %v4183
    %6085 = vmatprep.subr.mxu0 0.0
    %6086 = vmatpush1.msra.mxu0 %v4184
    %6087 = vmatprep.subr.mxu0 0.0
    %6088 = vmatpush1.msra.mxu0 %v4185
    %6089 = vmatprep.subr.mxu0 0.0
    %6090 = vmatpush1.msra.mxu0 %v4186
    %6091 = vmatprep.subr.mxu0 0.0
    %6092 = vmatpush1.msra.mxu0 %v4187
    %6093 = vmatprep.subr.mxu0 0.0
    %6094 = vmatpush1.msra.mxu0 %v4188
    %6095 = vmatprep.subr.mxu0 0.0
    %6096 = vmatpush1.msra.mxu0 %v4189
    %6097 = vmatprep.mubr.f32.mxu0 %v5870
    %6098 = vmatmul.mubr.f32.gmra.mrb[0].mxu0 %v5869
    %v6099 = vpop.f32.mrb[0].mxu0
    %v6100 = vadd.f32 %v6025, %v6099
    %v6101 = vpop.f32.mrb[0].mxu0
    %6102 = vmatprep.mubr.f32.mxu0 %v5876
    %6103 = vmatmul.mubr.f32.gmra.mrb[0].mxu0 %v5875
    %v6104 = vpop.f32.mrb[0].mxu0
    %v6105 = vadd.f32 %v6030, %v6104
    %v6106 = vpop.f32.mrb[0].mxu0
    %6107 = vdwg.mxu0
    %6108 = vst [vmem:[#allocation23] sm:$0xff] %v6100
    %6109 = vst [vmem:[#allocation23 + $0x8] sm:$0xff] %v6105
    // Predicated region
    $region106: #{tpu_custom_call.1} parent=1 // pred_check
      _
    $region107: #{tpu_custom_call.1} parent=1 // pred_check_branch
      %6111 = sbr.rel (0) target = $region109
    $region108: #{tpu_custom_call.1} parent=1 // pred_region
      %s6113 = ssub.s32 256, 256
      %6114 = vsyncadd [#allocation4], %s6113
      %s6115 = sshll.u32 [#allocation23], 4
      %s6116 = int_to_ptr.vmem [resolvable:$true] %s6115
      %6121 = dma.vmem_to_hbm [thread:$0]  %s6116, 256, %s13, [#allocation4], 128, 128, 8
    $region109: #{tpu_custom_call.1} parent=1 // pred_fallthru
      _
    // Predicated region
    $region110: #{tpu_custom_call.1} parent=1 // pred_check
      _
    $region111: #{tpu_custom_call.1} parent=1 // pred_check_branch
      %6123 = sbr.rel (0) target = $region113
    $region112: #{tpu_custom_call.1} parent=1 // pred_region
      %6124 = dma.done [#allocation4], 256
    $region113: #{tpu_custom_call.1} parent=1 // pred_fallthru
      _
    %6125 = vsyncpa [#allocation3], 1
    %6126 = vsyncpa [#allocation6], 1
    %6127 = vsyncpa [#allocation9], 1
    %6128 = vsyncpa [#allocation12], 1
    %6129 = vsyncpa [#allocation15], 1
    %6130 = vsyncpa [#allocation18], 1
    %6131 = vsyncpa [#allocation21], 1
    %6132 = vsyncpa [#allocation4], 1

</llo_original>
